<compile_context>
chip_gen: v7x
topology: tpu7x:2x2x1
jax: 0.10.0
libtpu: 0.0.40
codegen_flags: <defaults>
</compile_context>

<pallas_src>
import numpy as np
import jax
import jax.numpy as jnp
from jax.experimental import pallas as pl
from jax.experimental.pallas import tpu as pltpu

KSIZE = 11
SIGMA = 1.5
PAD = KSIZE // 2          # 5
HALO = 16                 # halo rows below each block (multiple of 16, >= KSIZE-1)
CENTER = 127.5            # constant centering for better f32 variance accuracy

C1 = (0.01 * 255) ** 2
C2 = (0.03 * 255) ** 2

_MXU_PRECISION = jax.lax.Precision.HIGHEST   # full-f32-accurate MXU passes


def _gaussian_kernel_1d():
    # Same formula cv2.getGaussianKernel uses for ksize=11, sigma=1.5.
    i = np.arange(KSIZE, dtype=np.float64) - (KSIZE - 1) / 2.0
    k = np.exp(-(i ** 2) / (2.0 * SIGMA ** 2))
    return k / k.sum()


_GK = _gaussian_kernel_1d()


def _round_up(a, m):
    return ((a + m - 1) // m) * m


def _vertical_weights(bh):
    """Banded weights so the sublane Gaussian pass becomes MXU matmuls.

    col[r, :] = sum_t gk[t] * window[r + t, :], window = [cur (bh rows); halo (HALO rows)]
    -> col = Wc @ cur + Wh @ halo,  Wc: (bh, bh),  Wh: (bh, HALO).
    """
    wf = np.zeros((bh, bh + HALO), dtype=np.float64)
    for r in range(bh):
        wf[r, r:r + KSIZE] = _GK
    return wf[:, :bh].astype(np.float32), wf[:, bh:].astype(np.float32)


def _lane_weights(wpad):
    """Banded (wpad, wpad) weights for the lane Gaussian pass as col @ Wl."""
    idx = np.arange(wpad)
    t = idx[:, None] - idx[None, :] + PAD          # tap index for out col j from in col i
    wl = np.zeros((wpad, wpad), dtype=np.float64)
    m = (t >= 0) & (t < KSIZE)
    wl[m] = _GK[t[m]]
    return wl.astype(np.float32)


def _make_kernel(bh, wpad, hv, wv, use_lane_matmul):
    gk = [float(v) for v in _GK]          # symmetric: gk[5+d] == gk[5-d]
    n_groups = bh // 8

    def hfilt_roll(m):
        # Wide-image fallback: symmetric +/-d XLU rolls, full 128-aligned lane width.
        acc = gk[PAD] * m
        for d in range(1, PAD + 1):
            acc = acc + gk[PAD + d] * (pltpu.roll(m, shift=d, axis=1) +
                                       pltpu.roll(m, shift=wpad - d, axis=1))
        return acc

    def kernel(wc_ref, wh_ref, *rest):
        if use_lane_matmul:
            wl_ref, xc_ref, xh_ref, yc_ref, yh_ref, o_ref = rest
        else:
            xc_ref, xh_ref, yc_ref, yh_ref, o_ref = rest

        u_c = xc_ref[0] - CENTER          # (bh, wpad)  current row block
        v_c = yc_ref[0] - CENTER
        u_h = xh_ref[0] - CENTER          # (HALO, wpad) halo rows below the block
        v_h = yh_ref[0] - CENTER

        wc = wc_ref[...]
        wh = wh_ref[...]

        def vfilt(qc, qh):                # vertical (sublane) Gaussian on the MXU
            return (jnp.dot(wc, qc, preferred_element_type=jnp.float32,
                            precision=_MXU_PRECISION) +
                    jnp.dot(wh, qh, preferred_element_type=jnp.float32,
                            precision=_MXU_PRECISION))

        if use_lane_matmul:
            wl = wl_ref[...]

            def hfilt(m):                 # horizontal (lane) Gaussian on the MXU
                return jnp.dot(m, wl, preferred_element_type=jnp.float32,
                               precision=_MXU_PRECISION)
        else:
            hfilt = hfilt_roll

        fu = hfilt(vfilt(u_c, u_h))
        fv = hfilt(vfilt(v_c, v_h))
        fuu = hfilt(vfilt(u_c * u_c, u_h * u_h))
        fvv = hfilt(vfilt(v_c * v_c, v_h * v_h))
        fuv = hfilt(vfilt(u_c * v_c, u_h * v_h))

        mu1 = fu + CENTER                 # filter weights sum to 1
        mu2 = fv + CENTER
        sigma1_sq = fuu - fu * fu
        sigma2_sq = fvv - fv * fv
        sigma12 = fuv - fu * fv
        mu1_mu2 = mu1 * mu2

        num = (2.0 * mu1_mu2 + C1) * (2.0 * sigma12 + C2)
        den = (mu1 * mu1 + mu2 * mu2 + C1) * (sigma1_sq + sigma2_sq + C2)
        r = pl.reciprocal(den, approx=True)   # EUP slot
        r = r * (2.0 - den * r)               # one Newton step -> ~f32 accuracy
        ssim_map = num * r

        # Static column-crop mask (valid output columns are [PAD, PAD + wv)).
        cols = jax.lax.broadcasted_iota(jnp.int32, (1, wpad), 1)
        col_ok = jnp.logical_and(cols >= PAD, cols < PAD + wv)

        def reduce_and_store(smap):
            p = smap[0:8, :]
            for g in range(1, n_groups):
                p = p + smap[g * 8:(g + 1) * 8, :]
            o_ref[0, 0] = p                    # lane-dense (8, wpad) partial sums

        rb = pl.program_id(0)
        last = pl.num_programs(0) - 1

        @pl.when(rb != last)                   # interior blocks: no row mask needed
        def _():
            reduce_and_store(jnp.where(col_ok, ssim_map, 0.0))

        @pl.when(rb == last)                   # last block: mask rows >= hv
        def _():
            rows = jax.lax.broadcasted_iota(jnp.int32, (bh, 1), 0) + rb * bh
            ok = jnp.logical_and(rows < hv, col_ok)
            reduce_and_store(jnp.where(ok, ssim_map, 0.0))

    return kernel


def ssim_metric(x, y, crop_border=0, input_order="HWC", test_y_channel=False,
                block_rows=None):
    """Equivalent of SSIMMetric(crop_border, input_order, test_y_channel)(x, y)."""
    assert x.shape == y.shape, f"Image shapes differ: {x.shape} vs {y.shape}"
    if test_y_channel:
        # TODO(synk): RGB -> Y (YCbCr) conversion not implemented (module default is False).
        raise NotImplementedError
    if input_order not in ("HWC", "CHW"):
        raise ValueError(f"Wrong input_order {input_order}")
    if input_order == "CHW":
        x = jnp.transpose(x, (1, 2, 0))
        y = jnp.transpose(y, (1, 2, 0))
    if crop_border != 0:
        x = x[crop_border:-crop_border, crop_border:-crop_border, ...]
        y = y[crop_border:-crop_border, crop_border:-crop_border, ...]

    # HWC -> CHW so H maps to sublanes and W maps to lanes (layout plumbing).
    # TODO(synk): for uint8 sources, transpose/pad in uint8 and cast in-kernel (4x less DMA).
    xc = jnp.transpose(x, (2, 0, 1)).astype(jnp.float32)
    yc = jnp.transpose(y, (2, 0, 1)).astype(jnp.float32)
    C, H, W = xc.shape
    Hv, Wv = H - 2 * PAD, W - 2 * PAD
    assert Hv > 0 and Wv > 0, "image must be at least 11x11 after cropping"

    wpad = _round_up(W, 128)                 # lane-dense width

    # Generation-aware tiling: bigger tiles / higher VMEM limit on 128-MiB parts
    # (v5e/v6e), conservative on 64-MiB v7x; validated fallback if query fails.
    try:
        vmem_cap = int(pltpu.get_tpu_info().vmem_capacity_bytes)
    except Exception:
        vmem_cap = 0
    if vmem_cap > 0:
        vmem_limit = max(min(int(0.70 * vmem_cap), 96 << 20), 16 << 20)
    else:
        vmem_limit = 32 << 20
    if block_rows is None:
        block_rows = 256 if vmem_cap >= (100 << 20) else 128

    # Rough budget: ~40 f32 (bh, wpad) tiles cover intermediates + double-buffered inputs.
    max_bh = max(16, (vmem_limit // (40 * wpad * 4)) // 16 * 16)
    bh = max(16, (int(block_rows) // 16) * 16)
    bh = min(bh, _round_up(Hv, 16), max_bh)

    nrb = -(-Hv // bh)                       # ceil(Hv / bh) row blocks
    hpad = (nrb + 1) * bh                    # room for the last halo fetch
    use_lane_matmul = wpad <= 512            # (wpad,wpad) weights too big for wide images

    xp = jnp.pad(xc, ((0, 0), (0, hpad - H), (0, wpad - W)))
    yp = jnp.pad(yc, ((0, 0), (0, hpad - H), (0, wpad - W)))

    wc_np, wh_np = _vertical_weights(bh)
    weights = [jnp.asarray(wc_np), jnp.asarray(wh_np)]
    w_specs = [pl.BlockSpec((bh, bh), lambda rb, c: (0, 0)),
               pl.BlockSpec((bh, HALO), lambda rb, c: (0, 0))]
    if use_lane_matmul:
        weights.append(jnp.asarray(_lane_weights(wpad)))
        w_specs.append(pl.BlockSpec((wpad, wpad), lambda rb, c: (0, 0)))

    cur_spec = pl.BlockSpec((1, bh, wpad), lambda rb, c: (c, rb, 0))
    halo_spec = pl.BlockSpec((1, HALO, wpad),
                             lambda rb, c: (c, (rb + 1) * (bh // HALO), 0))
    out_spec = pl.BlockSpec((1, 1, 8, wpad), lambda rb, c: (rb, c, 0, 0))

    partial = pl.pallas_call(
        _make_kernel(bh, wpad, Hv, Wv, use_lane_matmul),
        out_shape=jax.ShapeDtypeStruct((nrb, C, 8, wpad), jnp.float32),
        grid=(nrb, C),
        in_specs=w_specs + [cur_spec, halo_spec, cur_spec, halo_spec],
        out_specs=out_spec,
        compiler_params=pltpu.CompilerParams(
            dimension_semantics=("parallel", "parallel"),
            vmem_limit_bytes=vmem_limit,
        ),
    )(*weights, xp, xp, yp, yp)

    # mean over per-channel maps == global sum / (C*Hv*Wv) (equal-size maps)
    return jnp.sum(partial) / (C * Hv * Wv)


def _numpy_reference(x, y):
    """Pure-numpy float64 reference mirroring calculate_ssim (HWC, crop_border=0)."""
    x = np.asarray(x, dtype=np.float64)
    y = np.asarray(y, dtype=np.float64)
    win = np.outer(_GK, _GK)
    H, W, C = x.shape
    Hv, Wv = H - 2 * PAD, W - 2 * PAD

    def filt(m):
        out = np.zeros((Hv, Wv))
        for i in range(KSIZE):
            for j in range(KSIZE):
                out += win[i, j] * m[i:i + Hv, j:j + Wv]
        return out

    ssims = []
    for c in range(C):
        a, b = x[..., c], y[..., c]
        mu1, mu2 = filt(a), filt(b)
        s1 = filt(a * a) - mu1 ** 2
        s2 = filt(b * b) - mu2 ** 2
        s12 = filt(a * b) - mu1 * mu2
        smap = (2 * mu1 * mu2 + C1) * (2 * s12 + C2) / (
            (mu1 ** 2 + mu2 ** 2 + C1) * (s1 + s2 + C2))
        ssims.append(smap.mean())
    return float(np.mean(ssims))


if __name__ == "__main__":
    key = jax.random.PRNGKey(0)
    kx, ky = jax.random.split(key)
    H, W, C = 32, 32, 3  # HWC, values in [0, 255]
    x = jax.random.uniform(kx, (H, W, C), minval=0.0, maxval=255.0, dtype=jnp.float32)
    noise = jax.random.uniform(ky, (H, W, C), minval=-10.0, maxval=10.0, dtype=jnp.float32)
    y = jnp.clip(x + noise, 0.0, 255.0)

    result = ssim_metric(x, y)
    result = jax.block_until_ready(result)

    ref = _numpy_reference(np.asarray(x), np.asarray(y))
    assert np.allclose(float(result), ref, rtol=1e-4, atol=1e-4), (float(result), ref)
    print("KERNEL_OK")
</pallas_src>

<mosaic_0001>
module attributes {stable_mosaic.version = 11 : i64} {
  func.func @kernel(%arg0: i32, %arg1: i32, %arg2: memref<32x32xf32, #tpu.memory_space<vmem>>, %arg3: memref<32x16xf32, #tpu.memory_space<vmem>>, %arg4: memref<128x128xf32, #tpu.memory_space<vmem>>, %arg5: memref<1x32x128xf32, #tpu.memory_space<vmem>>, %arg6: memref<1x16x128xf32, #tpu.memory_space<vmem>>, %arg7: memref<1x32x128xf32, #tpu.memory_space<vmem>>, %arg8: memref<1x16x128xf32, #tpu.memory_space<vmem>>, %arg9: memref<1x1x8x128xf32, #tpu.memory_space<vmem>>) attributes {dimension_semantics = [#tpu.dimension_semantics<parallel>, #tpu.dimension_semantics<parallel>], iteration_bounds = array<i64: 1, 3>, scalar_prefetch = 0 : i64, scratch_operands = 0 : i64, tpu.core_type = #tpu.core_type<tc>, window_params = [{pipeline_mode = #tpu.pipeline_mode<synchronous>, transform_indices = @transform_0, window_bounds = array<i64: 32, 32>}, {pipeline_mode = #tpu.pipeline_mode<synchronous>, transform_indices = @transform_1, window_bounds = array<i64: 32, 16>}, {pipeline_mode = #tpu.pipeline_mode<synchronous>, transform_indices = @transform_2, window_bounds = array<i64: 128, 128>}, {transform_indices = @transform_3, window_bounds = array<i64: 1, 32, 128>}, {transform_indices = @transform_4, window_bounds = array<i64: 1, 16, 128>}, {transform_indices = @transform_5, window_bounds = array<i64: 1, 32, 128>}, {transform_indices = @transform_6, window_bounds = array<i64: 1, 16, 128>}, {transform_indices = @transform_7, window_bounds = array<i64: 1, 1, 8, 128>}]} {
    %c0 = arith.constant 0 : index
    %c0_0 = arith.constant 0 : index
    %c0_1 = arith.constant 0 : index
    %0 = vector.load %arg5[%c0, %c0_0, %c0_1] : memref<1x32x128xf32, #tpu.memory_space<vmem>>, vector<1x32x128xf32>
    %1 = vector.shape_cast %0 : vector<1x32x128xf32> to vector<32x128xf32>
    %cst = arith.constant 1.275000e+02 : f32
    %2 = vector.broadcast %cst : f32 to vector<32x128xf32>
    %3 = arith.subf %1, %2 : vector<32x128xf32>
    %c0_2 = arith.constant 0 : index
    %c0_3 = arith.constant 0 : index
    %c0_4 = arith.constant 0 : index
    %4 = vector.load %arg7[%c0_2, %c0_3, %c0_4] : memref<1x32x128xf32, #tpu.memory_space<vmem>>, vector<1x32x128xf32>
    %5 = vector.shape_cast %4 : vector<1x32x128xf32> to vector<32x128xf32>
    %cst_5 = arith.constant 1.275000e+02 : f32
    %6 = vector.broadcast %cst_5 : f32 to vector<32x128xf32>
    %7 = arith.subf %5, %6 : vector<32x128xf32>
    %c0_6 = arith.constant 0 : index
    %c0_7 = arith.constant 0 : index
    %c0_8 = arith.constant 0 : index
    %8 = vector.load %arg6[%c0_6, %c0_7, %c0_8] : memref<1x16x128xf32, #tpu.memory_space<vmem>>, vector<1x16x128xf32>
    %9 = vector.shape_cast %8 : vector<1x16x128xf32> to vector<16x128xf32>
    %cst_9 = arith.constant 1.275000e+02 : f32
    %10 = vector.broadcast %cst_9 : f32 to vector<16x128xf32>
    %11 = arith.subf %9, %10 : vector<16x128xf32>
    %c0_10 = arith.constant 0 : index
    %c0_11 = arith.constant 0 : index
    %c0_12 = arith.constant 0 : index
    %12 = vector.load %arg8[%c0_10, %c0_11, %c0_12] : memref<1x16x128xf32, #tpu.memory_space<vmem>>, vector<1x16x128xf32>
    %13 = vector.shape_cast %12 : vector<1x16x128xf32> to vector<16x128xf32>
    %cst_13 = arith.constant 1.275000e+02 : f32
    %14 = vector.broadcast %cst_13 : f32 to vector<16x128xf32>
    %15 = arith.subf %13, %14 : vector<16x128xf32>
    %c0_14 = arith.constant 0 : index
    %c0_15 = arith.constant 0 : index
    %16 = vector.load %arg2[%c0_14, %c0_15] : memref<32x32xf32, #tpu.memory_space<vmem>>, vector<32x32xf32>
    %c0_16 = arith.constant 0 : index
    %c0_17 = arith.constant 0 : index
    %17 = vector.load %arg3[%c0_16, %c0_17] : memref<32x16xf32, #tpu.memory_space<vmem>>, vector<32x16xf32>
    %c0_18 = arith.constant 0 : index
    %c0_19 = arith.constant 0 : index
    %18 = vector.load %arg4[%c0_18, %c0_19] : memref<128x128xf32, #tpu.memory_space<vmem>>, vector<128x128xf32>
    %cst_20 = arith.constant dense<0.000000e+00> : vector<32x128xf32>
    %19 = tpu.matmul %16, %3, %cst_20 {dimension_numbers = #tpu.dot_dimension_numbers<[1], [0], [0], [1], [0, 0, 1, 1], [], []>, precision = #tpu.contract_precision<fp32>} : vector<32x32xf32>, vector<32x128xf32>, vector<32x128xf32> -> vector<32x128xf32>
    %cst_21 = arith.constant dense<0.000000e+00> : vector<32x128xf32>
    %20 = tpu.matmul %17, %11, %cst_21 {dimension_numbers = #tpu.dot_dimension_numbers<[1], [0], [0], [1], [0, 0, 1, 1], [], []>, precision = #tpu.contract_precision<fp32>} : vector<32x16xf32>, vector<16x128xf32>, vector<32x128xf32> -> vector<32x128xf32>
    %21 = arith.addf %19, %20 : vector<32x128xf32>
    %cst_22 = arith.constant dense<0.000000e+00> : vector<32x128xf32>
    %22 = tpu.matmul %21, %18, %cst_22 {dimension_numbers = #tpu.dot_dimension_numbers<[1], [0], [0], [1], [0, 0, 1, 1], [], []>, precision = #tpu.contract_precision<fp32>} : vector<32x128xf32>, vector<128x128xf32>, vector<32x128xf32> -> vector<32x128xf32>
    %cst_23 = arith.constant dense<0.000000e+00> : vector<32x128xf32>
    %23 = tpu.matmul %16, %7, %cst_23 {dimension_numbers = #tpu.dot_dimension_numbers<[1], [0], [0], [1], [0, 0, 1, 1], [], []>, precision = #tpu.contract_precision<fp32>} : vector<32x32xf32>, vector<32x128xf32>, vector<32x128xf32> -> vector<32x128xf32>
    %cst_24 = arith.constant dense<0.000000e+00> : vector<32x128xf32>
    %24 = tpu.matmul %17, %15, %cst_24 {dimension_numbers = #tpu.dot_dimension_numbers<[1], [0], [0], [1], [0, 0, 1, 1], [], []>, precision = #tpu.contract_precision<fp32>} : vector<32x16xf32>, vector<16x128xf32>, vector<32x128xf32> -> vector<32x128xf32>
    %25 = arith.addf %23, %24 : vector<32x128xf32>
    %cst_25 = arith.constant dense<0.000000e+00> : vector<32x128xf32>
    %26 = tpu.matmul %25, %18, %cst_25 {dimension_numbers = #tpu.dot_dimension_numbers<[1], [0], [0], [1], [0, 0, 1, 1], [], []>, precision = #tpu.contract_precision<fp32>} : vector<32x128xf32>, vector<128x128xf32>, vector<32x128xf32> -> vector<32x128xf32>
    %27 = arith.mulf %3, %3 : vector<32x128xf32>
    %28 = arith.mulf %11, %11 : vector<16x128xf32>
    %cst_26 = arith.constant dense<0.000000e+00> : vector<32x128xf32>
    %29 = tpu.matmul %16, %27, %cst_26 {dimension_numbers = #tpu.dot_dimension_numbers<[1], [0], [0], [1], [0, 0, 1, 1], [], []>, precision = #tpu.contract_precision<fp32>} : vector<32x32xf32>, vector<32x128xf32>, vector<32x128xf32> -> vector<32x128xf32>
    %cst_27 = arith.constant dense<0.000000e+00> : vector<32x128xf32>
    %30 = tpu.matmul %17, %28, %cst_27 {dimension_numbers = #tpu.dot_dimension_numbers<[1], [0], [0], [1], [0, 0, 1, 1], [], []>, precision = #tpu.contract_precision<fp32>} : vector<32x16xf32>, vector<16x128xf32>, vector<32x128xf32> -> vector<32x128xf32>
    %31 = arith.addf %29, %30 : vector<32x128xf32>
    %cst_28 = arith.constant dense<0.000000e+00> : vector<32x128xf32>
    %32 = tpu.matmul %31, %18, %cst_28 {dimension_numbers = #tpu.dot_dimension_numbers<[1], [0], [0], [1], [0, 0, 1, 1], [], []>, precision = #tpu.contract_precision<fp32>} : vector<32x128xf32>, vector<128x128xf32>, vector<32x128xf32> -> vector<32x128xf32>
    %33 = arith.mulf %7, %7 : vector<32x128xf32>
    %34 = arith.mulf %15, %15 : vector<16x128xf32>
    %cst_29 = arith.constant dense<0.000000e+00> : vector<32x128xf32>
    %35 = tpu.matmul %16, %33, %cst_29 {dimension_numbers = #tpu.dot_dimension_numbers<[1], [0], [0], [1], [0, 0, 1, 1], [], []>, precision = #tpu.contract_precision<fp32>} : vector<32x32xf32>, vector<32x128xf32>, vector<32x128xf32> -> vector<32x128xf32>
    %cst_30 = arith.constant dense<0.000000e+00> : vector<32x128xf32>
    %36 = tpu.matmul %17, %34, %cst_30 {dimension_numbers = #tpu.dot_dimension_numbers<[1], [0], [0], [1], [0, 0, 1, 1], [], []>, precision = #tpu.contract_precision<fp32>} : vector<32x16xf32>, vector<16x128xf32>, vector<32x128xf32> -> vector<32x128xf32>
    %37 = arith.addf %35, %36 : vector<32x128xf32>
    %cst_31 = arith.constant dense<0.000000e+00> : vector<32x128xf32>
    %38 = tpu.matmul %37, %18, %cst_31 {dimension_numbers = #tpu.dot_dimension_numbers<[1], [0], [0], [1], [0, 0, 1, 1], [], []>, precision = #tpu.contract_precision<fp32>} : vector<32x128xf32>, vector<128x128xf32>, vector<32x128xf32> -> vector<32x128xf32>
    %39 = arith.mulf %3, %7 : vector<32x128xf32>
    %40 = arith.mulf %11, %15 : vector<16x128xf32>
    %cst_32 = arith.constant dense<0.000000e+00> : vector<32x128xf32>
    %41 = tpu.matmul %16, %39, %cst_32 {dimension_numbers = #tpu.dot_dimension_numbers<[1], [0], [0], [1], [0, 0, 1, 1], [], []>, precision = #tpu.contract_precision<fp32>} : vector<32x32xf32>, vector<32x128xf32>, vector<32x128xf32> -> vector<32x128xf32>
    %cst_33 = arith.constant dense<0.000000e+00> : vector<32x128xf32>
    %42 = tpu.matmul %17, %40, %cst_33 {dimension_numbers = #tpu.dot_dimension_numbers<[1], [0], [0], [1], [0, 0, 1, 1], [], []>, precision = #tpu.contract_precision<fp32>} : vector<32x16xf32>, vector<16x128xf32>, vector<32x128xf32> -> vector<32x128xf32>
    %43 = arith.addf %41, %42 : vector<32x128xf32>
    %cst_34 = arith.constant dense<0.000000e+00> : vector<32x128xf32>
    %44 = tpu.matmul %43, %18, %cst_34 {dimension_numbers = #tpu.dot_dimension_numbers<[1], [0], [0], [1], [0, 0, 1, 1], [], []>, precision = #tpu.contract_precision<fp32>} : vector<32x128xf32>, vector<128x128xf32>, vector<32x128xf32> -> vector<32x128xf32>
    %cst_35 = arith.constant 1.275000e+02 : f32
    %45 = vector.broadcast %cst_35 : f32 to vector<32x128xf32>
    %46 = arith.addf %22, %45 : vector<32x128xf32>
    %cst_36 = arith.constant 1.275000e+02 : f32
    %47 = vector.broadcast %cst_36 : f32 to vector<32x128xf32>
    %48 = arith.addf %26, %47 : vector<32x128xf32>
    %49 = arith.mulf %22, %22 : vector<32x128xf32>
    %50 = arith.subf %32, %49 : vector<32x128xf32>
    %51 = arith.mulf %26, %26 : vector<32x128xf32>
    %52 = arith.subf %38, %51 : vector<32x128xf32>
    %53 = arith.mulf %22, %26 : vector<32x128xf32>
    %54 = arith.subf %44, %53 : vector<32x128xf32>
    %55 = arith.mulf %46, %48 : vector<32x128xf32>
    %cst_37 = arith.constant 2.000000e+00 : f32
    %56 = vector.broadcast %cst_37 : f32 to vector<32x128xf32>
    %57 = arith.mulf %56, %55 : vector<32x128xf32>
    %cst_38 = arith.constant 6.502500e+00 : f32
    %58 = vector.broadcast %cst_38 : f32 to vector<32x128xf32>
    %59 = arith.addf %57, %58 : vector<32x128xf32>
    %cst_39 = arith.constant 2.000000e+00 : f32
    %60 = vector.broadcast %cst_39 : f32 to vector<32x128xf32>
    %61 = arith.mulf %60, %54 : vector<32x128xf32>
    %cst_40 = arith.constant 5.852250e+01 : f32
    %62 = vector.broadcast %cst_40 : f32 to vector<32x128xf32>
    %63 = arith.addf %61, %62 : vector<32x128xf32>
    %64 = arith.mulf %59, %63 : vector<32x128xf32>
    %65 = arith.mulf %46, %46 : vector<32x128xf32>
    %66 = arith.mulf %48, %48 : vector<32x128xf32>
    %67 = arith.addf %65, %66 : vector<32x128xf32>
    %cst_41 = arith.constant 6.502500e+00 : f32
    %68 = vector.broadcast %cst_41 : f32 to vector<32x128xf32>
    %69 = arith.addf %67, %68 : vector<32x128xf32>
    %70 = arith.addf %50, %52 : vector<32x128xf32>
    %cst_42 = arith.constant 5.852250e+01 : f32
    %71 = vector.broadcast %cst_42 : f32 to vector<32x128xf32>
    %72 = arith.addf %70, %71 : vector<32x128xf32>
    %73 = arith.mulf %69, %72 : vector<32x128xf32>
    %74 = tpu.reciprocal %73 {approx = true} : vector<32x128xf32> -> vector<32x128xf32>
    %75 = arith.mulf %73, %74 : vector<32x128xf32>
    %cst_43 = arith.constant 2.000000e+00 : f32
    %76 = vector.broadcast %cst_43 : f32 to vector<32x128xf32>
    %77 = arith.subf %76, %75 : vector<32x128xf32>
    %78 = arith.mulf %74, %77 : vector<32x128xf32>
    %79 = arith.mulf %64, %78 : vector<32x128xf32>
    %80 = tpu.iota {dimensions = array<i32: 1>} : vector<1x128xi32>
    %c5_i32 = arith.constant 5 : i32
    %81 = vector.broadcast %c5_i32 : i32 to vector<1x128xi32>
    %82 = arith.cmpi sge, %80, %81 : vector<1x128xi32>
    %c27_i32 = arith.constant 27 : i32
    %83 = vector.broadcast %c27_i32 : i32 to vector<1x128xi32>
    %84 = arith.cmpi slt, %80, %83 : vector<1x128xi32>
    %85 = arith.andi %82, %84 : vector<1x128xi1>
    %c0_i32 = arith.constant 0 : i32
    %86 = arith.cmpi ne, %arg0, %c0_i32 : i32
    %87 = arith.extui %86 : i1 to i32
    %c0_i32_44 = arith.constant 0 : i32
    %88 = arith.cmpi ne, %87, %c0_i32_44 : i32
    scf.if %88 {
      %cst_47 = arith.constant 0.000000e+00 : f32
      %92 = vector.shape_cast %85 : vector<1x128xi1> to vector<1x128xi1>
      %93 = vector.broadcast %92 : vector<1x128xi1> to vector<32x128xi1>
      %94 = vector.broadcast %cst_47 : f32 to vector<32x128xf32>
      %95 = arith.select %93, %79, %94 : vector<32x128xi1>, vector<32x128xf32>
      %96 = vector.extract_strided_slice %95 {offsets = [0, 0], sizes = [8, 128], strides = [1, 1]} : vector<32x128xf32> to vector<8x128xf32>
      %97 = vector.extract_strided_slice %95 {offsets = [8, 0], sizes = [8, 128], strides = [1, 1]} : vector<32x128xf32> to vector<8x128xf32>
      %98 = arith.addf %96, %97 : vector<8x128xf32>
      %99 = vector.extract_strided_slice %95 {offsets = [16, 0], sizes = [8, 128], strides = [1, 1]} : vector<32x128xf32> to vector<8x128xf32>
      %100 = arith.addf %98, %99 : vector<8x128xf32>
      %101 = vector.extract_strided_slice %95 {offsets = [24, 0], sizes = [8, 128], strides = [1, 1]} : vector<32x128xf32> to vector<8x128xf32>
      %102 = arith.addf %100, %101 : vector<8x128xf32>
      %c0_48 = arith.constant 0 : index
      %c0_49 = arith.constant 0 : index
      %c0_50 = arith.constant 0 : index
      %c0_51 = arith.constant 0 : index
      %103 = vector.load %arg9[%c0_48, %c0_49, %c0_50, %c0_51] : memref<1x1x8x128xf32, #tpu.memory_space<vmem>>, vector<1x1x8x128xf32>
      %104 = vector.shape_cast %103 : vector<1x1x8x128xf32> to vector<8x128xf32>
      %105 = vector.shape_cast %102 : vector<8x128xf32> to vector<1x1x8x128xf32>
      tpu.vector_store %arg9[%c0_48, %c0_49, %c0_50, %c0_51], %105 {strides = array<i32>} : memref<1x1x8x128xf32, #tpu.memory_space<vmem>>, vector<1x1x8x128xf32>,
    } else {
    }
    %c0_i32_45 = arith.constant 0 : i32
    %89 = arith.cmpi eq, %arg0, %c0_i32_45 : i32
    %90 = arith.extui %89 : i1 to i32
    %c0_i32_46 = arith.constant 0 : i32
    %91 = arith.cmpi ne, %90, %c0_i32_46 : i32
    scf.if %91 {
      %92 = tpu.iota {dimensions = array<i32: 0>} : vector<32x1xi32>
      %c32_i32 = arith.constant 32 : i32
      %93 = arith.muli %arg0, %c32_i32 : i32
      %94 = vector.broadcast %93 : i32 to vector<32x1xi32>
      %95 = arith.addi %92, %94 : vector<32x1xi32>
      %c22_i32 = arith.constant 22 : i32
      %96 = vector.broadcast %c22_i32 : i32 to vector<32x1xi32>
      %97 = arith.cmpi slt, %95, %96 : vector<32x1xi32>
      %98 = vector.broadcast %97 : vector<32x1xi1> to vector<32x128xi1>
      %99 = vector.broadcast %85 : vector<1x128xi1> to vector<32x128xi1>
      %100 = arith.andi %98, %99 : vector<32x128xi1>
      %cst_47 = arith.constant 0.000000e+00 : f32
      %101 = vector.broadcast %cst_47 : f32 to vector<32x128xf32>
      %102 = arith.select %100, %79, %101 : vector<32x128xi1>, vector<32x128xf32>
      %103 = vector.extract_strided_slice %102 {offsets = [0, 0], sizes = [8, 128], strides = [1, 1]} : vector<32x128xf32> to vector<8x128xf32>
      %104 = vector.extract_strided_slice %102 {offsets = [8, 0], sizes = [8, 128], strides = [1, 1]} : vector<32x128xf32> to vector<8x128xf32>
      %105 = arith.addf %103, %104 : vector<8x128xf32>
      %106 = vector.extract_strided_slice %102 {offsets = [16, 0], sizes = [8, 128], strides = [1, 1]} : vector<32x128xf32> to vector<8x128xf32>
      %107 = arith.addf %105, %106 : vector<8x128xf32>
      %108 = vector.extract_strided_slice %102 {offsets = [24, 0], sizes = [8, 128], strides = [1, 1]} : vector<32x128xf32> to vector<8x128xf32>
      %109 = arith.addf %107, %108 : vector<8x128xf32>
      %c0_48 = arith.constant 0 : index
      %c0_49 = arith.constant 0 : index
      %c0_50 = arith.constant 0 : index
      %c0_51 = arith.constant 0 : index
      %110 = vector.load %arg9[%c0_48, %c0_49, %c0_50, %c0_51] : memref<1x1x8x128xf32, #tpu.memory_space<vmem>>, vector<1x1x8x128xf32>
      %111 = vector.shape_cast %110 : vector<1x1x8x128xf32> to vector<8x128xf32>
      %112 = vector.shape_cast %109 : vector<8x128xf32> to vector<1x1x8x128xf32>
      tpu.vector_store %arg9[%c0_48, %c0_49, %c0_50, %c0_51], %112 {strides = array<i32>} : memref<1x1x8x128xf32, #tpu.memory_space<vmem>>, vector<1x1x8x128xf32>,
    } else {
    }
    return
  }
  func.func @transform_0(%arg0: i32, %arg1: i32) -> (i32, i32) {
    %c0_i32 = arith.constant 0 : i32
    %c0_i32_0 = arith.constant 0 : i32
    %c0_i32_1 = arith.constant 0 : i32
    return %c0_i32, %c0_i32_0 : i32, i32
  }
  func.func @transform_1(%arg0: i32, %arg1: i32) -> (i32, i32) {
    %c0_i32 = arith.constant 0 : i32
    %c0_i32_0 = arith.constant 0 : i32
    %c0_i32_1 = arith.constant 0 : i32
    return %c0_i32, %c0_i32_0 : i32, i32
  }
  func.func @transform_2(%arg0: i32, %arg1: i32) -> (i32, i32) {
    %c0_i32 = arith.constant 0 : i32
    %c0_i32_0 = arith.constant 0 : i32
    %c0_i32_1 = arith.constant 0 : i32
    return %c0_i32, %c0_i32_0 : i32, i32
  }
  func.func @transform_3(%arg0: i32, %arg1: i32) -> (i32, i32, i32) {
    %c0_i32 = arith.constant 0 : i32
    %c0_i32_0 = arith.constant 0 : i32
    return %arg1, %arg0, %c0_i32 : i32, i32, i32
  }
  func.func @transform_4(%arg0: i32, %arg1: i32) -> (i32, i32, i32) {
    %c1_i32 = arith.constant 1 : i32
    %0 = arith.addi %arg0, %c1_i32 : i32
    %c2_i32 = arith.constant 2 : i32
    %1 = arith.muli %0, %c2_i32 : i32
    %c0_i32 = arith.constant 0 : i32
    %c0_i32_0 = arith.constant 0 : i32
    return %arg1, %1, %c0_i32 : i32, i32, i32
  }
  func.func @transform_5(%arg0: i32, %arg1: i32) -> (i32, i32, i32) {
    %c0_i32 = arith.constant 0 : i32
    %c0_i32_0 = arith.constant 0 : i32
    return %arg1, %arg0, %c0_i32 : i32, i32, i32
  }
  func.func @transform_6(%arg0: i32, %arg1: i32) -> (i32, i32, i32) {
    %c1_i32 = arith.constant 1 : i32
    %0 = arith.addi %arg0, %c1_i32 : i32
    %c2_i32 = arith.constant 2 : i32
    %1 = arith.muli %0, %c2_i32 : i32
    %c0_i32 = arith.constant 0 : i32
    %c0_i32_0 = arith.constant 0 : i32
    return %arg1, %1, %c0_i32 : i32, i32, i32
  }
  func.func @transform_7(%arg0: i32, %arg1: i32) -> (i32, i32, i32, i32) {
    %c0_i32 = arith.constant 0 : i32
    %c0_i32_0 = arith.constant 0 : i32
    %c0_i32_1 = arith.constant 0 : i32
    return %arg0, %arg1, %c0_i32, %c0_i32_0 : i32, i32, i32, i32
  }
}

</mosaic_0001>

<llo_original>
// kernel: tpu_custom_call.1
$region0: #{tpu_custom_call.1}
  #allocation0 [shape = 'u32[]', space=smem, size = 0x4, offset = 0x4, fixed_abs, tag = 'smem constant byte address 0x4 - core index']
  #allocation1 [shape = 'u32[144,128]{1,0:T(1,128)}', space=vmem, size = 0x12000, scoped, tag = 'internal scratch']
  %s0 = inlined_call_operand.vmem [shape: f32[32,32], index: 0, kind: input, shape index: {}]
  %s1 = inlined_call_operand.vmem [shape: f32[32,16], index: 1, kind: input, shape index: {}]
  %s2 = inlined_call_operand.hbm [shape: f32[128,128], index: 2, kind: input, shape index: {}]
  %s3 = inlined_call_operand.hbm [shape: f32[3,64,128], index: 3, kind: input, shape index: {}]
  %s4 = inlined_call_operand.hbm [shape: f32[3,64,128], index: 4, kind: input, shape index: {}]
  %s5 = inlined_call_operand.hbm [shape: f32[3,64,128], index: 5, kind: input, shape index: {}]
  %s6 = inlined_call_operand.hbm [shape: f32[3,64,128], index: 6, kind: input, shape index: {}]
  %s7 = inlined_call_operand.hbm [shape: f32[1,3,8,128], index: 7, kind: output, shape index: {}]
  %s8 = sld [smem:[#allocation0]]
  $region89: #{tpu_custom_call.1} parent=0
    _
  %s10 = ssub.s32 1, %s8
  %s11 = scalar_select 0, %s10, %s8
  $region1: #{tpu_custom_call.1} parent=0
    #allocation2 [shape = 'u8[65536]{0}', space=vmem, size = 0x10000, scoped, tag = 'input window, operand 2, single buffered']
    #allocation3 [shape = 's32[2]{0}', space=sflag, size = 0x8, scoped, tag = 'scoped memory for tpu_custom_call.1']
    #allocation4 [shape = 's32[2]{0}', space=sflag, size = 0x8, scoped, tag = 'scoped memory for tpu_custom_call.1']
    #allocation5 [shape = 'u8[32768]{0}', space=vmem, size = 0x8000, scoped, tag = 'input window, operand 3']
    #allocation6 [shape = 's32[2]{0}', space=sflag, size = 0x8, scoped, tag = 'scoped memory for tpu_custom_call.1']
    #allocation7 [shape = 'u8[16384]{0}', space=vmem, size = 0x4000, scoped, tag = 'input window, operand 4']
    #allocation8 [shape = 'u8[32768]{0}', space=vmem, size = 0x8000, scoped, tag = 'input window, operand 5']
    #allocation9 [shape = 's32[2]{0}', space=sflag, size = 0x8, scoped, tag = 'scoped memory for tpu_custom_call.1']
    #allocation10 [shape = 'u8[16384]{0}', space=vmem, size = 0x4000, scoped, tag = 'input window, operand 6']
    #allocation11 [shape = 'u8[8192]{0}', space=vmem, size = 0x2000, scoped, tag = 'output window, operand 0']
    %12 = vsyncpa [#allocation3], 0
    %13 = vsyncpa [#allocation6], 0
    %s14 = scalar_lea.sflag [#allocation6], 1
    %15 = vsyncpa %s14, 0
    %16 = vsyncpa [#allocation9], 0
    %s17 = scalar_lea.sflag [#allocation9], 1
    %18 = vsyncpa %s17, 0
    %19 = vsyncpa [#allocation4], 0
    %s20 = scalar_lea.sflag [#allocation4], 1
    %21 = vsyncpa %s20, 0
    loop: start=0, step=1, limit=5
    $region2: #{tpu_custom_call.1} parent=1 // loop_pre_header
      _
    $region3: #{tpu_custom_call.1} parent=1 // loop_header
      %s23 = sphi 0, %s27
      %p24 = scmp.ge.s32.totalorder %s23, 5
      %s30 = sphi 0, %s42
      %s31 = sphi 0, %s38
      %s32 = sphi 0, %s30
      %s33 = sphi 0, %s31
      %s34 = sphi 0, %s32
      %s35 = sphi 0, %s33
      %s43 = sphi 0, %s43
      %s45 = sphi 0, %s43
      %s46 = sphi 0, %s45
      %s60 = sphi 0, %s46
      %s64 = sphi 0, %s64
      %s66 = sphi 0, %s64
      %s67 = sphi 0, %s66
      %s81 = sphi 0, %s67
      %s85 = sphi 0, %s85
      %s87 = sphi 0, %s85
      %s88 = sphi 0, %s87
      %s102 = sphi 0, %s88
      %s110 = sphi 0, %s112
      %s113 = sphi 0, %s110
      %s114 = sphi 0, %s113
      %s130 = sphi 0, %s114
      %s142 = sphi 0, %s144
      %s145 = sphi 0, %s142
      %s146 = sphi 0, %s145
      %s162 = sphi 0, %s146
      %s170 = sphi 0, %s172
      %s173 = sphi 0, %s170
      %s174 = sphi 0, %s173
      %s190 = sphi 0, %s174
      %s202 = sphi 0, %s204
      %s205 = sphi 0, %s202
      %s206 = sphi 0, %s205
      %s222 = sphi 0, %s206
      %s230 = sphi 0, %s232
      %s233 = sphi 0, %s230
      %s234 = sphi 0, %s233
      %s250 = sphi 0, %s234
    $region4: #{tpu_custom_call.1} parent=1 // loop_header_branch
      %26 = sbr.rel (%p24) target = $region8
    $region5: #{tpu_custom_call.1} parent=1 // loop_body
      %s28 = ssub.s32 %s23, 1
      %s29 = ssub.s32 %s23, 2
      %s36 = sadd.s32 1, %s31
      %p37 = scmp.ge.s32.totalorder %s36, 3
      %s38 = scalar_select %p37, 0, %s36
      %s39 = sadd.s32 1, %s30
      %s40 = scalar_select %p37, %s39, %s30
      %p41 = scmp.ge.s32.totalorder %s40, 1
      %s42 = scalar_select %p41, 0, %s40
      %s44 = sadd.s32 %s43, 1
      %p47 = scmp.eq.s32.totalorder %s23, 2
      %p48 = scmp.ne.s32.totalorder %s43, %s45
      %p49 = scmp.eq.s32.totalorder %s23, 0
      %p50 = por %p48, %p49
      %p51 = scmp.ne.s32.totalorder %s43, %s45
      %p52 = scmp.eq.s32.totalorder %s28, 2
      %p53 = por %p51, %p52
      %p54 = scmp.ne.s32.totalorder %s45, %s46
      %p55 = scmp.eq.s32.totalorder %s28, 0
      %p56 = por %p54, %p55
      %p57 = scmp.ne.s32.totalorder %s45, %s46
      %p58 = scmp.eq.s32.totalorder %s29, 2
      %p59 = por %p57, %p58
      %p61 = scmp.ne.s32.totalorder %s46, %s60
      %p62 = scmp.eq.s32.totalorder %s29, 0
      %p63 = por %p61, %p62
      %s65 = sadd.s32 %s64, 1
      %p68 = scmp.eq.s32.totalorder %s23, 2
      %p69 = scmp.ne.s32.totalorder %s64, %s66
      %p70 = scmp.eq.s32.totalorder %s23, 0
      %p71 = por %p69, %p70
      %p72 = scmp.ne.s32.totalorder %s64, %s66
      %p73 = scmp.eq.s32.totalorder %s28, 2
      %p74 = por %p72, %p73
      %p75 = scmp.ne.s32.totalorder %s66, %s67
      %p76 = scmp.eq.s32.totalorder %s28, 0
      %p77 = por %p75, %p76
      %p78 = scmp.ne.s32.totalorder %s66, %s67
      %p79 = scmp.eq.s32.totalorder %s29, 2
      %p80 = por %p78, %p79
      %p82 = scmp.ne.s32.totalorder %s67, %s81
      %p83 = scmp.eq.s32.totalorder %s29, 0
      %p84 = por %p82, %p83
      %s86 = sadd.s32 %s85, 1
      %p89 = scmp.eq.s32.totalorder %s23, 2
      %p90 = scmp.ne.s32.totalorder %s85, %s87
      %p91 = scmp.eq.s32.totalorder %s23, 0
      %p92 = por %p90, %p91
      %p93 = scmp.ne.s32.totalorder %s85, %s87
      %p94 = scmp.eq.s32.totalorder %s28, 2
      %p95 = por %p93, %p94
      %p96 = scmp.ne.s32.totalorder %s87, %s88
      %p97 = scmp.eq.s32.totalorder %s28, 0
      %p98 = por %p96, %p97
      %p99 = scmp.ne.s32.totalorder %s87, %s88
      %p100 = scmp.eq.s32.totalorder %s29, 2
      %p101 = por %p99, %p100
      %p103 = scmp.ne.s32.totalorder %s88, %s102
      %p104 = scmp.eq.s32.totalorder %s29, 0
      %p105 = por %p103, %p104
      %s106 = ssub.s32 %s31, %s38
      %s107 = ssub.s32 %s30, %s42
      %s108 = sor.u32 %s106, %s107
      %p109 = scmp.eq.s32.totalorder %s108, 0
      %s111 = sadd.s32 %s110, 1
      %s112 = scalar_select %p109, %s110, %s111
      %p115 = pneg %p109
      %p116 = scmp.eq.s32.totalorder %s23, 2
      %p117 = por %p115, %p116
      %p118 = scmp.ne.s32.totalorder %s110, %s113
      %p119 = scmp.eq.s32.totalorder %s23, 0
      %p120 = por %p118, %p119
      %p121 = scmp.ne.s32.totalorder %s110, %s113
      %p122 = scmp.eq.s32.totalorder %s28, 2
      %p123 = por %p121, %p122
      %p124 = scmp.ne.s32.totalorder %s113, %s114
      %p125 = scmp.eq.s32.totalorder %s28, 0
      %p126 = por %p124, %p125
      %p127 = scmp.ne.s32.totalorder %s113, %s114
      %p128 = scmp.eq.s32.totalorder %s29, 2
      %p129 = por %p127, %p128
      %p131 = scmp.ne.s32.totalorder %s114, %s130
      %p132 = scmp.eq.s32.totalorder %s29, 0
      %p133 = por %p131, %p132
      %s134 = sadd.s32 %s30, 1
      %s135 = smul.u32 %s134, 2
      %s136 = sadd.s32 %s42, 1
      %s137 = smul.u32 %s136, 2
      %s138 = ssub.s32 %s31, %s38
      %s139 = ssub.s32 %s135, %s137
      %s140 = sor.u32 %s138, %s139
      %p141 = scmp.eq.s32.totalorder %s140, 0
      %s143 = sadd.s32 %s142, 1
      %s144 = scalar_select %p141, %s142, %s143
      %p147 = pneg %p141
      %p148 = scmp.eq.s32.totalorder %s23, 2
      %p149 = por %p147, %p148
      %p150 = scmp.ne.s32.totalorder %s142, %s145
      %p151 = scmp.eq.s32.totalorder %s23, 0
      %p152 = por %p150, %p151
      %p153 = scmp.ne.s32.totalorder %s142, %s145
      %p154 = scmp.eq.s32.totalorder %s28, 2
      %p155 = por %p153, %p154
      %p156 = scmp.ne.s32.totalorder %s145, %s146
      %p157 = scmp.eq.s32.totalorder %s28, 0
      %p158 = por %p156, %p157
      %p159 = scmp.ne.s32.totalorder %s145, %s146
      %p160 = scmp.eq.s32.totalorder %s29, 2
      %p161 = por %p159, %p160
      %p163 = scmp.ne.s32.totalorder %s146, %s162
      %p164 = scmp.eq.s32.totalorder %s29, 0
      %p165 = por %p163, %p164
      %s166 = ssub.s32 %s31, %s38
      %s167 = ssub.s32 %s30, %s42
      %s168 = sor.u32 %s166, %s167
      %p169 = scmp.eq.s32.totalorder %s168, 0
      %s171 = sadd.s32 %s170, 1
      %s172 = scalar_select %p169, %s170, %s171
      %p175 = pneg %p169
      %p176 = scmp.eq.s32.totalorder %s23, 2
      %p177 = por %p175, %p176
      %p178 = scmp.ne.s32.totalorder %s170, %s173
      %p179 = scmp.eq.s32.totalorder %s23, 0
      %p180 = por %p178, %p179
      %p181 = scmp.ne.s32.totalorder %s170, %s173
      %p182 = scmp.eq.s32.totalorder %s28, 2
      %p183 = por %p181, %p182
      %p184 = scmp.ne.s32.totalorder %s173, %s174
      %p185 = scmp.eq.s32.totalorder %s28, 0
      %p186 = por %p184, %p185
      %p187 = scmp.ne.s32.totalorder %s173, %s174
      %p188 = scmp.eq.s32.totalorder %s29, 2
      %p189 = por %p187, %p188
      %p191 = scmp.ne.s32.totalorder %s174, %s190
      %p192 = scmp.eq.s32.totalorder %s29, 0
      %p193 = por %p191, %p192
      %s194 = sadd.s32 %s30, 1
      %s195 = smul.u32 %s194, 2
      %s196 = sadd.s32 %s42, 1
      %s197 = smul.u32 %s196, 2
      %s198 = ssub.s32 %s31, %s38
      %s199 = ssub.s32 %s195, %s197
      %s200 = sor.u32 %s198, %s199
      %p201 = scmp.eq.s32.totalorder %s200, 0
      %s203 = sadd.s32 %s202, 1
      %s204 = scalar_select %p201, %s202, %s203
      %p207 = pneg %p201
      %p208 = scmp.eq.s32.totalorder %s23, 2
      %p209 = por %p207, %p208
      %p210 = scmp.ne.s32.totalorder %s202, %s205
      %p211 = scmp.eq.s32.totalorder %s23, 0
      %p212 = por %p210, %p211
      %p213 = scmp.ne.s32.totalorder %s202, %s205
      %p214 = scmp.eq.s32.totalorder %s28, 2
      %p215 = por %p213, %p214
      %p216 = scmp.ne.s32.totalorder %s205, %s206
      %p217 = scmp.eq.s32.totalorder %s28, 0
      %p218 = por %p216, %p217
      %p219 = scmp.ne.s32.totalorder %s205, %s206
      %p220 = scmp.eq.s32.totalorder %s29, 2
      %p221 = por %p219, %p220
      %p223 = scmp.ne.s32.totalorder %s206, %s222
      %p224 = scmp.eq.s32.totalorder %s29, 0
      %p225 = por %p223, %p224
      %s226 = ssub.s32 %s30, %s42
      %s227 = ssub.s32 %s31, %s38
      %s228 = sor.u32 %s226, %s227
      %p229 = scmp.eq.s32.totalorder %s228, 0
      %s231 = sadd.s32 %s230, 1
      %s232 = scalar_select %p229, %s230, %s231
      %p235 = pneg %p229
      %p236 = scmp.eq.s32.totalorder %s23, 2
      %p237 = por %p235, %p236
      %p238 = scmp.ne.s32.totalorder %s230, %s233
      %p239 = scmp.eq.s32.totalorder %s23, 0
      %p240 = por %p238, %p239
      %p241 = scmp.ne.s32.totalorder %s230, %s233
      %p242 = scmp.eq.s32.totalorder %s28, 2
      %p243 = por %p241, %p242
      %p244 = scmp.ne.s32.totalorder %s233, %s234
      %p245 = scmp.eq.s32.totalorder %s28, 0
      %p246 = por %p244, %p245
      %p247 = scmp.ne.s32.totalorder %s233, %s234
      %p248 = scmp.eq.s32.totalorder %s29, 2
      %p249 = por %p247, %p248
      %p251 = scmp.ne.s32.totalorder %s234, %s250
      %p252 = scmp.eq.s32.totalorder %s29, 0
      %p253 = por %p251, %p252
      %p254 = scmp.le.s32.totalorder 1, %s23
      %p255 = scmp.lt.s32.totalorder %s23, 4
      %p256 = pnand %p254, %p255
      %p257 = pneg %p256
      // Predicated region
      $region9: #{tpu_custom_call.1} parent=5 // pred_check
        _
      $region10: #{tpu_custom_call.1} parent=5 // pred_check_branch
        %259 = sbr.rel (%p256) target = $region12
      $region11: #{tpu_custom_call.1} parent=5 // pred_region
        %s260 = ssub.s32 %s23, 1
        // Predicated region
        $region13: #{tpu_custom_call.1} parent=11 // pred_check
          %p261 = pneg %p56
        $region14: #{tpu_custom_call.1} parent=11 // pred_check_branch
          %263 = sbr.rel (%p261) target = $region16
        $region15: #{tpu_custom_call.1} parent=11 // pred_region
          _
        $region16: #{tpu_custom_call.1} parent=11 // pred_fallthru
          _
        // Predicated region
        $region17: #{tpu_custom_call.1} parent=11 // pred_check
          %p264 = pneg %p77
        $region18: #{tpu_custom_call.1} parent=11 // pred_check_branch
          %266 = sbr.rel (%p264) target = $region20
        $region19: #{tpu_custom_call.1} parent=11 // pred_region
          _
        $region20: #{tpu_custom_call.1} parent=11 // pred_fallthru
          _
        // Predicated region
        $region21: #{tpu_custom_call.1} parent=11 // pred_check
          %p267 = pneg %p98
        $region22: #{tpu_custom_call.1} parent=11 // pred_check_branch
          %269 = sbr.rel (%p267) target = $region24
        $region23: #{tpu_custom_call.1} parent=11 // pred_region
          %s271 = ssub.s32 2048, 2048
          %272 = vsyncadd [#allocation3], %s271
          %s273 = sshll.u32 [#allocation2], 4
          %s274 = int_to_ptr.vmem [resolvable:$true] %s273
          %279 = dma.hbm_to_vmem [thread:$0]  %s2, 2048, %s274, [#allocation3], 128, 128, 8
        $region24: #{tpu_custom_call.1} parent=11 // pred_fallthru
          _
      $region12: #{tpu_custom_call.1} parent=5 // pred_fallthru
        _
      %p280 = scmp.lt.s32.totalorder %s23, 3
      // Predicated region
      $region25: #{tpu_custom_call.1} parent=5 // pred_check
        %p281 = pneg %p280
      $region26: #{tpu_custom_call.1} parent=5 // pred_check_branch
        %283 = sbr.rel (%p281) target = $region28
      $region27: #{tpu_custom_call.1} parent=5 // pred_region
        // Predicated region
        $region29: #{tpu_custom_call.1} parent=27 // pred_check
          %p284 = pneg %p120
        $region30: #{tpu_custom_call.1} parent=27 // pred_check_branch
          %286 = sbr.rel (%p284) target = $region32
        $region31: #{tpu_custom_call.1} parent=27 // pred_region
          %s287 = sand.u32 %s23, 1
          %s288 = scalar_lea.sflag [#allocation6], %s287
          %s289 = sand.u32 %s110, 1
          %s290 = smul.addr %s289, 32
          %s291 = scalar_lea.vmem [#allocation5], %s290
          %s292 = smul.u32 4, %s30
          %s294 = ssub.s32 512, 512
          %295 = vsyncadd %s288, %s294
          %s296 = smul.addr %s31, 8
          %s297 = sadd.s32 %s292, %s296
          %s298 = smul.addr %s297, 128
          %s299 = scalar_lea.hbm %s3, %s298
          %s300 = sshll.u32 %s291, 4
          %s301 = int_to_ptr.vmem [resolvable:$true] %s300
          %306 = dma.hbm_to_vmem [thread:$0]  %s299, 512, %s301, %s288, 128, 128, 8
        $region32: #{tpu_custom_call.1} parent=27 // pred_fallthru
          _
        // Predicated region
        $region33: #{tpu_custom_call.1} parent=27 // pred_check
          %p307 = pneg %p152
        $region34: #{tpu_custom_call.1} parent=27 // pred_check_branch
          %309 = sbr.rel (%p307) target = $region36
        $region35: #{tpu_custom_call.1} parent=27 // pred_region
          %s310 = sand.u32 %s23, 1
          %s311 = scalar_lea.sflag [#allocation6], %s310
          %s312 = sand.u32 %s142, 1
          %s313 = smul.addr %s312, 16
          %s314 = scalar_lea.vmem [#allocation7], %s313
          %s315 = sadd.s32 %s30, 1
          %s316 = smul.u32 %s315, 2
          %s317 = smul.u32 2, %s316
          %s319 = ssub.s32 256, 256
          %320 = vsyncadd %s311, %s319
          %s321 = smul.addr %s31, 8
          %s322 = sadd.s32 %s317, %s321
          %s323 = smul.addr %s322, 128
          %s324 = scalar_lea.hbm %s4, %s323
          %s325 = sshll.u32 %s314, 4
          %s326 = int_to_ptr.vmem [resolvable:$true] %s325
          %331 = dma.hbm_to_vmem [thread:$0]  %s324, 256, %s326, %s311, 128, 128, 8
        $region36: #{tpu_custom_call.1} parent=27 // pred_fallthru
          _
        // Predicated region
        $region37: #{tpu_custom_call.1} parent=27 // pred_check
          %p332 = pneg %p180
        $region38: #{tpu_custom_call.1} parent=27 // pred_check_branch
          %334 = sbr.rel (%p332) target = $region40
        $region39: #{tpu_custom_call.1} parent=27 // pred_region
          %s335 = sand.u32 %s23, 1
          %s336 = scalar_lea.sflag [#allocation9], %s335
          %s337 = sand.u32 %s170, 1
          %s338 = smul.addr %s337, 32
          %s339 = scalar_lea.vmem [#allocation8], %s338
          %s340 = smul.u32 4, %s30
          %s342 = ssub.s32 512, 512
          %343 = vsyncadd %s336, %s342
          %s344 = smul.addr %s31, 8
          %s345 = sadd.s32 %s340, %s344
          %s346 = smul.addr %s345, 128
          %s347 = scalar_lea.hbm %s5, %s346
          %s348 = sshll.u32 %s339, 4
          %s349 = int_to_ptr.vmem [resolvable:$true] %s348
          %354 = dma.hbm_to_vmem [thread:$0]  %s347, 512, %s349, %s336, 128, 128, 8
        $region40: #{tpu_custom_call.1} parent=27 // pred_fallthru
          _
        // Predicated region
        $region41: #{tpu_custom_call.1} parent=27 // pred_check
          %p355 = pneg %p212
        $region42: #{tpu_custom_call.1} parent=27 // pred_check_branch
          %357 = sbr.rel (%p355) target = $region44
        $region43: #{tpu_custom_call.1} parent=27 // pred_region
          %s358 = sand.u32 %s23, 1
          %s359 = scalar_lea.sflag [#allocation9], %s358
          %s360 = sand.u32 %s202, 1
          %s361 = smul.addr %s360, 16
          %s362 = scalar_lea.vmem [#allocation10], %s361
          %s363 = sadd.s32 %s30, 1
          %s364 = smul.u32 %s363, 2
          %s365 = smul.u32 2, %s364
          %s367 = ssub.s32 256, 256
          %368 = vsyncadd %s359, %s367
          %s369 = smul.addr %s31, 8
          %s370 = sadd.s32 %s365, %s369
          %s371 = smul.addr %s370, 128
          %s372 = scalar_lea.hbm %s6, %s371
          %s373 = sshll.u32 %s362, 4
          %s374 = int_to_ptr.vmem [resolvable:$true] %s373
          %379 = dma.hbm_to_vmem [thread:$0]  %s372, 256, %s374, %s359, 128, 128, 8
        $region44: #{tpu_custom_call.1} parent=27 // pred_fallthru
          _
      $region28: #{tpu_custom_call.1} parent=5 // pred_fallthru
        _
      %p380 = scmp.le.s32.totalorder 1, %s23
      %p381 = scmp.lt.s32.totalorder %s23, 4
      %p382 = pnand %p380, %p381
      %p383 = pneg %p382
      // Predicated region
      $region45: #{tpu_custom_call.1} parent=5 // pred_check
        _
      $region46: #{tpu_custom_call.1} parent=5 // pred_check_branch
        %385 = sbr.rel (%p382) target = $region48
      $region47: #{tpu_custom_call.1} parent=5 // pred_region
        %s386 = ssub.s32 %s23, 1
        // Predicated region
        $region49: #{tpu_custom_call.1} parent=47 // pred_check
          %p387 = pneg %p98
        $region50: #{tpu_custom_call.1} parent=47 // pred_check_branch
          %389 = sbr.rel (%p387) target = $region52
        $region51: #{tpu_custom_call.1} parent=47 // pred_region
          %390 = dma.done [#allocation3], 2048
        $region52: #{tpu_custom_call.1} parent=47 // pred_fallthru
          _
        %s391 = sand.u32 %s28, 1
        %s392 = scalar_lea.sflag [#allocation6], %s391
        %s393 = sand.u32 %s113, 1
        %s394 = smul.addr %s393, 32
        %s395 = scalar_lea.vmem [#allocation5], %s394
        // Predicated region
        $region53: #{tpu_custom_call.1} parent=47 // pred_check
          %p396 = pneg %p126
        $region54: #{tpu_custom_call.1} parent=47 // pred_check_branch
          %398 = sbr.rel (%p396) target = $region56
        $region55: #{tpu_custom_call.1} parent=47 // pred_region
          %399 = dma.done %s392, 512
        $region56: #{tpu_custom_call.1} parent=47 // pred_fallthru
          _
        %s400 = sand.u32 %s28, 1
        %s401 = scalar_lea.sflag [#allocation6], %s400
        %s402 = sand.u32 %s145, 1
        %s403 = smul.addr %s402, 16
        %s404 = scalar_lea.vmem [#allocation7], %s403
        // Predicated region
        $region57: #{tpu_custom_call.1} parent=47 // pred_check
          %p405 = pneg %p158
        $region58: #{tpu_custom_call.1} parent=47 // pred_check_branch
          %407 = sbr.rel (%p405) target = $region60
        $region59: #{tpu_custom_call.1} parent=47 // pred_region
          %408 = dma.done %s401, 256
        $region60: #{tpu_custom_call.1} parent=47 // pred_fallthru
          _
        %s409 = sand.u32 %s28, 1
        %s410 = scalar_lea.sflag [#allocation9], %s409
        %s411 = sand.u32 %s173, 1
        %s412 = smul.addr %s411, 32
        %s413 = scalar_lea.vmem [#allocation8], %s412
        // Predicated region
        $region61: #{tpu_custom_call.1} parent=47 // pred_check
          %p414 = pneg %p186
        $region62: #{tpu_custom_call.1} parent=47 // pred_check_branch
          %416 = sbr.rel (%p414) target = $region64
        $region63: #{tpu_custom_call.1} parent=47 // pred_region
          %417 = dma.done %s410, 512
        $region64: #{tpu_custom_call.1} parent=47 // pred_fallthru
          _
        %s418 = sand.u32 %s28, 1
        %s419 = scalar_lea.sflag [#allocation9], %s418
        %s420 = sand.u32 %s205, 1
        %s421 = smul.addr %s420, 16
        %s422 = scalar_lea.vmem [#allocation10], %s421
        // Predicated region
        $region65: #{tpu_custom_call.1} parent=47 // pred_check
          %p423 = pneg %p218
        $region66: #{tpu_custom_call.1} parent=47 // pred_check_branch
          %425 = sbr.rel (%p423) target = $region68
        $region67: #{tpu_custom_call.1} parent=47 // pred_region
          %426 = dma.done %s419, 256
        $region68: #{tpu_custom_call.1} parent=47 // pred_fallthru
          _
        %p427 = pneg %p56
        %p428 = pneg %p53
        %p429 = pneg %p77
        %p430 = pneg %p74
        %p431 = pneg %p98
        %p432 = pneg %p95
        %s433 = sand.u32 %s28, 1
        %s434 = scalar_lea.sflag [#allocation6], %s433
        %s435 = sand.u32 %s113, 1
        %s436 = smul.addr %s435, 32
        %s437 = scalar_lea.vmem [#allocation5], %s436
        %p438 = pneg %p126
        %p439 = pneg %p123
        %s440 = sand.u32 %s28, 1
        %s441 = scalar_lea.sflag [#allocation6], %s440
        %s442 = sand.u32 %s145, 1
        %s443 = smul.addr %s442, 16
        %s444 = scalar_lea.vmem [#allocation7], %s443
        %p445 = pneg %p158
        %p446 = pneg %p155
        %s447 = sand.u32 %s28, 1
        %s448 = scalar_lea.sflag [#allocation9], %s447
        %s449 = sand.u32 %s173, 1
        %s450 = smul.addr %s449, 32
        %s451 = scalar_lea.vmem [#allocation8], %s450
        %p452 = pneg %p186
        %p453 = pneg %p183
        %s454 = sand.u32 %s28, 1
        %s455 = scalar_lea.sflag [#allocation9], %s454
        %s456 = sand.u32 %s205, 1
        %s457 = smul.addr %s456, 16
        %s458 = scalar_lea.vmem [#allocation10], %s457
        %p459 = pneg %p218
        %p460 = pneg %p215
        %p461 = pneg %p246
        %p462 = pneg %p243
        %s463 = sand.u32 %s233, 1
        %s464 = scalar_lea.sflag [#allocation4], %s463
        %s465 = sand.u32 %s233, 1
        %s466 = smul.addr %s465, 8
        %s467 = scalar_lea.vmem [#allocation11], %s466
        %s468 = smul.u32 4, %s32
        %s469 = sadd.s32 %s32, 1
        %s470 = smul.u32 %s469, 2
        %s471 = smul.u32 2, %s470
        %s472 = smul.u32 4, %s32
        %s473 = sadd.s32 %s32, 1
        %s474 = smul.u32 %s473, 2
        %s475 = smul.u32 2, %s474
        %v476 = vld [vmem:[%s395] sm:$0xff]
        %v477 = vld [vmem:[%s395 + $0x8] sm:$0xff]
        %v478 = vld [vmem:[%s395 + $0x10] sm:$0xff]
        %v479 = vld [vmem:[%s395 + $0x18] sm:$0xff]
        %v480 = vsub.f32 %v476, 127.5
        %v481 = vsub.f32 %v477, 127.5
        %v482 = vsub.f32 %v478, 127.5
        %v483 = vsub.f32 %v479, 127.5
        %v484 = vld [vmem:[%s413] sm:$0xff]
        %v485 = vld [vmem:[%s413 + $0x8] sm:$0xff]
        %v486 = vld [vmem:[%s413 + $0x10] sm:$0xff]
        %v487 = vld [vmem:[%s413 + $0x18] sm:$0xff]
        %v488 = vsub.f32 %v484, 127.5
        %v489 = vsub.f32 %v485, 127.5
        %v490 = vsub.f32 %v486, 127.5
        %v491 = vsub.f32 %v487, 127.5
        %v492 = vld [vmem:[%s404] sm:$0xff]
        %v493 = vld [vmem:[%s404 + $0x8] sm:$0xff]
        %v494 = vsub.f32 %v492, 127.5
        %v495 = vsub.f32 %v493, 127.5
        %v496 = vld [vmem:[%s422] sm:$0xff]
        %v497 = vld [vmem:[%s422 + $0x8] sm:$0xff]
        %v498 = vsub.f32 %v496, 127.5
        %v499 = vsub.f32 %v497, 127.5
        %v500 = vld [vmem:[%s0] sm:$0xff]
        %v501 = vld [vmem:[%s0 + $0x8] sm:$0xff]
        %v502 = vld [vmem:[%s0 + $0x10] sm:$0xff]
        %v503 = vld [vmem:[%s0 + $0x18] sm:$0xff]
        %v504 = vld [vmem:[%s1] sm:$0xff]
        %v505 = vld [vmem:[%s1 + $0x8] sm:$0xff]
        %v506 = vld [vmem:[%s1 + $0x10] sm:$0xff]
        %v507 = vld [vmem:[%s1 + $0x18] sm:$0xff]
        %v508 = vld [vmem:[#allocation2] sm:$0xff]
        %v509 = vld [vmem:[#allocation2 + $0x8] sm:$0xff]
        %v510 = vld [vmem:[#allocation2 + $0x10] sm:$0xff]
        %v511 = vld [vmem:[#allocation2 + $0x18] sm:$0xff]
        %v512 = vld [vmem:[#allocation2 + $0x20] sm:$0xff]
        %v513 = vld [vmem:[#allocation2 + $0x28] sm:$0xff]
        %v514 = vld [vmem:[#allocation2 + $0x30] sm:$0xff]
        %v515 = vld [vmem:[#allocation2 + $0x38] sm:$0xff]
        %v516 = vld [vmem:[#allocation2 + $0x40] sm:$0xff]
        %v517 = vld [vmem:[#allocation2 + $0x48] sm:$0xff]
        %v518 = vld [vmem:[#allocation2 + $0x50] sm:$0xff]
        %v519 = vld [vmem:[#allocation2 + $0x58] sm:$0xff]
        %v520 = vld [vmem:[#allocation2 + $0x60] sm:$0xff]
        %v521 = vld [vmem:[#allocation2 + $0x68] sm:$0xff]
        %v522 = vld [vmem:[#allocation2 + $0x70] sm:$0xff]
        %v523 = vld [vmem:[#allocation2 + $0x78] sm:$0xff]
        %vm524 = vcmask 130048
        %v526 = vsel %vm524, %v504, 0
        %v529 = vsel %vm524, %v505, 0
        %v532 = vsel %vm524, %v506, 0
        %v535 = vsel %vm524, %v507, 0
        %537 = vmatprep.subr.mxu0 0.0
        %v538 = vand.u32 %v494, 4294901760
        %539 = vmatpush1.msra.mxu0 %v538
        %540 = vmatprep.subr.mxu0 0.0
        %v541 = vand.u32 %v495, 4294901760
        %542 = vmatpush1.msra.mxu0 %v541
        %543 = vmatprep.subr.mxu0 0.0
        %544 = vmatpush1.msra.mxu0 0.0
        %545 = vmatprep.subr.mxu0 0.0
        %546 = vmatpush1.msra.mxu0 0.0
        %547 = vmatprep.subr.mxu0 0.0
        %548 = vmatpush1.msra.mxu0 0.0
        %549 = vmatprep.subr.mxu0 0.0
        %550 = vmatpush1.msra.mxu0 0.0
        %551 = vmatprep.subr.mxu0 0.0
        %552 = vmatpush1.msra.mxu0 0.0
        %553 = vmatprep.subr.mxu0 0.0
        %554 = vmatpush1.msra.mxu0 0.0
        %555 = vmatprep.subr.mxu0 0.0
        %556 = vmatpush1.msra.mxu0 0.0
        %557 = vmatprep.subr.mxu0 0.0
        %558 = vmatpush1.msra.mxu0 0.0
        %559 = vmatprep.subr.mxu0 0.0
        %560 = vmatpush1.msra.mxu0 0.0
        %561 = vmatprep.subr.mxu0 0.0
        %562 = vmatpush1.msra.mxu0 0.0
        %563 = vmatprep.subr.mxu0 0.0
        %564 = vmatpush1.msra.mxu0 0.0
        %565 = vmatprep.subr.mxu0 0.0
        %566 = vmatpush1.msra.mxu0 0.0
        %567 = vmatprep.subr.mxu0 0.0
        %568 = vmatpush1.msra.mxu0 0.0
        %569 = vmatprep.subr.mxu0 0.0
        %570 = vmatpush1.msra.mxu0 0.0
        %571 = vmatprep.subr.mxu0 0.0
        %572 = vmatpush1.msra.mxu0 0.0
        %573 = vmatprep.subr.mxu0 0.0
        %574 = vmatpush1.msra.mxu0 0.0
        %575 = vmatprep.subr.mxu0 0.0
        %576 = vmatpush1.msra.mxu0 0.0
        %577 = vmatprep.subr.mxu0 0.0
        %578 = vmatpush1.msra.mxu0 0.0
        %579 = vmatprep.subr.mxu0 0.0
        %580 = vmatpush1.msra.mxu0 0.0
        %581 = vmatprep.subr.mxu0 0.0
        %582 = vmatpush1.msra.mxu0 0.0
        %583 = vmatprep.subr.mxu0 0.0
        %584 = vmatpush1.msra.mxu0 0.0
        %585 = vmatprep.subr.mxu0 0.0
        %586 = vmatpush1.msra.mxu0 0.0
        %587 = vmatprep.subr.mxu0 0.0
        %588 = vmatpush1.msra.mxu0 0.0
        %589 = vmatprep.subr.mxu0 0.0
        %590 = vmatpush1.msra.mxu0 0.0
        %591 = vmatprep.subr.mxu0 0.0
        %592 = vmatpush1.msra.mxu0 0.0
        %593 = vmatprep.subr.mxu0 0.0
        %594 = vmatpush1.msra.mxu0 0.0
        %595 = vmatprep.subr.mxu0 0.0
        %596 = vmatpush1.msra.mxu0 0.0
        %597 = vmatprep.subr.mxu0 0.0
        %598 = vmatpush1.msra.mxu0 0.0
        %599 = vmatprep.subr.mxu0 0.0
        %600 = vmatpush1.msra.mxu0 0.0
        %601 = vmatprep.subr.mxu0 0.0
        %602 = vmatpush1.msra.mxu0 0.0
        %603 = vmatprep.mubr.f32.mxu0 0.0
        %v604 = vand.u32 %v526, 4294901760
        %v605 = vsub.f32 %v526, %v604
        %v606 = vand.u32 %v605, 4294901760
        %v607 = vsub.f32 %v605, %v606
        %v608 = vand.u32 %v607, 4294901760
        %609 = vmatmul.mubr.f32.gmra.mrb[0].mxu0 %v608
        %v610 = vpop.f32.mrb[0].mxu0
        %v611 = vadd.f32 0.0, %v610
        %v612 = vpop.f32.mrb[0].mxu0
        %613 = vmatprep.mubr.f32.mxu0 0.0
        %v614 = vand.u32 %v529, 4294901760
        %v615 = vsub.f32 %v529, %v614
        %v616 = vand.u32 %v615, 4294901760
        %v617 = vsub.f32 %v615, %v616
        %v618 = vand.u32 %v617, 4294901760
        %619 = vmatmul.mubr.f32.gmra.mrb[0].mxu0 %v618
        %v620 = vpop.f32.mrb[0].mxu0
        %v621 = vadd.f32 0.0, %v620
        %v622 = vpop.f32.mrb[0].mxu0
        %623 = vmatprep.mubr.f32.mxu0 0.0
        %v624 = vand.u32 %v532, 4294901760
        %v625 = vsub.f32 %v532, %v624
        %v626 = vand.u32 %v625, 4294901760
        %v627 = vsub.f32 %v625, %v626
        %v628 = vand.u32 %v627, 4294901760
        %629 = vmatmul.mubr.f32.gmra.mrb[0].mxu0 %v628
        %v630 = vpop.f32.mrb[0].mxu0
        %v631 = vadd.f32 0.0, %v630
        %v632 = vpop.f32.mrb[0].mxu0
        %633 = vmatprep.mubr.f32.mxu0 0.0
        %v634 = vand.u32 %v535, 4294901760
        %v635 = vsub.f32 %v535, %v634
        %v636 = vand.u32 %v635, 4294901760
        %v637 = vsub.f32 %v635, %v636
        %v638 = vand.u32 %v637, 4294901760
        %639 = vmatmul.mubr.f32.gmra.mrb[0].mxu0 %v638
        %v640 = vpop.f32.mrb[0].mxu0
        %v641 = vadd.f32 0.0, %v640
        %v642 = vpop.f32.mrb[0].mxu0
        %643 = vdwg.mxu0
        %644 = vmatprep.subr.mxu0 0.0
        %v645 = vand.u32 %v494, 4294901760
        %v646 = vsub.f32 %v494, %v645
        %v647 = vand.u32 %v646, 4294901760
        %v648 = vsub.f32 %v646, %v647
        %v649 = vand.u32 %v648, 4294901760
        %650 = vmatpush1.msra.mxu0 %v649
        %651 = vmatprep.subr.mxu0 0.0
        %v652 = vand.u32 %v495, 4294901760
        %v653 = vsub.f32 %v495, %v652
        %v654 = vand.u32 %v653, 4294901760
        %v655 = vsub.f32 %v653, %v654
        %v656 = vand.u32 %v655, 4294901760
        %657 = vmatpush1.msra.mxu0 %v656
        %658 = vmatprep.subr.mxu0 0.0
        %659 = vmatpush1.msra.mxu0 0.0
        %660 = vmatprep.subr.mxu0 0.0
        %661 = vmatpush1.msra.mxu0 0.0
        %662 = vmatprep.subr.mxu0 0.0
        %663 = vmatpush1.msra.mxu0 0.0
        %664 = vmatprep.subr.mxu0 0.0
        %665 = vmatpush1.msra.mxu0 0.0
        %666 = vmatprep.subr.mxu0 0.0
        %667 = vmatpush1.msra.mxu0 0.0
        %668 = vmatprep.subr.mxu0 0.0
        %669 = vmatpush1.msra.mxu0 0.0
        %670 = vmatprep.subr.mxu0 0.0
        %671 = vmatpush1.msra.mxu0 0.0
        %672 = vmatprep.subr.mxu0 0.0
        %673 = vmatpush1.msra.mxu0 0.0
        %674 = vmatprep.subr.mxu0 0.0
        %675 = vmatpush1.msra.mxu0 0.0
        %676 = vmatprep.subr.mxu0 0.0
        %677 = vmatpush1.msra.mxu0 0.0
        %678 = vmatprep.subr.mxu0 0.0
        %679 = vmatpush1.msra.mxu0 0.0
        %680 = vmatprep.subr.mxu0 0.0
        %681 = vmatpush1.msra.mxu0 0.0
        %682 = vmatprep.subr.mxu0 0.0
        %683 = vmatpush1.msra.mxu0 0.0
        %684 = vmatprep.subr.mxu0 0.0
        %685 = vmatpush1.msra.mxu0 0.0
        %686 = vmatprep.subr.mxu0 0.0
        %687 = vmatpush1.msra.mxu0 0.0
        %688 = vmatprep.subr.mxu0 0.0
        %689 = vmatpush1.msra.mxu0 0.0
        %690 = vmatprep.subr.mxu0 0.0
        %691 = vmatpush1.msra.mxu0 0.0
        %692 = vmatprep.subr.mxu0 0.0
        %693 = vmatpush1.msra.mxu0 0.0
        %694 = vmatprep.subr.mxu0 0.0
        %695 = vmatpush1.msra.mxu0 0.0
        %696 = vmatprep.subr.mxu0 0.0
        %697 = vmatpush1.msra.mxu0 0.0
        %698 = vmatprep.subr.mxu0 0.0
        %699 = vmatpush1.msra.mxu0 0.0
        %700 = vmatprep.subr.mxu0 0.0
        %701 = vmatpush1.msra.mxu0 0.0
        %702 = vmatprep.subr.mxu0 0.0
        %703 = vmatpush1.msra.mxu0 0.0
        %704 = vmatprep.subr.mxu0 0.0
        %705 = vmatpush1.msra.mxu0 0.0
        %706 = vmatprep.subr.mxu0 0.0
        %707 = vmatpush1.msra.mxu0 0.0
        %708 = vmatprep.subr.mxu0 0.0
        %709 = vmatpush1.msra.mxu0 0.0
        %710 = vmatprep.subr.mxu0 0.0
        %711 = vmatpush1.msra.mxu0 0.0
        %712 = vmatprep.subr.mxu0 0.0
        %713 = vmatpush1.msra.mxu0 0.0
        %714 = vmatprep.subr.mxu0 0.0
        %715 = vmatpush1.msra.mxu0 0.0
        %716 = vmatprep.subr.mxu0 0.0
        %717 = vmatpush1.msra.mxu0 0.0
        %718 = vmatprep.mubr.f32.mxu0 0.0
        %v719 = vand.u32 %v526, 4294901760
        %720 = vmatmul.mubr.f32.gmra.mrb[0].mxu0 %v719
        %v721 = vpop.f32.mrb[0].mxu0
        %v722 = vadd.f32 %v611, %v721
        %v723 = vpop.f32.mrb[0].mxu0
        %724 = vmatprep.mubr.f32.mxu0 0.0
        %v725 = vand.u32 %v529, 4294901760
        %726 = vmatmul.mubr.f32.gmra.mrb[0].mxu0 %v725
        %v727 = vpop.f32.mrb[0].mxu0
        %v728 = vadd.f32 %v621, %v727
        %v729 = vpop.f32.mrb[0].mxu0
        %730 = vmatprep.mubr.f32.mxu0 0.0
        %v731 = vand.u32 %v532, 4294901760
        %732 = vmatmul.mubr.f32.gmra.mrb[0].mxu0 %v731
        %v733 = vpop.f32.mrb[0].mxu0
        %v734 = vadd.f32 %v631, %v733
        %v735 = vpop.f32.mrb[0].mxu0
        %736 = vmatprep.mubr.f32.mxu0 0.0
        %v737 = vand.u32 %v535, 4294901760
        %738 = vmatmul.mubr.f32.gmra.mrb[0].mxu0 %v737
        %v739 = vpop.f32.mrb[0].mxu0
        %v740 = vadd.f32 %v641, %v739
        %v741 = vpop.f32.mrb[0].mxu0
        %742 = vdwg.mxu0
        %743 = vmatprep.subr.mxu0 0.0
        %v744 = vand.u32 %v494, 4294901760
        %v745 = vsub.f32 %v494, %v744
        %746 = vmatpush1.msra.mxu0 %v745
        %747 = vmatprep.subr.mxu0 0.0
        %v748 = vand.u32 %v495, 4294901760
        %v749 = vsub.f32 %v495, %v748
        %750 = vmatpush1.msra.mxu0 %v749
        %751 = vmatprep.subr.mxu0 0.0
        %752 = vmatpush1.msra.mxu0 0.0
        %753 = vmatprep.subr.mxu0 0.0
        %754 = vmatpush1.msra.mxu0 0.0
        %755 = vmatprep.subr.mxu0 0.0
        %756 = vmatpush1.msra.mxu0 0.0
        %757 = vmatprep.subr.mxu0 0.0
        %758 = vmatpush1.msra.mxu0 0.0
        %759 = vmatprep.subr.mxu0 0.0
        %760 = vmatpush1.msra.mxu0 0.0
        %761 = vmatprep.subr.mxu0 0.0
        %762 = vmatpush1.msra.mxu0 0.0
        %763 = vmatprep.subr.mxu0 0.0
        %764 = vmatpush1.msra.mxu0 0.0
        %765 = vmatprep.subr.mxu0 0.0
        %766 = vmatpush1.msra.mxu0 0.0
        %767 = vmatprep.subr.mxu0 0.0
        %768 = vmatpush1.msra.mxu0 0.0
        %769 = vmatprep.subr.mxu0 0.0
        %770 = vmatpush1.msra.mxu0 0.0
        %771 = vmatprep.subr.mxu0 0.0
        %772 = vmatpush1.msra.mxu0 0.0
        %773 = vmatprep.subr.mxu0 0.0
        %774 = vmatpush1.msra.mxu0 0.0
        %775 = vmatprep.subr.mxu0 0.0
        %776 = vmatpush1.msra.mxu0 0.0
        %777 = vmatprep.subr.mxu0 0.0
        %778 = vmatpush1.msra.mxu0 0.0
        %779 = vmatprep.subr.mxu0 0.0
        %780 = vmatpush1.msra.mxu0 0.0
        %781 = vmatprep.subr.mxu0 0.0
        %782 = vmatpush1.msra.mxu0 0.0
        %783 = vmatprep.subr.mxu0 0.0
        %784 = vmatpush1.msra.mxu0 0.0
        %785 = vmatprep.subr.mxu0 0.0
        %786 = vmatpush1.msra.mxu0 0.0
        %787 = vmatprep.subr.mxu0 0.0
        %788 = vmatpush1.msra.mxu0 0.0
        %789 = vmatprep.subr.mxu0 0.0
        %790 = vmatpush1.msra.mxu0 0.0
        %791 = vmatprep.subr.mxu0 0.0
        %792 = vmatpush1.msra.mxu0 0.0
        %793 = vmatprep.subr.mxu0 0.0
        %794 = vmatpush1.msra.mxu0 0.0
        %795 = vmatprep.subr.mxu0 0.0
        %796 = vmatpush1.msra.mxu0 0.0
        %797 = vmatprep.subr.mxu0 0.0
        %798 = vmatpush1.msra.mxu0 0.0
        %799 = vmatprep.subr.mxu0 0.0
        %800 = vmatpush1.msra.mxu0 0.0
        %801 = vmatprep.subr.mxu0 0.0
        %802 = vmatpush1.msra.mxu0 0.0
        %803 = vmatprep.subr.mxu0 0.0
        %804 = vmatpush1.msra.mxu0 0.0
        %805 = vmatprep.subr.mxu0 0.0
        %806 = vmatpush1.msra.mxu0 0.0
        %807 = vmatprep.subr.mxu0 0.0
        %808 = vmatpush1.msra.mxu0 0.0
        %809 = vmatprep.subr.mxu0 0.0
        %810 = vmatpush1.msra.mxu0 0.0
        %811 = vmatprep.mubr.f32.mxu0 0.0
        %v812 = vand.u32 %v526, 4294901760
        %v813 = vsub.f32 %v526, %v812
        %814 = vmatmul.mubr.f32.gmra.mrb[0].mxu0 %v813
        %v815 = vpop.f32.mrb[0].mxu0
        %v816 = vadd.f32 %v722, %v815
        %v817 = vpop.f32.mrb[0].mxu0
        %818 = vmatprep.mubr.f32.mxu0 0.0
        %v819 = vand.u32 %v529, 4294901760
        %v820 = vsub.f32 %v529, %v819
        %821 = vmatmul.mubr.f32.gmra.mrb[0].mxu0 %v820
        %v822 = vpop.f32.mrb[0].mxu0
        %v823 = vadd.f32 %v728, %v822
        %v824 = vpop.f32.mrb[0].mxu0
        %825 = vmatprep.mubr.f32.mxu0 0.0
        %v826 = vand.u32 %v532, 4294901760
        %v827 = vsub.f32 %v532, %v826
        %828 = vmatmul.mubr.f32.gmra.mrb[0].mxu0 %v827
        %v829 = vpop.f32.mrb[0].mxu0
        %v830 = vadd.f32 %v734, %v829
        %v831 = vpop.f32.mrb[0].mxu0
        %832 = vmatprep.mubr.f32.mxu0 0.0
        %v833 = vand.u32 %v535, 4294901760
        %v834 = vsub.f32 %v535, %v833
        %835 = vmatmul.mubr.f32.gmra.mrb[0].mxu0 %v834
        %v836 = vpop.f32.mrb[0].mxu0
        %v837 = vadd.f32 %v740, %v836
        %v838 = vpop.f32.mrb[0].mxu0
        %839 = vdwg.mxu0
        %840 = vmatprep.subr.mxu0 0.0
        %v841 = vand.u32 %v494, 4294901760
        %842 = vmatpush1.msra.mxu0 %v841
        %843 = vmatprep.subr.mxu0 0.0
        %v844 = vand.u32 %v495, 4294901760
        %845 = vmatpush1.msra.mxu0 %v844
        %846 = vmatprep.subr.mxu0 0.0
        %847 = vmatpush1.msra.mxu0 0.0
        %848 = vmatprep.subr.mxu0 0.0
        %849 = vmatpush1.msra.mxu0 0.0
        %850 = vmatprep.subr.mxu0 0.0
        %851 = vmatpush1.msra.mxu0 0.0
        %852 = vmatprep.subr.mxu0 0.0
        %853 = vmatpush1.msra.mxu0 0.0
        %854 = vmatprep.subr.mxu0 0.0
        %855 = vmatpush1.msra.mxu0 0.0
        %856 = vmatprep.subr.mxu0 0.0
        %857 = vmatpush1.msra.mxu0 0.0
        %858 = vmatprep.subr.mxu0 0.0
        %859 = vmatpush1.msra.mxu0 0.0
        %860 = vmatprep.subr.mxu0 0.0
        %861 = vmatpush1.msra.mxu0 0.0
        %862 = vmatprep.subr.mxu0 0.0
        %863 = vmatpush1.msra.mxu0 0.0
        %864 = vmatprep.subr.mxu0 0.0
        %865 = vmatpush1.msra.mxu0 0.0
        %866 = vmatprep.subr.mxu0 0.0
        %867 = vmatpush1.msra.mxu0 0.0
        %868 = vmatprep.subr.mxu0 0.0
        %869 = vmatpush1.msra.mxu0 0.0
        %870 = vmatprep.subr.mxu0 0.0
        %871 = vmatpush1.msra.mxu0 0.0
        %872 = vmatprep.subr.mxu0 0.0
        %873 = vmatpush1.msra.mxu0 0.0
        %874 = vmatprep.subr.mxu0 0.0
        %875 = vmatpush1.msra.mxu0 0.0
        %876 = vmatprep.subr.mxu0 0.0
        %877 = vmatpush1.msra.mxu0 0.0
        %878 = vmatprep.subr.mxu0 0.0
        %879 = vmatpush1.msra.mxu0 0.0
        %880 = vmatprep.subr.mxu0 0.0
        %881 = vmatpush1.msra.mxu0 0.0
        %882 = vmatprep.subr.mxu0 0.0
        %883 = vmatpush1.msra.mxu0 0.0
        %884 = vmatprep.subr.mxu0 0.0
        %885 = vmatpush1.msra.mxu0 0.0
        %886 = vmatprep.subr.mxu0 0.0
        %887 = vmatpush1.msra.mxu0 0.0
        %888 = vmatprep.subr.mxu0 0.0
        %889 = vmatpush1.msra.mxu0 0.0
        %890 = vmatprep.subr.mxu0 0.0
        %891 = vmatpush1.msra.mxu0 0.0
        %892 = vmatprep.subr.mxu0 0.0
        %893 = vmatpush1.msra.mxu0 0.0
        %894 = vmatprep.subr.mxu0 0.0
        %895 = vmatpush1.msra.mxu0 0.0
        %896 = vmatprep.subr.mxu0 0.0
        %897 = vmatpush1.msra.mxu0 0.0
        %898 = vmatprep.subr.mxu0 0.0
        %899 = vmatpush1.msra.mxu0 0.0
        %900 = vmatprep.subr.mxu0 0.0
        %901 = vmatpush1.msra.mxu0 0.0
        %902 = vmatprep.subr.mxu0 0.0
        %903 = vmatpush1.msra.mxu0 0.0
        %904 = vmatprep.subr.mxu0 0.0
        %905 = vmatpush1.msra.mxu0 0.0
        %906 = vmatprep.mubr.f32.mxu0 0.0
        %v907 = vand.u32 %v526, 4294901760
        %v908 = vsub.f32 %v526, %v907
        %v909 = vand.u32 %v908, 4294901760
        %910 = vmatmul.mubr.f32.gmra.mrb[0].mxu0 %v909
        %v911 = vpop.f32.mrb[0].mxu0
        %v912 = vadd.f32 %v816, %v911
        %v913 = vpop.f32.mrb[0].mxu0
        %914 = vmatprep.mubr.f32.mxu0 0.0
        %v915 = vand.u32 %v529, 4294901760
        %v916 = vsub.f32 %v529, %v915
        %v917 = vand.u32 %v916, 4294901760
        %918 = vmatmul.mubr.f32.gmra.mrb[0].mxu0 %v917
        %v919 = vpop.f32.mrb[0].mxu0
        %v920 = vadd.f32 %v823, %v919
        %v921 = vpop.f32.mrb[0].mxu0
        %922 = vmatprep.mubr.f32.mxu0 0.0
        %v923 = vand.u32 %v532, 4294901760
        %v924 = vsub.f32 %v532, %v923
        %v925 = vand.u32 %v924, 4294901760
        %926 = vmatmul.mubr.f32.gmra.mrb[0].mxu0 %v925
        %v927 = vpop.f32.mrb[0].mxu0
        %v928 = vadd.f32 %v830, %v927
        %v929 = vpop.f32.mrb[0].mxu0
        %930 = vmatprep.mubr.f32.mxu0 0.0
        %v931 = vand.u32 %v535, 4294901760
        %v932 = vsub.f32 %v535, %v931
        %v933 = vand.u32 %v932, 4294901760
        %934 = vmatmul.mubr.f32.gmra.mrb[0].mxu0 %v933
        %v935 = vpop.f32.mrb[0].mxu0
        %v936 = vadd.f32 %v837, %v935
        %v937 = vpop.f32.mrb[0].mxu0
        %938 = vdwg.mxu0
        %939 = vmatprep.subr.mxu0 0.0
        %v940 = vand.u32 %v494, 4294901760
        %v941 = vsub.f32 %v494, %v940
        %v942 = vand.u32 %v941, 4294901760
        %943 = vmatpush1.msra.mxu0 %v942
        %944 = vmatprep.subr.mxu0 0.0
        %v945 = vand.u32 %v495, 4294901760
        %v946 = vsub.f32 %v495, %v945
        %v947 = vand.u32 %v946, 4294901760
        %948 = vmatpush1.msra.mxu0 %v947
        %949 = vmatprep.subr.mxu0 0.0
        %950 = vmatpush1.msra.mxu0 0.0
        %951 = vmatprep.subr.mxu0 0.0
        %952 = vmatpush1.msra.mxu0 0.0
        %953 = vmatprep.subr.mxu0 0.0
        %954 = vmatpush1.msra.mxu0 0.0
        %955 = vmatprep.subr.mxu0 0.0
        %956 = vmatpush1.msra.mxu0 0.0
        %957 = vmatprep.subr.mxu0 0.0
        %958 = vmatpush1.msra.mxu0 0.0
        %959 = vmatprep.subr.mxu0 0.0
        %960 = vmatpush1.msra.mxu0 0.0
        %961 = vmatprep.subr.mxu0 0.0
        %962 = vmatpush1.msra.mxu0 0.0
        %963 = vmatprep.subr.mxu0 0.0
        %964 = vmatpush1.msra.mxu0 0.0
        %965 = vmatprep.subr.mxu0 0.0
        %966 = vmatpush1.msra.mxu0 0.0
        %967 = vmatprep.subr.mxu0 0.0
        %968 = vmatpush1.msra.mxu0 0.0
        %969 = vmatprep.subr.mxu0 0.0
        %970 = vmatpush1.msra.mxu0 0.0
        %971 = vmatprep.subr.mxu0 0.0
        %972 = vmatpush1.msra.mxu0 0.0
        %973 = vmatprep.subr.mxu0 0.0
        %974 = vmatpush1.msra.mxu0 0.0
        %975 = vmatprep.subr.mxu0 0.0
        %976 = vmatpush1.msra.mxu0 0.0
        %977 = vmatprep.subr.mxu0 0.0
        %978 = vmatpush1.msra.mxu0 0.0
        %979 = vmatprep.subr.mxu0 0.0
        %980 = vmatpush1.msra.mxu0 0.0
        %981 = vmatprep.subr.mxu0 0.0
        %982 = vmatpush1.msra.mxu0 0.0
        %983 = vmatprep.subr.mxu0 0.0
        %984 = vmatpush1.msra.mxu0 0.0
        %985 = vmatprep.subr.mxu0 0.0
        %986 = vmatpush1.msra.mxu0 0.0
        %987 = vmatprep.subr.mxu0 0.0
        %988 = vmatpush1.msra.mxu0 0.0
        %989 = vmatprep.subr.mxu0 0.0
        %990 = vmatpush1.msra.mxu0 0.0
        %991 = vmatprep.subr.mxu0 0.0
        %992 = vmatpush1.msra.mxu0 0.0
        %993 = vmatprep.subr.mxu0 0.0
        %994 = vmatpush1.msra.mxu0 0.0
        %995 = vmatprep.subr.mxu0 0.0
        %996 = vmatpush1.msra.mxu0 0.0
        %997 = vmatprep.subr.mxu0 0.0
        %998 = vmatpush1.msra.mxu0 0.0
        %999 = vmatprep.subr.mxu0 0.0
        %1000 = vmatpush1.msra.mxu0 0.0
        %1001 = vmatprep.subr.mxu0 0.0
        %1002 = vmatpush1.msra.mxu0 0.0
        %1003 = vmatprep.subr.mxu0 0.0
        %1004 = vmatpush1.msra.mxu0 0.0
        %1005 = vmatprep.subr.mxu0 0.0
        %1006 = vmatpush1.msra.mxu0 0.0
        %1007 = vmatprep.subr.mxu0 0.0
        %1008 = vmatpush1.msra.mxu0 0.0
        %1009 = vmatprep.mubr.f32.mxu0 0.0
        %v1010 = vand.u32 %v526, 4294901760
        %1011 = vmatmul.mubr.f32.gmra.mrb[0].mxu0 %v1010
        %v1012 = vpop.f32.mrb[0].mxu0
        %v1013 = vadd.f32 %v912, %v1012
        %v1014 = vpop.f32.mrb[0].mxu0
        %1015 = vmatprep.mubr.f32.mxu0 0.0
        %v1016 = vand.u32 %v529, 4294901760
        %1017 = vmatmul.mubr.f32.gmra.mrb[0].mxu0 %v1016
        %v1018 = vpop.f32.mrb[0].mxu0
        %v1019 = vadd.f32 %v920, %v1018
        %v1020 = vpop.f32.mrb[0].mxu0
        %1021 = vmatprep.mubr.f32.mxu0 0.0
        %v1022 = vand.u32 %v532, 4294901760
        %1023 = vmatmul.mubr.f32.gmra.mrb[0].mxu0 %v1022
        %v1024 = vpop.f32.mrb[0].mxu0
        %v1025 = vadd.f32 %v928, %v1024
        %v1026 = vpop.f32.mrb[0].mxu0
        %1027 = vmatprep.mubr.f32.mxu0 0.0
        %v1028 = vand.u32 %v535, 4294901760
        %1029 = vmatmul.mubr.f32.gmra.mrb[0].mxu0 %v1028
        %v1030 = vpop.f32.mrb[0].mxu0
        %v1031 = vadd.f32 %v936, %v1030
        %v1032 = vpop.f32.mrb[0].mxu0
        %1033 = vdwg.mxu0
        %1034 = vmatprep.subr.mxu0 0.0
        %v1035 = vand.u32 %v494, 4294901760
        %1036 = vmatpush1.msra.mxu0 %v1035
        %1037 = vmatprep.subr.mxu0 0.0
        %v1038 = vand.u32 %v495, 4294901760
        %1039 = vmatpush1.msra.mxu0 %v1038
        %1040 = vmatprep.subr.mxu0 0.0
        %1041 = vmatpush1.msra.mxu0 0.0
        %1042 = vmatprep.subr.mxu0 0.0
        %1043 = vmatpush1.msra.mxu0 0.0
        %1044 = vmatprep.subr.mxu0 0.0
        %1045 = vmatpush1.msra.mxu0 0.0
        %1046 = vmatprep.subr.mxu0 0.0
        %1047 = vmatpush1.msra.mxu0 0.0
        %1048 = vmatprep.subr.mxu0 0.0
        %1049 = vmatpush1.msra.mxu0 0.0
        %1050 = vmatprep.subr.mxu0 0.0
        %1051 = vmatpush1.msra.mxu0 0.0
        %1052 = vmatprep.subr.mxu0 0.0
        %1053 = vmatpush1.msra.mxu0 0.0
        %1054 = vmatprep.subr.mxu0 0.0
        %1055 = vmatpush1.msra.mxu0 0.0
        %1056 = vmatprep.subr.mxu0 0.0
        %1057 = vmatpush1.msra.mxu0 0.0
        %1058 = vmatprep.subr.mxu0 0.0
        %1059 = vmatpush1.msra.mxu0 0.0
        %1060 = vmatprep.subr.mxu0 0.0
        %1061 = vmatpush1.msra.mxu0 0.0
        %1062 = vmatprep.subr.mxu0 0.0
        %1063 = vmatpush1.msra.mxu0 0.0
        %1064 = vmatprep.subr.mxu0 0.0
        %1065 = vmatpush1.msra.mxu0 0.0
        %1066 = vmatprep.subr.mxu0 0.0
        %1067 = vmatpush1.msra.mxu0 0.0
        %1068 = vmatprep.subr.mxu0 0.0
        %1069 = vmatpush1.msra.mxu0 0.0
        %1070 = vmatprep.subr.mxu0 0.0
        %1071 = vmatpush1.msra.mxu0 0.0
        %1072 = vmatprep.subr.mxu0 0.0
        %1073 = vmatpush1.msra.mxu0 0.0
        %1074 = vmatprep.subr.mxu0 0.0
        %1075 = vmatpush1.msra.mxu0 0.0
        %1076 = vmatprep.subr.mxu0 0.0
        %1077 = vmatpush1.msra.mxu0 0.0
        %1078 = vmatprep.subr.mxu0 0.0
        %1079 = vmatpush1.msra.mxu0 0.0
        %1080 = vmatprep.subr.mxu0 0.0
        %1081 = vmatpush1.msra.mxu0 0.0
        %1082 = vmatprep.subr.mxu0 0.0
        %1083 = vmatpush1.msra.mxu0 0.0
        %1084 = vmatprep.subr.mxu0 0.0
        %1085 = vmatpush1.msra.mxu0 0.0
        %1086 = vmatprep.subr.mxu0 0.0
        %1087 = vmatpush1.msra.mxu0 0.0
        %1088 = vmatprep.subr.mxu0 0.0
        %1089 = vmatpush1.msra.mxu0 0.0
        %1090 = vmatprep.subr.mxu0 0.0
        %1091 = vmatpush1.msra.mxu0 0.0
        %1092 = vmatprep.subr.mxu0 0.0
        %1093 = vmatpush1.msra.mxu0 0.0
        %1094 = vmatprep.subr.mxu0 0.0
        %1095 = vmatpush1.msra.mxu0 0.0
        %1096 = vmatprep.subr.mxu0 0.0
        %1097 = vmatpush1.msra.mxu0 0.0
        %1098 = vmatprep.subr.mxu0 0.0
        %1099 = vmatpush1.msra.mxu0 0.0
        %1100 = vmatprep.mubr.f32.mxu0 0.0
        %v1101 = vand.u32 %v526, 4294901760
        %1102 = vmatmul.mubr.f32.gmra.mrb[0].mxu0 %v1101
        %v1103 = vpop.f32.mrb[0].mxu0
        %v1104 = vadd.f32 %v1013, %v1103
        %v1105 = vpop.f32.mrb[0].mxu0
        %1106 = vmatprep.mubr.f32.mxu0 0.0
        %v1107 = vand.u32 %v529, 4294901760
        %1108 = vmatmul.mubr.f32.gmra.mrb[0].mxu0 %v1107
        %v1109 = vpop.f32.mrb[0].mxu0
        %v1110 = vadd.f32 %v1019, %v1109
        %v1111 = vpop.f32.mrb[0].mxu0
        %1112 = vmatprep.mubr.f32.mxu0 0.0
        %v1113 = vand.u32 %v532, 4294901760
        %1114 = vmatmul.mubr.f32.gmra.mrb[0].mxu0 %v1113
        %v1115 = vpop.f32.mrb[0].mxu0
        %v1116 = vadd.f32 %v1025, %v1115
        %v1117 = vpop.f32.mrb[0].mxu0
        %1118 = vmatprep.mubr.f32.mxu0 0.0
        %v1119 = vand.u32 %v535, 4294901760
        %1120 = vmatmul.mubr.f32.gmra.mrb[0].mxu0 %v1119
        %v1121 = vpop.f32.mrb[0].mxu0
        %v1122 = vadd.f32 %v1031, %v1121
        %v1123 = vpop.f32.mrb[0].mxu0
        %1124 = vdwg.mxu0
        %vm1125 = vcmask 261120
        %v1127 = vsel %vm1125, %v500, 0
        %v1130 = vsel %vm1125, %v501, 0
        %v1133 = vsel %vm1125, %v502, 0
        %v1136 = vsel %vm1125, %v503, 0
        %1138 = vmatprep.subr.mxu0 0.0
        %v1139 = vand.u32 %v480, 4294901760
        %1140 = vmatpush1.msra.mxu0 %v1139
        %1141 = vmatprep.subr.mxu0 0.0
        %v1142 = vand.u32 %v481, 4294901760
        %1143 = vmatpush1.msra.mxu0 %v1142
        %1144 = vmatprep.subr.mxu0 0.0
        %v1145 = vand.u32 %v482, 4294901760
        %1146 = vmatpush1.msra.mxu0 %v1145
        %1147 = vmatprep.subr.mxu0 0.0
        %v1148 = vand.u32 %v483, 4294901760
        %1149 = vmatpush1.msra.mxu0 %v1148
        %1150 = vmatprep.subr.mxu0 0.0
        %1151 = vmatpush1.msra.mxu0 0.0
        %1152 = vmatprep.subr.mxu0 0.0
        %1153 = vmatpush1.msra.mxu0 0.0
        %1154 = vmatprep.subr.mxu0 0.0
        %1155 = vmatpush1.msra.mxu0 0.0
        %1156 = vmatprep.subr.mxu0 0.0
        %1157 = vmatpush1.msra.mxu0 0.0
        %1158 = vmatprep.subr.mxu0 0.0
        %1159 = vmatpush1.msra.mxu0 0.0
        %1160 = vmatprep.subr.mxu0 0.0
        %1161 = vmatpush1.msra.mxu0 0.0
        %1162 = vmatprep.subr.mxu0 0.0
        %1163 = vmatpush1.msra.mxu0 0.0
        %1164 = vmatprep.subr.mxu0 0.0
        %1165 = vmatpush1.msra.mxu0 0.0
        %1166 = vmatprep.subr.mxu0 0.0
        %1167 = vmatpush1.msra.mxu0 0.0
        %1168 = vmatprep.subr.mxu0 0.0
        %1169 = vmatpush1.msra.mxu0 0.0
        %1170 = vmatprep.subr.mxu0 0.0
        %1171 = vmatpush1.msra.mxu0 0.0
        %1172 = vmatprep.subr.mxu0 0.0
        %1173 = vmatpush1.msra.mxu0 0.0
        %1174 = vmatprep.subr.mxu0 0.0
        %1175 = vmatpush1.msra.mxu0 0.0
        %1176 = vmatprep.subr.mxu0 0.0
        %1177 = vmatpush1.msra.mxu0 0.0
        %1178 = vmatprep.subr.mxu0 0.0
        %1179 = vmatpush1.msra.mxu0 0.0
        %1180 = vmatprep.subr.mxu0 0.0
        %1181 = vmatpush1.msra.mxu0 0.0
        %1182 = vmatprep.subr.mxu0 0.0
        %1183 = vmatpush1.msra.mxu0 0.0
        %1184 = vmatprep.subr.mxu0 0.0
        %1185 = vmatpush1.msra.mxu0 0.0
        %1186 = vmatprep.subr.mxu0 0.0
        %1187 = vmatpush1.msra.mxu0 0.0
        %1188 = vmatprep.subr.mxu0 0.0
        %1189 = vmatpush1.msra.mxu0 0.0
        %1190 = vmatprep.subr.mxu0 0.0
        %1191 = vmatpush1.msra.mxu0 0.0
        %1192 = vmatprep.subr.mxu0 0.0
        %1193 = vmatpush1.msra.mxu0 0.0
        %1194 = vmatprep.subr.mxu0 0.0
        %1195 = vmatpush1.msra.mxu0 0.0
        %1196 = vmatprep.subr.mxu0 0.0
        %1197 = vmatpush1.msra.mxu0 0.0
        %1198 = vmatprep.subr.mxu0 0.0
        %1199 = vmatpush1.msra.mxu0 0.0
        %1200 = vmatprep.subr.mxu0 0.0
        %1201 = vmatpush1.msra.mxu0 0.0
        %1202 = vmatprep.subr.mxu0 0.0
        %1203 = vmatpush1.msra.mxu0 0.0
        %1204 = vmatprep.subr.mxu0 0.0
        %1205 = vmatpush1.msra.mxu0 0.0
        %1206 = vmatprep.mubr.f32.mxu0 0.0
        %v1207 = vand.u32 %v1127, 4294901760
        %v1208 = vsub.f32 %v1127, %v1207
        %v1209 = vand.u32 %v1208, 4294901760
        %v1210 = vsub.f32 %v1208, %v1209
        %v1211 = vand.u32 %v1210, 4294901760
        %1212 = vmatmul.mubr.f32.gmra.mrb[0].mxu0 %v1211
        %v1213 = vpop.f32.mrb[0].mxu0
        %v1214 = vadd.f32 %v1104, %v1213
        %v1215 = vpop.f32.mrb[0].mxu0
        %1216 = vmatprep.mubr.f32.mxu0 0.0
        %v1217 = vand.u32 %v1130, 4294901760
        %v1218 = vsub.f32 %v1130, %v1217
        %v1219 = vand.u32 %v1218, 4294901760
        %v1220 = vsub.f32 %v1218, %v1219
        %v1221 = vand.u32 %v1220, 4294901760
        %1222 = vmatmul.mubr.f32.gmra.mrb[0].mxu0 %v1221
        %v1223 = vpop.f32.mrb[0].mxu0
        %v1224 = vadd.f32 %v1110, %v1223
        %v1225 = vpop.f32.mrb[0].mxu0
        %1226 = vmatprep.mubr.f32.mxu0 0.0
        %v1227 = vand.u32 %v1133, 4294901760
        %v1228 = vsub.f32 %v1133, %v1227
        %v1229 = vand.u32 %v1228, 4294901760
        %v1230 = vsub.f32 %v1228, %v1229
        %v1231 = vand.u32 %v1230, 4294901760
        %1232 = vmatmul.mubr.f32.gmra.mrb[0].mxu0 %v1231
        %v1233 = vpop.f32.mrb[0].mxu0
        %v1234 = vadd.f32 %v1116, %v1233
        %v1235 = vpop.f32.mrb[0].mxu0
        %1236 = vmatprep.mubr.f32.mxu0 0.0
        %v1237 = vand.u32 %v1136, 4294901760
        %v1238 = vsub.f32 %v1136, %v1237
        %v1239 = vand.u32 %v1238, 4294901760
        %v1240 = vsub.f32 %v1238, %v1239
        %v1241 = vand.u32 %v1240, 4294901760
        %1242 = vmatmul.mubr.f32.gmra.mrb[0].mxu0 %v1241
        %v1243 = vpop.f32.mrb[0].mxu0
        %v1244 = vadd.f32 %v1122, %v1243
        %v1245 = vpop.f32.mrb[0].mxu0
        %1246 = vdwg.mxu0
        %1247 = vmatprep.subr.mxu0 0.0
        %v1248 = vand.u32 %v480, 4294901760
        %v1249 = vsub.f32 %v480, %v1248
        %v1250 = vand.u32 %v1249, 4294901760
        %v1251 = vsub.f32 %v1249, %v1250
        %v1252 = vand.u32 %v1251, 4294901760
        %1253 = vmatpush1.msra.mxu0 %v1252
        %1254 = vmatprep.subr.mxu0 0.0
        %v1255 = vand.u32 %v481, 4294901760
        %v1256 = vsub.f32 %v481, %v1255
        %v1257 = vand.u32 %v1256, 4294901760
        %v1258 = vsub.f32 %v1256, %v1257
        %v1259 = vand.u32 %v1258, 4294901760
        %1260 = vmatpush1.msra.mxu0 %v1259
        %1261 = vmatprep.subr.mxu0 0.0
        %v1262 = vand.u32 %v482, 4294901760
        %v1263 = vsub.f32 %v482, %v1262
        %v1264 = vand.u32 %v1263, 4294901760
        %v1265 = vsub.f32 %v1263, %v1264
        %v1266 = vand.u32 %v1265, 4294901760
        %1267 = vmatpush1.msra.mxu0 %v1266
        %1268 = vmatprep.subr.mxu0 0.0
        %v1269 = vand.u32 %v483, 4294901760
        %v1270 = vsub.f32 %v483, %v1269
        %v1271 = vand.u32 %v1270, 4294901760
        %v1272 = vsub.f32 %v1270, %v1271
        %v1273 = vand.u32 %v1272, 4294901760
        %1274 = vmatpush1.msra.mxu0 %v1273
        %1275 = vmatprep.subr.mxu0 0.0
        %1276 = vmatpush1.msra.mxu0 0.0
        %1277 = vmatprep.subr.mxu0 0.0
        %1278 = vmatpush1.msra.mxu0 0.0
        %1279 = vmatprep.subr.mxu0 0.0
        %1280 = vmatpush1.msra.mxu0 0.0
        %1281 = vmatprep.subr.mxu0 0.0
        %1282 = vmatpush1.msra.mxu0 0.0
        %1283 = vmatprep.subr.mxu0 0.0
        %1284 = vmatpush1.msra.mxu0 0.0
        %1285 = vmatprep.subr.mxu0 0.0
        %1286 = vmatpush1.msra.mxu0 0.0
        %1287 = vmatprep.subr.mxu0 0.0
        %1288 = vmatpush1.msra.mxu0 0.0
        %1289 = vmatprep.subr.mxu0 0.0
        %1290 = vmatpush1.msra.mxu0 0.0
        %1291 = vmatprep.subr.mxu0 0.0
        %1292 = vmatpush1.msra.mxu0 0.0
        %1293 = vmatprep.subr.mxu0 0.0
        %1294 = vmatpush1.msra.mxu0 0.0
        %1295 = vmatprep.subr.mxu0 0.0
        %1296 = vmatpush1.msra.mxu0 0.0
        %1297 = vmatprep.subr.mxu0 0.0
        %1298 = vmatpush1.msra.mxu0 0.0
        %1299 = vmatprep.subr.mxu0 0.0
        %1300 = vmatpush1.msra.mxu0 0.0
        %1301 = vmatprep.subr.mxu0 0.0
        %1302 = vmatpush1.msra.mxu0 0.0
        %1303 = vmatprep.subr.mxu0 0.0
        %1304 = vmatpush1.msra.mxu0 0.0
        %1305 = vmatprep.subr.mxu0 0.0
        %1306 = vmatpush1.msra.mxu0 0.0
        %1307 = vmatprep.subr.mxu0 0.0
        %1308 = vmatpush1.msra.mxu0 0.0
        %1309 = vmatprep.subr.mxu0 0.0
        %1310 = vmatpush1.msra.mxu0 0.0
        %1311 = vmatprep.subr.mxu0 0.0
        %1312 = vmatpush1.msra.mxu0 0.0
        %1313 = vmatprep.subr.mxu0 0.0
        %1314 = vmatpush1.msra.mxu0 0.0
        %1315 = vmatprep.subr.mxu0 0.0
        %1316 = vmatpush1.msra.mxu0 0.0
        %1317 = vmatprep.subr.mxu0 0.0
        %1318 = vmatpush1.msra.mxu0 0.0
        %1319 = vmatprep.subr.mxu0 0.0
        %1320 = vmatpush1.msra.mxu0 0.0
        %1321 = vmatprep.subr.mxu0 0.0
        %1322 = vmatpush1.msra.mxu0 0.0
        %1323 = vmatprep.subr.mxu0 0.0
        %1324 = vmatpush1.msra.mxu0 0.0
        %1325 = vmatprep.subr.mxu0 0.0
        %1326 = vmatpush1.msra.mxu0 0.0
        %1327 = vmatprep.subr.mxu0 0.0
        %1328 = vmatpush1.msra.mxu0 0.0
        %1329 = vmatprep.subr.mxu0 0.0
        %1330 = vmatpush1.msra.mxu0 0.0
        %1331 = vmatprep.mubr.f32.mxu0 0.0
        %v1332 = vand.u32 %v1127, 4294901760
        %1333 = vmatmul.mubr.f32.gmra.mrb[0].mxu0 %v1332
        %v1334 = vpop.f32.mrb[0].mxu0
        %v1335 = vadd.f32 %v1214, %v1334
        %v1336 = vpop.f32.mrb[0].mxu0
        %1337 = vmatprep.mubr.f32.mxu0 0.0
        %v1338 = vand.u32 %v1130, 4294901760
        %1339 = vmatmul.mubr.f32.gmra.mrb[0].mxu0 %v1338
        %v1340 = vpop.f32.mrb[0].mxu0
        %v1341 = vadd.f32 %v1224, %v1340
        %v1342 = vpop.f32.mrb[0].mxu0
        %1343 = vmatprep.mubr.f32.mxu0 0.0
        %v1344 = vand.u32 %v1133, 4294901760
        %1345 = vmatmul.mubr.f32.gmra.mrb[0].mxu0 %v1344
        %v1346 = vpop.f32.mrb[0].mxu0
        %v1347 = vadd.f32 %v1234, %v1346
        %v1348 = vpop.f32.mrb[0].mxu0
        %1349 = vmatprep.mubr.f32.mxu0 0.0
        %v1350 = vand.u32 %v1136, 4294901760
        %1351 = vmatmul.mubr.f32.gmra.mrb[0].mxu0 %v1350
        %v1352 = vpop.f32.mrb[0].mxu0
        %v1353 = vadd.f32 %v1244, %v1352
        %v1354 = vpop.f32.mrb[0].mxu0
        %1355 = vdwg.mxu0
        %1356 = vmatprep.subr.mxu0 0.0
        %v1357 = vand.u32 %v480, 4294901760
        %v1358 = vsub.f32 %v480, %v1357
        %1359 = vmatpush1.msra.mxu0 %v1358
        %1360 = vmatprep.subr.mxu0 0.0
        %v1361 = vand.u32 %v481, 4294901760
        %v1362 = vsub.f32 %v481, %v1361
        %1363 = vmatpush1.msra.mxu0 %v1362
        %1364 = vmatprep.subr.mxu0 0.0
        %v1365 = vand.u32 %v482, 4294901760
        %v1366 = vsub.f32 %v482, %v1365
        %1367 = vmatpush1.msra.mxu0 %v1366
        %1368 = vmatprep.subr.mxu0 0.0
        %v1369 = vand.u32 %v483, 4294901760
        %v1370 = vsub.f32 %v483, %v1369
        %1371 = vmatpush1.msra.mxu0 %v1370
        %1372 = vmatprep.subr.mxu0 0.0
        %1373 = vmatpush1.msra.mxu0 0.0
        %1374 = vmatprep.subr.mxu0 0.0
        %1375 = vmatpush1.msra.mxu0 0.0
        %1376 = vmatprep.subr.mxu0 0.0
        %1377 = vmatpush1.msra.mxu0 0.0
        %1378 = vmatprep.subr.mxu0 0.0
        %1379 = vmatpush1.msra.mxu0 0.0
        %1380 = vmatprep.subr.mxu0 0.0
        %1381 = vmatpush1.msra.mxu0 0.0
        %1382 = vmatprep.subr.mxu0 0.0
        %1383 = vmatpush1.msra.mxu0 0.0
        %1384 = vmatprep.subr.mxu0 0.0
        %1385 = vmatpush1.msra.mxu0 0.0
        %1386 = vmatprep.subr.mxu0 0.0
        %1387 = vmatpush1.msra.mxu0 0.0
        %1388 = vmatprep.subr.mxu0 0.0
        %1389 = vmatpush1.msra.mxu0 0.0
        %1390 = vmatprep.subr.mxu0 0.0
        %1391 = vmatpush1.msra.mxu0 0.0
        %1392 = vmatprep.subr.mxu0 0.0
        %1393 = vmatpush1.msra.mxu0 0.0
        %1394 = vmatprep.subr.mxu0 0.0
        %1395 = vmatpush1.msra.mxu0 0.0
        %1396 = vmatprep.subr.mxu0 0.0
        %1397 = vmatpush1.msra.mxu0 0.0
        %1398 = vmatprep.subr.mxu0 0.0
        %1399 = vmatpush1.msra.mxu0 0.0
        %1400 = vmatprep.subr.mxu0 0.0
        %1401 = vmatpush1.msra.mxu0 0.0
        %1402 = vmatprep.subr.mxu0 0.0
        %1403 = vmatpush1.msra.mxu0 0.0
        %1404 = vmatprep.subr.mxu0 0.0
        %1405 = vmatpush1.msra.mxu0 0.0
        %1406 = vmatprep.subr.mxu0 0.0
        %1407 = vmatpush1.msra.mxu0 0.0
        %1408 = vmatprep.subr.mxu0 0.0
        %1409 = vmatpush1.msra.mxu0 0.0
        %1410 = vmatprep.subr.mxu0 0.0
        %1411 = vmatpush1.msra.mxu0 0.0
        %1412 = vmatprep.subr.mxu0 0.0
        %1413 = vmatpush1.msra.mxu0 0.0
        %1414 = vmatprep.subr.mxu0 0.0
        %1415 = vmatpush1.msra.mxu0 0.0
        %1416 = vmatprep.subr.mxu0 0.0
        %1417 = vmatpush1.msra.mxu0 0.0
        %1418 = vmatprep.subr.mxu0 0.0
        %1419 = vmatpush1.msra.mxu0 0.0
        %1420 = vmatprep.subr.mxu0 0.0
        %1421 = vmatpush1.msra.mxu0 0.0
        %1422 = vmatprep.subr.mxu0 0.0
        %1423 = vmatpush1.msra.mxu0 0.0
        %1424 = vmatprep.subr.mxu0 0.0
        %1425 = vmatpush1.msra.mxu0 0.0
        %1426 = vmatprep.subr.mxu0 0.0
        %1427 = vmatpush1.msra.mxu0 0.0
        %1428 = vmatprep.mubr.f32.mxu0 0.0
        %v1429 = vand.u32 %v1127, 4294901760
        %v1430 = vsub.f32 %v1127, %v1429
        %1431 = vmatmul.mubr.f32.gmra.mrb[0].mxu0 %v1430
        %v1432 = vpop.f32.mrb[0].mxu0
        %v1433 = vadd.f32 %v1335, %v1432
        %v1434 = vpop.f32.mrb[0].mxu0
        %1435 = vmatprep.mubr.f32.mxu0 0.0
        %v1436 = vand.u32 %v1130, 4294901760
        %v1437 = vsub.f32 %v1130, %v1436
        %1438 = vmatmul.mubr.f32.gmra.mrb[0].mxu0 %v1437
        %v1439 = vpop.f32.mrb[0].mxu0
        %v1440 = vadd.f32 %v1341, %v1439
        %v1441 = vpop.f32.mrb[0].mxu0
        %1442 = vmatprep.mubr.f32.mxu0 0.0
        %v1443 = vand.u32 %v1133, 4294901760
        %v1444 = vsub.f32 %v1133, %v1443
        %1445 = vmatmul.mubr.f32.gmra.mrb[0].mxu0 %v1444
        %v1446 = vpop.f32.mrb[0].mxu0
        %v1447 = vadd.f32 %v1347, %v1446
        %v1448 = vpop.f32.mrb[0].mxu0
        %1449 = vmatprep.mubr.f32.mxu0 0.0
        %v1450 = vand.u32 %v1136, 4294901760
        %v1451 = vsub.f32 %v1136, %v1450
        %1452 = vmatmul.mubr.f32.gmra.mrb[0].mxu0 %v1451
        %v1453 = vpop.f32.mrb[0].mxu0
        %v1454 = vadd.f32 %v1353, %v1453
        %v1455 = vpop.f32.mrb[0].mxu0
        %1456 = vdwg.mxu0
        %1457 = vmatprep.subr.mxu0 0.0
        %v1458 = vand.u32 %v480, 4294901760
        %1459 = vmatpush1.msra.mxu0 %v1458
        %1460 = vmatprep.subr.mxu0 0.0
        %v1461 = vand.u32 %v481, 4294901760
        %1462 = vmatpush1.msra.mxu0 %v1461
        %1463 = vmatprep.subr.mxu0 0.0
        %v1464 = vand.u32 %v482, 4294901760
        %1465 = vmatpush1.msra.mxu0 %v1464
        %1466 = vmatprep.subr.mxu0 0.0
        %v1467 = vand.u32 %v483, 4294901760
        %1468 = vmatpush1.msra.mxu0 %v1467
        %1469 = vmatprep.subr.mxu0 0.0
        %1470 = vmatpush1.msra.mxu0 0.0
        %1471 = vmatprep.subr.mxu0 0.0
        %1472 = vmatpush1.msra.mxu0 0.0
        %1473 = vmatprep.subr.mxu0 0.0
        %1474 = vmatpush1.msra.mxu0 0.0
        %1475 = vmatprep.subr.mxu0 0.0
        %1476 = vmatpush1.msra.mxu0 0.0
        %1477 = vmatprep.subr.mxu0 0.0
        %1478 = vmatpush1.msra.mxu0 0.0
        %1479 = vmatprep.subr.mxu0 0.0
        %1480 = vmatpush1.msra.mxu0 0.0
        %1481 = vmatprep.subr.mxu0 0.0
        %1482 = vmatpush1.msra.mxu0 0.0
        %1483 = vmatprep.subr.mxu0 0.0
        %1484 = vmatpush1.msra.mxu0 0.0
        %1485 = vmatprep.subr.mxu0 0.0
        %1486 = vmatpush1.msra.mxu0 0.0
        %1487 = vmatprep.subr.mxu0 0.0
        %1488 = vmatpush1.msra.mxu0 0.0
        %1489 = vmatprep.subr.mxu0 0.0
        %1490 = vmatpush1.msra.mxu0 0.0
        %1491 = vmatprep.subr.mxu0 0.0
        %1492 = vmatpush1.msra.mxu0 0.0
        %1493 = vmatprep.subr.mxu0 0.0
        %1494 = vmatpush1.msra.mxu0 0.0
        %1495 = vmatprep.subr.mxu0 0.0
        %1496 = vmatpush1.msra.mxu0 0.0
        %1497 = vmatprep.subr.mxu0 0.0
        %1498 = vmatpush1.msra.mxu0 0.0
        %1499 = vmatprep.subr.mxu0 0.0
        %1500 = vmatpush1.msra.mxu0 0.0
        %1501 = vmatprep.subr.mxu0 0.0
        %1502 = vmatpush1.msra.mxu0 0.0
        %1503 = vmatprep.subr.mxu0 0.0
        %1504 = vmatpush1.msra.mxu0 0.0
        %1505 = vmatprep.subr.mxu0 0.0
        %1506 = vmatpush1.msra.mxu0 0.0
        %1507 = vmatprep.subr.mxu0 0.0
        %1508 = vmatpush1.msra.mxu0 0.0
        %1509 = vmatprep.subr.mxu0 0.0
        %1510 = vmatpush1.msra.mxu0 0.0
        %1511 = vmatprep.subr.mxu0 0.0
        %1512 = vmatpush1.msra.mxu0 0.0
        %1513 = vmatprep.subr.mxu0 0.0
        %1514 = vmatpush1.msra.mxu0 0.0
        %1515 = vmatprep.subr.mxu0 0.0
        %1516 = vmatpush1.msra.mxu0 0.0
        %1517 = vmatprep.subr.mxu0 0.0
        %1518 = vmatpush1.msra.mxu0 0.0
        %1519 = vmatprep.subr.mxu0 0.0
        %1520 = vmatpush1.msra.mxu0 0.0
        %1521 = vmatprep.subr.mxu0 0.0
        %1522 = vmatpush1.msra.mxu0 0.0
        %1523 = vmatprep.subr.mxu0 0.0
        %1524 = vmatpush1.msra.mxu0 0.0
        %1525 = vmatprep.mubr.f32.mxu0 0.0
        %v1526 = vand.u32 %v1127, 4294901760
        %v1527 = vsub.f32 %v1127, %v1526
        %v1528 = vand.u32 %v1527, 4294901760
        %1529 = vmatmul.mubr.f32.gmra.mrb[0].mxu0 %v1528
        %v1530 = vpop.f32.mrb[0].mxu0
        %v1531 = vadd.f32 %v1433, %v1530
        %v1532 = vpop.f32.mrb[0].mxu0
        %1533 = vmatprep.mubr.f32.mxu0 0.0
        %v1534 = vand.u32 %v1130, 4294901760
        %v1535 = vsub.f32 %v1130, %v1534
        %v1536 = vand.u32 %v1535, 4294901760
        %1537 = vmatmul.mubr.f32.gmra.mrb[0].mxu0 %v1536
        %v1538 = vpop.f32.mrb[0].mxu0
        %v1539 = vadd.f32 %v1440, %v1538
        %v1540 = vpop.f32.mrb[0].mxu0
        %1541 = vmatprep.mubr.f32.mxu0 0.0
        %v1542 = vand.u32 %v1133, 4294901760
        %v1543 = vsub.f32 %v1133, %v1542
        %v1544 = vand.u32 %v1543, 4294901760
        %1545 = vmatmul.mubr.f32.gmra.mrb[0].mxu0 %v1544
        %v1546 = vpop.f32.mrb[0].mxu0
        %v1547 = vadd.f32 %v1447, %v1546
        %v1548 = vpop.f32.mrb[0].mxu0
        %1549 = vmatprep.mubr.f32.mxu0 0.0
        %v1550 = vand.u32 %v1136, 4294901760
        %v1551 = vsub.f32 %v1136, %v1550
        %v1552 = vand.u32 %v1551, 4294901760
        %1553 = vmatmul.mubr.f32.gmra.mrb[0].mxu0 %v1552
        %v1554 = vpop.f32.mrb[0].mxu0
        %v1555 = vadd.f32 %v1454, %v1554
        %v1556 = vpop.f32.mrb[0].mxu0
        %1557 = vdwg.mxu0
        %1558 = vmatprep.subr.mxu0 0.0
        %v1559 = vand.u32 %v480, 4294901760
        %v1560 = vsub.f32 %v480, %v1559
        %v1561 = vand.u32 %v1560, 4294901760
        %1562 = vmatpush1.msra.mxu0 %v1561
        %1563 = vmatprep.subr.mxu0 0.0
        %v1564 = vand.u32 %v481, 4294901760
        %v1565 = vsub.f32 %v481, %v1564
        %v1566 = vand.u32 %v1565, 4294901760
        %1567 = vmatpush1.msra.mxu0 %v1566
        %1568 = vmatprep.subr.mxu0 0.0
        %v1569 = vand.u32 %v482, 4294901760
        %v1570 = vsub.f32 %v482, %v1569
        %v1571 = vand.u32 %v1570, 4294901760
        %1572 = vmatpush1.msra.mxu0 %v1571
        %1573 = vmatprep.subr.mxu0 0.0
        %v1574 = vand.u32 %v483, 4294901760
        %v1575 = vsub.f32 %v483, %v1574
        %v1576 = vand.u32 %v1575, 4294901760
        %1577 = vmatpush1.msra.mxu0 %v1576
        %1578 = vmatprep.subr.mxu0 0.0
        %1579 = vmatpush1.msra.mxu0 0.0
        %1580 = vmatprep.subr.mxu0 0.0
        %1581 = vmatpush1.msra.mxu0 0.0
        %1582 = vmatprep.subr.mxu0 0.0
        %1583 = vmatpush1.msra.mxu0 0.0
        %1584 = vmatprep.subr.mxu0 0.0
        %1585 = vmatpush1.msra.mxu0 0.0
        %1586 = vmatprep.subr.mxu0 0.0
        %1587 = vmatpush1.msra.mxu0 0.0
        %1588 = vmatprep.subr.mxu0 0.0
        %1589 = vmatpush1.msra.mxu0 0.0
        %1590 = vmatprep.subr.mxu0 0.0
        %1591 = vmatpush1.msra.mxu0 0.0
        %1592 = vmatprep.subr.mxu0 0.0
        %1593 = vmatpush1.msra.mxu0 0.0
        %1594 = vmatprep.subr.mxu0 0.0
        %1595 = vmatpush1.msra.mxu0 0.0
        %1596 = vmatprep.subr.mxu0 0.0
        %1597 = vmatpush1.msra.mxu0 0.0
        %1598 = vmatprep.subr.mxu0 0.0
        %1599 = vmatpush1.msra.mxu0 0.0
        %1600 = vmatprep.subr.mxu0 0.0
        %1601 = vmatpush1.msra.mxu0 0.0
        %1602 = vmatprep.subr.mxu0 0.0
        %1603 = vmatpush1.msra.mxu0 0.0
        %1604 = vmatprep.subr.mxu0 0.0
        %1605 = vmatpush1.msra.mxu0 0.0
        %1606 = vmatprep.subr.mxu0 0.0
        %1607 = vmatpush1.msra.mxu0 0.0
        %1608 = vmatprep.subr.mxu0 0.0
        %1609 = vmatpush1.msra.mxu0 0.0
        %1610 = vmatprep.subr.mxu0 0.0
        %1611 = vmatpush1.msra.mxu0 0.0
        %1612 = vmatprep.subr.mxu0 0.0
        %1613 = vmatpush1.msra.mxu0 0.0
        %1614 = vmatprep.subr.mxu0 0.0
        %1615 = vmatpush1.msra.mxu0 0.0
        %1616 = vmatprep.subr.mxu0 0.0
        %1617 = vmatpush1.msra.mxu0 0.0
        %1618 = vmatprep.subr.mxu0 0.0
        %1619 = vmatpush1.msra.mxu0 0.0
        %1620 = vmatprep.subr.mxu0 0.0
        %1621 = vmatpush1.msra.mxu0 0.0
        %1622 = vmatprep.subr.mxu0 0.0
        %1623 = vmatpush1.msra.mxu0 0.0
        %1624 = vmatprep.subr.mxu0 0.0
        %1625 = vmatpush1.msra.mxu0 0.0
        %1626 = vmatprep.subr.mxu0 0.0
        %1627 = vmatpush1.msra.mxu0 0.0
        %1628 = vmatprep.subr.mxu0 0.0
        %1629 = vmatpush1.msra.mxu0 0.0
        %1630 = vmatprep.subr.mxu0 0.0
        %1631 = vmatpush1.msra.mxu0 0.0
        %1632 = vmatprep.subr.mxu0 0.0
        %1633 = vmatpush1.msra.mxu0 0.0
        %1634 = vmatprep.mubr.f32.mxu0 0.0
        %v1635 = vand.u32 %v1127, 4294901760
        %1636 = vmatmul.mubr.f32.gmra.mrb[0].mxu0 %v1635
        %v1637 = vpop.f32.mrb[0].mxu0
        %v1638 = vadd.f32 %v1531, %v1637
        %v1639 = vpop.f32.mrb[0].mxu0
        %1640 = vmatprep.mubr.f32.mxu0 0.0
        %v1641 = vand.u32 %v1130, 4294901760
        %1642 = vmatmul.mubr.f32.gmra.mrb[0].mxu0 %v1641
        %v1643 = vpop.f32.mrb[0].mxu0
        %v1644 = vadd.f32 %v1539, %v1643
        %v1645 = vpop.f32.mrb[0].mxu0
        %1646 = vmatprep.mubr.f32.mxu0 0.0
        %v1647 = vand.u32 %v1133, 4294901760
        %1648 = vmatmul.mubr.f32.gmra.mrb[0].mxu0 %v1647
        %v1649 = vpop.f32.mrb[0].mxu0
        %v1650 = vadd.f32 %v1547, %v1649
        %v1651 = vpop.f32.mrb[0].mxu0
        %1652 = vmatprep.mubr.f32.mxu0 0.0
        %v1653 = vand.u32 %v1136, 4294901760
        %1654 = vmatmul.mubr.f32.gmra.mrb[0].mxu0 %v1653
        %v1655 = vpop.f32.mrb[0].mxu0
        %v1656 = vadd.f32 %v1555, %v1655
        %v1657 = vpop.f32.mrb[0].mxu0
        %1658 = vdwg.mxu0
        %1659 = vmatprep.subr.mxu0 0.0
        %v1660 = vand.u32 %v480, 4294901760
        %1661 = vmatpush1.msra.mxu0 %v1660
        %1662 = vmatprep.subr.mxu0 0.0
        %v1663 = vand.u32 %v481, 4294901760
        %1664 = vmatpush1.msra.mxu0 %v1663
        %1665 = vmatprep.subr.mxu0 0.0
        %v1666 = vand.u32 %v482, 4294901760
        %1667 = vmatpush1.msra.mxu0 %v1666
        %1668 = vmatprep.subr.mxu0 0.0
        %v1669 = vand.u32 %v483, 4294901760
        %1670 = vmatpush1.msra.mxu0 %v1669
        %1671 = vmatprep.subr.mxu0 0.0
        %1672 = vmatpush1.msra.mxu0 0.0
        %1673 = vmatprep.subr.mxu0 0.0
        %1674 = vmatpush1.msra.mxu0 0.0
        %1675 = vmatprep.subr.mxu0 0.0
        %1676 = vmatpush1.msra.mxu0 0.0
        %1677 = vmatprep.subr.mxu0 0.0
        %1678 = vmatpush1.msra.mxu0 0.0
        %1679 = vmatprep.subr.mxu0 0.0
        %1680 = vmatpush1.msra.mxu0 0.0
        %1681 = vmatprep.subr.mxu0 0.0
        %1682 = vmatpush1.msra.mxu0 0.0
        %1683 = vmatprep.subr.mxu0 0.0
        %1684 = vmatpush1.msra.mxu0 0.0
        %1685 = vmatprep.subr.mxu0 0.0
        %1686 = vmatpush1.msra.mxu0 0.0
        %1687 = vmatprep.subr.mxu0 0.0
        %1688 = vmatpush1.msra.mxu0 0.0
        %1689 = vmatprep.subr.mxu0 0.0
        %1690 = vmatpush1.msra.mxu0 0.0
        %1691 = vmatprep.subr.mxu0 0.0
        %1692 = vmatpush1.msra.mxu0 0.0
        %1693 = vmatprep.subr.mxu0 0.0
        %1694 = vmatpush1.msra.mxu0 0.0
        %1695 = vmatprep.subr.mxu0 0.0
        %1696 = vmatpush1.msra.mxu0 0.0
        %1697 = vmatprep.subr.mxu0 0.0
        %1698 = vmatpush1.msra.mxu0 0.0
        %1699 = vmatprep.subr.mxu0 0.0
        %1700 = vmatpush1.msra.mxu0 0.0
        %1701 = vmatprep.subr.mxu0 0.0
        %1702 = vmatpush1.msra.mxu0 0.0
        %1703 = vmatprep.subr.mxu0 0.0
        %1704 = vmatpush1.msra.mxu0 0.0
        %1705 = vmatprep.subr.mxu0 0.0
        %1706 = vmatpush1.msra.mxu0 0.0
        %1707 = vmatprep.subr.mxu0 0.0
        %1708 = vmatpush1.msra.mxu0 0.0
        %1709 = vmatprep.subr.mxu0 0.0
        %1710 = vmatpush1.msra.mxu0 0.0
        %1711 = vmatprep.subr.mxu0 0.0
        %1712 = vmatpush1.msra.mxu0 0.0
        %1713 = vmatprep.subr.mxu0 0.0
        %1714 = vmatpush1.msra.mxu0 0.0
        %1715 = vmatprep.subr.mxu0 0.0
        %1716 = vmatpush1.msra.mxu0 0.0
        %1717 = vmatprep.subr.mxu0 0.0
        %1718 = vmatpush1.msra.mxu0 0.0
        %1719 = vmatprep.subr.mxu0 0.0
        %1720 = vmatpush1.msra.mxu0 0.0
        %1721 = vmatprep.subr.mxu0 0.0
        %1722 = vmatpush1.msra.mxu0 0.0
        %1723 = vmatprep.subr.mxu0 0.0
        %1724 = vmatpush1.msra.mxu0 0.0
        %1725 = vmatprep.subr.mxu0 0.0
        %1726 = vmatpush1.msra.mxu0 0.0
        %1727 = vmatprep.mubr.f32.mxu0 0.0
        %v1728 = vand.u32 %v1127, 4294901760
        %1729 = vmatmul.mubr.f32.gmra.mrb[0].mxu0 %v1728
        %v1730 = vpop.f32.mrb[0].mxu0
        %v1731 = vadd.f32 %v1638, %v1730
        %v1732 = vpop.f32.mrb[0].mxu0
        %1733 = vmatprep.mubr.f32.mxu0 0.0
        %v1734 = vand.u32 %v1130, 4294901760
        %1735 = vmatmul.mubr.f32.gmra.mrb[0].mxu0 %v1734
        %v1736 = vpop.f32.mrb[0].mxu0
        %v1737 = vadd.f32 %v1644, %v1736
        %v1738 = vpop.f32.mrb[0].mxu0
        %1739 = vmatprep.mubr.f32.mxu0 0.0
        %v1740 = vand.u32 %v1133, 4294901760
        %1741 = vmatmul.mubr.f32.gmra.mrb[0].mxu0 %v1740
        %v1742 = vpop.f32.mrb[0].mxu0
        %v1743 = vadd.f32 %v1650, %v1742
        %v1744 = vpop.f32.mrb[0].mxu0
        %1745 = vmatprep.mubr.f32.mxu0 0.0
        %v1746 = vand.u32 %v1136, 4294901760
        %1747 = vmatmul.mubr.f32.gmra.mrb[0].mxu0 %v1746
        %v1748 = vpop.f32.mrb[0].mxu0
        %v1749 = vadd.f32 %v1656, %v1748
        %v1750 = vpop.f32.mrb[0].mxu0
        %1751 = vdwg.mxu0
        %1752 = vmatprep.subr.mxu0 0.0
        %v1753 = vand.u32 %v508, 4294901760
        %1754 = vmatpush1.msra.mxu0 %v1753
        %1755 = vmatprep.subr.mxu0 0.0
        %v1756 = vand.u32 %v509, 4294901760
        %1757 = vmatpush1.msra.mxu0 %v1756
        %1758 = vmatprep.subr.mxu0 0.0
        %v1759 = vand.u32 %v510, 4294901760
        %1760 = vmatpush1.msra.mxu0 %v1759
        %1761 = vmatprep.subr.mxu0 0.0
        %v1762 = vand.u32 %v511, 4294901760
        %1763 = vmatpush1.msra.mxu0 %v1762
        %1764 = vmatprep.subr.mxu0 0.0
        %v1765 = vand.u32 %v512, 4294901760
        %1766 = vmatpush1.msra.mxu0 %v1765
        %1767 = vmatprep.subr.mxu0 0.0
        %v1768 = vand.u32 %v513, 4294901760
        %1769 = vmatpush1.msra.mxu0 %v1768
        %1770 = vmatprep.subr.mxu0 0.0
        %v1771 = vand.u32 %v514, 4294901760
        %1772 = vmatpush1.msra.mxu0 %v1771
        %1773 = vmatprep.subr.mxu0 0.0
        %v1774 = vand.u32 %v515, 4294901760
        %1775 = vmatpush1.msra.mxu0 %v1774
        %1776 = vmatprep.subr.mxu0 0.0
        %v1777 = vand.u32 %v516, 4294901760
        %1778 = vmatpush1.msra.mxu0 %v1777
        %1779 = vmatprep.subr.mxu0 0.0
        %v1780 = vand.u32 %v517, 4294901760
        %1781 = vmatpush1.msra.mxu0 %v1780
        %1782 = vmatprep.subr.mxu0 0.0
        %v1783 = vand.u32 %v518, 4294901760
        %1784 = vmatpush1.msra.mxu0 %v1783
        %1785 = vmatprep.subr.mxu0 0.0
        %v1786 = vand.u32 %v519, 4294901760
        %1787 = vmatpush1.msra.mxu0 %v1786
        %1788 = vmatprep.subr.mxu0 0.0
        %v1789 = vand.u32 %v520, 4294901760
        %1790 = vmatpush1.msra.mxu0 %v1789
        %1791 = vmatprep.subr.mxu0 0.0
        %v1792 = vand.u32 %v521, 4294901760
        %1793 = vmatpush1.msra.mxu0 %v1792
        %1794 = vmatprep.subr.mxu0 0.0
        %v1795 = vand.u32 %v522, 4294901760
        %1796 = vmatpush1.msra.mxu0 %v1795
        %1797 = vmatprep.subr.mxu0 0.0
        %v1798 = vand.u32 %v523, 4294901760
        %1799 = vmatpush1.msra.mxu0 %v1798
        %1800 = vmatprep.subr.mxu0 0.0
        %1801 = vmatpush1.msra.mxu0 0.0
        %1802 = vmatprep.subr.mxu0 0.0
        %1803 = vmatpush1.msra.mxu0 0.0
        %1804 = vmatprep.subr.mxu0 0.0
        %1805 = vmatpush1.msra.mxu0 0.0
        %1806 = vmatprep.subr.mxu0 0.0
        %1807 = vmatpush1.msra.mxu0 0.0
        %1808 = vmatprep.subr.mxu0 0.0
        %1809 = vmatpush1.msra.mxu0 0.0
        %1810 = vmatprep.subr.mxu0 0.0
        %1811 = vmatpush1.msra.mxu0 0.0
        %1812 = vmatprep.subr.mxu0 0.0
        %1813 = vmatpush1.msra.mxu0 0.0
        %1814 = vmatprep.subr.mxu0 0.0
        %1815 = vmatpush1.msra.mxu0 0.0
        %1816 = vmatprep.subr.mxu0 0.0
        %1817 = vmatpush1.msra.mxu0 0.0
        %1818 = vmatprep.subr.mxu0 0.0
        %1819 = vmatpush1.msra.mxu0 0.0
        %1820 = vmatprep.subr.mxu0 0.0
        %1821 = vmatpush1.msra.mxu0 0.0
        %1822 = vmatprep.subr.mxu0 0.0
        %1823 = vmatpush1.msra.mxu0 0.0
        %1824 = vmatprep.subr.mxu0 0.0
        %1825 = vmatpush1.msra.mxu0 0.0
        %1826 = vmatprep.subr.mxu0 0.0
        %1827 = vmatpush1.msra.mxu0 0.0
        %1828 = vmatprep.subr.mxu0 0.0
        %1829 = vmatpush1.msra.mxu0 0.0
        %1830 = vmatprep.subr.mxu0 0.0
        %1831 = vmatpush1.msra.mxu0 0.0
        %1832 = vmatprep.mubr.f32.mxu0 0.0
        %v1833 = vand.u32 %v1731, 4294901760
        %v1834 = vsub.f32 %v1731, %v1833
        %v1835 = vand.u32 %v1834, 4294901760
        %v1836 = vsub.f32 %v1834, %v1835
        %v1837 = vand.u32 %v1836, 4294901760
        %1838 = vmatmul.mubr.f32.gmra.mrb[0].mxu0 %v1837
        %v1839 = vpop.f32.mrb[0].mxu0
        %v1840 = vadd.f32 0.0, %v1839
        %v1841 = vpop.f32.mrb[0].mxu0
        %1842 = vmatprep.mubr.f32.mxu0 0.0
        %v1843 = vand.u32 %v1737, 4294901760
        %v1844 = vsub.f32 %v1737, %v1843
        %v1845 = vand.u32 %v1844, 4294901760
        %v1846 = vsub.f32 %v1844, %v1845
        %v1847 = vand.u32 %v1846, 4294901760
        %1848 = vmatmul.mubr.f32.gmra.mrb[0].mxu0 %v1847
        %v1849 = vpop.f32.mrb[0].mxu0
        %v1850 = vadd.f32 0.0, %v1849
        %v1851 = vpop.f32.mrb[0].mxu0
        %1852 = vmatprep.mubr.f32.mxu0 0.0
        %v1853 = vand.u32 %v1743, 4294901760
        %v1854 = vsub.f32 %v1743, %v1853
        %v1855 = vand.u32 %v1854, 4294901760
        %v1856 = vsub.f32 %v1854, %v1855
        %v1857 = vand.u32 %v1856, 4294901760
        %1858 = vmatmul.mubr.f32.gmra.mrb[0].mxu0 %v1857
        %v1859 = vpop.f32.mrb[0].mxu0
        %v1860 = vadd.f32 0.0, %v1859
        %v1861 = vpop.f32.mrb[0].mxu0
        %1862 = vmatprep.mubr.f32.mxu0 0.0
        %v1863 = vand.u32 %v1749, 4294901760
        %v1864 = vsub.f32 %v1749, %v1863
        %v1865 = vand.u32 %v1864, 4294901760
        %v1866 = vsub.f32 %v1864, %v1865
        %v1867 = vand.u32 %v1866, 4294901760
        %1868 = vmatmul.mubr.f32.gmra.mrb[0].mxu0 %v1867
        %v1869 = vpop.f32.mrb[0].mxu0
        %v1870 = vadd.f32 0.0, %v1869
        %v1871 = vpop.f32.mrb[0].mxu0
        %1872 = vdwg.mxu0
        %1873 = vmatprep.subr.mxu0 0.0
        %v1874 = vand.u32 %v508, 4294901760
        %v1875 = vsub.f32 %v508, %v1874
        %v1876 = vand.u32 %v1875, 4294901760
        %v1877 = vsub.f32 %v1875, %v1876
        %v1878 = vand.u32 %v1877, 4294901760
        %1879 = vmatpush1.msra.mxu0 %v1878
        %1880 = vmatprep.subr.mxu0 0.0
        %v1881 = vand.u32 %v509, 4294901760
        %v1882 = vsub.f32 %v509, %v1881
        %v1883 = vand.u32 %v1882, 4294901760
        %v1884 = vsub.f32 %v1882, %v1883
        %v1885 = vand.u32 %v1884, 4294901760
        %1886 = vmatpush1.msra.mxu0 %v1885
        %1887 = vmatprep.subr.mxu0 0.0
        %v1888 = vand.u32 %v510, 4294901760
        %v1889 = vsub.f32 %v510, %v1888
        %v1890 = vand.u32 %v1889, 4294901760
        %v1891 = vsub.f32 %v1889, %v1890
        %v1892 = vand.u32 %v1891, 4294901760
        %1893 = vmatpush1.msra.mxu0 %v1892
        %1894 = vmatprep.subr.mxu0 0.0
        %v1895 = vand.u32 %v511, 4294901760
        %v1896 = vsub.f32 %v511, %v1895
        %v1897 = vand.u32 %v1896, 4294901760
        %v1898 = vsub.f32 %v1896, %v1897
        %v1899 = vand.u32 %v1898, 4294901760
        %1900 = vmatpush1.msra.mxu0 %v1899
        %1901 = vmatprep.subr.mxu0 0.0
        %v1902 = vand.u32 %v512, 4294901760
        %v1903 = vsub.f32 %v512, %v1902
        %v1904 = vand.u32 %v1903, 4294901760
        %v1905 = vsub.f32 %v1903, %v1904
        %v1906 = vand.u32 %v1905, 4294901760
        %1907 = vmatpush1.msra.mxu0 %v1906
        %1908 = vmatprep.subr.mxu0 0.0
        %v1909 = vand.u32 %v513, 4294901760
        %v1910 = vsub.f32 %v513, %v1909
        %v1911 = vand.u32 %v1910, 4294901760
        %v1912 = vsub.f32 %v1910, %v1911
        %v1913 = vand.u32 %v1912, 4294901760
        %1914 = vmatpush1.msra.mxu0 %v1913
        %1915 = vmatprep.subr.mxu0 0.0
        %v1916 = vand.u32 %v514, 4294901760
        %v1917 = vsub.f32 %v514, %v1916
        %v1918 = vand.u32 %v1917, 4294901760
        %v1919 = vsub.f32 %v1917, %v1918
        %v1920 = vand.u32 %v1919, 4294901760
        %1921 = vmatpush1.msra.mxu0 %v1920
        %1922 = vmatprep.subr.mxu0 0.0
        %v1923 = vand.u32 %v515, 4294901760
        %v1924 = vsub.f32 %v515, %v1923
        %v1925 = vand.u32 %v1924, 4294901760
        %v1926 = vsub.f32 %v1924, %v1925
        %v1927 = vand.u32 %v1926, 4294901760
        %1928 = vmatpush1.msra.mxu0 %v1927
        %1929 = vmatprep.subr.mxu0 0.0
        %v1930 = vand.u32 %v516, 4294901760
        %v1931 = vsub.f32 %v516, %v1930
        %v1932 = vand.u32 %v1931, 4294901760
        %v1933 = vsub.f32 %v1931, %v1932
        %v1934 = vand.u32 %v1933, 4294901760
        %1935 = vmatpush1.msra.mxu0 %v1934
        %1936 = vmatprep.subr.mxu0 0.0
        %v1937 = vand.u32 %v517, 4294901760
        %v1938 = vsub.f32 %v517, %v1937
        %v1939 = vand.u32 %v1938, 4294901760
        %v1940 = vsub.f32 %v1938, %v1939
        %v1941 = vand.u32 %v1940, 4294901760
        %1942 = vmatpush1.msra.mxu0 %v1941
        %1943 = vmatprep.subr.mxu0 0.0
        %v1944 = vand.u32 %v518, 4294901760
        %v1945 = vsub.f32 %v518, %v1944
        %v1946 = vand.u32 %v1945, 4294901760
        %v1947 = vsub.f32 %v1945, %v1946
        %v1948 = vand.u32 %v1947, 4294901760
        %1949 = vmatpush1.msra.mxu0 %v1948
        %1950 = vmatprep.subr.mxu0 0.0
        %v1951 = vand.u32 %v519, 4294901760
        %v1952 = vsub.f32 %v519, %v1951
        %v1953 = vand.u32 %v1952, 4294901760
        %v1954 = vsub.f32 %v1952, %v1953
        %v1955 = vand.u32 %v1954, 4294901760
        %1956 = vmatpush1.msra.mxu0 %v1955
        %1957 = vmatprep.subr.mxu0 0.0
        %v1958 = vand.u32 %v520, 4294901760
        %v1959 = vsub.f32 %v520, %v1958
        %v1960 = vand.u32 %v1959, 4294901760
        %v1961 = vsub.f32 %v1959, %v1960
        %v1962 = vand.u32 %v1961, 4294901760
        %1963 = vmatpush1.msra.mxu0 %v1962
        %1964 = vmatprep.subr.mxu0 0.0
        %v1965 = vand.u32 %v521, 4294901760
        %v1966 = vsub.f32 %v521, %v1965
        %v1967 = vand.u32 %v1966, 4294901760
        %v1968 = vsub.f32 %v1966, %v1967
        %v1969 = vand.u32 %v1968, 4294901760
        %1970 = vmatpush1.msra.mxu0 %v1969
        %1971 = vmatprep.subr.mxu0 0.0
        %v1972 = vand.u32 %v522, 4294901760
        %v1973 = vsub.f32 %v522, %v1972
        %v1974 = vand.u32 %v1973, 4294901760
        %v1975 = vsub.f32 %v1973, %v1974
        %v1976 = vand.u32 %v1975, 4294901760
        %1977 = vmatpush1.msra.mxu0 %v1976
        %1978 = vmatprep.subr.mxu0 0.0
        %v1979 = vand.u32 %v523, 4294901760
        %v1980 = vsub.f32 %v523, %v1979
        %v1981 = vand.u32 %v1980, 4294901760
        %v1982 = vsub.f32 %v1980, %v1981
        %v1983 = vand.u32 %v1982, 4294901760
        %1984 = vmatpush1.msra.mxu0 %v1983
        %1985 = vmatprep.subr.mxu0 0.0
        %1986 = vmatpush1.msra.mxu0 0.0
        %1987 = vmatprep.subr.mxu0 0.0
        %1988 = vmatpush1.msra.mxu0 0.0
        %1989 = vmatprep.subr.mxu0 0.0
        %1990 = vmatpush1.msra.mxu0 0.0
        %1991 = vmatprep.subr.mxu0 0.0
        %1992 = vmatpush1.msra.mxu0 0.0
        %1993 = vmatprep.subr.mxu0 0.0
        %1994 = vmatpush1.msra.mxu0 0.0
        %1995 = vmatprep.subr.mxu0 0.0
        %1996 = vmatpush1.msra.mxu0 0.0
        %1997 = vmatprep.subr.mxu0 0.0
        %1998 = vmatpush1.msra.mxu0 0.0
        %1999 = vmatprep.subr.mxu0 0.0
        %2000 = vmatpush1.msra.mxu0 0.0
        %2001 = vmatprep.subr.mxu0 0.0
        %2002 = vmatpush1.msra.mxu0 0.0
        %2003 = vmatprep.subr.mxu0 0.0
        %2004 = vmatpush1.msra.mxu0 0.0
        %2005 = vmatprep.subr.mxu0 0.0
        %2006 = vmatpush1.msra.mxu0 0.0
        %2007 = vmatprep.subr.mxu0 0.0
        %2008 = vmatpush1.msra.mxu0 0.0
        %2009 = vmatprep.subr.mxu0 0.0
        %2010 = vmatpush1.msra.mxu0 0.0
        %2011 = vmatprep.subr.mxu0 0.0
        %2012 = vmatpush1.msra.mxu0 0.0
        %2013 = vmatprep.subr.mxu0 0.0
        %2014 = vmatpush1.msra.mxu0 0.0
        %2015 = vmatprep.subr.mxu0 0.0
        %2016 = vmatpush1.msra.mxu0 0.0
        %2017 = vmatprep.mubr.f32.mxu0 0.0
        %v2018 = vand.u32 %v1731, 4294901760
        %2019 = vmatmul.mubr.f32.gmra.mrb[0].mxu0 %v2018
        %v2020 = vpop.f32.mrb[0].mxu0
        %v2021 = vadd.f32 %v1840, %v2020
        %v2022 = vpop.f32.mrb[0].mxu0
        %2023 = vmatprep.mubr.f32.mxu0 0.0
        %v2024 = vand.u32 %v1737, 4294901760
        %2025 = vmatmul.mubr.f32.gmra.mrb[0].mxu0 %v2024
        %v2026 = vpop.f32.mrb[0].mxu0
        %v2027 = vadd.f32 %v1850, %v2026
        %v2028 = vpop.f32.mrb[0].mxu0
        %2029 = vmatprep.mubr.f32.mxu0 0.0
        %v2030 = vand.u32 %v1743, 4294901760
        %2031 = vmatmul.mubr.f32.gmra.mrb[0].mxu0 %v2030
        %v2032 = vpop.f32.mrb[0].mxu0
        %v2033 = vadd.f32 %v1860, %v2032
        %v2034 = vpop.f32.mrb[0].mxu0
        %2035 = vmatprep.mubr.f32.mxu0 0.0
        %v2036 = vand.u32 %v1749, 4294901760
        %2037 = vmatmul.mubr.f32.gmra.mrb[0].mxu0 %v2036
        %v2038 = vpop.f32.mrb[0].mxu0
        %v2039 = vadd.f32 %v1870, %v2038
        %v2040 = vpop.f32.mrb[0].mxu0
        %2041 = vdwg.mxu0
        %2042 = vmatprep.subr.mxu0 0.0
        %v2043 = vand.u32 %v508, 4294901760
        %v2044 = vsub.f32 %v508, %v2043
        %2045 = vmatpush1.msra.mxu0 %v2044
        %2046 = vmatprep.subr.mxu0 0.0
        %v2047 = vand.u32 %v509, 4294901760
        %v2048 = vsub.f32 %v509, %v2047
        %2049 = vmatpush1.msra.mxu0 %v2048
        %2050 = vmatprep.subr.mxu0 0.0
        %v2051 = vand.u32 %v510, 4294901760
        %v2052 = vsub.f32 %v510, %v2051
        %2053 = vmatpush1.msra.mxu0 %v2052
        %2054 = vmatprep.subr.mxu0 0.0
        %v2055 = vand.u32 %v511, 4294901760
        %v2056 = vsub.f32 %v511, %v2055
        %2057 = vmatpush1.msra.mxu0 %v2056
        %2058 = vmatprep.subr.mxu0 0.0
        %v2059 = vand.u32 %v512, 4294901760
        %v2060 = vsub.f32 %v512, %v2059
        %2061 = vmatpush1.msra.mxu0 %v2060
        %2062 = vmatprep.subr.mxu0 0.0
        %v2063 = vand.u32 %v513, 4294901760
        %v2064 = vsub.f32 %v513, %v2063
        %2065 = vmatpush1.msra.mxu0 %v2064
        %2066 = vmatprep.subr.mxu0 0.0
        %v2067 = vand.u32 %v514, 4294901760
        %v2068 = vsub.f32 %v514, %v2067
        %2069 = vmatpush1.msra.mxu0 %v2068
        %2070 = vmatprep.subr.mxu0 0.0
        %v2071 = vand.u32 %v515, 4294901760
        %v2072 = vsub.f32 %v515, %v2071
        %2073 = vmatpush1.msra.mxu0 %v2072
        %2074 = vmatprep.subr.mxu0 0.0
        %v2075 = vand.u32 %v516, 4294901760
        %v2076 = vsub.f32 %v516, %v2075
        %2077 = vmatpush1.msra.mxu0 %v2076
        %2078 = vmatprep.subr.mxu0 0.0
        %v2079 = vand.u32 %v517, 4294901760
        %v2080 = vsub.f32 %v517, %v2079
        %2081 = vmatpush1.msra.mxu0 %v2080
        %2082 = vmatprep.subr.mxu0 0.0
        %v2083 = vand.u32 %v518, 4294901760
        %v2084 = vsub.f32 %v518, %v2083
        %2085 = vmatpush1.msra.mxu0 %v2084
        %2086 = vmatprep.subr.mxu0 0.0
        %v2087 = vand.u32 %v519, 4294901760
        %v2088 = vsub.f32 %v519, %v2087
        %2089 = vmatpush1.msra.mxu0 %v2088
        %2090 = vmatprep.subr.mxu0 0.0
        %v2091 = vand.u32 %v520, 4294901760
        %v2092 = vsub.f32 %v520, %v2091
        %2093 = vmatpush1.msra.mxu0 %v2092
        %2094 = vmatprep.subr.mxu0 0.0
        %v2095 = vand.u32 %v521, 4294901760
        %v2096 = vsub.f32 %v521, %v2095
        %2097 = vmatpush1.msra.mxu0 %v2096
        %2098 = vmatprep.subr.mxu0 0.0
        %v2099 = vand.u32 %v522, 4294901760
        %v2100 = vsub.f32 %v522, %v2099
        %2101 = vmatpush1.msra.mxu0 %v2100
        %2102 = vmatprep.subr.mxu0 0.0
        %v2103 = vand.u32 %v523, 4294901760
        %v2104 = vsub.f32 %v523, %v2103
        %2105 = vmatpush1.msra.mxu0 %v2104
        %2106 = vmatprep.subr.mxu0 0.0
        %2107 = vmatpush1.msra.mxu0 0.0
        %2108 = vmatprep.subr.mxu0 0.0
        %2109 = vmatpush1.msra.mxu0 0.0
        %2110 = vmatprep.subr.mxu0 0.0
        %2111 = vmatpush1.msra.mxu0 0.0
        %2112 = vmatprep.subr.mxu0 0.0
        %2113 = vmatpush1.msra.mxu0 0.0
        %2114 = vmatprep.subr.mxu0 0.0
        %2115 = vmatpush1.msra.mxu0 0.0
        %2116 = vmatprep.subr.mxu0 0.0
        %2117 = vmatpush1.msra.mxu0 0.0
        %2118 = vmatprep.subr.mxu0 0.0
        %2119 = vmatpush1.msra.mxu0 0.0
        %2120 = vmatprep.subr.mxu0 0.0
        %2121 = vmatpush1.msra.mxu0 0.0
        %2122 = vmatprep.subr.mxu0 0.0
        %2123 = vmatpush1.msra.mxu0 0.0
        %2124 = vmatprep.subr.mxu0 0.0
        %2125 = vmatpush1.msra.mxu0 0.0
        %2126 = vmatprep.subr.mxu0 0.0
        %2127 = vmatpush1.msra.mxu0 0.0
        %2128 = vmatprep.subr.mxu0 0.0
        %2129 = vmatpush1.msra.mxu0 0.0
        %2130 = vmatprep.subr.mxu0 0.0
        %2131 = vmatpush1.msra.mxu0 0.0
        %2132 = vmatprep.subr.mxu0 0.0
        %2133 = vmatpush1.msra.mxu0 0.0
        %2134 = vmatprep.subr.mxu0 0.0
        %2135 = vmatpush1.msra.mxu0 0.0
        %2136 = vmatprep.subr.mxu0 0.0
        %2137 = vmatpush1.msra.mxu0 0.0
        %2138 = vmatprep.mubr.f32.mxu0 0.0
        %v2139 = vand.u32 %v1731, 4294901760
        %v2140 = vsub.f32 %v1731, %v2139
        %2141 = vmatmul.mubr.f32.gmra.mrb[0].mxu0 %v2140
        %v2142 = vpop.f32.mrb[0].mxu0
        %v2143 = vadd.f32 %v2021, %v2142
        %v2144 = vpop.f32.mrb[0].mxu0
        %2145 = vmatprep.mubr.f32.mxu0 0.0
        %v2146 = vand.u32 %v1737, 4294901760
        %v2147 = vsub.f32 %v1737, %v2146
        %2148 = vmatmul.mubr.f32.gmra.mrb[0].mxu0 %v2147
        %v2149 = vpop.f32.mrb[0].mxu0
        %v2150 = vadd.f32 %v2027, %v2149
        %v2151 = vpop.f32.mrb[0].mxu0
        %2152 = vmatprep.mubr.f32.mxu0 0.0
        %v2153 = vand.u32 %v1743, 4294901760
        %v2154 = vsub.f32 %v1743, %v2153
        %2155 = vmatmul.mubr.f32.gmra.mrb[0].mxu0 %v2154
        %v2156 = vpop.f32.mrb[0].mxu0
        %v2157 = vadd.f32 %v2033, %v2156
        %v2158 = vpop.f32.mrb[0].mxu0
        %2159 = vmatprep.mubr.f32.mxu0 0.0
        %v2160 = vand.u32 %v1749, 4294901760
        %v2161 = vsub.f32 %v1749, %v2160
        %2162 = vmatmul.mubr.f32.gmra.mrb[0].mxu0 %v2161
        %v2163 = vpop.f32.mrb[0].mxu0
        %v2164 = vadd.f32 %v2039, %v2163
        %v2165 = vpop.f32.mrb[0].mxu0
        %2166 = vdwg.mxu0
        %2167 = vmatprep.subr.mxu0 0.0
        %v2168 = vand.u32 %v508, 4294901760
        %2169 = vmatpush1.msra.mxu0 %v2168
        %2170 = vmatprep.subr.mxu0 0.0
        %v2171 = vand.u32 %v509, 4294901760
        %2172 = vmatpush1.msra.mxu0 %v2171
        %2173 = vmatprep.subr.mxu0 0.0
        %v2174 = vand.u32 %v510, 4294901760
        %2175 = vmatpush1.msra.mxu0 %v2174
        %2176 = vmatprep.subr.mxu0 0.0
        %v2177 = vand.u32 %v511, 4294901760
        %2178 = vmatpush1.msra.mxu0 %v2177
        %2179 = vmatprep.subr.mxu0 0.0
        %v2180 = vand.u32 %v512, 4294901760
        %2181 = vmatpush1.msra.mxu0 %v2180
        %2182 = vmatprep.subr.mxu0 0.0
        %v2183 = vand.u32 %v513, 4294901760
        %2184 = vmatpush1.msra.mxu0 %v2183
        %2185 = vmatprep.subr.mxu0 0.0
        %v2186 = vand.u32 %v514, 4294901760
        %2187 = vmatpush1.msra.mxu0 %v2186
        %2188 = vmatprep.subr.mxu0 0.0
        %v2189 = vand.u32 %v515, 4294901760
        %2190 = vmatpush1.msra.mxu0 %v2189
        %2191 = vmatprep.subr.mxu0 0.0
        %v2192 = vand.u32 %v516, 4294901760
        %2193 = vmatpush1.msra.mxu0 %v2192
        %2194 = vmatprep.subr.mxu0 0.0
        %v2195 = vand.u32 %v517, 4294901760
        %2196 = vmatpush1.msra.mxu0 %v2195
        %2197 = vmatprep.subr.mxu0 0.0
        %v2198 = vand.u32 %v518, 4294901760
        %2199 = vmatpush1.msra.mxu0 %v2198
        %2200 = vmatprep.subr.mxu0 0.0
        %v2201 = vand.u32 %v519, 4294901760
        %2202 = vmatpush1.msra.mxu0 %v2201
        %2203 = vmatprep.subr.mxu0 0.0
        %v2204 = vand.u32 %v520, 4294901760
        %2205 = vmatpush1.msra.mxu0 %v2204
        %2206 = vmatprep.subr.mxu0 0.0
        %v2207 = vand.u32 %v521, 4294901760
        %2208 = vmatpush1.msra.mxu0 %v2207
        %2209 = vmatprep.subr.mxu0 0.0
        %v2210 = vand.u32 %v522, 4294901760
        %2211 = vmatpush1.msra.mxu0 %v2210
        %2212 = vmatprep.subr.mxu0 0.0
        %v2213 = vand.u32 %v523, 4294901760
        %2214 = vmatpush1.msra.mxu0 %v2213
        %2215 = vmatprep.subr.mxu0 0.0
        %2216 = vmatpush1.msra.mxu0 0.0
        %2217 = vmatprep.subr.mxu0 0.0
        %2218 = vmatpush1.msra.mxu0 0.0
        %2219 = vmatprep.subr.mxu0 0.0
        %2220 = vmatpush1.msra.mxu0 0.0
        %2221 = vmatprep.subr.mxu0 0.0
        %2222 = vmatpush1.msra.mxu0 0.0
        %2223 = vmatprep.subr.mxu0 0.0
        %2224 = vmatpush1.msra.mxu0 0.0
        %2225 = vmatprep.subr.mxu0 0.0
        %2226 = vmatpush1.msra.mxu0 0.0
        %2227 = vmatprep.subr.mxu0 0.0
        %2228 = vmatpush1.msra.mxu0 0.0
        %2229 = vmatprep.subr.mxu0 0.0
        %2230 = vmatpush1.msra.mxu0 0.0
        %2231 = vmatprep.subr.mxu0 0.0
        %2232 = vmatpush1.msra.mxu0 0.0
        %2233 = vmatprep.subr.mxu0 0.0
        %2234 = vmatpush1.msra.mxu0 0.0
        %2235 = vmatprep.subr.mxu0 0.0
        %2236 = vmatpush1.msra.mxu0 0.0
        %2237 = vmatprep.subr.mxu0 0.0
        %2238 = vmatpush1.msra.mxu0 0.0
        %2239 = vmatprep.subr.mxu0 0.0
        %2240 = vmatpush1.msra.mxu0 0.0
        %2241 = vmatprep.subr.mxu0 0.0
        %2242 = vmatpush1.msra.mxu0 0.0
        %2243 = vmatprep.subr.mxu0 0.0
        %2244 = vmatpush1.msra.mxu0 0.0
        %2245 = vmatprep.subr.mxu0 0.0
        %2246 = vmatpush1.msra.mxu0 0.0
        %2247 = vmatprep.mubr.f32.mxu0 0.0
        %v2248 = vand.u32 %v1731, 4294901760
        %v2249 = vsub.f32 %v1731, %v2248
        %v2250 = vand.u32 %v2249, 4294901760
        %2251 = vmatmul.mubr.f32.gmra.mrb[0].mxu0 %v2250
        %v2252 = vpop.f32.mrb[0].mxu0
        %v2253 = vadd.f32 %v2143, %v2252
        %v2254 = vpop.f32.mrb[0].mxu0
        %2255 = vmatprep.mubr.f32.mxu0 0.0
        %v2256 = vand.u32 %v1737, 4294901760
        %v2257 = vsub.f32 %v1737, %v2256
        %v2258 = vand.u32 %v2257, 4294901760
        %2259 = vmatmul.mubr.f32.gmra.mrb[0].mxu0 %v2258
        %v2260 = vpop.f32.mrb[0].mxu0
        %v2261 = vadd.f32 %v2150, %v2260
        %v2262 = vpop.f32.mrb[0].mxu0
        %2263 = vmatprep.mubr.f32.mxu0 0.0
        %v2264 = vand.u32 %v1743, 4294901760
        %v2265 = vsub.f32 %v1743, %v2264
        %v2266 = vand.u32 %v2265, 4294901760
        %2267 = vmatmul.mubr.f32.gmra.mrb[0].mxu0 %v2266
        %v2268 = vpop.f32.mrb[0].mxu0
        %v2269 = vadd.f32 %v2157, %v2268
        %v2270 = vpop.f32.mrb[0].mxu0
        %2271 = vmatprep.mubr.f32.mxu0 0.0
        %v2272 = vand.u32 %v1749, 4294901760
        %v2273 = vsub.f32 %v1749, %v2272
        %v2274 = vand.u32 %v2273, 4294901760
        %2275 = vmatmul.mubr.f32.gmra.mrb[0].mxu0 %v2274
        %v2276 = vpop.f32.mrb[0].mxu0
        %v2277 = vadd.f32 %v2164, %v2276
        %v2278 = vpop.f32.mrb[0].mxu0
        %2279 = vdwg.mxu0
        %2280 = vmatprep.subr.mxu0 0.0
        %v2281 = vand.u32 %v508, 4294901760
        %v2282 = vsub.f32 %v508, %v2281
        %v2283 = vand.u32 %v2282, 4294901760
        %2284 = vmatpush1.msra.mxu0 %v2283
        %2285 = vmatprep.subr.mxu0 0.0
        %v2286 = vand.u32 %v509, 4294901760
        %v2287 = vsub.f32 %v509, %v2286
        %v2288 = vand.u32 %v2287, 4294901760
        %2289 = vmatpush1.msra.mxu0 %v2288
        %2290 = vmatprep.subr.mxu0 0.0
        %v2291 = vand.u32 %v510, 4294901760
        %v2292 = vsub.f32 %v510, %v2291
        %v2293 = vand.u32 %v2292, 4294901760
        %2294 = vmatpush1.msra.mxu0 %v2293
        %2295 = vmatprep.subr.mxu0 0.0
        %v2296 = vand.u32 %v511, 4294901760
        %v2297 = vsub.f32 %v511, %v2296
        %v2298 = vand.u32 %v2297, 4294901760
        %2299 = vmatpush1.msra.mxu0 %v2298
        %2300 = vmatprep.subr.mxu0 0.0
        %v2301 = vand.u32 %v512, 4294901760
        %v2302 = vsub.f32 %v512, %v2301
        %v2303 = vand.u32 %v2302, 4294901760
        %2304 = vmatpush1.msra.mxu0 %v2303
        %2305 = vmatprep.subr.mxu0 0.0
        %v2306 = vand.u32 %v513, 4294901760
        %v2307 = vsub.f32 %v513, %v2306
        %v2308 = vand.u32 %v2307, 4294901760
        %2309 = vmatpush1.msra.mxu0 %v2308
        %2310 = vmatprep.subr.mxu0 0.0
        %v2311 = vand.u32 %v514, 4294901760
        %v2312 = vsub.f32 %v514, %v2311
        %v2313 = vand.u32 %v2312, 4294901760
        %2314 = vmatpush1.msra.mxu0 %v2313
        %2315 = vmatprep.subr.mxu0 0.0
        %v2316 = vand.u32 %v515, 4294901760
        %v2317 = vsub.f32 %v515, %v2316
        %v2318 = vand.u32 %v2317, 4294901760
        %2319 = vmatpush1.msra.mxu0 %v2318
        %2320 = vmatprep.subr.mxu0 0.0
        %v2321 = vand.u32 %v516, 4294901760
        %v2322 = vsub.f32 %v516, %v2321
        %v2323 = vand.u32 %v2322, 4294901760
        %2324 = vmatpush1.msra.mxu0 %v2323
        %2325 = vmatprep.subr.mxu0 0.0
        %v2326 = vand.u32 %v517, 4294901760
        %v2327 = vsub.f32 %v517, %v2326
        %v2328 = vand.u32 %v2327, 4294901760
        %2329 = vmatpush1.msra.mxu0 %v2328
        %2330 = vmatprep.subr.mxu0 0.0
        %v2331 = vand.u32 %v518, 4294901760
        %v2332 = vsub.f32 %v518, %v2331
        %v2333 = vand.u32 %v2332, 4294901760
        %2334 = vmatpush1.msra.mxu0 %v2333
        %2335 = vmatprep.subr.mxu0 0.0
        %v2336 = vand.u32 %v519, 4294901760
        %v2337 = vsub.f32 %v519, %v2336
        %v2338 = vand.u32 %v2337, 4294901760
        %2339 = vmatpush1.msra.mxu0 %v2338
        %2340 = vmatprep.subr.mxu0 0.0
        %v2341 = vand.u32 %v520, 4294901760
        %v2342 = vsub.f32 %v520, %v2341
        %v2343 = vand.u32 %v2342, 4294901760
        %2344 = vmatpush1.msra.mxu0 %v2343
        %2345 = vmatprep.subr.mxu0 0.0
        %v2346 = vand.u32 %v521, 4294901760
        %v2347 = vsub.f32 %v521, %v2346
        %v2348 = vand.u32 %v2347, 4294901760
        %2349 = vmatpush1.msra.mxu0 %v2348
        %2350 = vmatprep.subr.mxu0 0.0
        %v2351 = vand.u32 %v522, 4294901760
        %v2352 = vsub.f32 %v522, %v2351
        %v2353 = vand.u32 %v2352, 4294901760
        %2354 = vmatpush1.msra.mxu0 %v2353
        %2355 = vmatprep.subr.mxu0 0.0
        %v2356 = vand.u32 %v523, 4294901760
        %v2357 = vsub.f32 %v523, %v2356
        %v2358 = vand.u32 %v2357, 4294901760
        %2359 = vmatpush1.msra.mxu0 %v2358
        %2360 = vmatprep.subr.mxu0 0.0
        %2361 = vmatpush1.msra.mxu0 0.0
        %2362 = vmatprep.subr.mxu0 0.0
        %2363 = vmatpush1.msra.mxu0 0.0
        %2364 = vmatprep.subr.mxu0 0.0
        %2365 = vmatpush1.msra.mxu0 0.0
        %2366 = vmatprep.subr.mxu0 0.0
        %2367 = vmatpush1.msra.mxu0 0.0
        %2368 = vmatprep.subr.mxu0 0.0
        %2369 = vmatpush1.msra.mxu0 0.0
        %2370 = vmatprep.subr.mxu0 0.0
        %2371 = vmatpush1.msra.mxu0 0.0
        %2372 = vmatprep.subr.mxu0 0.0
        %2373 = vmatpush1.msra.mxu0 0.0
        %2374 = vmatprep.subr.mxu0 0.0
        %2375 = vmatpush1.msra.mxu0 0.0
        %2376 = vmatprep.subr.mxu0 0.0
        %2377 = vmatpush1.msra.mxu0 0.0
        %2378 = vmatprep.subr.mxu0 0.0
        %2379 = vmatpush1.msra.mxu0 0.0
        %2380 = vmatprep.subr.mxu0 0.0
        %2381 = vmatpush1.msra.mxu0 0.0
        %2382 = vmatprep.subr.mxu0 0.0
        %2383 = vmatpush1.msra.mxu0 0.0
        %2384 = vmatprep.subr.mxu0 0.0
        %2385 = vmatpush1.msra.mxu0 0.0
        %2386 = vmatprep.subr.mxu0 0.0
        %2387 = vmatpush1.msra.mxu0 0.0
        %2388 = vmatprep.subr.mxu0 0.0
        %2389 = vmatpush1.msra.mxu0 0.0
        %2390 = vmatprep.subr.mxu0 0.0
        %2391 = vmatpush1.msra.mxu0 0.0
        %2392 = vmatprep.mubr.f32.mxu0 0.0
        %v2393 = vand.u32 %v1731, 4294901760
        %2394 = vmatmul.mubr.f32.gmra.mrb[0].mxu0 %v2393
        %v2395 = vpop.f32.mrb[0].mxu0
        %v2396 = vadd.f32 %v2253, %v2395
        %v2397 = vpop.f32.mrb[0].mxu0
        %2398 = vmatprep.mubr.f32.mxu0 0.0
        %v2399 = vand.u32 %v1737, 4294901760
        %2400 = vmatmul.mubr.f32.gmra.mrb[0].mxu0 %v2399
        %v2401 = vpop.f32.mrb[0].mxu0
        %v2402 = vadd.f32 %v2261, %v2401
        %v2403 = vpop.f32.mrb[0].mxu0
        %2404 = vmatprep.mubr.f32.mxu0 0.0
        %v2405 = vand.u32 %v1743, 4294901760
        %2406 = vmatmul.mubr.f32.gmra.mrb[0].mxu0 %v2405
        %v2407 = vpop.f32.mrb[0].mxu0
        %v2408 = vadd.f32 %v2269, %v2407
        %v2409 = vpop.f32.mrb[0].mxu0
        %2410 = vmatprep.mubr.f32.mxu0 0.0
        %v2411 = vand.u32 %v1749, 4294901760
        %2412 = vmatmul.mubr.f32.gmra.mrb[0].mxu0 %v2411
        %v2413 = vpop.f32.mrb[0].mxu0
        %v2414 = vadd.f32 %v2277, %v2413
        %v2415 = vpop.f32.mrb[0].mxu0
        %2416 = vdwg.mxu0
        %2417 = vmatprep.subr.mxu0 0.0
        %v2418 = vand.u32 %v508, 4294901760
        %2419 = vmatpush1.msra.mxu0 %v2418
        %2420 = vmatprep.subr.mxu0 0.0
        %v2421 = vand.u32 %v509, 4294901760
        %2422 = vmatpush1.msra.mxu0 %v2421
        %2423 = vmatprep.subr.mxu0 0.0
        %v2424 = vand.u32 %v510, 4294901760
        %2425 = vmatpush1.msra.mxu0 %v2424
        %2426 = vmatprep.subr.mxu0 0.0
        %v2427 = vand.u32 %v511, 4294901760
        %2428 = vmatpush1.msra.mxu0 %v2427
        %2429 = vmatprep.subr.mxu0 0.0
        %v2430 = vand.u32 %v512, 4294901760
        %2431 = vmatpush1.msra.mxu0 %v2430
        %2432 = vmatprep.subr.mxu0 0.0
        %v2433 = vand.u32 %v513, 4294901760
        %2434 = vmatpush1.msra.mxu0 %v2433
        %2435 = vmatprep.subr.mxu0 0.0
        %v2436 = vand.u32 %v514, 4294901760
        %2437 = vmatpush1.msra.mxu0 %v2436
        %2438 = vmatprep.subr.mxu0 0.0
        %v2439 = vand.u32 %v515, 4294901760
        %2440 = vmatpush1.msra.mxu0 %v2439
        %2441 = vmatprep.subr.mxu0 0.0
        %v2442 = vand.u32 %v516, 4294901760
        %2443 = vmatpush1.msra.mxu0 %v2442
        %2444 = vmatprep.subr.mxu0 0.0
        %v2445 = vand.u32 %v517, 4294901760
        %2446 = vmatpush1.msra.mxu0 %v2445
        %2447 = vmatprep.subr.mxu0 0.0
        %v2448 = vand.u32 %v518, 4294901760
        %2449 = vmatpush1.msra.mxu0 %v2448
        %2450 = vmatprep.subr.mxu0 0.0
        %v2451 = vand.u32 %v519, 4294901760
        %2452 = vmatpush1.msra.mxu0 %v2451
        %2453 = vmatprep.subr.mxu0 0.0
        %v2454 = vand.u32 %v520, 4294901760
        %2455 = vmatpush1.msra.mxu0 %v2454
        %2456 = vmatprep.subr.mxu0 0.0
        %v2457 = vand.u32 %v521, 4294901760
        %2458 = vmatpush1.msra.mxu0 %v2457
        %2459 = vmatprep.subr.mxu0 0.0
        %v2460 = vand.u32 %v522, 4294901760
        %2461 = vmatpush1.msra.mxu0 %v2460
        %2462 = vmatprep.subr.mxu0 0.0
        %v2463 = vand.u32 %v523, 4294901760
        %2464 = vmatpush1.msra.mxu0 %v2463
        %2465 = vmatprep.subr.mxu0 0.0
        %2466 = vmatpush1.msra.mxu0 0.0
        %2467 = vmatprep.subr.mxu0 0.0
        %2468 = vmatpush1.msra.mxu0 0.0
        %2469 = vmatprep.subr.mxu0 0.0
        %2470 = vmatpush1.msra.mxu0 0.0
        %2471 = vmatprep.subr.mxu0 0.0
        %2472 = vmatpush1.msra.mxu0 0.0
        %2473 = vmatprep.subr.mxu0 0.0
        %2474 = vmatpush1.msra.mxu0 0.0
        %2475 = vmatprep.subr.mxu0 0.0
        %2476 = vmatpush1.msra.mxu0 0.0
        %2477 = vmatprep.subr.mxu0 0.0
        %2478 = vmatpush1.msra.mxu0 0.0
        %2479 = vmatprep.subr.mxu0 0.0
        %2480 = vmatpush1.msra.mxu0 0.0
        %2481 = vmatprep.subr.mxu0 0.0
        %2482 = vmatpush1.msra.mxu0 0.0
        %2483 = vmatprep.subr.mxu0 0.0
        %2484 = vmatpush1.msra.mxu0 0.0
        %2485 = vmatprep.subr.mxu0 0.0
        %2486 = vmatpush1.msra.mxu0 0.0
        %2487 = vmatprep.subr.mxu0 0.0
        %2488 = vmatpush1.msra.mxu0 0.0
        %2489 = vmatprep.subr.mxu0 0.0
        %2490 = vmatpush1.msra.mxu0 0.0
        %2491 = vmatprep.subr.mxu0 0.0
        %2492 = vmatpush1.msra.mxu0 0.0
        %2493 = vmatprep.subr.mxu0 0.0
        %2494 = vmatpush1.msra.mxu0 0.0
        %2495 = vmatprep.subr.mxu0 0.0
        %2496 = vmatpush1.msra.mxu0 0.0
        %2497 = vmatprep.mubr.f32.mxu0 0.0
        %v2498 = vand.u32 %v1731, 4294901760
        %2499 = vmatmul.mubr.f32.gmra.mrb[0].mxu0 %v2498
        %v2500 = vpop.f32.mrb[0].mxu0
        %v2501 = vadd.f32 %v2396, %v2500
        %v2502 = vpop.f32.mrb[0].mxu0
        %2503 = vmatprep.mubr.f32.mxu0 0.0
        %v2504 = vand.u32 %v1737, 4294901760
        %2505 = vmatmul.mubr.f32.gmra.mrb[0].mxu0 %v2504
        %v2506 = vpop.f32.mrb[0].mxu0
        %v2507 = vadd.f32 %v2402, %v2506
        %v2508 = vpop.f32.mrb[0].mxu0
        %2509 = vmatprep.mubr.f32.mxu0 0.0
        %v2510 = vand.u32 %v1743, 4294901760
        %2511 = vmatmul.mubr.f32.gmra.mrb[0].mxu0 %v2510
        %v2512 = vpop.f32.mrb[0].mxu0
        %v2513 = vadd.f32 %v2408, %v2512
        %v2514 = vpop.f32.mrb[0].mxu0
        %2515 = vmatprep.mubr.f32.mxu0 0.0
        %v2516 = vand.u32 %v1749, 4294901760
        %2517 = vmatmul.mubr.f32.gmra.mrb[0].mxu0 %v2516
        %v2518 = vpop.f32.mrb[0].mxu0
        %v2519 = vadd.f32 %v2414, %v2518
        %v2520 = vpop.f32.mrb[0].mxu0
        %2521 = vdwg.mxu0
        %2522 = vmatprep.subr.mxu0 0.0
        %v2523 = vand.u32 %v498, 4294901760
        %2524 = vmatpush1.msra.mxu0 %v2523
        %2525 = vmatprep.subr.mxu0 0.0
        %v2526 = vand.u32 %v499, 4294901760
        %2527 = vmatpush1.msra.mxu0 %v2526
        %2528 = vmatprep.subr.mxu0 0.0
        %2529 = vmatpush1.msra.mxu0 0.0
        %2530 = vmatprep.subr.mxu0 0.0
        %2531 = vmatpush1.msra.mxu0 0.0
        %2532 = vmatprep.subr.mxu0 0.0
        %2533 = vmatpush1.msra.mxu0 0.0
        %2534 = vmatprep.subr.mxu0 0.0
        %2535 = vmatpush1.msra.mxu0 0.0
        %2536 = vmatprep.subr.mxu0 0.0
        %2537 = vmatpush1.msra.mxu0 0.0
        %2538 = vmatprep.subr.mxu0 0.0
        %2539 = vmatpush1.msra.mxu0 0.0
        %2540 = vmatprep.subr.mxu0 0.0
        %2541 = vmatpush1.msra.mxu0 0.0
        %2542 = vmatprep.subr.mxu0 0.0
        %2543 = vmatpush1.msra.mxu0 0.0
        %2544 = vmatprep.subr.mxu0 0.0
        %2545 = vmatpush1.msra.mxu0 0.0
        %2546 = vmatprep.subr.mxu0 0.0
        %2547 = vmatpush1.msra.mxu0 0.0
        %2548 = vmatprep.subr.mxu0 0.0
        %2549 = vmatpush1.msra.mxu0 0.0
        %2550 = vmatprep.subr.mxu0 0.0
        %2551 = vmatpush1.msra.mxu0 0.0
        %2552 = vmatprep.subr.mxu0 0.0
        %2553 = vmatpush1.msra.mxu0 0.0
        %2554 = vmatprep.subr.mxu0 0.0
        %2555 = vmatpush1.msra.mxu0 0.0
        %2556 = vmatprep.subr.mxu0 0.0
        %2557 = vmatpush1.msra.mxu0 0.0
        %2558 = vmatprep.subr.mxu0 0.0
        %2559 = vmatpush1.msra.mxu0 0.0
        %2560 = vmatprep.subr.mxu0 0.0
        %2561 = vmatpush1.msra.mxu0 0.0
        %2562 = vmatprep.subr.mxu0 0.0
        %2563 = vmatpush1.msra.mxu0 0.0
        %2564 = vmatprep.subr.mxu0 0.0
        %2565 = vmatpush1.msra.mxu0 0.0
        %2566 = vmatprep.subr.mxu0 0.0
        %2567 = vmatpush1.msra.mxu0 0.0
        %2568 = vmatprep.subr.mxu0 0.0
        %2569 = vmatpush1.msra.mxu0 0.0
        %2570 = vmatprep.subr.mxu0 0.0
        %2571 = vmatpush1.msra.mxu0 0.0
        %2572 = vmatprep.subr.mxu0 0.0
        %2573 = vmatpush1.msra.mxu0 0.0
        %2574 = vmatprep.subr.mxu0 0.0
        %2575 = vmatpush1.msra.mxu0 0.0
        %2576 = vmatprep.subr.mxu0 0.0
        %2577 = vmatpush1.msra.mxu0 0.0
        %2578 = vmatprep.subr.mxu0 0.0
        %2579 = vmatpush1.msra.mxu0 0.0
        %2580 = vmatprep.subr.mxu0 0.0
        %2581 = vmatpush1.msra.mxu0 0.0
        %2582 = vmatprep.subr.mxu0 0.0
        %2583 = vmatpush1.msra.mxu0 0.0
        %2584 = vmatprep.subr.mxu0 0.0
        %2585 = vmatpush1.msra.mxu0 0.0
        %2586 = vmatprep.subr.mxu0 0.0
        %2587 = vmatpush1.msra.mxu0 0.0
        %2588 = vmatprep.mubr.f32.mxu0 0.0
        %v2589 = vand.u32 %v526, 4294901760
        %v2590 = vsub.f32 %v526, %v2589
        %v2591 = vand.u32 %v2590, 4294901760
        %v2592 = vsub.f32 %v2590, %v2591
        %v2593 = vand.u32 %v2592, 4294901760
        %2594 = vmatmul.mubr.f32.gmra.mrb[0].mxu0 %v2593
        %v2595 = vpop.f32.mrb[0].mxu0
        %v2596 = vadd.f32 0.0, %v2595
        %v2597 = vpop.f32.mrb[0].mxu0
        %2598 = vmatprep.mubr.f32.mxu0 0.0
        %v2599 = vand.u32 %v529, 4294901760
        %v2600 = vsub.f32 %v529, %v2599
        %v2601 = vand.u32 %v2600, 4294901760
        %v2602 = vsub.f32 %v2600, %v2601
        %v2603 = vand.u32 %v2602, 4294901760
        %2604 = vmatmul.mubr.f32.gmra.mrb[0].mxu0 %v2603
        %v2605 = vpop.f32.mrb[0].mxu0
        %v2606 = vadd.f32 0.0, %v2605
        %v2607 = vpop.f32.mrb[0].mxu0
        %2608 = vmatprep.mubr.f32.mxu0 0.0
        %v2609 = vand.u32 %v532, 4294901760
        %v2610 = vsub.f32 %v532, %v2609
        %v2611 = vand.u32 %v2610, 4294901760
        %v2612 = vsub.f32 %v2610, %v2611
        %v2613 = vand.u32 %v2612, 4294901760
        %2614 = vmatmul.mubr.f32.gmra.mrb[0].mxu0 %v2613
        %v2615 = vpop.f32.mrb[0].mxu0
        %v2616 = vadd.f32 0.0, %v2615
        %v2617 = vpop.f32.mrb[0].mxu0
        %2618 = vmatprep.mubr.f32.mxu0 0.0
        %v2619 = vand.u32 %v535, 4294901760
        %v2620 = vsub.f32 %v535, %v2619
        %v2621 = vand.u32 %v2620, 4294901760
        %v2622 = vsub.f32 %v2620, %v2621
        %v2623 = vand.u32 %v2622, 4294901760
        %2624 = vmatmul.mubr.f32.gmra.mrb[0].mxu0 %v2623
        %v2625 = vpop.f32.mrb[0].mxu0
        %v2626 = vadd.f32 0.0, %v2625
        %v2627 = vpop.f32.mrb[0].mxu0
        %2628 = vdwg.mxu0
        %2629 = vmatprep.subr.mxu0 0.0
        %v2630 = vand.u32 %v498, 4294901760
        %v2631 = vsub.f32 %v498, %v2630
        %v2632 = vand.u32 %v2631, 4294901760
        %v2633 = vsub.f32 %v2631, %v2632
        %v2634 = vand.u32 %v2633, 4294901760
        %2635 = vmatpush1.msra.mxu0 %v2634
        %2636 = vmatprep.subr.mxu0 0.0
        %v2637 = vand.u32 %v499, 4294901760
        %v2638 = vsub.f32 %v499, %v2637
        %v2639 = vand.u32 %v2638, 4294901760
        %v2640 = vsub.f32 %v2638, %v2639
        %v2641 = vand.u32 %v2640, 4294901760
        %2642 = vmatpush1.msra.mxu0 %v2641
        %2643 = vmatprep.subr.mxu0 0.0
        %2644 = vmatpush1.msra.mxu0 0.0
        %2645 = vmatprep.subr.mxu0 0.0
        %2646 = vmatpush1.msra.mxu0 0.0
        %2647 = vmatprep.subr.mxu0 0.0
        %2648 = vmatpush1.msra.mxu0 0.0
        %2649 = vmatprep.subr.mxu0 0.0
        %2650 = vmatpush1.msra.mxu0 0.0
        %2651 = vmatprep.subr.mxu0 0.0
        %2652 = vmatpush1.msra.mxu0 0.0
        %2653 = vmatprep.subr.mxu0 0.0
        %2654 = vmatpush1.msra.mxu0 0.0
        %2655 = vmatprep.subr.mxu0 0.0
        %2656 = vmatpush1.msra.mxu0 0.0
        %2657 = vmatprep.subr.mxu0 0.0
        %2658 = vmatpush1.msra.mxu0 0.0
        %2659 = vmatprep.subr.mxu0 0.0
        %2660 = vmatpush1.msra.mxu0 0.0
        %2661 = vmatprep.subr.mxu0 0.0
        %2662 = vmatpush1.msra.mxu0 0.0
        %2663 = vmatprep.subr.mxu0 0.0
        %2664 = vmatpush1.msra.mxu0 0.0
        %2665 = vmatprep.subr.mxu0 0.0
        %2666 = vmatpush1.msra.mxu0 0.0
        %2667 = vmatprep.subr.mxu0 0.0
        %2668 = vmatpush1.msra.mxu0 0.0
        %2669 = vmatprep.subr.mxu0 0.0
        %2670 = vmatpush1.msra.mxu0 0.0
        %2671 = vmatprep.subr.mxu0 0.0
        %2672 = vmatpush1.msra.mxu0 0.0
        %2673 = vmatprep.subr.mxu0 0.0
        %2674 = vmatpush1.msra.mxu0 0.0
        %2675 = vmatprep.subr.mxu0 0.0
        %2676 = vmatpush1.msra.mxu0 0.0
        %2677 = vmatprep.subr.mxu0 0.0
        %2678 = vmatpush1.msra.mxu0 0.0
        %2679 = vmatprep.subr.mxu0 0.0
        %2680 = vmatpush1.msra.mxu0 0.0
        %2681 = vmatprep.subr.mxu0 0.0
        %2682 = vmatpush1.msra.mxu0 0.0
        %2683 = vmatprep.subr.mxu0 0.0
        %2684 = vmatpush1.msra.mxu0 0.0
        %2685 = vmatprep.subr.mxu0 0.0
        %2686 = vmatpush1.msra.mxu0 0.0
        %2687 = vmatprep.subr.mxu0 0.0
        %2688 = vmatpush1.msra.mxu0 0.0
        %2689 = vmatprep.subr.mxu0 0.0
        %2690 = vmatpush1.msra.mxu0 0.0
        %2691 = vmatprep.subr.mxu0 0.0
        %2692 = vmatpush1.msra.mxu0 0.0
        %2693 = vmatprep.subr.mxu0 0.0
        %2694 = vmatpush1.msra.mxu0 0.0
        %2695 = vmatprep.subr.mxu0 0.0
        %2696 = vmatpush1.msra.mxu0 0.0
        %2697 = vmatprep.subr.mxu0 0.0
        %2698 = vmatpush1.msra.mxu0 0.0
        %2699 = vmatprep.subr.mxu0 0.0
        %2700 = vmatpush1.msra.mxu0 0.0
        %2701 = vmatprep.subr.mxu0 0.0
        %2702 = vmatpush1.msra.mxu0 0.0
        %2703 = vmatprep.mubr.f32.mxu0 0.0
        %v2704 = vand.u32 %v526, 4294901760
        %2705 = vmatmul.mubr.f32.gmra.mrb[0].mxu0 %v2704
        %v2706 = vpop.f32.mrb[0].mxu0
        %v2707 = vadd.f32 %v2596, %v2706
        %v2708 = vpop.f32.mrb[0].mxu0
        %2709 = vmatprep.mubr.f32.mxu0 0.0
        %v2710 = vand.u32 %v529, 4294901760
        %2711 = vmatmul.mubr.f32.gmra.mrb[0].mxu0 %v2710
        %v2712 = vpop.f32.mrb[0].mxu0
        %v2713 = vadd.f32 %v2606, %v2712
        %v2714 = vpop.f32.mrb[0].mxu0
        %2715 = vmatprep.mubr.f32.mxu0 0.0
        %v2716 = vand.u32 %v532, 4294901760
        %2717 = vmatmul.mubr.f32.gmra.mrb[0].mxu0 %v2716
        %v2718 = vpop.f32.mrb[0].mxu0
        %v2719 = vadd.f32 %v2616, %v2718
        %v2720 = vpop.f32.mrb[0].mxu0
        %2721 = vmatprep.mubr.f32.mxu0 0.0
        %v2722 = vand.u32 %v535, 4294901760
        %2723 = vmatmul.mubr.f32.gmra.mrb[0].mxu0 %v2722
        %v2724 = vpop.f32.mrb[0].mxu0
        %v2725 = vadd.f32 %v2626, %v2724
        %v2726 = vpop.f32.mrb[0].mxu0
        %2727 = vdwg.mxu0
        %2728 = vmatprep.subr.mxu0 0.0
        %v2729 = vand.u32 %v498, 4294901760
        %v2730 = vsub.f32 %v498, %v2729
        %2731 = vmatpush1.msra.mxu0 %v2730
        %2732 = vmatprep.subr.mxu0 0.0
        %v2733 = vand.u32 %v499, 4294901760
        %v2734 = vsub.f32 %v499, %v2733
        %2735 = vmatpush1.msra.mxu0 %v2734
        %2736 = vmatprep.subr.mxu0 0.0
        %2737 = vmatpush1.msra.mxu0 0.0
        %2738 = vmatprep.subr.mxu0 0.0
        %2739 = vmatpush1.msra.mxu0 0.0
        %2740 = vmatprep.subr.mxu0 0.0
        %2741 = vmatpush1.msra.mxu0 0.0
        %2742 = vmatprep.subr.mxu0 0.0
        %2743 = vmatpush1.msra.mxu0 0.0
        %2744 = vmatprep.subr.mxu0 0.0
        %2745 = vmatpush1.msra.mxu0 0.0
        %2746 = vmatprep.subr.mxu0 0.0
        %2747 = vmatpush1.msra.mxu0 0.0
        %2748 = vmatprep.subr.mxu0 0.0
        %2749 = vmatpush1.msra.mxu0 0.0
        %2750 = vmatprep.subr.mxu0 0.0
        %2751 = vmatpush1.msra.mxu0 0.0
        %2752 = vmatprep.subr.mxu0 0.0
        %2753 = vmatpush1.msra.mxu0 0.0
        %2754 = vmatprep.subr.mxu0 0.0
        %2755 = vmatpush1.msra.mxu0 0.0
        %2756 = vmatprep.subr.mxu0 0.0
        %2757 = vmatpush1.msra.mxu0 0.0
        %2758 = vmatprep.subr.mxu0 0.0
        %2759 = vmatpush1.msra.mxu0 0.0
        %2760 = vmatprep.subr.mxu0 0.0
        %2761 = vmatpush1.msra.mxu0 0.0
        %2762 = vmatprep.subr.mxu0 0.0
        %2763 = vmatpush1.msra.mxu0 0.0
        %2764 = vmatprep.subr.mxu0 0.0
        %2765 = vmatpush1.msra.mxu0 0.0
        %2766 = vmatprep.subr.mxu0 0.0
        %2767 = vmatpush1.msra.mxu0 0.0
        %2768 = vmatprep.subr.mxu0 0.0
        %2769 = vmatpush1.msra.mxu0 0.0
        %2770 = vmatprep.subr.mxu0 0.0
        %2771 = vmatpush1.msra.mxu0 0.0
        %2772 = vmatprep.subr.mxu0 0.0
        %2773 = vmatpush1.msra.mxu0 0.0
        %2774 = vmatprep.subr.mxu0 0.0
        %2775 = vmatpush1.msra.mxu0 0.0
        %2776 = vmatprep.subr.mxu0 0.0
        %2777 = vmatpush1.msra.mxu0 0.0
        %2778 = vmatprep.subr.mxu0 0.0
        %2779 = vmatpush1.msra.mxu0 0.0
        %2780 = vmatprep.subr.mxu0 0.0
        %2781 = vmatpush1.msra.mxu0 0.0
        %2782 = vmatprep.subr.mxu0 0.0
        %2783 = vmatpush1.msra.mxu0 0.0
        %2784 = vmatprep.subr.mxu0 0.0
        %2785 = vmatpush1.msra.mxu0 0.0
        %2786 = vmatprep.subr.mxu0 0.0
        %2787 = vmatpush1.msra.mxu0 0.0
        %2788 = vmatprep.subr.mxu0 0.0
        %2789 = vmatpush1.msra.mxu0 0.0
        %2790 = vmatprep.subr.mxu0 0.0
        %2791 = vmatpush1.msra.mxu0 0.0
        %2792 = vmatprep.subr.mxu0 0.0
        %2793 = vmatpush1.msra.mxu0 0.0
        %2794 = vmatprep.subr.mxu0 0.0
        %2795 = vmatpush1.msra.mxu0 0.0
        %2796 = vmatprep.mubr.f32.mxu0 0.0
        %v2797 = vand.u32 %v526, 4294901760
        %v2798 = vsub.f32 %v526, %v2797
        %2799 = vmatmul.mubr.f32.gmra.mrb[0].mxu0 %v2798
        %v2800 = vpop.f32.mrb[0].mxu0
        %v2801 = vadd.f32 %v2707, %v2800
        %v2802 = vpop.f32.mrb[0].mxu0
        %2803 = vmatprep.mubr.f32.mxu0 0.0
        %v2804 = vand.u32 %v529, 4294901760
        %v2805 = vsub.f32 %v529, %v2804
        %2806 = vmatmul.mubr.f32.gmra.mrb[0].mxu0 %v2805
        %v2807 = vpop.f32.mrb[0].mxu0
        %v2808 = vadd.f32 %v2713, %v2807
        %v2809 = vpop.f32.mrb[0].mxu0
        %2810 = vmatprep.mubr.f32.mxu0 0.0
        %v2811 = vand.u32 %v532, 4294901760
        %v2812 = vsub.f32 %v532, %v2811
        %2813 = vmatmul.mubr.f32.gmra.mrb[0].mxu0 %v2812
        %v2814 = vpop.f32.mrb[0].mxu0
        %v2815 = vadd.f32 %v2719, %v2814
        %v2816 = vpop.f32.mrb[0].mxu0
        %2817 = vmatprep.mubr.f32.mxu0 0.0
        %v2818 = vand.u32 %v535, 4294901760
        %v2819 = vsub.f32 %v535, %v2818
        %2820 = vmatmul.mubr.f32.gmra.mrb[0].mxu0 %v2819
        %v2821 = vpop.f32.mrb[0].mxu0
        %v2822 = vadd.f32 %v2725, %v2821
        %v2823 = vpop.f32.mrb[0].mxu0
        %2824 = vdwg.mxu0
        %2825 = vmatprep.subr.mxu0 0.0
        %v2826 = vand.u32 %v498, 4294901760
        %2827 = vmatpush1.msra.mxu0 %v2826
        %2828 = vmatprep.subr.mxu0 0.0
        %v2829 = vand.u32 %v499, 4294901760
        %2830 = vmatpush1.msra.mxu0 %v2829
        %2831 = vmatprep.subr.mxu0 0.0
        %2832 = vmatpush1.msra.mxu0 0.0
        %2833 = vmatprep.subr.mxu0 0.0
        %2834 = vmatpush1.msra.mxu0 0.0
        %2835 = vmatprep.subr.mxu0 0.0
        %2836 = vmatpush1.msra.mxu0 0.0
        %2837 = vmatprep.subr.mxu0 0.0
        %2838 = vmatpush1.msra.mxu0 0.0
        %2839 = vmatprep.subr.mxu0 0.0
        %2840 = vmatpush1.msra.mxu0 0.0
        %2841 = vmatprep.subr.mxu0 0.0
        %2842 = vmatpush1.msra.mxu0 0.0
        %2843 = vmatprep.subr.mxu0 0.0
        %2844 = vmatpush1.msra.mxu0 0.0
        %2845 = vmatprep.subr.mxu0 0.0
        %2846 = vmatpush1.msra.mxu0 0.0
        %2847 = vmatprep.subr.mxu0 0.0
        %2848 = vmatpush1.msra.mxu0 0.0
        %2849 = vmatprep.subr.mxu0 0.0
        %2850 = vmatpush1.msra.mxu0 0.0
        %2851 = vmatprep.subr.mxu0 0.0
        %2852 = vmatpush1.msra.mxu0 0.0
        %2853 = vmatprep.subr.mxu0 0.0
        %2854 = vmatpush1.msra.mxu0 0.0
        %2855 = vmatprep.subr.mxu0 0.0
        %2856 = vmatpush1.msra.mxu0 0.0
        %2857 = vmatprep.subr.mxu0 0.0
        %2858 = vmatpush1.msra.mxu0 0.0
        %2859 = vmatprep.subr.mxu0 0.0
        %2860 = vmatpush1.msra.mxu0 0.0
        %2861 = vmatprep.subr.mxu0 0.0
        %2862 = vmatpush1.msra.mxu0 0.0
        %2863 = vmatprep.subr.mxu0 0.0
        %2864 = vmatpush1.msra.mxu0 0.0
        %2865 = vmatprep.subr.mxu0 0.0
        %2866 = vmatpush1.msra.mxu0 0.0
        %2867 = vmatprep.subr.mxu0 0.0
        %2868 = vmatpush1.msra.mxu0 0.0
        %2869 = vmatprep.subr.mxu0 0.0
        %2870 = vmatpush1.msra.mxu0 0.0
        %2871 = vmatprep.subr.mxu0 0.0
        %2872 = vmatpush1.msra.mxu0 0.0
        %2873 = vmatprep.subr.mxu0 0.0
        %2874 = vmatpush1.msra.mxu0 0.0
        %2875 = vmatprep.subr.mxu0 0.0
        %2876 = vmatpush1.msra.mxu0 0.0
        %2877 = vmatprep.subr.mxu0 0.0
        %2878 = vmatpush1.msra.mxu0 0.0
        %2879 = vmatprep.subr.mxu0 0.0
        %2880 = vmatpush1.msra.mxu0 0.0
        %2881 = vmatprep.subr.mxu0 0.0
        %2882 = vmatpush1.msra.mxu0 0.0
        %2883 = vmatprep.subr.mxu0 0.0
        %2884 = vmatpush1.msra.mxu0 0.0
        %2885 = vmatprep.subr.mxu0 0.0
        %2886 = vmatpush1.msra.mxu0 0.0
        %2887 = vmatprep.subr.mxu0 0.0
        %2888 = vmatpush1.msra.mxu0 0.0
        %2889 = vmatprep.subr.mxu0 0.0
        %2890 = vmatpush1.msra.mxu0 0.0
        %2891 = vmatprep.mubr.f32.mxu0 0.0
        %v2892 = vand.u32 %v526, 4294901760
        %v2893 = vsub.f32 %v526, %v2892
        %v2894 = vand.u32 %v2893, 4294901760
        %2895 = vmatmul.mubr.f32.gmra.mrb[0].mxu0 %v2894
        %v2896 = vpop.f32.mrb[0].mxu0
        %v2897 = vadd.f32 %v2801, %v2896
        %v2898 = vpop.f32.mrb[0].mxu0
        %2899 = vmatprep.mubr.f32.mxu0 0.0
        %v2900 = vand.u32 %v529, 4294901760
        %v2901 = vsub.f32 %v529, %v2900
        %v2902 = vand.u32 %v2901, 4294901760
        %2903 = vmatmul.mubr.f32.gmra.mrb[0].mxu0 %v2902
        %v2904 = vpop.f32.mrb[0].mxu0
        %v2905 = vadd.f32 %v2808, %v2904
        %v2906 = vpop.f32.mrb[0].mxu0
        %2907 = vmatprep.mubr.f32.mxu0 0.0
        %v2908 = vand.u32 %v532, 4294901760
        %v2909 = vsub.f32 %v532, %v2908
        %v2910 = vand.u32 %v2909, 4294901760
        %2911 = vmatmul.mubr.f32.gmra.mrb[0].mxu0 %v2910
        %v2912 = vpop.f32.mrb[0].mxu0
        %v2913 = vadd.f32 %v2815, %v2912
        %v2914 = vpop.f32.mrb[0].mxu0
        %2915 = vmatprep.mubr.f32.mxu0 0.0
        %v2916 = vand.u32 %v535, 4294901760
        %v2917 = vsub.f32 %v535, %v2916
        %v2918 = vand.u32 %v2917, 4294901760
        %2919 = vmatmul.mubr.f32.gmra.mrb[0].mxu0 %v2918
        %v2920 = vpop.f32.mrb[0].mxu0
        %v2921 = vadd.f32 %v2822, %v2920
        %v2922 = vpop.f32.mrb[0].mxu0
        %2923 = vdwg.mxu0
        %2924 = vmatprep.subr.mxu0 0.0
        %v2925 = vand.u32 %v498, 4294901760
        %v2926 = vsub.f32 %v498, %v2925
        %v2927 = vand.u32 %v2926, 4294901760
        %2928 = vmatpush1.msra.mxu0 %v2927
        %2929 = vmatprep.subr.mxu0 0.0
        %v2930 = vand.u32 %v499, 4294901760
        %v2931 = vsub.f32 %v499, %v2930
        %v2932 = vand.u32 %v2931, 4294901760
        %2933 = vmatpush1.msra.mxu0 %v2932
        %2934 = vmatprep.subr.mxu0 0.0
        %2935 = vmatpush1.msra.mxu0 0.0
        %2936 = vmatprep.subr.mxu0 0.0
        %2937 = vmatpush1.msra.mxu0 0.0
        %2938 = vmatprep.subr.mxu0 0.0
        %2939 = vmatpush1.msra.mxu0 0.0
        %2940 = vmatprep.subr.mxu0 0.0
        %2941 = vmatpush1.msra.mxu0 0.0
        %2942 = vmatprep.subr.mxu0 0.0
        %2943 = vmatpush1.msra.mxu0 0.0
        %2944 = vmatprep.subr.mxu0 0.0
        %2945 = vmatpush1.msra.mxu0 0.0
        %2946 = vmatprep.subr.mxu0 0.0
        %2947 = vmatpush1.msra.mxu0 0.0
        %2948 = vmatprep.subr.mxu0 0.0
        %2949 = vmatpush1.msra.mxu0 0.0
        %2950 = vmatprep.subr.mxu0 0.0
        %2951 = vmatpush1.msra.mxu0 0.0
        %2952 = vmatprep.subr.mxu0 0.0
        %2953 = vmatpush1.msra.mxu0 0.0
        %2954 = vmatprep.subr.mxu0 0.0
        %2955 = vmatpush1.msra.mxu0 0.0
        %2956 = vmatprep.subr.mxu0 0.0
        %2957 = vmatpush1.msra.mxu0 0.0
        %2958 = vmatprep.subr.mxu0 0.0
        %2959 = vmatpush1.msra.mxu0 0.0
        %2960 = vmatprep.subr.mxu0 0.0
        %2961 = vmatpush1.msra.mxu0 0.0
        %2962 = vmatprep.subr.mxu0 0.0
        %2963 = vmatpush1.msra.mxu0 0.0
        %2964 = vmatprep.subr.mxu0 0.0
        %2965 = vmatpush1.msra.mxu0 0.0
        %2966 = vmatprep.subr.mxu0 0.0
        %2967 = vmatpush1.msra.mxu0 0.0
        %2968 = vmatprep.subr.mxu0 0.0
        %2969 = vmatpush1.msra.mxu0 0.0
        %2970 = vmatprep.subr.mxu0 0.0
        %2971 = vmatpush1.msra.mxu0 0.0
        %2972 = vmatprep.subr.mxu0 0.0
        %2973 = vmatpush1.msra.mxu0 0.0
        %2974 = vmatprep.subr.mxu0 0.0
        %2975 = vmatpush1.msra.mxu0 0.0
        %2976 = vmatprep.subr.mxu0 0.0
        %2977 = vmatpush1.msra.mxu0 0.0
        %2978 = vmatprep.subr.mxu0 0.0
        %2979 = vmatpush1.msra.mxu0 0.0
        %2980 = vmatprep.subr.mxu0 0.0
        %2981 = vmatpush1.msra.mxu0 0.0
        %2982 = vmatprep.subr.mxu0 0.0
        %2983 = vmatpush1.msra.mxu0 0.0
        %2984 = vmatprep.subr.mxu0 0.0
        %2985 = vmatpush1.msra.mxu0 0.0
        %2986 = vmatprep.subr.mxu0 0.0
        %2987 = vmatpush1.msra.mxu0 0.0
        %2988 = vmatprep.subr.mxu0 0.0
        %2989 = vmatpush1.msra.mxu0 0.0
        %2990 = vmatprep.subr.mxu0 0.0
        %2991 = vmatpush1.msra.mxu0 0.0
        %2992 = vmatprep.subr.mxu0 0.0
        %2993 = vmatpush1.msra.mxu0 0.0
        %2994 = vmatprep.mubr.f32.mxu0 0.0
        %v2995 = vand.u32 %v526, 4294901760
        %2996 = vmatmul.mubr.f32.gmra.mrb[0].mxu0 %v2995
        %v2997 = vpop.f32.mrb[0].mxu0
        %v2998 = vadd.f32 %v2897, %v2997
        %v2999 = vpop.f32.mrb[0].mxu0
        %3000 = vmatprep.mubr.f32.mxu0 0.0
        %v3001 = vand.u32 %v529, 4294901760
        %3002 = vmatmul.mubr.f32.gmra.mrb[0].mxu0 %v3001
        %v3003 = vpop.f32.mrb[0].mxu0
        %v3004 = vadd.f32 %v2905, %v3003
        %v3005 = vpop.f32.mrb[0].mxu0
        %3006 = vmatprep.mubr.f32.mxu0 0.0
        %v3007 = vand.u32 %v532, 4294901760
        %3008 = vmatmul.mubr.f32.gmra.mrb[0].mxu0 %v3007
        %v3009 = vpop.f32.mrb[0].mxu0
        %v3010 = vadd.f32 %v2913, %v3009
        %v3011 = vpop.f32.mrb[0].mxu0
        %3012 = vmatprep.mubr.f32.mxu0 0.0
        %v3013 = vand.u32 %v535, 4294901760
        %3014 = vmatmul.mubr.f32.gmra.mrb[0].mxu0 %v3013
        %v3015 = vpop.f32.mrb[0].mxu0
        %v3016 = vadd.f32 %v2921, %v3015
        %v3017 = vpop.f32.mrb[0].mxu0
        %3018 = vdwg.mxu0
        %3019 = vmatprep.subr.mxu0 0.0
        %v3020 = vand.u32 %v498, 4294901760
        %3021 = vmatpush1.msra.mxu0 %v3020
        %3022 = vmatprep.subr.mxu0 0.0
        %v3023 = vand.u32 %v499, 4294901760
        %3024 = vmatpush1.msra.mxu0 %v3023
        %3025 = vmatprep.subr.mxu0 0.0
        %3026 = vmatpush1.msra.mxu0 0.0
        %3027 = vmatprep.subr.mxu0 0.0
        %3028 = vmatpush1.msra.mxu0 0.0
        %3029 = vmatprep.subr.mxu0 0.0
        %3030 = vmatpush1.msra.mxu0 0.0
        %3031 = vmatprep.subr.mxu0 0.0
        %3032 = vmatpush1.msra.mxu0 0.0
        %3033 = vmatprep.subr.mxu0 0.0
        %3034 = vmatpush1.msra.mxu0 0.0
        %3035 = vmatprep.subr.mxu0 0.0
        %3036 = vmatpush1.msra.mxu0 0.0
        %3037 = vmatprep.subr.mxu0 0.0
        %3038 = vmatpush1.msra.mxu0 0.0
        %3039 = vmatprep.subr.mxu0 0.0
        %3040 = vmatpush1.msra.mxu0 0.0
        %3041 = vmatprep.subr.mxu0 0.0
        %3042 = vmatpush1.msra.mxu0 0.0
        %3043 = vmatprep.subr.mxu0 0.0
        %3044 = vmatpush1.msra.mxu0 0.0
        %3045 = vmatprep.subr.mxu0 0.0
        %3046 = vmatpush1.msra.mxu0 0.0
        %3047 = vmatprep.subr.mxu0 0.0
        %3048 = vmatpush1.msra.mxu0 0.0
        %3049 = vmatprep.subr.mxu0 0.0
        %3050 = vmatpush1.msra.mxu0 0.0
        %3051 = vmatprep.subr.mxu0 0.0
        %3052 = vmatpush1.msra.mxu0 0.0
        %3053 = vmatprep.subr.mxu0 0.0
        %3054 = vmatpush1.msra.mxu0 0.0
        %3055 = vmatprep.subr.mxu0 0.0
        %3056 = vmatpush1.msra.mxu0 0.0
        %3057 = vmatprep.subr.mxu0 0.0
        %3058 = vmatpush1.msra.mxu0 0.0
        %3059 = vmatprep.subr.mxu0 0.0
        %3060 = vmatpush1.msra.mxu0 0.0
        %3061 = vmatprep.subr.mxu0 0.0
        %3062 = vmatpush1.msra.mxu0 0.0
        %3063 = vmatprep.subr.mxu0 0.0
        %3064 = vmatpush1.msra.mxu0 0.0
        %3065 = vmatprep.subr.mxu0 0.0
        %3066 = vmatpush1.msra.mxu0 0.0
        %3067 = vmatprep.subr.mxu0 0.0
        %3068 = vmatpush1.msra.mxu0 0.0
        %3069 = vmatprep.subr.mxu0 0.0
        %3070 = vmatpush1.msra.mxu0 0.0
        %3071 = vmatprep.subr.mxu0 0.0
        %3072 = vmatpush1.msra.mxu0 0.0
        %3073 = vmatprep.subr.mxu0 0.0
        %3074 = vmatpush1.msra.mxu0 0.0
        %3075 = vmatprep.subr.mxu0 0.0
        %3076 = vmatpush1.msra.mxu0 0.0
        %3077 = vmatprep.subr.mxu0 0.0
        %3078 = vmatpush1.msra.mxu0 0.0
        %3079 = vmatprep.subr.mxu0 0.0
        %3080 = vmatpush1.msra.mxu0 0.0
        %3081 = vmatprep.subr.mxu0 0.0
        %3082 = vmatpush1.msra.mxu0 0.0
        %3083 = vmatprep.subr.mxu0 0.0
        %3084 = vmatpush1.msra.mxu0 0.0
        %3085 = vmatprep.mubr.f32.mxu0 0.0
        %v3086 = vand.u32 %v526, 4294901760
        %3087 = vmatmul.mubr.f32.gmra.mrb[0].mxu0 %v3086
        %v3088 = vpop.f32.mrb[0].mxu0
        %v3089 = vadd.f32 %v2998, %v3088
        %v3090 = vpop.f32.mrb[0].mxu0
        %3091 = vmatprep.mubr.f32.mxu0 0.0
        %v3092 = vand.u32 %v529, 4294901760
        %3093 = vmatmul.mubr.f32.gmra.mrb[0].mxu0 %v3092
        %v3094 = vpop.f32.mrb[0].mxu0
        %v3095 = vadd.f32 %v3004, %v3094
        %v3096 = vpop.f32.mrb[0].mxu0
        %3097 = vmatprep.mubr.f32.mxu0 0.0
        %v3098 = vand.u32 %v532, 4294901760
        %3099 = vmatmul.mubr.f32.gmra.mrb[0].mxu0 %v3098
        %v3100 = vpop.f32.mrb[0].mxu0
        %v3101 = vadd.f32 %v3010, %v3100
        %v3102 = vpop.f32.mrb[0].mxu0
        %3103 = vmatprep.mubr.f32.mxu0 0.0
        %v3104 = vand.u32 %v535, 4294901760
        %3105 = vmatmul.mubr.f32.gmra.mrb[0].mxu0 %v3104
        %v3106 = vpop.f32.mrb[0].mxu0
        %v3107 = vadd.f32 %v3016, %v3106
        %v3108 = vpop.f32.mrb[0].mxu0
        %3109 = vdwg.mxu0
        %3110 = vmatprep.subr.mxu0 0.0
        %v3111 = vand.u32 %v488, 4294901760
        %3112 = vmatpush1.msra.mxu0 %v3111
        %3113 = vmatprep.subr.mxu0 0.0
        %v3114 = vand.u32 %v489, 4294901760
        %3115 = vmatpush1.msra.mxu0 %v3114
        %3116 = vmatprep.subr.mxu0 0.0
        %v3117 = vand.u32 %v490, 4294901760
        %3118 = vmatpush1.msra.mxu0 %v3117
        %3119 = vmatprep.subr.mxu0 0.0
        %v3120 = vand.u32 %v491, 4294901760
        %3121 = vmatpush1.msra.mxu0 %v3120
        %3122 = vmatprep.subr.mxu0 0.0
        %3123 = vmatpush1.msra.mxu0 0.0
        %3124 = vmatprep.subr.mxu0 0.0
        %3125 = vmatpush1.msra.mxu0 0.0
        %3126 = vmatprep.subr.mxu0 0.0
        %3127 = vmatpush1.msra.mxu0 0.0
        %3128 = vmatprep.subr.mxu0 0.0
        %3129 = vmatpush1.msra.mxu0 0.0
        %3130 = vmatprep.subr.mxu0 0.0
        %3131 = vmatpush1.msra.mxu0 0.0
        %3132 = vmatprep.subr.mxu0 0.0
        %3133 = vmatpush1.msra.mxu0 0.0
        %3134 = vmatprep.subr.mxu0 0.0
        %3135 = vmatpush1.msra.mxu0 0.0
        %3136 = vmatprep.subr.mxu0 0.0
        %3137 = vmatpush1.msra.mxu0 0.0
        %3138 = vmatprep.subr.mxu0 0.0
        %3139 = vmatpush1.msra.mxu0 0.0
        %3140 = vmatprep.subr.mxu0 0.0
        %3141 = vmatpush1.msra.mxu0 0.0
        %3142 = vmatprep.subr.mxu0 0.0
        %3143 = vmatpush1.msra.mxu0 0.0
        %3144 = vmatprep.subr.mxu0 0.0
        %3145 = vmatpush1.msra.mxu0 0.0
        %3146 = vmatprep.subr.mxu0 0.0
        %3147 = vmatpush1.msra.mxu0 0.0
        %3148 = vmatprep.subr.mxu0 0.0
        %3149 = vmatpush1.msra.mxu0 0.0
        %3150 = vmatprep.subr.mxu0 0.0
        %3151 = vmatpush1.msra.mxu0 0.0
        %3152 = vmatprep.subr.mxu0 0.0
        %3153 = vmatpush1.msra.mxu0 0.0
        %3154 = vmatprep.subr.mxu0 0.0
        %3155 = vmatpush1.msra.mxu0 0.0
        %3156 = vmatprep.subr.mxu0 0.0
        %3157 = vmatpush1.msra.mxu0 0.0
        %3158 = vmatprep.subr.mxu0 0.0
        %3159 = vmatpush1.msra.mxu0 0.0
        %3160 = vmatprep.subr.mxu0 0.0
        %3161 = vmatpush1.msra.mxu0 0.0
        %3162 = vmatprep.subr.mxu0 0.0
        %3163 = vmatpush1.msra.mxu0 0.0
        %3164 = vmatprep.subr.mxu0 0.0
        %3165 = vmatpush1.msra.mxu0 0.0
        %3166 = vmatprep.subr.mxu0 0.0
        %3167 = vmatpush1.msra.mxu0 0.0
        %3168 = vmatprep.subr.mxu0 0.0
        %3169 = vmatpush1.msra.mxu0 0.0
        %3170 = vmatprep.subr.mxu0 0.0
        %3171 = vmatpush1.msra.mxu0 0.0
        %3172 = vmatprep.subr.mxu0 0.0
        %3173 = vmatpush1.msra.mxu0 0.0
        %3174 = vmatprep.subr.mxu0 0.0
        %3175 = vmatpush1.msra.mxu0 0.0
        %3176 = vmatprep.subr.mxu0 0.0
        %3177 = vmatpush1.msra.mxu0 0.0
        %3178 = vmatprep.mubr.f32.mxu0 0.0
        %v3179 = vand.u32 %v1127, 4294901760
        %v3180 = vsub.f32 %v1127, %v3179
        %v3181 = vand.u32 %v3180, 4294901760
        %v3182 = vsub.f32 %v3180, %v3181
        %v3183 = vand.u32 %v3182, 4294901760
        %3184 = vmatmul.mubr.f32.gmra.mrb[0].mxu0 %v3183
        %v3185 = vpop.f32.mrb[0].mxu0
        %v3186 = vadd.f32 %v3089, %v3185
        %v3187 = vpop.f32.mrb[0].mxu0
        %3188 = vmatprep.mubr.f32.mxu0 0.0
        %v3189 = vand.u32 %v1130, 4294901760
        %v3190 = vsub.f32 %v1130, %v3189
        %v3191 = vand.u32 %v3190, 4294901760
        %v3192 = vsub.f32 %v3190, %v3191
        %v3193 = vand.u32 %v3192, 4294901760
        %3194 = vmatmul.mubr.f32.gmra.mrb[0].mxu0 %v3193
        %v3195 = vpop.f32.mrb[0].mxu0
        %v3196 = vadd.f32 %v3095, %v3195
        %v3197 = vpop.f32.mrb[0].mxu0
        %3198 = vmatprep.mubr.f32.mxu0 0.0
        %v3199 = vand.u32 %v1133, 4294901760
        %v3200 = vsub.f32 %v1133, %v3199
        %v3201 = vand.u32 %v3200, 4294901760
        %v3202 = vsub.f32 %v3200, %v3201
        %v3203 = vand.u32 %v3202, 4294901760
        %3204 = vmatmul.mubr.f32.gmra.mrb[0].mxu0 %v3203
        %v3205 = vpop.f32.mrb[0].mxu0
        %v3206 = vadd.f32 %v3101, %v3205
        %v3207 = vpop.f32.mrb[0].mxu0
        %3208 = vmatprep.mubr.f32.mxu0 0.0
        %v3209 = vand.u32 %v1136, 4294901760
        %v3210 = vsub.f32 %v1136, %v3209
        %v3211 = vand.u32 %v3210, 4294901760
        %v3212 = vsub.f32 %v3210, %v3211
        %v3213 = vand.u32 %v3212, 4294901760
        %3214 = vmatmul.mubr.f32.gmra.mrb[0].mxu0 %v3213
        %v3215 = vpop.f32.mrb[0].mxu0
        %v3216 = vadd.f32 %v3107, %v3215
        %v3217 = vpop.f32.mrb[0].mxu0
        %3218 = vdwg.mxu0
        %3219 = vmatprep.subr.mxu0 0.0
        %v3220 = vand.u32 %v488, 4294901760
        %v3221 = vsub.f32 %v488, %v3220
        %v3222 = vand.u32 %v3221, 4294901760
        %v3223 = vsub.f32 %v3221, %v3222
        %v3224 = vand.u32 %v3223, 4294901760
        %3225 = vmatpush1.msra.mxu0 %v3224
        %3226 = vmatprep.subr.mxu0 0.0
        %v3227 = vand.u32 %v489, 4294901760
        %v3228 = vsub.f32 %v489, %v3227
        %v3229 = vand.u32 %v3228, 4294901760
        %v3230 = vsub.f32 %v3228, %v3229
        %v3231 = vand.u32 %v3230, 4294901760
        %3232 = vmatpush1.msra.mxu0 %v3231
        %3233 = vmatprep.subr.mxu0 0.0
        %v3234 = vand.u32 %v490, 4294901760
        %v3235 = vsub.f32 %v490, %v3234
        %v3236 = vand.u32 %v3235, 4294901760
        %v3237 = vsub.f32 %v3235, %v3236
        %v3238 = vand.u32 %v3237, 4294901760
        %3239 = vmatpush1.msra.mxu0 %v3238
        %3240 = vmatprep.subr.mxu0 0.0
        %v3241 = vand.u32 %v491, 4294901760
        %v3242 = vsub.f32 %v491, %v3241
        %v3243 = vand.u32 %v3242, 4294901760
        %v3244 = vsub.f32 %v3242, %v3243
        %v3245 = vand.u32 %v3244, 4294901760
        %3246 = vmatpush1.msra.mxu0 %v3245
        %3247 = vmatprep.subr.mxu0 0.0
        %3248 = vmatpush1.msra.mxu0 0.0
        %3249 = vmatprep.subr.mxu0 0.0
        %3250 = vmatpush1.msra.mxu0 0.0
        %3251 = vmatprep.subr.mxu0 0.0
        %3252 = vmatpush1.msra.mxu0 0.0
        %3253 = vmatprep.subr.mxu0 0.0
        %3254 = vmatpush1.msra.mxu0 0.0
        %3255 = vmatprep.subr.mxu0 0.0
        %3256 = vmatpush1.msra.mxu0 0.0
        %3257 = vmatprep.subr.mxu0 0.0
        %3258 = vmatpush1.msra.mxu0 0.0
        %3259 = vmatprep.subr.mxu0 0.0
        %3260 = vmatpush1.msra.mxu0 0.0
        %3261 = vmatprep.subr.mxu0 0.0
        %3262 = vmatpush1.msra.mxu0 0.0
        %3263 = vmatprep.subr.mxu0 0.0
        %3264 = vmatpush1.msra.mxu0 0.0
        %3265 = vmatprep.subr.mxu0 0.0
        %3266 = vmatpush1.msra.mxu0 0.0
        %3267 = vmatprep.subr.mxu0 0.0
        %3268 = vmatpush1.msra.mxu0 0.0
        %3269 = vmatprep.subr.mxu0 0.0
        %3270 = vmatpush1.msra.mxu0 0.0
        %3271 = vmatprep.subr.mxu0 0.0
        %3272 = vmatpush1.msra.mxu0 0.0
        %3273 = vmatprep.subr.mxu0 0.0
        %3274 = vmatpush1.msra.mxu0 0.0
        %3275 = vmatprep.subr.mxu0 0.0
        %3276 = vmatpush1.msra.mxu0 0.0
        %3277 = vmatprep.subr.mxu0 0.0
        %3278 = vmatpush1.msra.mxu0 0.0
        %3279 = vmatprep.subr.mxu0 0.0
        %3280 = vmatpush1.msra.mxu0 0.0
        %3281 = vmatprep.subr.mxu0 0.0
        %3282 = vmatpush1.msra.mxu0 0.0
        %3283 = vmatprep.subr.mxu0 0.0
        %3284 = vmatpush1.msra.mxu0 0.0
        %3285 = vmatprep.subr.mxu0 0.0
        %3286 = vmatpush1.msra.mxu0 0.0
        %3287 = vmatprep.subr.mxu0 0.0
        %3288 = vmatpush1.msra.mxu0 0.0
        %3289 = vmatprep.subr.mxu0 0.0
        %3290 = vmatpush1.msra.mxu0 0.0
        %3291 = vmatprep.subr.mxu0 0.0
        %3292 = vmatpush1.msra.mxu0 0.0
        %3293 = vmatprep.subr.mxu0 0.0
        %3294 = vmatpush1.msra.mxu0 0.0
        %3295 = vmatprep.subr.mxu0 0.0
        %3296 = vmatpush1.msra.mxu0 0.0
        %3297 = vmatprep.subr.mxu0 0.0
        %3298 = vmatpush1.msra.mxu0 0.0
        %3299 = vmatprep.subr.mxu0 0.0
        %3300 = vmatpush1.msra.mxu0 0.0
        %3301 = vmatprep.subr.mxu0 0.0
        %3302 = vmatpush1.msra.mxu0 0.0
        %3303 = vmatprep.mubr.f32.mxu0 0.0
        %v3304 = vand.u32 %v1127, 4294901760
        %3305 = vmatmul.mubr.f32.gmra.mrb[0].mxu0 %v3304
        %v3306 = vpop.f32.mrb[0].mxu0
        %v3307 = vadd.f32 %v3186, %v3306
        %v3308 = vpop.f32.mrb[0].mxu0
        %3309 = vmatprep.mubr.f32.mxu0 0.0
        %v3310 = vand.u32 %v1130, 4294901760
        %3311 = vmatmul.mubr.f32.gmra.mrb[0].mxu0 %v3310
        %v3312 = vpop.f32.mrb[0].mxu0
        %v3313 = vadd.f32 %v3196, %v3312
        %v3314 = vpop.f32.mrb[0].mxu0
        %3315 = vmatprep.mubr.f32.mxu0 0.0
        %v3316 = vand.u32 %v1133, 4294901760
        %3317 = vmatmul.mubr.f32.gmra.mrb[0].mxu0 %v3316
        %v3318 = vpop.f32.mrb[0].mxu0
        %v3319 = vadd.f32 %v3206, %v3318
        %v3320 = vpop.f32.mrb[0].mxu0
        %3321 = vmatprep.mubr.f32.mxu0 0.0
        %v3322 = vand.u32 %v1136, 4294901760
        %3323 = vmatmul.mubr.f32.gmra.mrb[0].mxu0 %v3322
        %v3324 = vpop.f32.mrb[0].mxu0
        %v3325 = vadd.f32 %v3216, %v3324
        %v3326 = vpop.f32.mrb[0].mxu0
        %3327 = vdwg.mxu0
        %3328 = vmatprep.subr.mxu0 0.0
        %v3329 = vand.u32 %v488, 4294901760
        %v3330 = vsub.f32 %v488, %v3329
        %3331 = vmatpush1.msra.mxu0 %v3330
        %3332 = vmatprep.subr.mxu0 0.0
        %v3333 = vand.u32 %v489, 4294901760
        %v3334 = vsub.f32 %v489, %v3333
        %3335 = vmatpush1.msra.mxu0 %v3334
        %3336 = vmatprep.subr.mxu0 0.0
        %v3337 = vand.u32 %v490, 4294901760
        %v3338 = vsub.f32 %v490, %v3337
        %3339 = vmatpush1.msra.mxu0 %v3338
        %3340 = vmatprep.subr.mxu0 0.0
        %v3341 = vand.u32 %v491, 4294901760
        %v3342 = vsub.f32 %v491, %v3341
        %3343 = vmatpush1.msra.mxu0 %v3342
        %3344 = vmatprep.subr.mxu0 0.0
        %3345 = vmatpush1.msra.mxu0 0.0
        %3346 = vmatprep.subr.mxu0 0.0
        %3347 = vmatpush1.msra.mxu0 0.0
        %3348 = vmatprep.subr.mxu0 0.0
        %3349 = vmatpush1.msra.mxu0 0.0
        %3350 = vmatprep.subr.mxu0 0.0
        %3351 = vmatpush1.msra.mxu0 0.0
        %3352 = vmatprep.subr.mxu0 0.0
        %3353 = vmatpush1.msra.mxu0 0.0
        %3354 = vmatprep.subr.mxu0 0.0
        %3355 = vmatpush1.msra.mxu0 0.0
        %3356 = vmatprep.subr.mxu0 0.0
        %3357 = vmatpush1.msra.mxu0 0.0
        %3358 = vmatprep.subr.mxu0 0.0
        %3359 = vmatpush1.msra.mxu0 0.0
        %3360 = vmatprep.subr.mxu0 0.0
        %3361 = vmatpush1.msra.mxu0 0.0
        %3362 = vmatprep.subr.mxu0 0.0
        %3363 = vmatpush1.msra.mxu0 0.0
        %3364 = vmatprep.subr.mxu0 0.0
        %3365 = vmatpush1.msra.mxu0 0.0
        %3366 = vmatprep.subr.mxu0 0.0
        %3367 = vmatpush1.msra.mxu0 0.0
        %3368 = vmatprep.subr.mxu0 0.0
        %3369 = vmatpush1.msra.mxu0 0.0
        %3370 = vmatprep.subr.mxu0 0.0
        %3371 = vmatpush1.msra.mxu0 0.0
        %3372 = vmatprep.subr.mxu0 0.0
        %3373 = vmatpush1.msra.mxu0 0.0
        %3374 = vmatprep.subr.mxu0 0.0
        %3375 = vmatpush1.msra.mxu0 0.0
        %3376 = vmatprep.subr.mxu0 0.0
        %3377 = vmatpush1.msra.mxu0 0.0
        %3378 = vmatprep.subr.mxu0 0.0
        %3379 = vmatpush1.msra.mxu0 0.0
        %3380 = vmatprep.subr.mxu0 0.0
        %3381 = vmatpush1.msra.mxu0 0.0
        %3382 = vmatprep.subr.mxu0 0.0
        %3383 = vmatpush1.msra.mxu0 0.0
        %3384 = vmatprep.subr.mxu0 0.0
        %3385 = vmatpush1.msra.mxu0 0.0
        %3386 = vmatprep.subr.mxu0 0.0
        %3387 = vmatpush1.msra.mxu0 0.0
        %3388 = vmatprep.subr.mxu0 0.0
        %3389 = vmatpush1.msra.mxu0 0.0
        %3390 = vmatprep.subr.mxu0 0.0
        %3391 = vmatpush1.msra.mxu0 0.0
        %3392 = vmatprep.subr.mxu0 0.0
        %3393 = vmatpush1.msra.mxu0 0.0
        %3394 = vmatprep.subr.mxu0 0.0
        %3395 = vmatpush1.msra.mxu0 0.0
        %3396 = vmatprep.subr.mxu0 0.0
        %3397 = vmatpush1.msra.mxu0 0.0
        %3398 = vmatprep.subr.mxu0 0.0
        %3399 = vmatpush1.msra.mxu0 0.0
        %3400 = vmatprep.mubr.f32.mxu0 0.0
        %v3401 = vand.u32 %v1127, 4294901760
        %v3402 = vsub.f32 %v1127, %v3401
        %3403 = vmatmul.mubr.f32.gmra.mrb[0].mxu0 %v3402
        %v3404 = vpop.f32.mrb[0].mxu0
        %v3405 = vadd.f32 %v3307, %v3404
        %v3406 = vpop.f32.mrb[0].mxu0
        %3407 = vmatprep.mubr.f32.mxu0 0.0
        %v3408 = vand.u32 %v1130, 4294901760
        %v3409 = vsub.f32 %v1130, %v3408
        %3410 = vmatmul.mubr.f32.gmra.mrb[0].mxu0 %v3409
        %v3411 = vpop.f32.mrb[0].mxu0
        %v3412 = vadd.f32 %v3313, %v3411
        %v3413 = vpop.f32.mrb[0].mxu0
        %3414 = vmatprep.mubr.f32.mxu0 0.0
        %v3415 = vand.u32 %v1133, 4294901760
        %v3416 = vsub.f32 %v1133, %v3415
        %3417 = vmatmul.mubr.f32.gmra.mrb[0].mxu0 %v3416
        %v3418 = vpop.f32.mrb[0].mxu0
        %v3419 = vadd.f32 %v3319, %v3418
        %v3420 = vpop.f32.mrb[0].mxu0
        %3421 = vmatprep.mubr.f32.mxu0 0.0
        %v3422 = vand.u32 %v1136, 4294901760
        %v3423 = vsub.f32 %v1136, %v3422
        %3424 = vmatmul.mubr.f32.gmra.mrb[0].mxu0 %v3423
        %v3425 = vpop.f32.mrb[0].mxu0
        %v3426 = vadd.f32 %v3325, %v3425
        %v3427 = vpop.f32.mrb[0].mxu0
        %3428 = vdwg.mxu0
        %3429 = vmatprep.subr.mxu0 0.0
        %v3430 = vand.u32 %v488, 4294901760
        %3431 = vmatpush1.msra.mxu0 %v3430
        %3432 = vmatprep.subr.mxu0 0.0
        %v3433 = vand.u32 %v489, 4294901760
        %3434 = vmatpush1.msra.mxu0 %v3433
        %3435 = vmatprep.subr.mxu0 0.0
        %v3436 = vand.u32 %v490, 4294901760
        %3437 = vmatpush1.msra.mxu0 %v3436
        %3438 = vmatprep.subr.mxu0 0.0
        %v3439 = vand.u32 %v491, 4294901760
        %3440 = vmatpush1.msra.mxu0 %v3439
        %3441 = vmatprep.subr.mxu0 0.0
        %3442 = vmatpush1.msra.mxu0 0.0
        %3443 = vmatprep.subr.mxu0 0.0
        %3444 = vmatpush1.msra.mxu0 0.0
        %3445 = vmatprep.subr.mxu0 0.0
        %3446 = vmatpush1.msra.mxu0 0.0
        %3447 = vmatprep.subr.mxu0 0.0
        %3448 = vmatpush1.msra.mxu0 0.0
        %3449 = vmatprep.subr.mxu0 0.0
        %3450 = vmatpush1.msra.mxu0 0.0
        %3451 = vmatprep.subr.mxu0 0.0
        %3452 = vmatpush1.msra.mxu0 0.0
        %3453 = vmatprep.subr.mxu0 0.0
        %3454 = vmatpush1.msra.mxu0 0.0
        %3455 = vmatprep.subr.mxu0 0.0
        %3456 = vmatpush1.msra.mxu0 0.0
        %3457 = vmatprep.subr.mxu0 0.0
        %3458 = vmatpush1.msra.mxu0 0.0
        %3459 = vmatprep.subr.mxu0 0.0
        %3460 = vmatpush1.msra.mxu0 0.0
        %3461 = vmatprep.subr.mxu0 0.0
        %3462 = vmatpush1.msra.mxu0 0.0
        %3463 = vmatprep.subr.mxu0 0.0
        %3464 = vmatpush1.msra.mxu0 0.0
        %3465 = vmatprep.subr.mxu0 0.0
        %3466 = vmatpush1.msra.mxu0 0.0
        %3467 = vmatprep.subr.mxu0 0.0
        %3468 = vmatpush1.msra.mxu0 0.0
        %3469 = vmatprep.subr.mxu0 0.0
        %3470 = vmatpush1.msra.mxu0 0.0
        %3471 = vmatprep.subr.mxu0 0.0
        %3472 = vmatpush1.msra.mxu0 0.0
        %3473 = vmatprep.subr.mxu0 0.0
        %3474 = vmatpush1.msra.mxu0 0.0
        %3475 = vmatprep.subr.mxu0 0.0
        %3476 = vmatpush1.msra.mxu0 0.0
        %3477 = vmatprep.subr.mxu0 0.0
        %3478 = vmatpush1.msra.mxu0 0.0
        %3479 = vmatprep.subr.mxu0 0.0
        %3480 = vmatpush1.msra.mxu0 0.0
        %3481 = vmatprep.subr.mxu0 0.0
        %3482 = vmatpush1.msra.mxu0 0.0
        %3483 = vmatprep.subr.mxu0 0.0
        %3484 = vmatpush1.msra.mxu0 0.0
        %3485 = vmatprep.subr.mxu0 0.0
        %3486 = vmatpush1.msra.mxu0 0.0
        %3487 = vmatprep.subr.mxu0 0.0
        %3488 = vmatpush1.msra.mxu0 0.0
        %3489 = vmatprep.subr.mxu0 0.0
        %3490 = vmatpush1.msra.mxu0 0.0
        %3491 = vmatprep.subr.mxu0 0.0
        %3492 = vmatpush1.msra.mxu0 0.0
        %3493 = vmatprep.subr.mxu0 0.0
        %3494 = vmatpush1.msra.mxu0 0.0
        %3495 = vmatprep.subr.mxu0 0.0
        %3496 = vmatpush1.msra.mxu0 0.0
        %3497 = vmatprep.mubr.f32.mxu0 0.0
        %v3498 = vand.u32 %v1127, 4294901760
        %v3499 = vsub.f32 %v1127, %v3498
        %v3500 = vand.u32 %v3499, 4294901760
        %3501 = vmatmul.mubr.f32.gmra.mrb[0].mxu0 %v3500
        %v3502 = vpop.f32.mrb[0].mxu0
        %v3503 = vadd.f32 %v3405, %v3502
        %v3504 = vpop.f32.mrb[0].mxu0
        %3505 = vmatprep.mubr.f32.mxu0 0.0
        %v3506 = vand.u32 %v1130, 4294901760
        %v3507 = vsub.f32 %v1130, %v3506
        %v3508 = vand.u32 %v3507, 4294901760
        %3509 = vmatmul.mubr.f32.gmra.mrb[0].mxu0 %v3508
        %v3510 = vpop.f32.mrb[0].mxu0
        %v3511 = vadd.f32 %v3412, %v3510
        %v3512 = vpop.f32.mrb[0].mxu0
        %3513 = vmatprep.mubr.f32.mxu0 0.0
        %v3514 = vand.u32 %v1133, 4294901760
        %v3515 = vsub.f32 %v1133, %v3514
        %v3516 = vand.u32 %v3515, 4294901760
        %3517 = vmatmul.mubr.f32.gmra.mrb[0].mxu0 %v3516
        %v3518 = vpop.f32.mrb[0].mxu0
        %v3519 = vadd.f32 %v3419, %v3518
        %v3520 = vpop.f32.mrb[0].mxu0
        %3521 = vmatprep.mubr.f32.mxu0 0.0
        %v3522 = vand.u32 %v1136, 4294901760
        %v3523 = vsub.f32 %v1136, %v3522
        %v3524 = vand.u32 %v3523, 4294901760
        %3525 = vmatmul.mubr.f32.gmra.mrb[0].mxu0 %v3524
        %v3526 = vpop.f32.mrb[0].mxu0
        %v3527 = vadd.f32 %v3426, %v3526
        %v3528 = vpop.f32.mrb[0].mxu0
        %3529 = vdwg.mxu0
        %3530 = vmatprep.subr.mxu0 0.0
        %v3531 = vand.u32 %v488, 4294901760
        %v3532 = vsub.f32 %v488, %v3531
        %v3533 = vand.u32 %v3532, 4294901760
        %3534 = vmatpush1.msra.mxu0 %v3533
        %3535 = vmatprep.subr.mxu0 0.0
        %v3536 = vand.u32 %v489, 4294901760
        %v3537 = vsub.f32 %v489, %v3536
        %v3538 = vand.u32 %v3537, 4294901760
        %3539 = vmatpush1.msra.mxu0 %v3538
        %3540 = vmatprep.subr.mxu0 0.0
        %v3541 = vand.u32 %v490, 4294901760
        %v3542 = vsub.f32 %v490, %v3541
        %v3543 = vand.u32 %v3542, 4294901760
        %3544 = vmatpush1.msra.mxu0 %v3543
        %3545 = vmatprep.subr.mxu0 0.0
        %v3546 = vand.u32 %v491, 4294901760
        %v3547 = vsub.f32 %v491, %v3546
        %v3548 = vand.u32 %v3547, 4294901760
        %3549 = vmatpush1.msra.mxu0 %v3548
        %3550 = vmatprep.subr.mxu0 0.0
        %3551 = vmatpush1.msra.mxu0 0.0
        %3552 = vmatprep.subr.mxu0 0.0
        %3553 = vmatpush1.msra.mxu0 0.0
        %3554 = vmatprep.subr.mxu0 0.0
        %3555 = vmatpush1.msra.mxu0 0.0
        %3556 = vmatprep.subr.mxu0 0.0
        %3557 = vmatpush1.msra.mxu0 0.0
        %3558 = vmatprep.subr.mxu0 0.0
        %3559 = vmatpush1.msra.mxu0 0.0
        %3560 = vmatprep.subr.mxu0 0.0
        %3561 = vmatpush1.msra.mxu0 0.0
        %3562 = vmatprep.subr.mxu0 0.0
        %3563 = vmatpush1.msra.mxu0 0.0
        %3564 = vmatprep.subr.mxu0 0.0
        %3565 = vmatpush1.msra.mxu0 0.0
        %3566 = vmatprep.subr.mxu0 0.0
        %3567 = vmatpush1.msra.mxu0 0.0
        %3568 = vmatprep.subr.mxu0 0.0
        %3569 = vmatpush1.msra.mxu0 0.0
        %3570 = vmatprep.subr.mxu0 0.0
        %3571 = vmatpush1.msra.mxu0 0.0
        %3572 = vmatprep.subr.mxu0 0.0
        %3573 = vmatpush1.msra.mxu0 0.0
        %3574 = vmatprep.subr.mxu0 0.0
        %3575 = vmatpush1.msra.mxu0 0.0
        %3576 = vmatprep.subr.mxu0 0.0
        %3577 = vmatpush1.msra.mxu0 0.0
        %3578 = vmatprep.subr.mxu0 0.0
        %3579 = vmatpush1.msra.mxu0 0.0
        %3580 = vmatprep.subr.mxu0 0.0
        %3581 = vmatpush1.msra.mxu0 0.0
        %3582 = vmatprep.subr.mxu0 0.0
        %3583 = vmatpush1.msra.mxu0 0.0
        %3584 = vmatprep.subr.mxu0 0.0
        %3585 = vmatpush1.msra.mxu0 0.0
        %3586 = vmatprep.subr.mxu0 0.0
        %3587 = vmatpush1.msra.mxu0 0.0
        %3588 = vmatprep.subr.mxu0 0.0
        %3589 = vmatpush1.msra.mxu0 0.0
        %3590 = vmatprep.subr.mxu0 0.0
        %3591 = vmatpush1.msra.mxu0 0.0
        %3592 = vmatprep.subr.mxu0 0.0
        %3593 = vmatpush1.msra.mxu0 0.0
        %3594 = vmatprep.subr.mxu0 0.0
        %3595 = vmatpush1.msra.mxu0 0.0
        %3596 = vmatprep.subr.mxu0 0.0
        %3597 = vmatpush1.msra.mxu0 0.0
        %3598 = vmatprep.subr.mxu0 0.0
        %3599 = vmatpush1.msra.mxu0 0.0
        %3600 = vmatprep.subr.mxu0 0.0
        %3601 = vmatpush1.msra.mxu0 0.0
        %3602 = vmatprep.subr.mxu0 0.0
        %3603 = vmatpush1.msra.mxu0 0.0
        %3604 = vmatprep.subr.mxu0 0.0
        %3605 = vmatpush1.msra.mxu0 0.0
        %3606 = vmatprep.mubr.f32.mxu0 0.0
        %v3607 = vand.u32 %v1127, 4294901760
        %3608 = vmatmul.mubr.f32.gmra.mrb[0].mxu0 %v3607
        %v3609 = vpop.f32.mrb[0].mxu0
        %v3610 = vadd.f32 %v3503, %v3609
        %v3611 = vpop.f32.mrb[0].mxu0
        %3612 = vmatprep.mubr.f32.mxu0 0.0
        %v3613 = vand.u32 %v1130, 4294901760
        %3614 = vmatmul.mubr.f32.gmra.mrb[0].mxu0 %v3613
        %v3615 = vpop.f32.mrb[0].mxu0
        %v3616 = vadd.f32 %v3511, %v3615
        %v3617 = vpop.f32.mrb[0].mxu0
        %3618 = vmatprep.mubr.f32.mxu0 0.0
        %v3619 = vand.u32 %v1133, 4294901760
        %3620 = vmatmul.mubr.f32.gmra.mrb[0].mxu0 %v3619
        %v3621 = vpop.f32.mrb[0].mxu0
        %v3622 = vadd.f32 %v3519, %v3621
        %v3623 = vpop.f32.mrb[0].mxu0
        %3624 = vmatprep.mubr.f32.mxu0 0.0
        %v3625 = vand.u32 %v1136, 4294901760
        %3626 = vmatmul.mubr.f32.gmra.mrb[0].mxu0 %v3625
        %v3627 = vpop.f32.mrb[0].mxu0
        %v3628 = vadd.f32 %v3527, %v3627
        %v3629 = vpop.f32.mrb[0].mxu0
        %3630 = vdwg.mxu0
        %3631 = vmatprep.subr.mxu0 0.0
        %v3632 = vand.u32 %v488, 4294901760
        %3633 = vmatpush1.msra.mxu0 %v3632
        %3634 = vmatprep.subr.mxu0 0.0
        %v3635 = vand.u32 %v489, 4294901760
        %3636 = vmatpush1.msra.mxu0 %v3635
        %3637 = vmatprep.subr.mxu0 0.0
        %v3638 = vand.u32 %v490, 4294901760
        %3639 = vmatpush1.msra.mxu0 %v3638
        %3640 = vmatprep.subr.mxu0 0.0
        %v3641 = vand.u32 %v491, 4294901760
        %3642 = vmatpush1.msra.mxu0 %v3641
        %3643 = vmatprep.subr.mxu0 0.0
        %3644 = vmatpush1.msra.mxu0 0.0
        %3645 = vmatprep.subr.mxu0 0.0
        %3646 = vmatpush1.msra.mxu0 0.0
        %3647 = vmatprep.subr.mxu0 0.0
        %3648 = vmatpush1.msra.mxu0 0.0
        %3649 = vmatprep.subr.mxu0 0.0
        %3650 = vmatpush1.msra.mxu0 0.0
        %3651 = vmatprep.subr.mxu0 0.0
        %3652 = vmatpush1.msra.mxu0 0.0
        %3653 = vmatprep.subr.mxu0 0.0
        %3654 = vmatpush1.msra.mxu0 0.0
        %3655 = vmatprep.subr.mxu0 0.0
        %3656 = vmatpush1.msra.mxu0 0.0
        %3657 = vmatprep.subr.mxu0 0.0
        %3658 = vmatpush1.msra.mxu0 0.0
        %3659 = vmatprep.subr.mxu0 0.0
        %3660 = vmatpush1.msra.mxu0 0.0
        %3661 = vmatprep.subr.mxu0 0.0
        %3662 = vmatpush1.msra.mxu0 0.0
        %3663 = vmatprep.subr.mxu0 0.0
        %3664 = vmatpush1.msra.mxu0 0.0
        %3665 = vmatprep.subr.mxu0 0.0
        %3666 = vmatpush1.msra.mxu0 0.0
        %3667 = vmatprep.subr.mxu0 0.0
        %3668 = vmatpush1.msra.mxu0 0.0
        %3669 = vmatprep.subr.mxu0 0.0
        %3670 = vmatpush1.msra.mxu0 0.0
        %3671 = vmatprep.subr.mxu0 0.0
        %3672 = vmatpush1.msra.mxu0 0.0
        %3673 = vmatprep.subr.mxu0 0.0
        %3674 = vmatpush1.msra.mxu0 0.0
        %3675 = vmatprep.subr.mxu0 0.0
        %3676 = vmatpush1.msra.mxu0 0.0
        %3677 = vmatprep.subr.mxu0 0.0
        %3678 = vmatpush1.msra.mxu0 0.0
        %3679 = vmatprep.subr.mxu0 0.0
        %3680 = vmatpush1.msra.mxu0 0.0
        %3681 = vmatprep.subr.mxu0 0.0
        %3682 = vmatpush1.msra.mxu0 0.0
        %3683 = vmatprep.subr.mxu0 0.0
        %3684 = vmatpush1.msra.mxu0 0.0
        %3685 = vmatprep.subr.mxu0 0.0
        %3686 = vmatpush1.msra.mxu0 0.0
        %3687 = vmatprep.subr.mxu0 0.0
        %3688 = vmatpush1.msra.mxu0 0.0
        %3689 = vmatprep.subr.mxu0 0.0
        %3690 = vmatpush1.msra.mxu0 0.0
        %3691 = vmatprep.subr.mxu0 0.0
        %3692 = vmatpush1.msra.mxu0 0.0
        %3693 = vmatprep.subr.mxu0 0.0
        %3694 = vmatpush1.msra.mxu0 0.0
        %3695 = vmatprep.subr.mxu0 0.0
        %3696 = vmatpush1.msra.mxu0 0.0
        %3697 = vmatprep.subr.mxu0 0.0
        %3698 = vmatpush1.msra.mxu0 0.0
        %3699 = vmatprep.mubr.f32.mxu0 0.0
        %v3700 = vand.u32 %v1127, 4294901760
        %3701 = vmatmul.mubr.f32.gmra.mrb[0].mxu0 %v3700
        %v3702 = vpop.f32.mrb[0].mxu0
        %v3703 = vadd.f32 %v3610, %v3702
        %v3704 = vpop.f32.mrb[0].mxu0
        %3705 = vmatprep.mubr.f32.mxu0 0.0
        %v3706 = vand.u32 %v1130, 4294901760
        %3707 = vmatmul.mubr.f32.gmra.mrb[0].mxu0 %v3706
        %v3708 = vpop.f32.mrb[0].mxu0
        %v3709 = vadd.f32 %v3616, %v3708
        %v3710 = vpop.f32.mrb[0].mxu0
        %3711 = vmatprep.mubr.f32.mxu0 0.0
        %v3712 = vand.u32 %v1133, 4294901760
        %3713 = vmatmul.mubr.f32.gmra.mrb[0].mxu0 %v3712
        %v3714 = vpop.f32.mrb[0].mxu0
        %v3715 = vadd.f32 %v3622, %v3714
        %v3716 = vpop.f32.mrb[0].mxu0
        %3717 = vmatprep.mubr.f32.mxu0 0.0
        %v3718 = vand.u32 %v1136, 4294901760
        %3719 = vmatmul.mubr.f32.gmra.mrb[0].mxu0 %v3718
        %v3720 = vpop.f32.mrb[0].mxu0
        %v3721 = vadd.f32 %v3628, %v3720
        %v3722 = vpop.f32.mrb[0].mxu0
        %3723 = vdwg.mxu0
        %3724 = vmatprep.subr.mxu0 0.0
        %v3725 = vand.u32 %v508, 4294901760
        %3726 = vmatpush1.msra.mxu0 %v3725
        %3727 = vmatprep.subr.mxu0 0.0
        %v3728 = vand.u32 %v509, 4294901760
        %3729 = vmatpush1.msra.mxu0 %v3728
        %3730 = vmatprep.subr.mxu0 0.0
        %v3731 = vand.u32 %v510, 4294901760
        %3732 = vmatpush1.msra.mxu0 %v3731
        %3733 = vmatprep.subr.mxu0 0.0
        %v3734 = vand.u32 %v511, 4294901760
        %3735 = vmatpush1.msra.mxu0 %v3734
        %3736 = vmatprep.subr.mxu0 0.0
        %v3737 = vand.u32 %v512, 4294901760
        %3738 = vmatpush1.msra.mxu0 %v3737
        %3739 = vmatprep.subr.mxu0 0.0
        %v3740 = vand.u32 %v513, 4294901760
        %3741 = vmatpush1.msra.mxu0 %v3740
        %3742 = vmatprep.subr.mxu0 0.0
        %v3743 = vand.u32 %v514, 4294901760
        %3744 = vmatpush1.msra.mxu0 %v3743
        %3745 = vmatprep.subr.mxu0 0.0
        %v3746 = vand.u32 %v515, 4294901760
        %3747 = vmatpush1.msra.mxu0 %v3746
        %3748 = vmatprep.subr.mxu0 0.0
        %v3749 = vand.u32 %v516, 4294901760
        %3750 = vmatpush1.msra.mxu0 %v3749
        %3751 = vmatprep.subr.mxu0 0.0
        %v3752 = vand.u32 %v517, 4294901760
        %3753 = vmatpush1.msra.mxu0 %v3752
        %3754 = vmatprep.subr.mxu0 0.0
        %v3755 = vand.u32 %v518, 4294901760
        %3756 = vmatpush1.msra.mxu0 %v3755
        %3757 = vmatprep.subr.mxu0 0.0
        %v3758 = vand.u32 %v519, 4294901760
        %3759 = vmatpush1.msra.mxu0 %v3758
        %3760 = vmatprep.subr.mxu0 0.0
        %v3761 = vand.u32 %v520, 4294901760
        %3762 = vmatpush1.msra.mxu0 %v3761
        %3763 = vmatprep.subr.mxu0 0.0
        %v3764 = vand.u32 %v521, 4294901760
        %3765 = vmatpush1.msra.mxu0 %v3764
        %3766 = vmatprep.subr.mxu0 0.0
        %v3767 = vand.u32 %v522, 4294901760
        %3768 = vmatpush1.msra.mxu0 %v3767
        %3769 = vmatprep.subr.mxu0 0.0
        %v3770 = vand.u32 %v523, 4294901760
        %3771 = vmatpush1.msra.mxu0 %v3770
        %3772 = vmatprep.subr.mxu0 0.0
        %3773 = vmatpush1.msra.mxu0 0.0
        %3774 = vmatprep.subr.mxu0 0.0
        %3775 = vmatpush1.msra.mxu0 0.0
        %3776 = vmatprep.subr.mxu0 0.0
        %3777 = vmatpush1.msra.mxu0 0.0
        %3778 = vmatprep.subr.mxu0 0.0
        %3779 = vmatpush1.msra.mxu0 0.0
        %3780 = vmatprep.subr.mxu0 0.0
        %3781 = vmatpush1.msra.mxu0 0.0
        %3782 = vmatprep.subr.mxu0 0.0
        %3783 = vmatpush1.msra.mxu0 0.0
        %3784 = vmatprep.subr.mxu0 0.0
        %3785 = vmatpush1.msra.mxu0 0.0
        %3786 = vmatprep.subr.mxu0 0.0
        %3787 = vmatpush1.msra.mxu0 0.0
        %3788 = vmatprep.subr.mxu0 0.0
        %3789 = vmatpush1.msra.mxu0 0.0
        %3790 = vmatprep.subr.mxu0 0.0
        %3791 = vmatpush1.msra.mxu0 0.0
        %3792 = vmatprep.subr.mxu0 0.0
        %3793 = vmatpush1.msra.mxu0 0.0
        %3794 = vmatprep.subr.mxu0 0.0
        %3795 = vmatpush1.msra.mxu0 0.0
        %3796 = vmatprep.subr.mxu0 0.0
        %3797 = vmatpush1.msra.mxu0 0.0
        %3798 = vmatprep.subr.mxu0 0.0
        %3799 = vmatpush1.msra.mxu0 0.0
        %3800 = vmatprep.subr.mxu0 0.0
        %3801 = vmatpush1.msra.mxu0 0.0
        %3802 = vmatprep.subr.mxu0 0.0
        %3803 = vmatpush1.msra.mxu0 0.0
        %3804 = vmatprep.mubr.f32.mxu0 0.0
        %v3805 = vand.u32 %v3703, 4294901760
        %v3806 = vsub.f32 %v3703, %v3805
        %v3807 = vand.u32 %v3806, 4294901760
        %v3808 = vsub.f32 %v3806, %v3807
        %v3809 = vand.u32 %v3808, 4294901760
        %3810 = vmatmul.mubr.f32.gmra.mrb[0].mxu0 %v3809
        %v3811 = vpop.f32.mrb[0].mxu0
        %v3812 = vadd.f32 0.0, %v3811
        %v3813 = vpop.f32.mrb[0].mxu0
        %3814 = vmatprep.mubr.f32.mxu0 0.0
        %v3815 = vand.u32 %v3709, 4294901760
        %v3816 = vsub.f32 %v3709, %v3815
        %v3817 = vand.u32 %v3816, 4294901760
        %v3818 = vsub.f32 %v3816, %v3817
        %v3819 = vand.u32 %v3818, 4294901760
        %3820 = vmatmul.mubr.f32.gmra.mrb[0].mxu0 %v3819
        %v3821 = vpop.f32.mrb[0].mxu0
        %v3822 = vadd.f32 0.0, %v3821
        %v3823 = vpop.f32.mrb[0].mxu0
        %3824 = vmatprep.mubr.f32.mxu0 0.0
        %v3825 = vand.u32 %v3715, 4294901760
        %v3826 = vsub.f32 %v3715, %v3825
        %v3827 = vand.u32 %v3826, 4294901760
        %v3828 = vsub.f32 %v3826, %v3827
        %v3829 = vand.u32 %v3828, 4294901760
        %3830 = vmatmul.mubr.f32.gmra.mrb[0].mxu0 %v3829
        %v3831 = vpop.f32.mrb[0].mxu0
        %v3832 = vadd.f32 0.0, %v3831
        %v3833 = vpop.f32.mrb[0].mxu0
        %3834 = vmatprep.mubr.f32.mxu0 0.0
        %v3835 = vand.u32 %v3721, 4294901760
        %v3836 = vsub.f32 %v3721, %v3835
        %v3837 = vand.u32 %v3836, 4294901760
        %v3838 = vsub.f32 %v3836, %v3837
        %v3839 = vand.u32 %v3838, 4294901760
        %3840 = vmatmul.mubr.f32.gmra.mrb[0].mxu0 %v3839
        %v3841 = vpop.f32.mrb[0].mxu0
        %v3842 = vadd.f32 0.0, %v3841
        %v3843 = vpop.f32.mrb[0].mxu0
        %3844 = vdwg.mxu0
        %3845 = vmatprep.subr.mxu0 0.0
        %v3846 = vand.u32 %v508, 4294901760
        %v3847 = vsub.f32 %v508, %v3846
        %v3848 = vand.u32 %v3847, 4294901760
        %v3849 = vsub.f32 %v3847, %v3848
        %v3850 = vand.u32 %v3849, 4294901760
        %3851 = vmatpush1.msra.mxu0 %v3850
        %3852 = vmatprep.subr.mxu0 0.0
        %v3853 = vand.u32 %v509, 4294901760
        %v3854 = vsub.f32 %v509, %v3853
        %v3855 = vand.u32 %v3854, 4294901760
        %v3856 = vsub.f32 %v3854, %v3855
        %v3857 = vand.u32 %v3856, 4294901760
        %3858 = vmatpush1.msra.mxu0 %v3857
        %3859 = vmatprep.subr.mxu0 0.0
        %v3860 = vand.u32 %v510, 4294901760
        %v3861 = vsub.f32 %v510, %v3860
        %v3862 = vand.u32 %v3861, 4294901760
        %v3863 = vsub.f32 %v3861, %v3862
        %v3864 = vand.u32 %v3863, 4294901760
        %3865 = vmatpush1.msra.mxu0 %v3864
        %3866 = vmatprep.subr.mxu0 0.0
        %v3867 = vand.u32 %v511, 4294901760
        %v3868 = vsub.f32 %v511, %v3867
        %v3869 = vand.u32 %v3868, 4294901760
        %v3870 = vsub.f32 %v3868, %v3869
        %v3871 = vand.u32 %v3870, 4294901760
        %3872 = vmatpush1.msra.mxu0 %v3871
        %3873 = vmatprep.subr.mxu0 0.0
        %v3874 = vand.u32 %v512, 4294901760
        %v3875 = vsub.f32 %v512, %v3874
        %v3876 = vand.u32 %v3875, 4294901760
        %v3877 = vsub.f32 %v3875, %v3876
        %v3878 = vand.u32 %v3877, 4294901760
        %3879 = vmatpush1.msra.mxu0 %v3878
        %3880 = vmatprep.subr.mxu0 0.0
        %v3881 = vand.u32 %v513, 4294901760
        %v3882 = vsub.f32 %v513, %v3881
        %v3883 = vand.u32 %v3882, 4294901760
        %v3884 = vsub.f32 %v3882, %v3883
        %v3885 = vand.u32 %v3884, 4294901760
        %3886 = vmatpush1.msra.mxu0 %v3885
        %3887 = vmatprep.subr.mxu0 0.0
        %v3888 = vand.u32 %v514, 4294901760
        %v3889 = vsub.f32 %v514, %v3888
        %v3890 = vand.u32 %v3889, 4294901760
        %v3891 = vsub.f32 %v3889, %v3890
        %v3892 = vand.u32 %v3891, 4294901760
        %3893 = vmatpush1.msra.mxu0 %v3892
        %3894 = vmatprep.subr.mxu0 0.0
        %v3895 = vand.u32 %v515, 4294901760
        %v3896 = vsub.f32 %v515, %v3895
        %v3897 = vand.u32 %v3896, 4294901760
        %v3898 = vsub.f32 %v3896, %v3897
        %v3899 = vand.u32 %v3898, 4294901760
        %3900 = vmatpush1.msra.mxu0 %v3899
        %3901 = vmatprep.subr.mxu0 0.0
        %v3902 = vand.u32 %v516, 4294901760
        %v3903 = vsub.f32 %v516, %v3902
        %v3904 = vand.u32 %v3903, 4294901760
        %v3905 = vsub.f32 %v3903, %v3904
        %v3906 = vand.u32 %v3905, 4294901760
        %3907 = vmatpush1.msra.mxu0 %v3906
        %3908 = vmatprep.subr.mxu0 0.0
        %v3909 = vand.u32 %v517, 4294901760
        %v3910 = vsub.f32 %v517, %v3909
        %v3911 = vand.u32 %v3910, 4294901760
        %v3912 = vsub.f32 %v3910, %v3911
        %v3913 = vand.u32 %v3912, 4294901760
        %3914 = vmatpush1.msra.mxu0 %v3913
        %3915 = vmatprep.subr.mxu0 0.0
        %v3916 = vand.u32 %v518, 4294901760
        %v3917 = vsub.f32 %v518, %v3916
        %v3918 = vand.u32 %v3917, 4294901760
        %v3919 = vsub.f32 %v3917, %v3918
        %v3920 = vand.u32 %v3919, 4294901760
        %3921 = vmatpush1.msra.mxu0 %v3920
        %3922 = vmatprep.subr.mxu0 0.0
        %v3923 = vand.u32 %v519, 4294901760
        %v3924 = vsub.f32 %v519, %v3923
        %v3925 = vand.u32 %v3924, 4294901760
        %v3926 = vsub.f32 %v3924, %v3925
        %v3927 = vand.u32 %v3926, 4294901760
        %3928 = vmatpush1.msra.mxu0 %v3927
        %3929 = vmatprep.subr.mxu0 0.0
        %v3930 = vand.u32 %v520, 4294901760
        %v3931 = vsub.f32 %v520, %v3930
        %v3932 = vand.u32 %v3931, 4294901760
        %v3933 = vsub.f32 %v3931, %v3932
        %v3934 = vand.u32 %v3933, 4294901760
        %3935 = vmatpush1.msra.mxu0 %v3934
        %3936 = vmatprep.subr.mxu0 0.0
        %v3937 = vand.u32 %v521, 4294901760
        %v3938 = vsub.f32 %v521, %v3937
        %v3939 = vand.u32 %v3938, 4294901760
        %v3940 = vsub.f32 %v3938, %v3939
        %v3941 = vand.u32 %v3940, 4294901760
        %3942 = vmatpush1.msra.mxu0 %v3941
        %3943 = vmatprep.subr.mxu0 0.0
        %v3944 = vand.u32 %v522, 4294901760
        %v3945 = vsub.f32 %v522, %v3944
        %v3946 = vand.u32 %v3945, 4294901760
        %v3947 = vsub.f32 %v3945, %v3946
        %v3948 = vand.u32 %v3947, 4294901760
        %3949 = vmatpush1.msra.mxu0 %v3948
        %3950 = vmatprep.subr.mxu0 0.0
        %v3951 = vand.u32 %v523, 4294901760
        %v3952 = vsub.f32 %v523, %v3951
        %v3953 = vand.u32 %v3952, 4294901760
        %v3954 = vsub.f32 %v3952, %v3953
        %v3955 = vand.u32 %v3954, 4294901760
        %3956 = vmatpush1.msra.mxu0 %v3955
        %3957 = vmatprep.subr.mxu0 0.0
        %3958 = vmatpush1.msra.mxu0 0.0
        %3959 = vmatprep.subr.mxu0 0.0
        %3960 = vmatpush1.msra.mxu0 0.0
        %3961 = vmatprep.subr.mxu0 0.0
        %3962 = vmatpush1.msra.mxu0 0.0
        %3963 = vmatprep.subr.mxu0 0.0
        %3964 = vmatpush1.msra.mxu0 0.0
        %3965 = vmatprep.subr.mxu0 0.0
        %3966 = vmatpush1.msra.mxu0 0.0
        %3967 = vmatprep.subr.mxu0 0.0
        %3968 = vmatpush1.msra.mxu0 0.0
        %3969 = vmatprep.subr.mxu0 0.0
        %3970 = vmatpush1.msra.mxu0 0.0
        %3971 = vmatprep.subr.mxu0 0.0
        %3972 = vmatpush1.msra.mxu0 0.0
        %3973 = vmatprep.subr.mxu0 0.0
        %3974 = vmatpush1.msra.mxu0 0.0
        %3975 = vmatprep.subr.mxu0 0.0
        %3976 = vmatpush1.msra.mxu0 0.0
        %3977 = vmatprep.subr.mxu0 0.0
        %3978 = vmatpush1.msra.mxu0 0.0
        %3979 = vmatprep.subr.mxu0 0.0
        %3980 = vmatpush1.msra.mxu0 0.0
        %3981 = vmatprep.subr.mxu0 0.0
        %3982 = vmatpush1.msra.mxu0 0.0
        %3983 = vmatprep.subr.mxu0 0.0
        %3984 = vmatpush1.msra.mxu0 0.0
        %3985 = vmatprep.subr.mxu0 0.0
        %3986 = vmatpush1.msra.mxu0 0.0
        %3987 = vmatprep.subr.mxu0 0.0
        %3988 = vmatpush1.msra.mxu0 0.0
        %3989 = vmatprep.mubr.f32.mxu0 0.0
        %v3990 = vand.u32 %v3703, 4294901760
        %3991 = vmatmul.mubr.f32.gmra.mrb[0].mxu0 %v3990
        %v3992 = vpop.f32.mrb[0].mxu0
        %v3993 = vadd.f32 %v3812, %v3992
        %v3994 = vpop.f32.mrb[0].mxu0
        %3995 = vmatprep.mubr.f32.mxu0 0.0
        %v3996 = vand.u32 %v3709, 4294901760
        %3997 = vmatmul.mubr.f32.gmra.mrb[0].mxu0 %v3996
        %v3998 = vpop.f32.mrb[0].mxu0
        %v3999 = vadd.f32 %v3822, %v3998
        %v4000 = vpop.f32.mrb[0].mxu0
        %4001 = vmatprep.mubr.f32.mxu0 0.0
        %v4002 = vand.u32 %v3715, 4294901760
        %4003 = vmatmul.mubr.f32.gmra.mrb[0].mxu0 %v4002
        %v4004 = vpop.f32.mrb[0].mxu0
        %v4005 = vadd.f32 %v3832, %v4004
        %v4006 = vpop.f32.mrb[0].mxu0
        %4007 = vmatprep.mubr.f32.mxu0 0.0
        %v4008 = vand.u32 %v3721, 4294901760
        %4009 = vmatmul.mubr.f32.gmra.mrb[0].mxu0 %v4008
        %v4010 = vpop.f32.mrb[0].mxu0
        %v4011 = vadd.f32 %v3842, %v4010
        %v4012 = vpop.f32.mrb[0].mxu0
        %4013 = vdwg.mxu0
        %4014 = vmatprep.subr.mxu0 0.0
        %v4015 = vand.u32 %v508, 4294901760
        %v4016 = vsub.f32 %v508, %v4015
        %4017 = vmatpush1.msra.mxu0 %v4016
        %4018 = vmatprep.subr.mxu0 0.0
        %v4019 = vand.u32 %v509, 4294901760
        %v4020 = vsub.f32 %v509, %v4019
        %4021 = vmatpush1.msra.mxu0 %v4020
        %4022 = vmatprep.subr.mxu0 0.0
        %v4023 = vand.u32 %v510, 4294901760
        %v4024 = vsub.f32 %v510, %v4023
        %4025 = vmatpush1.msra.mxu0 %v4024
        %4026 = vmatprep.subr.mxu0 0.0
        %v4027 = vand.u32 %v511, 4294901760
        %v4028 = vsub.f32 %v511, %v4027
        %4029 = vmatpush1.msra.mxu0 %v4028
        %4030 = vmatprep.subr.mxu0 0.0
        %v4031 = vand.u32 %v512, 4294901760
        %v4032 = vsub.f32 %v512, %v4031
        %4033 = vmatpush1.msra.mxu0 %v4032
        %4034 = vmatprep.subr.mxu0 0.0
        %v4035 = vand.u32 %v513, 4294901760
        %v4036 = vsub.f32 %v513, %v4035
        %4037 = vmatpush1.msra.mxu0 %v4036
        %4038 = vmatprep.subr.mxu0 0.0
        %v4039 = vand.u32 %v514, 4294901760
        %v4040 = vsub.f32 %v514, %v4039
        %4041 = vmatpush1.msra.mxu0 %v4040
        %4042 = vmatprep.subr.mxu0 0.0
        %v4043 = vand.u32 %v515, 4294901760
        %v4044 = vsub.f32 %v515, %v4043
        %4045 = vmatpush1.msra.mxu0 %v4044
        %4046 = vmatprep.subr.mxu0 0.0
        %v4047 = vand.u32 %v516, 4294901760
        %v4048 = vsub.f32 %v516, %v4047
        %4049 = vmatpush1.msra.mxu0 %v4048
        %4050 = vmatprep.subr.mxu0 0.0
        %v4051 = vand.u32 %v517, 4294901760
        %v4052 = vsub.f32 %v517, %v4051
        %4053 = vmatpush1.msra.mxu0 %v4052
        %4054 = vmatprep.subr.mxu0 0.0
        %v4055 = vand.u32 %v518, 4294901760
        %v4056 = vsub.f32 %v518, %v4055
        %4057 = vmatpush1.msra.mxu0 %v4056
        %4058 = vmatprep.subr.mxu0 0.0
        %v4059 = vand.u32 %v519, 4294901760
        %v4060 = vsub.f32 %v519, %v4059
        %4061 = vmatpush1.msra.mxu0 %v4060
        %4062 = vmatprep.subr.mxu0 0.0
        %v4063 = vand.u32 %v520, 4294901760
        %v4064 = vsub.f32 %v520, %v4063
        %4065 = vmatpush1.msra.mxu0 %v4064
        %4066 = vmatprep.subr.mxu0 0.0
        %v4067 = vand.u32 %v521, 4294901760
        %v4068 = vsub.f32 %v521, %v4067
        %4069 = vmatpush1.msra.mxu0 %v4068
        %4070 = vmatprep.subr.mxu0 0.0
        %v4071 = vand.u32 %v522, 4294901760
        %v4072 = vsub.f32 %v522, %v4071
        %4073 = vmatpush1.msra.mxu0 %v4072
        %4074 = vmatprep.subr.mxu0 0.0
        %v4075 = vand.u32 %v523, 4294901760
        %v4076 = vsub.f32 %v523, %v4075
        %4077 = vmatpush1.msra.mxu0 %v4076
        %4078 = vmatprep.subr.mxu0 0.0
        %4079 = vmatpush1.msra.mxu0 0.0
        %4080 = vmatprep.subr.mxu0 0.0
        %4081 = vmatpush1.msra.mxu0 0.0
        %4082 = vmatprep.subr.mxu0 0.0
        %4083 = vmatpush1.msra.mxu0 0.0
        %4084 = vmatprep.subr.mxu0 0.0
        %4085 = vmatpush1.msra.mxu0 0.0
        %4086 = vmatprep.subr.mxu0 0.0
        %4087 = vmatpush1.msra.mxu0 0.0
        %4088 = vmatprep.subr.mxu0 0.0
        %4089 = vmatpush1.msra.mxu0 0.0
        %4090 = vmatprep.subr.mxu0 0.0
        %4091 = vmatpush1.msra.mxu0 0.0
        %4092 = vmatprep.subr.mxu0 0.0
        %4093 = vmatpush1.msra.mxu0 0.0
        %4094 = vmatprep.subr.mxu0 0.0
        %4095 = vmatpush1.msra.mxu0 0.0
        %4096 = vmatprep.subr.mxu0 0.0
        %4097 = vmatpush1.msra.mxu0 0.0
        %4098 = vmatprep.subr.mxu0 0.0
        %4099 = vmatpush1.msra.mxu0 0.0
        %4100 = vmatprep.subr.mxu0 0.0
        %4101 = vmatpush1.msra.mxu0 0.0
        %4102 = vmatprep.subr.mxu0 0.0
        %4103 = vmatpush1.msra.mxu0 0.0
        %4104 = vmatprep.subr.mxu0 0.0
        %4105 = vmatpush1.msra.mxu0 0.0
        %4106 = vmatprep.subr.mxu0 0.0
        %4107 = vmatpush1.msra.mxu0 0.0
        %4108 = vmatprep.subr.mxu0 0.0
        %4109 = vmatpush1.msra.mxu0 0.0
        %4110 = vmatprep.mubr.f32.mxu0 0.0
        %v4111 = vand.u32 %v3703, 4294901760
        %v4112 = vsub.f32 %v3703, %v4111
        %4113 = vmatmul.mubr.f32.gmra.mrb[0].mxu0 %v4112
        %v4114 = vpop.f32.mrb[0].mxu0
        %v4115 = vadd.f32 %v3993, %v4114
        %v4116 = vpop.f32.mrb[0].mxu0
        %4117 = vmatprep.mubr.f32.mxu0 0.0
        %v4118 = vand.u32 %v3709, 4294901760
        %v4119 = vsub.f32 %v3709, %v4118
        %4120 = vmatmul.mubr.f32.gmra.mrb[0].mxu0 %v4119
        %v4121 = vpop.f32.mrb[0].mxu0
        %v4122 = vadd.f32 %v3999, %v4121
        %v4123 = vpop.f32.mrb[0].mxu0
        %4124 = vmatprep.mubr.f32.mxu0 0.0
        %v4125 = vand.u32 %v3715, 4294901760
        %v4126 = vsub.f32 %v3715, %v4125
        %4127 = vmatmul.mubr.f32.gmra.mrb[0].mxu0 %v4126
        %v4128 = vpop.f32.mrb[0].mxu0
        %v4129 = vadd.f32 %v4005, %v4128
        %v4130 = vpop.f32.mrb[0].mxu0
        %4131 = vmatprep.mubr.f32.mxu0 0.0
        %v4132 = vand.u32 %v3721, 4294901760
        %v4133 = vsub.f32 %v3721, %v4132
        %4134 = vmatmul.mubr.f32.gmra.mrb[0].mxu0 %v4133
        %v4135 = vpop.f32.mrb[0].mxu0
        %v4136 = vadd.f32 %v4011, %v4135
        %v4137 = vpop.f32.mrb[0].mxu0
        %4138 = vdwg.mxu0
        %4139 = vmatprep.subr.mxu0 0.0
        %v4140 = vand.u32 %v508, 4294901760
        %4141 = vmatpush1.msra.mxu0 %v4140
        %4142 = vmatprep.subr.mxu0 0.0
        %v4143 = vand.u32 %v509, 4294901760
        %4144 = vmatpush1.msra.mxu0 %v4143
        %4145 = vmatprep.subr.mxu0 0.0
        %v4146 = vand.u32 %v510, 4294901760
        %4147 = vmatpush1.msra.mxu0 %v4146
        %4148 = vmatprep.subr.mxu0 0.0
        %v4149 = vand.u32 %v511, 4294901760
        %4150 = vmatpush1.msra.mxu0 %v4149
        %4151 = vmatprep.subr.mxu0 0.0
        %v4152 = vand.u32 %v512, 4294901760
        %4153 = vmatpush1.msra.mxu0 %v4152
        %4154 = vmatprep.subr.mxu0 0.0
        %v4155 = vand.u32 %v513, 4294901760
        %4156 = vmatpush1.msra.mxu0 %v4155
        %4157 = vmatprep.subr.mxu0 0.0
        %v4158 = vand.u32 %v514, 4294901760
        %4159 = vmatpush1.msra.mxu0 %v4158
        %4160 = vmatprep.subr.mxu0 0.0
        %v4161 = vand.u32 %v515, 4294901760
        %4162 = vmatpush1.msra.mxu0 %v4161
        %4163 = vmatprep.subr.mxu0 0.0
        %v4164 = vand.u32 %v516, 4294901760
        %4165 = vmatpush1.msra.mxu0 %v4164
        %4166 = vmatprep.subr.mxu0 0.0
        %v4167 = vand.u32 %v517, 4294901760
        %4168 = vmatpush1.msra.mxu0 %v4167
        %4169 = vmatprep.subr.mxu0 0.0
        %v4170 = vand.u32 %v518, 4294901760
        %4171 = vmatpush1.msra.mxu0 %v4170
        %4172 = vmatprep.subr.mxu0 0.0
        %v4173 = vand.u32 %v519, 4294901760
        %4174 = vmatpush1.msra.mxu0 %v4173
        %4175 = vmatprep.subr.mxu0 0.0
        %v4176 = vand.u32 %v520, 4294901760
        %4177 = vmatpush1.msra.mxu0 %v4176
        %4178 = vmatprep.subr.mxu0 0.0
        %v4179 = vand.u32 %v521, 4294901760
        %4180 = vmatpush1.msra.mxu0 %v4179
        %4181 = vmatprep.subr.mxu0 0.0
        %v4182 = vand.u32 %v522, 4294901760
        %4183 = vmatpush1.msra.mxu0 %v4182
        %4184 = vmatprep.subr.mxu0 0.0
        %v4185 = vand.u32 %v523, 4294901760
        %4186 = vmatpush1.msra.mxu0 %v4185
        %4187 = vmatprep.subr.mxu0 0.0
        %4188 = vmatpush1.msra.mxu0 0.0
        %4189 = vmatprep.subr.mxu0 0.0
        %4190 = vmatpush1.msra.mxu0 0.0
        %4191 = vmatprep.subr.mxu0 0.0
        %4192 = vmatpush1.msra.mxu0 0.0
        %4193 = vmatprep.subr.mxu0 0.0
        %4194 = vmatpush1.msra.mxu0 0.0
        %4195 = vmatprep.subr.mxu0 0.0
        %4196 = vmatpush1.msra.mxu0 0.0
        %4197 = vmatprep.subr.mxu0 0.0
        %4198 = vmatpush1.msra.mxu0 0.0
        %4199 = vmatprep.subr.mxu0 0.0
        %4200 = vmatpush1.msra.mxu0 0.0
        %4201 = vmatprep.subr.mxu0 0.0
        %4202 = vmatpush1.msra.mxu0 0.0
        %4203 = vmatprep.subr.mxu0 0.0
        %4204 = vmatpush1.msra.mxu0 0.0
        %4205 = vmatprep.subr.mxu0 0.0
        %4206 = vmatpush1.msra.mxu0 0.0
        %4207 = vmatprep.subr.mxu0 0.0
        %4208 = vmatpush1.msra.mxu0 0.0
        %4209 = vmatprep.subr.mxu0 0.0
        %4210 = vmatpush1.msra.mxu0 0.0
        %4211 = vmatprep.subr.mxu0 0.0
        %4212 = vmatpush1.msra.mxu0 0.0
        %4213 = vmatprep.subr.mxu0 0.0
        %4214 = vmatpush1.msra.mxu0 0.0
        %4215 = vmatprep.subr.mxu0 0.0
        %4216 = vmatpush1.msra.mxu0 0.0
        %4217 = vmatprep.subr.mxu0 0.0
        %4218 = vmatpush1.msra.mxu0 0.0
        %4219 = vmatprep.mubr.f32.mxu0 0.0
        %v4220 = vand.u32 %v3703, 4294901760
        %v4221 = vsub.f32 %v3703, %v4220
        %v4222 = vand.u32 %v4221, 4294901760
        %4223 = vmatmul.mubr.f32.gmra.mrb[0].mxu0 %v4222
        %v4224 = vpop.f32.mrb[0].mxu0
        %v4225 = vadd.f32 %v4115, %v4224
        %v4226 = vpop.f32.mrb[0].mxu0
        %4227 = vmatprep.mubr.f32.mxu0 0.0
        %v4228 = vand.u32 %v3709, 4294901760
        %v4229 = vsub.f32 %v3709, %v4228
        %v4230 = vand.u32 %v4229, 4294901760
        %4231 = vmatmul.mubr.f32.gmra.mrb[0].mxu0 %v4230
        %v4232 = vpop.f32.mrb[0].mxu0
        %v4233 = vadd.f32 %v4122, %v4232
        %v4234 = vpop.f32.mrb[0].mxu0
        %4235 = vmatprep.mubr.f32.mxu0 0.0
        %v4236 = vand.u32 %v3715, 4294901760
        %v4237 = vsub.f32 %v3715, %v4236
        %v4238 = vand.u32 %v4237, 4294901760
        %4239 = vmatmul.mubr.f32.gmra.mrb[0].mxu0 %v4238
        %v4240 = vpop.f32.mrb[0].mxu0
        %v4241 = vadd.f32 %v4129, %v4240
        %v4242 = vpop.f32.mrb[0].mxu0
        %4243 = vmatprep.mubr.f32.mxu0 0.0
        %v4244 = vand.u32 %v3721, 4294901760
        %v4245 = vsub.f32 %v3721, %v4244
        %v4246 = vand.u32 %v4245, 4294901760
        %4247 = vmatmul.mubr.f32.gmra.mrb[0].mxu0 %v4246
        %v4248 = vpop.f32.mrb[0].mxu0
        %v4249 = vadd.f32 %v4136, %v4248
        %v4250 = vpop.f32.mrb[0].mxu0
        %4251 = vdwg.mxu0
        %4252 = vmatprep.subr.mxu0 0.0
        %v4253 = vand.u32 %v508, 4294901760
        %v4254 = vsub.f32 %v508, %v4253
        %v4255 = vand.u32 %v4254, 4294901760
        %4256 = vmatpush1.msra.mxu0 %v4255
        %4257 = vmatprep.subr.mxu0 0.0
        %v4258 = vand.u32 %v509, 4294901760
        %v4259 = vsub.f32 %v509, %v4258
        %v4260 = vand.u32 %v4259, 4294901760
        %4261 = vmatpush1.msra.mxu0 %v4260
        %4262 = vmatprep.subr.mxu0 0.0
        %v4263 = vand.u32 %v510, 4294901760
        %v4264 = vsub.f32 %v510, %v4263
        %v4265 = vand.u32 %v4264, 4294901760
        %4266 = vmatpush1.msra.mxu0 %v4265
        %4267 = vmatprep.subr.mxu0 0.0
        %v4268 = vand.u32 %v511, 4294901760
        %v4269 = vsub.f32 %v511, %v4268
        %v4270 = vand.u32 %v4269, 4294901760
        %4271 = vmatpush1.msra.mxu0 %v4270
        %4272 = vmatprep.subr.mxu0 0.0
        %v4273 = vand.u32 %v512, 4294901760
        %v4274 = vsub.f32 %v512, %v4273
        %v4275 = vand.u32 %v4274, 4294901760
        %4276 = vmatpush1.msra.mxu0 %v4275
        %4277 = vmatprep.subr.mxu0 0.0
        %v4278 = vand.u32 %v513, 4294901760
        %v4279 = vsub.f32 %v513, %v4278
        %v4280 = vand.u32 %v4279, 4294901760
        %4281 = vmatpush1.msra.mxu0 %v4280
        %4282 = vmatprep.subr.mxu0 0.0
        %v4283 = vand.u32 %v514, 4294901760
        %v4284 = vsub.f32 %v514, %v4283
        %v4285 = vand.u32 %v4284, 4294901760
        %4286 = vmatpush1.msra.mxu0 %v4285
        %4287 = vmatprep.subr.mxu0 0.0
        %v4288 = vand.u32 %v515, 4294901760
        %v4289 = vsub.f32 %v515, %v4288
        %v4290 = vand.u32 %v4289, 4294901760
        %4291 = vmatpush1.msra.mxu0 %v4290
        %4292 = vmatprep.subr.mxu0 0.0
        %v4293 = vand.u32 %v516, 4294901760
        %v4294 = vsub.f32 %v516, %v4293
        %v4295 = vand.u32 %v4294, 4294901760
        %4296 = vmatpush1.msra.mxu0 %v4295
        %4297 = vmatprep.subr.mxu0 0.0
        %v4298 = vand.u32 %v517, 4294901760
        %v4299 = vsub.f32 %v517, %v4298
        %v4300 = vand.u32 %v4299, 4294901760
        %4301 = vmatpush1.msra.mxu0 %v4300
        %4302 = vmatprep.subr.mxu0 0.0
        %v4303 = vand.u32 %v518, 4294901760
        %v4304 = vsub.f32 %v518, %v4303
        %v4305 = vand.u32 %v4304, 4294901760
        %4306 = vmatpush1.msra.mxu0 %v4305
        %4307 = vmatprep.subr.mxu0 0.0
        %v4308 = vand.u32 %v519, 4294901760
        %v4309 = vsub.f32 %v519, %v4308
        %v4310 = vand.u32 %v4309, 4294901760
        %4311 = vmatpush1.msra.mxu0 %v4310
        %4312 = vmatprep.subr.mxu0 0.0
        %v4313 = vand.u32 %v520, 4294901760
        %v4314 = vsub.f32 %v520, %v4313
        %v4315 = vand.u32 %v4314, 4294901760
        %4316 = vmatpush1.msra.mxu0 %v4315
        %4317 = vmatprep.subr.mxu0 0.0
        %v4318 = vand.u32 %v521, 4294901760
        %v4319 = vsub.f32 %v521, %v4318
        %v4320 = vand.u32 %v4319, 4294901760
        %4321 = vmatpush1.msra.mxu0 %v4320
        %4322 = vmatprep.subr.mxu0 0.0
        %v4323 = vand.u32 %v522, 4294901760
        %v4324 = vsub.f32 %v522, %v4323
        %v4325 = vand.u32 %v4324, 4294901760
        %4326 = vmatpush1.msra.mxu0 %v4325
        %4327 = vmatprep.subr.mxu0 0.0
        %v4328 = vand.u32 %v523, 4294901760
        %v4329 = vsub.f32 %v523, %v4328
        %v4330 = vand.u32 %v4329, 4294901760
        %4331 = vmatpush1.msra.mxu0 %v4330
        %4332 = vmatprep.subr.mxu0 0.0
        %4333 = vmatpush1.msra.mxu0 0.0
        %4334 = vmatprep.subr.mxu0 0.0
        %4335 = vmatpush1.msra.mxu0 0.0
        %4336 = vmatprep.subr.mxu0 0.0
        %4337 = vmatpush1.msra.mxu0 0.0
        %4338 = vmatprep.subr.mxu0 0.0
        %4339 = vmatpush1.msra.mxu0 0.0
        %4340 = vmatprep.subr.mxu0 0.0
        %4341 = vmatpush1.msra.mxu0 0.0
        %4342 = vmatprep.subr.mxu0 0.0
        %4343 = vmatpush1.msra.mxu0 0.0
        %4344 = vmatprep.subr.mxu0 0.0
        %4345 = vmatpush1.msra.mxu0 0.0
        %4346 = vmatprep.subr.mxu0 0.0
        %4347 = vmatpush1.msra.mxu0 0.0
        %4348 = vmatprep.subr.mxu0 0.0
        %4349 = vmatpush1.msra.mxu0 0.0
        %4350 = vmatprep.subr.mxu0 0.0
        %4351 = vmatpush1.msra.mxu0 0.0
        %4352 = vmatprep.subr.mxu0 0.0
        %4353 = vmatpush1.msra.mxu0 0.0
        %4354 = vmatprep.subr.mxu0 0.0
        %4355 = vmatpush1.msra.mxu0 0.0
        %4356 = vmatprep.subr.mxu0 0.0
        %4357 = vmatpush1.msra.mxu0 0.0
        %4358 = vmatprep.subr.mxu0 0.0
        %4359 = vmatpush1.msra.mxu0 0.0
        %4360 = vmatprep.subr.mxu0 0.0
        %4361 = vmatpush1.msra.mxu0 0.0
        %4362 = vmatprep.subr.mxu0 0.0
        %4363 = vmatpush1.msra.mxu0 0.0
        %4364 = vmatprep.mubr.f32.mxu0 0.0
        %v4365 = vand.u32 %v3703, 4294901760
        %4366 = vmatmul.mubr.f32.gmra.mrb[0].mxu0 %v4365
        %v4367 = vpop.f32.mrb[0].mxu0
        %v4368 = vadd.f32 %v4225, %v4367
        %v4369 = vpop.f32.mrb[0].mxu0
        %4370 = vmatprep.mubr.f32.mxu0 0.0
        %v4371 = vand.u32 %v3709, 4294901760
        %4372 = vmatmul.mubr.f32.gmra.mrb[0].mxu0 %v4371
        %v4373 = vpop.f32.mrb[0].mxu0
        %v4374 = vadd.f32 %v4233, %v4373
        %v4375 = vpop.f32.mrb[0].mxu0
        %4376 = vmatprep.mubr.f32.mxu0 0.0
        %v4377 = vand.u32 %v3715, 4294901760
        %4378 = vmatmul.mubr.f32.gmra.mrb[0].mxu0 %v4377
        %v4379 = vpop.f32.mrb[0].mxu0
        %v4380 = vadd.f32 %v4241, %v4379
        %v4381 = vpop.f32.mrb[0].mxu0
        %4382 = vmatprep.mubr.f32.mxu0 0.0
        %v4383 = vand.u32 %v3721, 4294901760
        %4384 = vmatmul.mubr.f32.gmra.mrb[0].mxu0 %v4383
        %v4385 = vpop.f32.mrb[0].mxu0
        %v4386 = vadd.f32 %v4249, %v4385
        %v4387 = vpop.f32.mrb[0].mxu0
        %4388 = vdwg.mxu0
        %4389 = vmatprep.subr.mxu0 0.0
        %v4390 = vand.u32 %v508, 4294901760
        %4391 = vmatpush1.msra.mxu0 %v4390
        %4392 = vmatprep.subr.mxu0 0.0
        %v4393 = vand.u32 %v509, 4294901760
        %4394 = vmatpush1.msra.mxu0 %v4393
        %4395 = vmatprep.subr.mxu0 0.0
        %v4396 = vand.u32 %v510, 4294901760
        %4397 = vmatpush1.msra.mxu0 %v4396
        %4398 = vmatprep.subr.mxu0 0.0
        %v4399 = vand.u32 %v511, 4294901760
        %4400 = vmatpush1.msra.mxu0 %v4399
        %4401 = vmatprep.subr.mxu0 0.0
        %v4402 = vand.u32 %v512, 4294901760
        %4403 = vmatpush1.msra.mxu0 %v4402
        %4404 = vmatprep.subr.mxu0 0.0
        %v4405 = vand.u32 %v513, 4294901760
        %4406 = vmatpush1.msra.mxu0 %v4405
        %4407 = vmatprep.subr.mxu0 0.0
        %v4408 = vand.u32 %v514, 4294901760
        %4409 = vmatpush1.msra.mxu0 %v4408
        %4410 = vmatprep.subr.mxu0 0.0
        %v4411 = vand.u32 %v515, 4294901760
        %4412 = vmatpush1.msra.mxu0 %v4411
        %4413 = vmatprep.subr.mxu0 0.0
        %v4414 = vand.u32 %v516, 4294901760
        %4415 = vmatpush1.msra.mxu0 %v4414
        %4416 = vmatprep.subr.mxu0 0.0
        %v4417 = vand.u32 %v517, 4294901760
        %4418 = vmatpush1.msra.mxu0 %v4417
        %4419 = vmatprep.subr.mxu0 0.0
        %v4420 = vand.u32 %v518, 4294901760
        %4421 = vmatpush1.msra.mxu0 %v4420
        %4422 = vmatprep.subr.mxu0 0.0
        %v4423 = vand.u32 %v519, 4294901760
        %4424 = vmatpush1.msra.mxu0 %v4423
        %4425 = vmatprep.subr.mxu0 0.0
        %v4426 = vand.u32 %v520, 4294901760
        %4427 = vmatpush1.msra.mxu0 %v4426
        %4428 = vmatprep.subr.mxu0 0.0
        %v4429 = vand.u32 %v521, 4294901760
        %4430 = vmatpush1.msra.mxu0 %v4429
        %4431 = vmatprep.subr.mxu0 0.0
        %v4432 = vand.u32 %v522, 4294901760
        %4433 = vmatpush1.msra.mxu0 %v4432
        %4434 = vmatprep.subr.mxu0 0.0
        %v4435 = vand.u32 %v523, 4294901760
        %4436 = vmatpush1.msra.mxu0 %v4435
        %4437 = vmatprep.subr.mxu0 0.0
        %4438 = vmatpush1.msra.mxu0 0.0
        %4439 = vmatprep.subr.mxu0 0.0
        %4440 = vmatpush1.msra.mxu0 0.0
        %4441 = vmatprep.subr.mxu0 0.0
        %4442 = vmatpush1.msra.mxu0 0.0
        %4443 = vmatprep.subr.mxu0 0.0
        %4444 = vmatpush1.msra.mxu0 0.0
        %4445 = vmatprep.subr.mxu0 0.0
        %4446 = vmatpush1.msra.mxu0 0.0
        %4447 = vmatprep.subr.mxu0 0.0
        %4448 = vmatpush1.msra.mxu0 0.0
        %4449 = vmatprep.subr.mxu0 0.0
        %4450 = vmatpush1.msra.mxu0 0.0
        %4451 = vmatprep.subr.mxu0 0.0
        %4452 = vmatpush1.msra.mxu0 0.0
        %4453 = vmatprep.subr.mxu0 0.0
        %4454 = vmatpush1.msra.mxu0 0.0
        %4455 = vmatprep.subr.mxu0 0.0
        %4456 = vmatpush1.msra.mxu0 0.0
        %4457 = vmatprep.subr.mxu0 0.0
        %4458 = vmatpush1.msra.mxu0 0.0
        %4459 = vmatprep.subr.mxu0 0.0
        %4460 = vmatpush1.msra.mxu0 0.0
        %4461 = vmatprep.subr.mxu0 0.0
        %4462 = vmatpush1.msra.mxu0 0.0
        %4463 = vmatprep.subr.mxu0 0.0
        %4464 = vmatpush1.msra.mxu0 0.0
        %4465 = vmatprep.subr.mxu0 0.0
        %4466 = vmatpush1.msra.mxu0 0.0
        %4467 = vmatprep.subr.mxu0 0.0
        %4468 = vmatpush1.msra.mxu0 0.0
        %4469 = vmatprep.mubr.f32.mxu0 0.0
        %v4470 = vand.u32 %v3703, 4294901760
        %4471 = vmatmul.mubr.f32.gmra.mrb[0].mxu0 %v4470
        %v4472 = vpop.f32.mrb[0].mxu0
        %v4473 = vadd.f32 %v4368, %v4472
        %v4474 = vpop.f32.mrb[0].mxu0
        %4475 = vmatprep.mubr.f32.mxu0 0.0
        %v4476 = vand.u32 %v3709, 4294901760
        %4477 = vmatmul.mubr.f32.gmra.mrb[0].mxu0 %v4476
        %v4478 = vpop.f32.mrb[0].mxu0
        %v4479 = vadd.f32 %v4374, %v4478
        %v4480 = vpop.f32.mrb[0].mxu0
        %4481 = vmatprep.mubr.f32.mxu0 0.0
        %v4482 = vand.u32 %v3715, 4294901760
        %4483 = vmatmul.mubr.f32.gmra.mrb[0].mxu0 %v4482
        %v4484 = vpop.f32.mrb[0].mxu0
        %v4485 = vadd.f32 %v4380, %v4484
        %v4486 = vpop.f32.mrb[0].mxu0
        %4487 = vmatprep.mubr.f32.mxu0 0.0
        %v4488 = vand.u32 %v3721, 4294901760
        %4489 = vmatmul.mubr.f32.gmra.mrb[0].mxu0 %v4488
        %v4490 = vpop.f32.mrb[0].mxu0
        %v4491 = vadd.f32 %v4386, %v4490
        %v4492 = vpop.f32.mrb[0].mxu0
        %4493 = vdwg.mxu0
        %v4494 = vmul.f32 %v480, %v480
        %v4495 = vmul.f32 %v481, %v481
        %v4496 = vmul.f32 %v482, %v482
        %v4497 = vmul.f32 %v483, %v483
        %v4498 = vmul.f32 %v494, %v494
        %v4499 = vmul.f32 %v495, %v495
        %4500 = vmatprep.subr.mxu0 0.0
        %v4501 = vand.u32 %v4498, 4294901760
        %4502 = vmatpush1.msra.mxu0 %v4501
        %4503 = vmatprep.subr.mxu0 0.0
        %v4504 = vand.u32 %v4499, 4294901760
        %4505 = vmatpush1.msra.mxu0 %v4504
        %4506 = vmatprep.subr.mxu0 0.0
        %4507 = vmatpush1.msra.mxu0 0.0
        %4508 = vmatprep.subr.mxu0 0.0
        %4509 = vmatpush1.msra.mxu0 0.0
        %4510 = vmatprep.subr.mxu0 0.0
        %4511 = vmatpush1.msra.mxu0 0.0
        %4512 = vmatprep.subr.mxu0 0.0
        %4513 = vmatpush1.msra.mxu0 0.0
        %4514 = vmatprep.subr.mxu0 0.0
        %4515 = vmatpush1.msra.mxu0 0.0
        %4516 = vmatprep.subr.mxu0 0.0
        %4517 = vmatpush1.msra.mxu0 0.0
        %4518 = vmatprep.subr.mxu0 0.0
        %4519 = vmatpush1.msra.mxu0 0.0
        %4520 = vmatprep.subr.mxu0 0.0
        %4521 = vmatpush1.msra.mxu0 0.0
        %4522 = vmatprep.subr.mxu0 0.0
        %4523 = vmatpush1.msra.mxu0 0.0
        %4524 = vmatprep.subr.mxu0 0.0
        %4525 = vmatpush1.msra.mxu0 0.0
        %4526 = vmatprep.subr.mxu0 0.0
        %4527 = vmatpush1.msra.mxu0 0.0
        %4528 = vmatprep.subr.mxu0 0.0
        %4529 = vmatpush1.msra.mxu0 0.0
        %4530 = vmatprep.subr.mxu0 0.0
        %4531 = vmatpush1.msra.mxu0 0.0
        %4532 = vmatprep.subr.mxu0 0.0
        %4533 = vmatpush1.msra.mxu0 0.0
        %4534 = vmatprep.subr.mxu0 0.0
        %4535 = vmatpush1.msra.mxu0 0.0
        %4536 = vmatprep.subr.mxu0 0.0
        %4537 = vmatpush1.msra.mxu0 0.0
        %4538 = vmatprep.subr.mxu0 0.0
        %4539 = vmatpush1.msra.mxu0 0.0
        %4540 = vmatprep.subr.mxu0 0.0
        %4541 = vmatpush1.msra.mxu0 0.0
        %4542 = vmatprep.subr.mxu0 0.0
        %4543 = vmatpush1.msra.mxu0 0.0
        %4544 = vmatprep.subr.mxu0 0.0
        %4545 = vmatpush1.msra.mxu0 0.0
        %4546 = vmatprep.subr.mxu0 0.0
        %4547 = vmatpush1.msra.mxu0 0.0
        %4548 = vmatprep.subr.mxu0 0.0
        %4549 = vmatpush1.msra.mxu0 0.0
        %4550 = vmatprep.subr.mxu0 0.0
        %4551 = vmatpush1.msra.mxu0 0.0
        %4552 = vmatprep.subr.mxu0 0.0
        %4553 = vmatpush1.msra.mxu0 0.0
        %4554 = vmatprep.subr.mxu0 0.0
        %4555 = vmatpush1.msra.mxu0 0.0
        %4556 = vmatprep.subr.mxu0 0.0
        %4557 = vmatpush1.msra.mxu0 0.0
        %4558 = vmatprep.subr.mxu0 0.0
        %4559 = vmatpush1.msra.mxu0 0.0
        %4560 = vmatprep.subr.mxu0 0.0
        %4561 = vmatpush1.msra.mxu0 0.0
        %4562 = vmatprep.subr.mxu0 0.0
        %4563 = vmatpush1.msra.mxu0 0.0
        %4564 = vmatprep.subr.mxu0 0.0
        %4565 = vmatpush1.msra.mxu0 0.0
        %4566 = vmatprep.mubr.f32.mxu0 0.0
        %v4567 = vand.u32 %v526, 4294901760
        %v4568 = vsub.f32 %v526, %v4567
        %v4569 = vand.u32 %v4568, 4294901760
        %v4570 = vsub.f32 %v4568, %v4569
        %v4571 = vand.u32 %v4570, 4294901760
        %4572 = vmatmul.mubr.f32.gmra.mrb[0].mxu0 %v4571
        %v4573 = vpop.f32.mrb[0].mxu0
        %v4574 = vadd.f32 0.0, %v4573
        %v4575 = vpop.f32.mrb[0].mxu0
        %4576 = vmatprep.mubr.f32.mxu0 0.0
        %v4577 = vand.u32 %v529, 4294901760
        %v4578 = vsub.f32 %v529, %v4577
        %v4579 = vand.u32 %v4578, 4294901760
        %v4580 = vsub.f32 %v4578, %v4579
        %v4581 = vand.u32 %v4580, 4294901760
        %4582 = vmatmul.mubr.f32.gmra.mrb[0].mxu0 %v4581
        %v4583 = vpop.f32.mrb[0].mxu0
        %v4584 = vadd.f32 0.0, %v4583
        %v4585 = vpop.f32.mrb[0].mxu0
        %4586 = vmatprep.mubr.f32.mxu0 0.0
        %v4587 = vand.u32 %v532, 4294901760
        %v4588 = vsub.f32 %v532, %v4587
        %v4589 = vand.u32 %v4588, 4294901760
        %v4590 = vsub.f32 %v4588, %v4589
        %v4591 = vand.u32 %v4590, 4294901760
        %4592 = vmatmul.mubr.f32.gmra.mrb[0].mxu0 %v4591
        %v4593 = vpop.f32.mrb[0].mxu0
        %v4594 = vadd.f32 0.0, %v4593
        %v4595 = vpop.f32.mrb[0].mxu0
        %4596 = vmatprep.mubr.f32.mxu0 0.0
        %v4597 = vand.u32 %v535, 4294901760
        %v4598 = vsub.f32 %v535, %v4597
        %v4599 = vand.u32 %v4598, 4294901760
        %v4600 = vsub.f32 %v4598, %v4599
        %v4601 = vand.u32 %v4600, 4294901760
        %4602 = vmatmul.mubr.f32.gmra.mrb[0].mxu0 %v4601
        %v4603 = vpop.f32.mrb[0].mxu0
        %v4604 = vadd.f32 0.0, %v4603
        %v4605 = vpop.f32.mrb[0].mxu0
        %4606 = vdwg.mxu0
        %4607 = vmatprep.subr.mxu0 0.0
        %v4608 = vand.u32 %v4498, 4294901760
        %v4609 = vsub.f32 %v4498, %v4608
        %v4610 = vand.u32 %v4609, 4294901760
        %v4611 = vsub.f32 %v4609, %v4610
        %v4612 = vand.u32 %v4611, 4294901760
        %4613 = vmatpush1.msra.mxu0 %v4612
        %4614 = vmatprep.subr.mxu0 0.0
        %v4615 = vand.u32 %v4499, 4294901760
        %v4616 = vsub.f32 %v4499, %v4615
        %v4617 = vand.u32 %v4616, 4294901760
        %v4618 = vsub.f32 %v4616, %v4617
        %v4619 = vand.u32 %v4618, 4294901760
        %4620 = vmatpush1.msra.mxu0 %v4619
        %4621 = vmatprep.subr.mxu0 0.0
        %4622 = vmatpush1.msra.mxu0 0.0
        %4623 = vmatprep.subr.mxu0 0.0
        %4624 = vmatpush1.msra.mxu0 0.0
        %4625 = vmatprep.subr.mxu0 0.0
        %4626 = vmatpush1.msra.mxu0 0.0
        %4627 = vmatprep.subr.mxu0 0.0
        %4628 = vmatpush1.msra.mxu0 0.0
        %4629 = vmatprep.subr.mxu0 0.0
        %4630 = vmatpush1.msra.mxu0 0.0
        %4631 = vmatprep.subr.mxu0 0.0
        %4632 = vmatpush1.msra.mxu0 0.0
        %4633 = vmatprep.subr.mxu0 0.0
        %4634 = vmatpush1.msra.mxu0 0.0
        %4635 = vmatprep.subr.mxu0 0.0
        %4636 = vmatpush1.msra.mxu0 0.0
        %4637 = vmatprep.subr.mxu0 0.0
        %4638 = vmatpush1.msra.mxu0 0.0
        %4639 = vmatprep.subr.mxu0 0.0
        %4640 = vmatpush1.msra.mxu0 0.0
        %4641 = vmatprep.subr.mxu0 0.0
        %4642 = vmatpush1.msra.mxu0 0.0
        %4643 = vmatprep.subr.mxu0 0.0
        %4644 = vmatpush1.msra.mxu0 0.0
        %4645 = vmatprep.subr.mxu0 0.0
        %4646 = vmatpush1.msra.mxu0 0.0
        %4647 = vmatprep.subr.mxu0 0.0
        %4648 = vmatpush1.msra.mxu0 0.0
        %4649 = vmatprep.subr.mxu0 0.0
        %4650 = vmatpush1.msra.mxu0 0.0
        %4651 = vmatprep.subr.mxu0 0.0
        %4652 = vmatpush1.msra.mxu0 0.0
        %4653 = vmatprep.subr.mxu0 0.0
        %4654 = vmatpush1.msra.mxu0 0.0
        %4655 = vmatprep.subr.mxu0 0.0
        %4656 = vmatpush1.msra.mxu0 0.0
        %4657 = vmatprep.subr.mxu0 0.0
        %4658 = vmatpush1.msra.mxu0 0.0
        %4659 = vmatprep.subr.mxu0 0.0
        %4660 = vmatpush1.msra.mxu0 0.0
        %4661 = vmatprep.subr.mxu0 0.0
        %4662 = vmatpush1.msra.mxu0 0.0
        %4663 = vmatprep.subr.mxu0 0.0
        %4664 = vmatpush1.msra.mxu0 0.0
        %4665 = vmatprep.subr.mxu0 0.0
        %4666 = vmatpush1.msra.mxu0 0.0
        %4667 = vmatprep.subr.mxu0 0.0
        %4668 = vmatpush1.msra.mxu0 0.0
        %4669 = vmatprep.subr.mxu0 0.0
        %4670 = vmatpush1.msra.mxu0 0.0
        %4671 = vmatprep.subr.mxu0 0.0
        %4672 = vmatpush1.msra.mxu0 0.0
        %4673 = vmatprep.subr.mxu0 0.0
        %4674 = vmatpush1.msra.mxu0 0.0
        %4675 = vmatprep.subr.mxu0 0.0
        %4676 = vmatpush1.msra.mxu0 0.0
        %4677 = vmatprep.subr.mxu0 0.0
        %4678 = vmatpush1.msra.mxu0 0.0
        %4679 = vmatprep.subr.mxu0 0.0
        %4680 = vmatpush1.msra.mxu0 0.0
        %4681 = vmatprep.mubr.f32.mxu0 0.0
        %v4682 = vand.u32 %v526, 4294901760
        %4683 = vmatmul.mubr.f32.gmra.mrb[0].mxu0 %v4682
        %v4684 = vpop.f32.mrb[0].mxu0
        %v4685 = vadd.f32 %v4574, %v4684
        %v4686 = vpop.f32.mrb[0].mxu0
        %4687 = vmatprep.mubr.f32.mxu0 0.0
        %v4688 = vand.u32 %v529, 4294901760
        %4689 = vmatmul.mubr.f32.gmra.mrb[0].mxu0 %v4688
        %v4690 = vpop.f32.mrb[0].mxu0
        %v4691 = vadd.f32 %v4584, %v4690
        %v4692 = vpop.f32.mrb[0].mxu0
        %4693 = vmatprep.mubr.f32.mxu0 0.0
        %v4694 = vand.u32 %v532, 4294901760
        %4695 = vmatmul.mubr.f32.gmra.mrb[0].mxu0 %v4694
        %v4696 = vpop.f32.mrb[0].mxu0
        %v4697 = vadd.f32 %v4594, %v4696
        %v4698 = vpop.f32.mrb[0].mxu0
        %4699 = vmatprep.mubr.f32.mxu0 0.0
        %v4700 = vand.u32 %v535, 4294901760
        %4701 = vmatmul.mubr.f32.gmra.mrb[0].mxu0 %v4700
        %v4702 = vpop.f32.mrb[0].mxu0
        %v4703 = vadd.f32 %v4604, %v4702
        %v4704 = vpop.f32.mrb[0].mxu0
        %4705 = vdwg.mxu0
        %4706 = vmatprep.subr.mxu0 0.0
        %v4707 = vand.u32 %v4498, 4294901760
        %v4708 = vsub.f32 %v4498, %v4707
        %4709 = vmatpush1.msra.mxu0 %v4708
        %4710 = vmatprep.subr.mxu0 0.0
        %v4711 = vand.u32 %v4499, 4294901760
        %v4712 = vsub.f32 %v4499, %v4711
        %4713 = vmatpush1.msra.mxu0 %v4712
        %4714 = vmatprep.subr.mxu0 0.0
        %4715 = vmatpush1.msra.mxu0 0.0
        %4716 = vmatprep.subr.mxu0 0.0
        %4717 = vmatpush1.msra.mxu0 0.0
        %4718 = vmatprep.subr.mxu0 0.0
        %4719 = vmatpush1.msra.mxu0 0.0
        %4720 = vmatprep.subr.mxu0 0.0
        %4721 = vmatpush1.msra.mxu0 0.0
        %4722 = vmatprep.subr.mxu0 0.0
        %4723 = vmatpush1.msra.mxu0 0.0
        %4724 = vmatprep.subr.mxu0 0.0
        %4725 = vmatpush1.msra.mxu0 0.0
        %4726 = vmatprep.subr.mxu0 0.0
        %4727 = vmatpush1.msra.mxu0 0.0
        %4728 = vmatprep.subr.mxu0 0.0
        %4729 = vmatpush1.msra.mxu0 0.0
        %4730 = vmatprep.subr.mxu0 0.0
        %4731 = vmatpush1.msra.mxu0 0.0
        %4732 = vmatprep.subr.mxu0 0.0
        %4733 = vmatpush1.msra.mxu0 0.0
        %4734 = vmatprep.subr.mxu0 0.0
        %4735 = vmatpush1.msra.mxu0 0.0
        %4736 = vmatprep.subr.mxu0 0.0
        %4737 = vmatpush1.msra.mxu0 0.0
        %4738 = vmatprep.subr.mxu0 0.0
        %4739 = vmatpush1.msra.mxu0 0.0
        %4740 = vmatprep.subr.mxu0 0.0
        %4741 = vmatpush1.msra.mxu0 0.0
        %4742 = vmatprep.subr.mxu0 0.0
        %4743 = vmatpush1.msra.mxu0 0.0
        %4744 = vmatprep.subr.mxu0 0.0
        %4745 = vmatpush1.msra.mxu0 0.0
        %4746 = vmatprep.subr.mxu0 0.0
        %4747 = vmatpush1.msra.mxu0 0.0
        %4748 = vmatprep.subr.mxu0 0.0
        %4749 = vmatpush1.msra.mxu0 0.0
        %4750 = vmatprep.subr.mxu0 0.0
        %4751 = vmatpush1.msra.mxu0 0.0
        %4752 = vmatprep.subr.mxu0 0.0
        %4753 = vmatpush1.msra.mxu0 0.0
        %4754 = vmatprep.subr.mxu0 0.0
        %4755 = vmatpush1.msra.mxu0 0.0
        %4756 = vmatprep.subr.mxu0 0.0
        %4757 = vmatpush1.msra.mxu0 0.0
        %4758 = vmatprep.subr.mxu0 0.0
        %4759 = vmatpush1.msra.mxu0 0.0
        %4760 = vmatprep.subr.mxu0 0.0
        %4761 = vmatpush1.msra.mxu0 0.0
        %4762 = vmatprep.subr.mxu0 0.0
        %4763 = vmatpush1.msra.mxu0 0.0
        %4764 = vmatprep.subr.mxu0 0.0
        %4765 = vmatpush1.msra.mxu0 0.0
        %4766 = vmatprep.subr.mxu0 0.0
        %4767 = vmatpush1.msra.mxu0 0.0
        %4768 = vmatprep.subr.mxu0 0.0
        %4769 = vmatpush1.msra.mxu0 0.0
        %4770 = vmatprep.subr.mxu0 0.0
        %4771 = vmatpush1.msra.mxu0 0.0
        %4772 = vmatprep.subr.mxu0 0.0
        %4773 = vmatpush1.msra.mxu0 0.0
        %4774 = vmatprep.mubr.f32.mxu0 0.0
        %v4775 = vand.u32 %v526, 4294901760
        %v4776 = vsub.f32 %v526, %v4775
        %4777 = vmatmul.mubr.f32.gmra.mrb[0].mxu0 %v4776
        %v4778 = vpop.f32.mrb[0].mxu0
        %v4779 = vadd.f32 %v4685, %v4778
        %v4780 = vpop.f32.mrb[0].mxu0
        %4781 = vmatprep.mubr.f32.mxu0 0.0
        %v4782 = vand.u32 %v529, 4294901760
        %v4783 = vsub.f32 %v529, %v4782
        %4784 = vmatmul.mubr.f32.gmra.mrb[0].mxu0 %v4783
        %v4785 = vpop.f32.mrb[0].mxu0
        %v4786 = vadd.f32 %v4691, %v4785
        %v4787 = vpop.f32.mrb[0].mxu0
        %4788 = vmatprep.mubr.f32.mxu0 0.0
        %v4789 = vand.u32 %v532, 4294901760
        %v4790 = vsub.f32 %v532, %v4789
        %4791 = vmatmul.mubr.f32.gmra.mrb[0].mxu0 %v4790
        %v4792 = vpop.f32.mrb[0].mxu0
        %v4793 = vadd.f32 %v4697, %v4792
        %v4794 = vpop.f32.mrb[0].mxu0
        %4795 = vmatprep.mubr.f32.mxu0 0.0
        %v4796 = vand.u32 %v535, 4294901760
        %v4797 = vsub.f32 %v535, %v4796
        %4798 = vmatmul.mubr.f32.gmra.mrb[0].mxu0 %v4797
        %v4799 = vpop.f32.mrb[0].mxu0
        %v4800 = vadd.f32 %v4703, %v4799
        %v4801 = vpop.f32.mrb[0].mxu0
        %4802 = vdwg.mxu0
        %4803 = vmatprep.subr.mxu0 0.0
        %v4804 = vand.u32 %v4498, 4294901760
        %4805 = vmatpush1.msra.mxu0 %v4804
        %4806 = vmatprep.subr.mxu0 0.0
        %v4807 = vand.u32 %v4499, 4294901760
        %4808 = vmatpush1.msra.mxu0 %v4807
        %4809 = vmatprep.subr.mxu0 0.0
        %4810 = vmatpush1.msra.mxu0 0.0
        %4811 = vmatprep.subr.mxu0 0.0
        %4812 = vmatpush1.msra.mxu0 0.0
        %4813 = vmatprep.subr.mxu0 0.0
        %4814 = vmatpush1.msra.mxu0 0.0
        %4815 = vmatprep.subr.mxu0 0.0
        %4816 = vmatpush1.msra.mxu0 0.0
        %4817 = vmatprep.subr.mxu0 0.0
        %4818 = vmatpush1.msra.mxu0 0.0
        %4819 = vmatprep.subr.mxu0 0.0
        %4820 = vmatpush1.msra.mxu0 0.0
        %4821 = vmatprep.subr.mxu0 0.0
        %4822 = vmatpush1.msra.mxu0 0.0
        %4823 = vmatprep.subr.mxu0 0.0
        %4824 = vmatpush1.msra.mxu0 0.0
        %4825 = vmatprep.subr.mxu0 0.0
        %4826 = vmatpush1.msra.mxu0 0.0
        %4827 = vmatprep.subr.mxu0 0.0
        %4828 = vmatpush1.msra.mxu0 0.0
        %4829 = vmatprep.subr.mxu0 0.0
        %4830 = vmatpush1.msra.mxu0 0.0
        %4831 = vmatprep.subr.mxu0 0.0
        %4832 = vmatpush1.msra.mxu0 0.0
        %4833 = vmatprep.subr.mxu0 0.0
        %4834 = vmatpush1.msra.mxu0 0.0
        %4835 = vmatprep.subr.mxu0 0.0
        %4836 = vmatpush1.msra.mxu0 0.0
        %4837 = vmatprep.subr.mxu0 0.0
        %4838 = vmatpush1.msra.mxu0 0.0
        %4839 = vmatprep.subr.mxu0 0.0
        %4840 = vmatpush1.msra.mxu0 0.0
        %4841 = vmatprep.subr.mxu0 0.0
        %4842 = vmatpush1.msra.mxu0 0.0
        %4843 = vmatprep.subr.mxu0 0.0
        %4844 = vmatpush1.msra.mxu0 0.0
        %4845 = vmatprep.subr.mxu0 0.0
        %4846 = vmatpush1.msra.mxu0 0.0
        %4847 = vmatprep.subr.mxu0 0.0
        %4848 = vmatpush1.msra.mxu0 0.0
        %4849 = vmatprep.subr.mxu0 0.0
        %4850 = vmatpush1.msra.mxu0 0.0
        %4851 = vmatprep.subr.mxu0 0.0
        %4852 = vmatpush1.msra.mxu0 0.0
        %4853 = vmatprep.subr.mxu0 0.0
        %4854 = vmatpush1.msra.mxu0 0.0
        %4855 = vmatprep.subr.mxu0 0.0
        %4856 = vmatpush1.msra.mxu0 0.0
        %4857 = vmatprep.subr.mxu0 0.0
        %4858 = vmatpush1.msra.mxu0 0.0
        %4859 = vmatprep.subr.mxu0 0.0
        %4860 = vmatpush1.msra.mxu0 0.0
        %4861 = vmatprep.subr.mxu0 0.0
        %4862 = vmatpush1.msra.mxu0 0.0
        %4863 = vmatprep.subr.mxu0 0.0
        %4864 = vmatpush1.msra.mxu0 0.0
        %4865 = vmatprep.subr.mxu0 0.0
        %4866 = vmatpush1.msra.mxu0 0.0
        %4867 = vmatprep.subr.mxu0 0.0
        %4868 = vmatpush1.msra.mxu0 0.0
        %4869 = vmatprep.mubr.f32.mxu0 0.0
        %v4870 = vand.u32 %v526, 4294901760
        %v4871 = vsub.f32 %v526, %v4870
        %v4872 = vand.u32 %v4871, 4294901760
        %4873 = vmatmul.mubr.f32.gmra.mrb[0].mxu0 %v4872
        %v4874 = vpop.f32.mrb[0].mxu0
        %v4875 = vadd.f32 %v4779, %v4874
        %v4876 = vpop.f32.mrb[0].mxu0
        %4877 = vmatprep.mubr.f32.mxu0 0.0
        %v4878 = vand.u32 %v529, 4294901760
        %v4879 = vsub.f32 %v529, %v4878
        %v4880 = vand.u32 %v4879, 4294901760
        %4881 = vmatmul.mubr.f32.gmra.mrb[0].mxu0 %v4880
        %v4882 = vpop.f32.mrb[0].mxu0
        %v4883 = vadd.f32 %v4786, %v4882
        %v4884 = vpop.f32.mrb[0].mxu0
        %4885 = vmatprep.mubr.f32.mxu0 0.0
        %v4886 = vand.u32 %v532, 4294901760
        %v4887 = vsub.f32 %v532, %v4886
        %v4888 = vand.u32 %v4887, 4294901760
        %4889 = vmatmul.mubr.f32.gmra.mrb[0].mxu0 %v4888
        %v4890 = vpop.f32.mrb[0].mxu0
        %v4891 = vadd.f32 %v4793, %v4890
        %v4892 = vpop.f32.mrb[0].mxu0
        %4893 = vmatprep.mubr.f32.mxu0 0.0
        %v4894 = vand.u32 %v535, 4294901760
        %v4895 = vsub.f32 %v535, %v4894
        %v4896 = vand.u32 %v4895, 4294901760
        %4897 = vmatmul.mubr.f32.gmra.mrb[0].mxu0 %v4896
        %v4898 = vpop.f32.mrb[0].mxu0
        %v4899 = vadd.f32 %v4800, %v4898
        %v4900 = vpop.f32.mrb[0].mxu0
        %4901 = vdwg.mxu0
        %4902 = vmatprep.subr.mxu0 0.0
        %v4903 = vand.u32 %v4498, 4294901760
        %v4904 = vsub.f32 %v4498, %v4903
        %v4905 = vand.u32 %v4904, 4294901760
        %4906 = vmatpush1.msra.mxu0 %v4905
        %4907 = vmatprep.subr.mxu0 0.0
        %v4908 = vand.u32 %v4499, 4294901760
        %v4909 = vsub.f32 %v4499, %v4908
        %v4910 = vand.u32 %v4909, 4294901760
        %4911 = vmatpush1.msra.mxu0 %v4910
        %4912 = vmatprep.subr.mxu0 0.0
        %4913 = vmatpush1.msra.mxu0 0.0
        %4914 = vmatprep.subr.mxu0 0.0
        %4915 = vmatpush1.msra.mxu0 0.0
        %4916 = vmatprep.subr.mxu0 0.0
        %4917 = vmatpush1.msra.mxu0 0.0
        %4918 = vmatprep.subr.mxu0 0.0
        %4919 = vmatpush1.msra.mxu0 0.0
        %4920 = vmatprep.subr.mxu0 0.0
        %4921 = vmatpush1.msra.mxu0 0.0
        %4922 = vmatprep.subr.mxu0 0.0
        %4923 = vmatpush1.msra.mxu0 0.0
        %4924 = vmatprep.subr.mxu0 0.0
        %4925 = vmatpush1.msra.mxu0 0.0
        %4926 = vmatprep.subr.mxu0 0.0
        %4927 = vmatpush1.msra.mxu0 0.0
        %4928 = vmatprep.subr.mxu0 0.0
        %4929 = vmatpush1.msra.mxu0 0.0
        %4930 = vmatprep.subr.mxu0 0.0
        %4931 = vmatpush1.msra.mxu0 0.0
        %4932 = vmatprep.subr.mxu0 0.0
        %4933 = vmatpush1.msra.mxu0 0.0
        %4934 = vmatprep.subr.mxu0 0.0
        %4935 = vmatpush1.msra.mxu0 0.0
        %4936 = vmatprep.subr.mxu0 0.0
        %4937 = vmatpush1.msra.mxu0 0.0
        %4938 = vmatprep.subr.mxu0 0.0
        %4939 = vmatpush1.msra.mxu0 0.0
        %4940 = vmatprep.subr.mxu0 0.0
        %4941 = vmatpush1.msra.mxu0 0.0
        %4942 = vmatprep.subr.mxu0 0.0
        %4943 = vmatpush1.msra.mxu0 0.0
        %4944 = vmatprep.subr.mxu0 0.0
        %4945 = vmatpush1.msra.mxu0 0.0
        %4946 = vmatprep.subr.mxu0 0.0
        %4947 = vmatpush1.msra.mxu0 0.0
        %4948 = vmatprep.subr.mxu0 0.0
        %4949 = vmatpush1.msra.mxu0 0.0
        %4950 = vmatprep.subr.mxu0 0.0
        %4951 = vmatpush1.msra.mxu0 0.0
        %4952 = vmatprep.subr.mxu0 0.0
        %4953 = vmatpush1.msra.mxu0 0.0
        %4954 = vmatprep.subr.mxu0 0.0
        %4955 = vmatpush1.msra.mxu0 0.0
        %4956 = vmatprep.subr.mxu0 0.0
        %4957 = vmatpush1.msra.mxu0 0.0
        %4958 = vmatprep.subr.mxu0 0.0
        %4959 = vmatpush1.msra.mxu0 0.0
        %4960 = vmatprep.subr.mxu0 0.0
        %4961 = vmatpush1.msra.mxu0 0.0
        %4962 = vmatprep.subr.mxu0 0.0
        %4963 = vmatpush1.msra.mxu0 0.0
        %4964 = vmatprep.subr.mxu0 0.0
        %4965 = vmatpush1.msra.mxu0 0.0
        %4966 = vmatprep.subr.mxu0 0.0
        %4967 = vmatpush1.msra.mxu0 0.0
        %4968 = vmatprep.subr.mxu0 0.0
        %4969 = vmatpush1.msra.mxu0 0.0
        %4970 = vmatprep.subr.mxu0 0.0
        %4971 = vmatpush1.msra.mxu0 0.0
        %4972 = vmatprep.mubr.f32.mxu0 0.0
        %v4973 = vand.u32 %v526, 4294901760
        %4974 = vmatmul.mubr.f32.gmra.mrb[0].mxu0 %v4973
        %v4975 = vpop.f32.mrb[0].mxu0
        %v4976 = vadd.f32 %v4875, %v4975
        %v4977 = vpop.f32.mrb[0].mxu0
        %4978 = vmatprep.mubr.f32.mxu0 0.0
        %v4979 = vand.u32 %v529, 4294901760
        %4980 = vmatmul.mubr.f32.gmra.mrb[0].mxu0 %v4979
        %v4981 = vpop.f32.mrb[0].mxu0
        %v4982 = vadd.f32 %v4883, %v4981
        %v4983 = vpop.f32.mrb[0].mxu0
        %4984 = vmatprep.mubr.f32.mxu0 0.0
        %v4985 = vand.u32 %v532, 4294901760
        %4986 = vmatmul.mubr.f32.gmra.mrb[0].mxu0 %v4985
        %v4987 = vpop.f32.mrb[0].mxu0
        %v4988 = vadd.f32 %v4891, %v4987
        %v4989 = vpop.f32.mrb[0].mxu0
        %4990 = vmatprep.mubr.f32.mxu0 0.0
        %v4991 = vand.u32 %v535, 4294901760
        %4992 = vmatmul.mubr.f32.gmra.mrb[0].mxu0 %v4991
        %v4993 = vpop.f32.mrb[0].mxu0
        %v4994 = vadd.f32 %v4899, %v4993
        %v4995 = vpop.f32.mrb[0].mxu0
        %4996 = vdwg.mxu0
        %4997 = vmatprep.subr.mxu0 0.0
        %v4998 = vand.u32 %v4498, 4294901760
        %4999 = vmatpush1.msra.mxu0 %v4998
        %5000 = vmatprep.subr.mxu0 0.0
        %v5001 = vand.u32 %v4499, 4294901760
        %5002 = vmatpush1.msra.mxu0 %v5001
        %5003 = vmatprep.subr.mxu0 0.0
        %5004 = vmatpush1.msra.mxu0 0.0
        %5005 = vmatprep.subr.mxu0 0.0
        %5006 = vmatpush1.msra.mxu0 0.0
        %5007 = vmatprep.subr.mxu0 0.0
        %5008 = vmatpush1.msra.mxu0 0.0
        %5009 = vmatprep.subr.mxu0 0.0
        %5010 = vmatpush1.msra.mxu0 0.0
        %5011 = vmatprep.subr.mxu0 0.0
        %5012 = vmatpush1.msra.mxu0 0.0
        %5013 = vmatprep.subr.mxu0 0.0
        %5014 = vmatpush1.msra.mxu0 0.0
        %5015 = vmatprep.subr.mxu0 0.0
        %5016 = vmatpush1.msra.mxu0 0.0
        %5017 = vmatprep.subr.mxu0 0.0
        %5018 = vmatpush1.msra.mxu0 0.0
        %5019 = vmatprep.subr.mxu0 0.0
        %5020 = vmatpush1.msra.mxu0 0.0
        %5021 = vmatprep.subr.mxu0 0.0
        %5022 = vmatpush1.msra.mxu0 0.0
        %5023 = vmatprep.subr.mxu0 0.0
        %5024 = vmatpush1.msra.mxu0 0.0
        %5025 = vmatprep.subr.mxu0 0.0
        %5026 = vmatpush1.msra.mxu0 0.0
        %5027 = vmatprep.subr.mxu0 0.0
        %5028 = vmatpush1.msra.mxu0 0.0
        %5029 = vmatprep.subr.mxu0 0.0
        %5030 = vmatpush1.msra.mxu0 0.0
        %5031 = vmatprep.subr.mxu0 0.0
        %5032 = vmatpush1.msra.mxu0 0.0
        %5033 = vmatprep.subr.mxu0 0.0
        %5034 = vmatpush1.msra.mxu0 0.0
        %5035 = vmatprep.subr.mxu0 0.0
        %5036 = vmatpush1.msra.mxu0 0.0
        %5037 = vmatprep.subr.mxu0 0.0
        %5038 = vmatpush1.msra.mxu0 0.0
        %5039 = vmatprep.subr.mxu0 0.0
        %5040 = vmatpush1.msra.mxu0 0.0
        %5041 = vmatprep.subr.mxu0 0.0
        %5042 = vmatpush1.msra.mxu0 0.0
        %5043 = vmatprep.subr.mxu0 0.0
        %5044 = vmatpush1.msra.mxu0 0.0
        %5045 = vmatprep.subr.mxu0 0.0
        %5046 = vmatpush1.msra.mxu0 0.0
        %5047 = vmatprep.subr.mxu0 0.0
        %5048 = vmatpush1.msra.mxu0 0.0
        %5049 = vmatprep.subr.mxu0 0.0
        %5050 = vmatpush1.msra.mxu0 0.0
        %5051 = vmatprep.subr.mxu0 0.0
        %5052 = vmatpush1.msra.mxu0 0.0
        %5053 = vmatprep.subr.mxu0 0.0
        %5054 = vmatpush1.msra.mxu0 0.0
        %5055 = vmatprep.subr.mxu0 0.0
        %5056 = vmatpush1.msra.mxu0 0.0
        %5057 = vmatprep.subr.mxu0 0.0
        %5058 = vmatpush1.msra.mxu0 0.0
        %5059 = vmatprep.subr.mxu0 0.0
        %5060 = vmatpush1.msra.mxu0 0.0
        %5061 = vmatprep.subr.mxu0 0.0
        %5062 = vmatpush1.msra.mxu0 0.0
        %5063 = vmatprep.mubr.f32.mxu0 0.0
        %v5064 = vand.u32 %v526, 4294901760
        %5065 = vmatmul.mubr.f32.gmra.mrb[0].mxu0 %v5064
        %v5066 = vpop.f32.mrb[0].mxu0
        %v5067 = vadd.f32 %v4976, %v5066
        %v5068 = vpop.f32.mrb[0].mxu0
        %5069 = vmatprep.mubr.f32.mxu0 0.0
        %v5070 = vand.u32 %v529, 4294901760
        %5071 = vmatmul.mubr.f32.gmra.mrb[0].mxu0 %v5070
        %v5072 = vpop.f32.mrb[0].mxu0
        %v5073 = vadd.f32 %v4982, %v5072
        %v5074 = vpop.f32.mrb[0].mxu0
        %5075 = vmatprep.mubr.f32.mxu0 0.0
        %v5076 = vand.u32 %v532, 4294901760
        %5077 = vmatmul.mubr.f32.gmra.mrb[0].mxu0 %v5076
        %v5078 = vpop.f32.mrb[0].mxu0
        %v5079 = vadd.f32 %v4988, %v5078
        %v5080 = vpop.f32.mrb[0].mxu0
        %5081 = vmatprep.mubr.f32.mxu0 0.0
        %v5082 = vand.u32 %v535, 4294901760
        %5083 = vmatmul.mubr.f32.gmra.mrb[0].mxu0 %v5082
        %v5084 = vpop.f32.mrb[0].mxu0
        %v5085 = vadd.f32 %v4994, %v5084
        %v5086 = vpop.f32.mrb[0].mxu0
        %5087 = vdwg.mxu0
        %5088 = vmatprep.subr.mxu0 0.0
        %v5089 = vand.u32 %v4494, 4294901760
        %5090 = vmatpush1.msra.mxu0 %v5089
        %5091 = vmatprep.subr.mxu0 0.0
        %v5092 = vand.u32 %v4495, 4294901760
        %5093 = vmatpush1.msra.mxu0 %v5092
        %5094 = vmatprep.subr.mxu0 0.0
        %v5095 = vand.u32 %v4496, 4294901760
        %5096 = vmatpush1.msra.mxu0 %v5095
        %5097 = vmatprep.subr.mxu0 0.0
        %v5098 = vand.u32 %v4497, 4294901760
        %5099 = vmatpush1.msra.mxu0 %v5098
        %5100 = vmatprep.subr.mxu0 0.0
        %5101 = vmatpush1.msra.mxu0 0.0
        %5102 = vmatprep.subr.mxu0 0.0
        %5103 = vmatpush1.msra.mxu0 0.0
        %5104 = vmatprep.subr.mxu0 0.0
        %5105 = vmatpush1.msra.mxu0 0.0
        %5106 = vmatprep.subr.mxu0 0.0
        %5107 = vmatpush1.msra.mxu0 0.0
        %5108 = vmatprep.subr.mxu0 0.0
        %5109 = vmatpush1.msra.mxu0 0.0
        %5110 = vmatprep.subr.mxu0 0.0
        %5111 = vmatpush1.msra.mxu0 0.0
        %5112 = vmatprep.subr.mxu0 0.0
        %5113 = vmatpush1.msra.mxu0 0.0
        %5114 = vmatprep.subr.mxu0 0.0
        %5115 = vmatpush1.msra.mxu0 0.0
        %5116 = vmatprep.subr.mxu0 0.0
        %5117 = vmatpush1.msra.mxu0 0.0
        %5118 = vmatprep.subr.mxu0 0.0
        %5119 = vmatpush1.msra.mxu0 0.0
        %5120 = vmatprep.subr.mxu0 0.0
        %5121 = vmatpush1.msra.mxu0 0.0
        %5122 = vmatprep.subr.mxu0 0.0
        %5123 = vmatpush1.msra.mxu0 0.0
        %5124 = vmatprep.subr.mxu0 0.0
        %5125 = vmatpush1.msra.mxu0 0.0
        %5126 = vmatprep.subr.mxu0 0.0
        %5127 = vmatpush1.msra.mxu0 0.0
        %5128 = vmatprep.subr.mxu0 0.0
        %5129 = vmatpush1.msra.mxu0 0.0
        %5130 = vmatprep.subr.mxu0 0.0
        %5131 = vmatpush1.msra.mxu0 0.0
        %5132 = vmatprep.subr.mxu0 0.0
        %5133 = vmatpush1.msra.mxu0 0.0
        %5134 = vmatprep.subr.mxu0 0.0
        %5135 = vmatpush1.msra.mxu0 0.0
        %5136 = vmatprep.subr.mxu0 0.0
        %5137 = vmatpush1.msra.mxu0 0.0
        %5138 = vmatprep.subr.mxu0 0.0
        %5139 = vmatpush1.msra.mxu0 0.0
        %5140 = vmatprep.subr.mxu0 0.0
        %5141 = vmatpush1.msra.mxu0 0.0
        %5142 = vmatprep.subr.mxu0 0.0
        %5143 = vmatpush1.msra.mxu0 0.0
        %5144 = vmatprep.subr.mxu0 0.0
        %5145 = vmatpush1.msra.mxu0 0.0
        %5146 = vmatprep.subr.mxu0 0.0
        %5147 = vmatpush1.msra.mxu0 0.0
        %5148 = vmatprep.subr.mxu0 0.0
        %5149 = vmatpush1.msra.mxu0 0.0
        %5150 = vmatprep.subr.mxu0 0.0
        %5151 = vmatpush1.msra.mxu0 0.0
        %5152 = vmatprep.subr.mxu0 0.0
        %5153 = vmatpush1.msra.mxu0 0.0
        %5154 = vmatprep.subr.mxu0 0.0
        %5155 = vmatpush1.msra.mxu0 0.0
        %5156 = vmatprep.mubr.f32.mxu0 0.0
        %v5157 = vand.u32 %v1127, 4294901760
        %v5158 = vsub.f32 %v1127, %v5157
        %v5159 = vand.u32 %v5158, 4294901760
        %v5160 = vsub.f32 %v5158, %v5159
        %v5161 = vand.u32 %v5160, 4294901760
        %5162 = vmatmul.mubr.f32.gmra.mrb[0].mxu0 %v5161
        %v5163 = vpop.f32.mrb[0].mxu0
        %v5164 = vadd.f32 %v5067, %v5163
        %v5165 = vpop.f32.mrb[0].mxu0
        %5166 = vmatprep.mubr.f32.mxu0 0.0
        %v5167 = vand.u32 %v1130, 4294901760
        %v5168 = vsub.f32 %v1130, %v5167
        %v5169 = vand.u32 %v5168, 4294901760
        %v5170 = vsub.f32 %v5168, %v5169
        %v5171 = vand.u32 %v5170, 4294901760
        %5172 = vmatmul.mubr.f32.gmra.mrb[0].mxu0 %v5171
        %v5173 = vpop.f32.mrb[0].mxu0
        %v5174 = vadd.f32 %v5073, %v5173
        %v5175 = vpop.f32.mrb[0].mxu0
        %5176 = vmatprep.mubr.f32.mxu0 0.0
        %v5177 = vand.u32 %v1133, 4294901760
        %v5178 = vsub.f32 %v1133, %v5177
        %v5179 = vand.u32 %v5178, 4294901760
        %v5180 = vsub.f32 %v5178, %v5179
        %v5181 = vand.u32 %v5180, 4294901760
        %5182 = vmatmul.mubr.f32.gmra.mrb[0].mxu0 %v5181
        %v5183 = vpop.f32.mrb[0].mxu0
        %v5184 = vadd.f32 %v5079, %v5183
        %v5185 = vpop.f32.mrb[0].mxu0
        %5186 = vmatprep.mubr.f32.mxu0 0.0
        %v5187 = vand.u32 %v1136, 4294901760
        %v5188 = vsub.f32 %v1136, %v5187
        %v5189 = vand.u32 %v5188, 4294901760
        %v5190 = vsub.f32 %v5188, %v5189
        %v5191 = vand.u32 %v5190, 4294901760
        %5192 = vmatmul.mubr.f32.gmra.mrb[0].mxu0 %v5191
        %v5193 = vpop.f32.mrb[0].mxu0
        %v5194 = vadd.f32 %v5085, %v5193
        %v5195 = vpop.f32.mrb[0].mxu0
        %5196 = vdwg.mxu0
        %5197 = vmatprep.subr.mxu0 0.0
        %v5198 = vand.u32 %v4494, 4294901760
        %v5199 = vsub.f32 %v4494, %v5198
        %v5200 = vand.u32 %v5199, 4294901760
        %v5201 = vsub.f32 %v5199, %v5200
        %v5202 = vand.u32 %v5201, 4294901760
        %5203 = vmatpush1.msra.mxu0 %v5202
        %5204 = vmatprep.subr.mxu0 0.0
        %v5205 = vand.u32 %v4495, 4294901760
        %v5206 = vsub.f32 %v4495, %v5205
        %v5207 = vand.u32 %v5206, 4294901760
        %v5208 = vsub.f32 %v5206, %v5207
        %v5209 = vand.u32 %v5208, 4294901760
        %5210 = vmatpush1.msra.mxu0 %v5209
        %5211 = vmatprep.subr.mxu0 0.0
        %v5212 = vand.u32 %v4496, 4294901760
        %v5213 = vsub.f32 %v4496, %v5212
        %v5214 = vand.u32 %v5213, 4294901760
        %v5215 = vsub.f32 %v5213, %v5214
        %v5216 = vand.u32 %v5215, 4294901760
        %5217 = vmatpush1.msra.mxu0 %v5216
        %5218 = vmatprep.subr.mxu0 0.0
        %v5219 = vand.u32 %v4497, 4294901760
        %v5220 = vsub.f32 %v4497, %v5219
        %v5221 = vand.u32 %v5220, 4294901760
        %v5222 = vsub.f32 %v5220, %v5221
        %v5223 = vand.u32 %v5222, 4294901760
        %5224 = vmatpush1.msra.mxu0 %v5223
        %5225 = vmatprep.subr.mxu0 0.0
        %5226 = vmatpush1.msra.mxu0 0.0
        %5227 = vmatprep.subr.mxu0 0.0
        %5228 = vmatpush1.msra.mxu0 0.0
        %5229 = vmatprep.subr.mxu0 0.0
        %5230 = vmatpush1.msra.mxu0 0.0
        %5231 = vmatprep.subr.mxu0 0.0
        %5232 = vmatpush1.msra.mxu0 0.0
        %5233 = vmatprep.subr.mxu0 0.0
        %5234 = vmatpush1.msra.mxu0 0.0
        %5235 = vmatprep.subr.mxu0 0.0
        %5236 = vmatpush1.msra.mxu0 0.0
        %5237 = vmatprep.subr.mxu0 0.0
        %5238 = vmatpush1.msra.mxu0 0.0
        %5239 = vmatprep.subr.mxu0 0.0
        %5240 = vmatpush1.msra.mxu0 0.0
        %5241 = vmatprep.subr.mxu0 0.0
        %5242 = vmatpush1.msra.mxu0 0.0
        %5243 = vmatprep.subr.mxu0 0.0
        %5244 = vmatpush1.msra.mxu0 0.0
        %5245 = vmatprep.subr.mxu0 0.0
        %5246 = vmatpush1.msra.mxu0 0.0
        %5247 = vmatprep.subr.mxu0 0.0
        %5248 = vmatpush1.msra.mxu0 0.0
        %5249 = vmatprep.subr.mxu0 0.0
        %5250 = vmatpush1.msra.mxu0 0.0
        %5251 = vmatprep.subr.mxu0 0.0
        %5252 = vmatpush1.msra.mxu0 0.0
        %5253 = vmatprep.subr.mxu0 0.0
        %5254 = vmatpush1.msra.mxu0 0.0
        %5255 = vmatprep.subr.mxu0 0.0
        %5256 = vmatpush1.msra.mxu0 0.0
        %5257 = vmatprep.subr.mxu0 0.0
        %5258 = vmatpush1.msra.mxu0 0.0
        %5259 = vmatprep.subr.mxu0 0.0
        %5260 = vmatpush1.msra.mxu0 0.0
        %5261 = vmatprep.subr.mxu0 0.0
        %5262 = vmatpush1.msra.mxu0 0.0
        %5263 = vmatprep.subr.mxu0 0.0
        %5264 = vmatpush1.msra.mxu0 0.0
        %5265 = vmatprep.subr.mxu0 0.0
        %5266 = vmatpush1.msra.mxu0 0.0
        %5267 = vmatprep.subr.mxu0 0.0
        %5268 = vmatpush1.msra.mxu0 0.0
        %5269 = vmatprep.subr.mxu0 0.0
        %5270 = vmatpush1.msra.mxu0 0.0
        %5271 = vmatprep.subr.mxu0 0.0
        %5272 = vmatpush1.msra.mxu0 0.0
        %5273 = vmatprep.subr.mxu0 0.0
        %5274 = vmatpush1.msra.mxu0 0.0
        %5275 = vmatprep.subr.mxu0 0.0
        %5276 = vmatpush1.msra.mxu0 0.0
        %5277 = vmatprep.subr.mxu0 0.0
        %5278 = vmatpush1.msra.mxu0 0.0
        %5279 = vmatprep.subr.mxu0 0.0
        %5280 = vmatpush1.msra.mxu0 0.0
        %5281 = vmatprep.mubr.f32.mxu0 0.0
        %v5282 = vand.u32 %v1127, 4294901760
        %5283 = vmatmul.mubr.f32.gmra.mrb[0].mxu0 %v5282
        %v5284 = vpop.f32.mrb[0].mxu0
        %v5285 = vadd.f32 %v5164, %v5284
        %v5286 = vpop.f32.mrb[0].mxu0
        %5287 = vmatprep.mubr.f32.mxu0 0.0
        %v5288 = vand.u32 %v1130, 4294901760
        %5289 = vmatmul.mubr.f32.gmra.mrb[0].mxu0 %v5288
        %v5290 = vpop.f32.mrb[0].mxu0
        %v5291 = vadd.f32 %v5174, %v5290
        %v5292 = vpop.f32.mrb[0].mxu0
        %5293 = vmatprep.mubr.f32.mxu0 0.0
        %v5294 = vand.u32 %v1133, 4294901760
        %5295 = vmatmul.mubr.f32.gmra.mrb[0].mxu0 %v5294
        %v5296 = vpop.f32.mrb[0].mxu0
        %v5297 = vadd.f32 %v5184, %v5296
        %v5298 = vpop.f32.mrb[0].mxu0
        %5299 = vmatprep.mubr.f32.mxu0 0.0
        %v5300 = vand.u32 %v1136, 4294901760
        %5301 = vmatmul.mubr.f32.gmra.mrb[0].mxu0 %v5300
        %v5302 = vpop.f32.mrb[0].mxu0
        %v5303 = vadd.f32 %v5194, %v5302
        %v5304 = vpop.f32.mrb[0].mxu0
        %5305 = vdwg.mxu0
        %5306 = vmatprep.subr.mxu0 0.0
        %v5307 = vand.u32 %v4494, 4294901760
        %v5308 = vsub.f32 %v4494, %v5307
        %5309 = vmatpush1.msra.mxu0 %v5308
        %5310 = vmatprep.subr.mxu0 0.0
        %v5311 = vand.u32 %v4495, 4294901760
        %v5312 = vsub.f32 %v4495, %v5311
        %5313 = vmatpush1.msra.mxu0 %v5312
        %5314 = vmatprep.subr.mxu0 0.0
        %v5315 = vand.u32 %v4496, 4294901760
        %v5316 = vsub.f32 %v4496, %v5315
        %5317 = vmatpush1.msra.mxu0 %v5316
        %5318 = vmatprep.subr.mxu0 0.0
        %v5319 = vand.u32 %v4497, 4294901760
        %v5320 = vsub.f32 %v4497, %v5319
        %5321 = vmatpush1.msra.mxu0 %v5320
        %5322 = vmatprep.subr.mxu0 0.0
        %5323 = vmatpush1.msra.mxu0 0.0
        %5324 = vmatprep.subr.mxu0 0.0
        %5325 = vmatpush1.msra.mxu0 0.0
        %5326 = vmatprep.subr.mxu0 0.0
        %5327 = vmatpush1.msra.mxu0 0.0
        %5328 = vmatprep.subr.mxu0 0.0
        %5329 = vmatpush1.msra.mxu0 0.0
        %5330 = vmatprep.subr.mxu0 0.0
        %5331 = vmatpush1.msra.mxu0 0.0
        %5332 = vmatprep.subr.mxu0 0.0
        %5333 = vmatpush1.msra.mxu0 0.0
        %5334 = vmatprep.subr.mxu0 0.0
        %5335 = vmatpush1.msra.mxu0 0.0
        %5336 = vmatprep.subr.mxu0 0.0
        %5337 = vmatpush1.msra.mxu0 0.0
        %5338 = vmatprep.subr.mxu0 0.0
        %5339 = vmatpush1.msra.mxu0 0.0
        %5340 = vmatprep.subr.mxu0 0.0
        %5341 = vmatpush1.msra.mxu0 0.0
        %5342 = vmatprep.subr.mxu0 0.0
        %5343 = vmatpush1.msra.mxu0 0.0
        %5344 = vmatprep.subr.mxu0 0.0
        %5345 = vmatpush1.msra.mxu0 0.0
        %5346 = vmatprep.subr.mxu0 0.0
        %5347 = vmatpush1.msra.mxu0 0.0
        %5348 = vmatprep.subr.mxu0 0.0
        %5349 = vmatpush1.msra.mxu0 0.0
        %5350 = vmatprep.subr.mxu0 0.0
        %5351 = vmatpush1.msra.mxu0 0.0
        %5352 = vmatprep.subr.mxu0 0.0
        %5353 = vmatpush1.msra.mxu0 0.0
        %5354 = vmatprep.subr.mxu0 0.0
        %5355 = vmatpush1.msra.mxu0 0.0
        %5356 = vmatprep.subr.mxu0 0.0
        %5357 = vmatpush1.msra.mxu0 0.0
        %5358 = vmatprep.subr.mxu0 0.0
        %5359 = vmatpush1.msra.mxu0 0.0
        %5360 = vmatprep.subr.mxu0 0.0
        %5361 = vmatpush1.msra.mxu0 0.0
        %5362 = vmatprep.subr.mxu0 0.0
        %5363 = vmatpush1.msra.mxu0 0.0
        %5364 = vmatprep.subr.mxu0 0.0
        %5365 = vmatpush1.msra.mxu0 0.0
        %5366 = vmatprep.subr.mxu0 0.0
        %5367 = vmatpush1.msra.mxu0 0.0
        %5368 = vmatprep.subr.mxu0 0.0
        %5369 = vmatpush1.msra.mxu0 0.0
        %5370 = vmatprep.subr.mxu0 0.0
        %5371 = vmatpush1.msra.mxu0 0.0
        %5372 = vmatprep.subr.mxu0 0.0
        %5373 = vmatpush1.msra.mxu0 0.0
        %5374 = vmatprep.subr.mxu0 0.0
        %5375 = vmatpush1.msra.mxu0 0.0
        %5376 = vmatprep.subr.mxu0 0.0
        %5377 = vmatpush1.msra.mxu0 0.0
        %5378 = vmatprep.mubr.f32.mxu0 0.0
        %v5379 = vand.u32 %v1127, 4294901760
        %v5380 = vsub.f32 %v1127, %v5379
        %5381 = vmatmul.mubr.f32.gmra.mrb[0].mxu0 %v5380
        %v5382 = vpop.f32.mrb[0].mxu0
        %v5383 = vadd.f32 %v5285, %v5382
        %v5384 = vpop.f32.mrb[0].mxu0
        %5385 = vmatprep.mubr.f32.mxu0 0.0
        %v5386 = vand.u32 %v1130, 4294901760
        %v5387 = vsub.f32 %v1130, %v5386
        %5388 = vmatmul.mubr.f32.gmra.mrb[0].mxu0 %v5387
        %v5389 = vpop.f32.mrb[0].mxu0
        %v5390 = vadd.f32 %v5291, %v5389
        %v5391 = vpop.f32.mrb[0].mxu0
        %5392 = vmatprep.mubr.f32.mxu0 0.0
        %v5393 = vand.u32 %v1133, 4294901760
        %v5394 = vsub.f32 %v1133, %v5393
        %5395 = vmatmul.mubr.f32.gmra.mrb[0].mxu0 %v5394
        %v5396 = vpop.f32.mrb[0].mxu0
        %v5397 = vadd.f32 %v5297, %v5396
        %v5398 = vpop.f32.mrb[0].mxu0
        %5399 = vmatprep.mubr.f32.mxu0 0.0
        %v5400 = vand.u32 %v1136, 4294901760
        %v5401 = vsub.f32 %v1136, %v5400
        %5402 = vmatmul.mubr.f32.gmra.mrb[0].mxu0 %v5401
        %v5403 = vpop.f32.mrb[0].mxu0
        %v5404 = vadd.f32 %v5303, %v5403
        %v5405 = vpop.f32.mrb[0].mxu0
        %5406 = vdwg.mxu0
        %5407 = vmatprep.subr.mxu0 0.0
        %v5408 = vand.u32 %v4494, 4294901760
        %5409 = vmatpush1.msra.mxu0 %v5408
        %5410 = vmatprep.subr.mxu0 0.0
        %v5411 = vand.u32 %v4495, 4294901760
        %5412 = vmatpush1.msra.mxu0 %v5411
        %5413 = vmatprep.subr.mxu0 0.0
        %v5414 = vand.u32 %v4496, 4294901760
        %5415 = vmatpush1.msra.mxu0 %v5414
        %5416 = vmatprep.subr.mxu0 0.0
        %v5417 = vand.u32 %v4497, 4294901760
        %5418 = vmatpush1.msra.mxu0 %v5417
        %5419 = vmatprep.subr.mxu0 0.0
        %5420 = vmatpush1.msra.mxu0 0.0
        %5421 = vmatprep.subr.mxu0 0.0
        %5422 = vmatpush1.msra.mxu0 0.0
        %5423 = vmatprep.subr.mxu0 0.0
        %5424 = vmatpush1.msra.mxu0 0.0
        %5425 = vmatprep.subr.mxu0 0.0
        %5426 = vmatpush1.msra.mxu0 0.0
        %5427 = vmatprep.subr.mxu0 0.0
        %5428 = vmatpush1.msra.mxu0 0.0
        %5429 = vmatprep.subr.mxu0 0.0
        %5430 = vmatpush1.msra.mxu0 0.0
        %5431 = vmatprep.subr.mxu0 0.0
        %5432 = vmatpush1.msra.mxu0 0.0
        %5433 = vmatprep.subr.mxu0 0.0
        %5434 = vmatpush1.msra.mxu0 0.0
        %5435 = vmatprep.subr.mxu0 0.0
        %5436 = vmatpush1.msra.mxu0 0.0
        %5437 = vmatprep.subr.mxu0 0.0
        %5438 = vmatpush1.msra.mxu0 0.0
        %5439 = vmatprep.subr.mxu0 0.0
        %5440 = vmatpush1.msra.mxu0 0.0
        %5441 = vmatprep.subr.mxu0 0.0
        %5442 = vmatpush1.msra.mxu0 0.0
        %5443 = vmatprep.subr.mxu0 0.0
        %5444 = vmatpush1.msra.mxu0 0.0
        %5445 = vmatprep.subr.mxu0 0.0
        %5446 = vmatpush1.msra.mxu0 0.0
        %5447 = vmatprep.subr.mxu0 0.0
        %5448 = vmatpush1.msra.mxu0 0.0
        %5449 = vmatprep.subr.mxu0 0.0
        %5450 = vmatpush1.msra.mxu0 0.0
        %5451 = vmatprep.subr.mxu0 0.0
        %5452 = vmatpush1.msra.mxu0 0.0
        %5453 = vmatprep.subr.mxu0 0.0
        %5454 = vmatpush1.msra.mxu0 0.0
        %5455 = vmatprep.subr.mxu0 0.0
        %5456 = vmatpush1.msra.mxu0 0.0
        %5457 = vmatprep.subr.mxu0 0.0
        %5458 = vmatpush1.msra.mxu0 0.0
        %5459 = vmatprep.subr.mxu0 0.0
        %5460 = vmatpush1.msra.mxu0 0.0
        %5461 = vmatprep.subr.mxu0 0.0
        %5462 = vmatpush1.msra.mxu0 0.0
        %5463 = vmatprep.subr.mxu0 0.0
        %5464 = vmatpush1.msra.mxu0 0.0
        %5465 = vmatprep.subr.mxu0 0.0
        %5466 = vmatpush1.msra.mxu0 0.0
        %5467 = vmatprep.subr.mxu0 0.0
        %5468 = vmatpush1.msra.mxu0 0.0
        %5469 = vmatprep.subr.mxu0 0.0
        %5470 = vmatpush1.msra.mxu0 0.0
        %5471 = vmatprep.subr.mxu0 0.0
        %5472 = vmatpush1.msra.mxu0 0.0
        %5473 = vmatprep.subr.mxu0 0.0
        %5474 = vmatpush1.msra.mxu0 0.0
        %5475 = vmatprep.mubr.f32.mxu0 0.0
        %v5476 = vand.u32 %v1127, 4294901760
        %v5477 = vsub.f32 %v1127, %v5476
        %v5478 = vand.u32 %v5477, 4294901760
        %5479 = vmatmul.mubr.f32.gmra.mrb[0].mxu0 %v5478
        %v5480 = vpop.f32.mrb[0].mxu0
        %v5481 = vadd.f32 %v5383, %v5480
        %v5482 = vpop.f32.mrb[0].mxu0
        %5483 = vmatprep.mubr.f32.mxu0 0.0
        %v5484 = vand.u32 %v1130, 4294901760
        %v5485 = vsub.f32 %v1130, %v5484
        %v5486 = vand.u32 %v5485, 4294901760
        %5487 = vmatmul.mubr.f32.gmra.mrb[0].mxu0 %v5486
        %v5488 = vpop.f32.mrb[0].mxu0
        %v5489 = vadd.f32 %v5390, %v5488
        %v5490 = vpop.f32.mrb[0].mxu0
        %5491 = vmatprep.mubr.f32.mxu0 0.0
        %v5492 = vand.u32 %v1133, 4294901760
        %v5493 = vsub.f32 %v1133, %v5492
        %v5494 = vand.u32 %v5493, 4294901760
        %5495 = vmatmul.mubr.f32.gmra.mrb[0].mxu0 %v5494
        %v5496 = vpop.f32.mrb[0].mxu0
        %v5497 = vadd.f32 %v5397, %v5496
        %v5498 = vpop.f32.mrb[0].mxu0
        %5499 = vmatprep.mubr.f32.mxu0 0.0
        %v5500 = vand.u32 %v1136, 4294901760
        %v5501 = vsub.f32 %v1136, %v5500
        %v5502 = vand.u32 %v5501, 4294901760
        %5503 = vmatmul.mubr.f32.gmra.mrb[0].mxu0 %v5502
        %v5504 = vpop.f32.mrb[0].mxu0
        %v5505 = vadd.f32 %v5404, %v5504
        %v5506 = vpop.f32.mrb[0].mxu0
        %5507 = vdwg.mxu0
        %5508 = vmatprep.subr.mxu0 0.0
        %v5509 = vand.u32 %v4494, 4294901760
        %v5510 = vsub.f32 %v4494, %v5509
        %v5511 = vand.u32 %v5510, 4294901760
        %5512 = vmatpush1.msra.mxu0 %v5511
        %5513 = vmatprep.subr.mxu0 0.0
        %v5514 = vand.u32 %v4495, 4294901760
        %v5515 = vsub.f32 %v4495, %v5514
        %v5516 = vand.u32 %v5515, 4294901760
        %5517 = vmatpush1.msra.mxu0 %v5516
        %5518 = vmatprep.subr.mxu0 0.0
        %v5519 = vand.u32 %v4496, 4294901760
        %v5520 = vsub.f32 %v4496, %v5519
        %v5521 = vand.u32 %v5520, 4294901760
        %5522 = vmatpush1.msra.mxu0 %v5521
        %5523 = vmatprep.subr.mxu0 0.0
        %v5524 = vand.u32 %v4497, 4294901760
        %v5525 = vsub.f32 %v4497, %v5524
        %v5526 = vand.u32 %v5525, 4294901760
        %5527 = vmatpush1.msra.mxu0 %v5526
        %5528 = vmatprep.subr.mxu0 0.0
        %5529 = vmatpush1.msra.mxu0 0.0
        %5530 = vmatprep.subr.mxu0 0.0
        %5531 = vmatpush1.msra.mxu0 0.0
        %5532 = vmatprep.subr.mxu0 0.0
        %5533 = vmatpush1.msra.mxu0 0.0
        %5534 = vmatprep.subr.mxu0 0.0
        %5535 = vmatpush1.msra.mxu0 0.0
        %5536 = vmatprep.subr.mxu0 0.0
        %5537 = vmatpush1.msra.mxu0 0.0
        %5538 = vmatprep.subr.mxu0 0.0
        %5539 = vmatpush1.msra.mxu0 0.0
        %5540 = vmatprep.subr.mxu0 0.0
        %5541 = vmatpush1.msra.mxu0 0.0
        %5542 = vmatprep.subr.mxu0 0.0
        %5543 = vmatpush1.msra.mxu0 0.0
        %5544 = vmatprep.subr.mxu0 0.0
        %5545 = vmatpush1.msra.mxu0 0.0
        %5546 = vmatprep.subr.mxu0 0.0
        %5547 = vmatpush1.msra.mxu0 0.0
        %5548 = vmatprep.subr.mxu0 0.0
        %5549 = vmatpush1.msra.mxu0 0.0
        %5550 = vmatprep.subr.mxu0 0.0
        %5551 = vmatpush1.msra.mxu0 0.0
        %5552 = vmatprep.subr.mxu0 0.0
        %5553 = vmatpush1.msra.mxu0 0.0
        %5554 = vmatprep.subr.mxu0 0.0
        %5555 = vmatpush1.msra.mxu0 0.0
        %5556 = vmatprep.subr.mxu0 0.0
        %5557 = vmatpush1.msra.mxu0 0.0
        %5558 = vmatprep.subr.mxu0 0.0
        %5559 = vmatpush1.msra.mxu0 0.0
        %5560 = vmatprep.subr.mxu0 0.0
        %5561 = vmatpush1.msra.mxu0 0.0
        %5562 = vmatprep.subr.mxu0 0.0
        %5563 = vmatpush1.msra.mxu0 0.0
        %5564 = vmatprep.subr.mxu0 0.0
        %5565 = vmatpush1.msra.mxu0 0.0
        %5566 = vmatprep.subr.mxu0 0.0
        %5567 = vmatpush1.msra.mxu0 0.0
        %5568 = vmatprep.subr.mxu0 0.0
        %5569 = vmatpush1.msra.mxu0 0.0
        %5570 = vmatprep.subr.mxu0 0.0
        %5571 = vmatpush1.msra.mxu0 0.0
        %5572 = vmatprep.subr.mxu0 0.0
        %5573 = vmatpush1.msra.mxu0 0.0
        %5574 = vmatprep.subr.mxu0 0.0
        %5575 = vmatpush1.msra.mxu0 0.0
        %5576 = vmatprep.subr.mxu0 0.0
        %5577 = vmatpush1.msra.mxu0 0.0
        %5578 = vmatprep.subr.mxu0 0.0
        %5579 = vmatpush1.msra.mxu0 0.0
        %5580 = vmatprep.subr.mxu0 0.0
        %5581 = vmatpush1.msra.mxu0 0.0
        %5582 = vmatprep.subr.mxu0 0.0
        %5583 = vmatpush1.msra.mxu0 0.0
        %5584 = vmatprep.mubr.f32.mxu0 0.0
        %v5585 = vand.u32 %v1127, 4294901760
        %5586 = vmatmul.mubr.f32.gmra.mrb[0].mxu0 %v5585
        %v5587 = vpop.f32.mrb[0].mxu0
        %v5588 = vadd.f32 %v5481, %v5587
        %v5589 = vpop.f32.mrb[0].mxu0
        %5590 = vmatprep.mubr.f32.mxu0 0.0
        %v5591 = vand.u32 %v1130, 4294901760
        %5592 = vmatmul.mubr.f32.gmra.mrb[0].mxu0 %v5591
        %v5593 = vpop.f32.mrb[0].mxu0
        %v5594 = vadd.f32 %v5489, %v5593
        %v5595 = vpop.f32.mrb[0].mxu0
        %5596 = vmatprep.mubr.f32.mxu0 0.0
        %v5597 = vand.u32 %v1133, 4294901760
        %5598 = vmatmul.mubr.f32.gmra.mrb[0].mxu0 %v5597
        %v5599 = vpop.f32.mrb[0].mxu0
        %v5600 = vadd.f32 %v5497, %v5599
        %v5601 = vpop.f32.mrb[0].mxu0
        %5602 = vmatprep.mubr.f32.mxu0 0.0
        %v5603 = vand.u32 %v1136, 4294901760
        %5604 = vmatmul.mubr.f32.gmra.mrb[0].mxu0 %v5603
        %v5605 = vpop.f32.mrb[0].mxu0
        %v5606 = vadd.f32 %v5505, %v5605
        %v5607 = vpop.f32.mrb[0].mxu0
        %5608 = vdwg.mxu0
        %5609 = vmatprep.subr.mxu0 0.0
        %v5610 = vand.u32 %v4494, 4294901760
        %5611 = vmatpush1.msra.mxu0 %v5610
        %5612 = vmatprep.subr.mxu0 0.0
        %v5613 = vand.u32 %v4495, 4294901760
        %5614 = vmatpush1.msra.mxu0 %v5613
        %5615 = vmatprep.subr.mxu0 0.0
        %v5616 = vand.u32 %v4496, 4294901760
        %5617 = vmatpush1.msra.mxu0 %v5616
        %5618 = vmatprep.subr.mxu0 0.0
        %v5619 = vand.u32 %v4497, 4294901760
        %5620 = vmatpush1.msra.mxu0 %v5619
        %5621 = vmatprep.subr.mxu0 0.0
        %5622 = vmatpush1.msra.mxu0 0.0
        %5623 = vmatprep.subr.mxu0 0.0
        %5624 = vmatpush1.msra.mxu0 0.0
        %5625 = vmatprep.subr.mxu0 0.0
        %5626 = vmatpush1.msra.mxu0 0.0
        %5627 = vmatprep.subr.mxu0 0.0
        %5628 = vmatpush1.msra.mxu0 0.0
        %5629 = vmatprep.subr.mxu0 0.0
        %5630 = vmatpush1.msra.mxu0 0.0
        %5631 = vmatprep.subr.mxu0 0.0
        %5632 = vmatpush1.msra.mxu0 0.0
        %5633 = vmatprep.subr.mxu0 0.0
        %5634 = vmatpush1.msra.mxu0 0.0
        %5635 = vmatprep.subr.mxu0 0.0
        %5636 = vmatpush1.msra.mxu0 0.0
        %5637 = vmatprep.subr.mxu0 0.0
        %5638 = vmatpush1.msra.mxu0 0.0
        %5639 = vmatprep.subr.mxu0 0.0
        %5640 = vmatpush1.msra.mxu0 0.0
        %5641 = vmatprep.subr.mxu0 0.0
        %5642 = vmatpush1.msra.mxu0 0.0
        %5643 = vmatprep.subr.mxu0 0.0
        %5644 = vmatpush1.msra.mxu0 0.0
        %5645 = vmatprep.subr.mxu0 0.0
        %5646 = vmatpush1.msra.mxu0 0.0
        %5647 = vmatprep.subr.mxu0 0.0
        %5648 = vmatpush1.msra.mxu0 0.0
        %5649 = vmatprep.subr.mxu0 0.0
        %5650 = vmatpush1.msra.mxu0 0.0
        %5651 = vmatprep.subr.mxu0 0.0
        %5652 = vmatpush1.msra.mxu0 0.0
        %5653 = vmatprep.subr.mxu0 0.0
        %5654 = vmatpush1.msra.mxu0 0.0
        %5655 = vmatprep.subr.mxu0 0.0
        %5656 = vmatpush1.msra.mxu0 0.0
        %5657 = vmatprep.subr.mxu0 0.0
        %5658 = vmatpush1.msra.mxu0 0.0
        %5659 = vmatprep.subr.mxu0 0.0
        %5660 = vmatpush1.msra.mxu0 0.0
        %5661 = vmatprep.subr.mxu0 0.0
        %5662 = vmatpush1.msra.mxu0 0.0
        %5663 = vmatprep.subr.mxu0 0.0
        %5664 = vmatpush1.msra.mxu0 0.0
        %5665 = vmatprep.subr.mxu0 0.0
        %5666 = vmatpush1.msra.mxu0 0.0
        %5667 = vmatprep.subr.mxu0 0.0
        %5668 = vmatpush1.msra.mxu0 0.0
        %5669 = vmatprep.subr.mxu0 0.0
        %5670 = vmatpush1.msra.mxu0 0.0
        %5671 = vmatprep.subr.mxu0 0.0
        %5672 = vmatpush1.msra.mxu0 0.0
        %5673 = vmatprep.subr.mxu0 0.0
        %5674 = vmatpush1.msra.mxu0 0.0
        %5675 = vmatprep.subr.mxu0 0.0
        %5676 = vmatpush1.msra.mxu0 0.0
        %5677 = vmatprep.mubr.f32.mxu0 0.0
        %v5678 = vand.u32 %v1127, 4294901760
        %5679 = vmatmul.mubr.f32.gmra.mrb[0].mxu0 %v5678
        %v5680 = vpop.f32.mrb[0].mxu0
        %v5681 = vadd.f32 %v5588, %v5680
        %v5682 = vpop.f32.mrb[0].mxu0
        %5683 = vmatprep.mubr.f32.mxu0 0.0
        %v5684 = vand.u32 %v1130, 4294901760
        %5685 = vmatmul.mubr.f32.gmra.mrb[0].mxu0 %v5684
        %v5686 = vpop.f32.mrb[0].mxu0
        %v5687 = vadd.f32 %v5594, %v5686
        %v5688 = vpop.f32.mrb[0].mxu0
        %5689 = vmatprep.mubr.f32.mxu0 0.0
        %v5690 = vand.u32 %v1133, 4294901760
        %5691 = vmatmul.mubr.f32.gmra.mrb[0].mxu0 %v5690
        %v5692 = vpop.f32.mrb[0].mxu0
        %v5693 = vadd.f32 %v5600, %v5692
        %v5694 = vpop.f32.mrb[0].mxu0
        %5695 = vmatprep.mubr.f32.mxu0 0.0
        %v5696 = vand.u32 %v1136, 4294901760
        %5697 = vmatmul.mubr.f32.gmra.mrb[0].mxu0 %v5696
        %v5698 = vpop.f32.mrb[0].mxu0
        %v5699 = vadd.f32 %v5606, %v5698
        %v5700 = vpop.f32.mrb[0].mxu0
        %5701 = vdwg.mxu0
        %5702 = vmatprep.subr.mxu0 0.0
        %v5703 = vand.u32 %v508, 4294901760
        %5704 = vmatpush1.msra.mxu0 %v5703
        %5705 = vmatprep.subr.mxu0 0.0
        %v5706 = vand.u32 %v509, 4294901760
        %5707 = vmatpush1.msra.mxu0 %v5706
        %5708 = vmatprep.subr.mxu0 0.0
        %v5709 = vand.u32 %v510, 4294901760
        %5710 = vmatpush1.msra.mxu0 %v5709
        %5711 = vmatprep.subr.mxu0 0.0
        %v5712 = vand.u32 %v511, 4294901760
        %5713 = vmatpush1.msra.mxu0 %v5712
        %5714 = vmatprep.subr.mxu0 0.0
        %v5715 = vand.u32 %v512, 4294901760
        %5716 = vmatpush1.msra.mxu0 %v5715
        %5717 = vmatprep.subr.mxu0 0.0
        %v5718 = vand.u32 %v513, 4294901760
        %5719 = vmatpush1.msra.mxu0 %v5718
        %5720 = vmatprep.subr.mxu0 0.0
        %v5721 = vand.u32 %v514, 4294901760
        %5722 = vmatpush1.msra.mxu0 %v5721
        %5723 = vmatprep.subr.mxu0 0.0
        %v5724 = vand.u32 %v515, 4294901760
        %5725 = vmatpush1.msra.mxu0 %v5724
        %5726 = vmatprep.subr.mxu0 0.0
        %v5727 = vand.u32 %v516, 4294901760
        %5728 = vmatpush1.msra.mxu0 %v5727
        %5729 = vmatprep.subr.mxu0 0.0
        %v5730 = vand.u32 %v517, 4294901760
        %5731 = vmatpush1.msra.mxu0 %v5730
        %5732 = vmatprep.subr.mxu0 0.0
        %v5733 = vand.u32 %v518, 4294901760
        %5734 = vmatpush1.msra.mxu0 %v5733
        %5735 = vmatprep.subr.mxu0 0.0
        %v5736 = vand.u32 %v519, 4294901760
        %5737 = vmatpush1.msra.mxu0 %v5736
        %5738 = vmatprep.subr.mxu0 0.0
        %v5739 = vand.u32 %v520, 4294901760
        %5740 = vmatpush1.msra.mxu0 %v5739
        %5741 = vmatprep.subr.mxu0 0.0
        %v5742 = vand.u32 %v521, 4294901760
        %5743 = vmatpush1.msra.mxu0 %v5742
        %5744 = vmatprep.subr.mxu0 0.0
        %v5745 = vand.u32 %v522, 4294901760
        %5746 = vmatpush1.msra.mxu0 %v5745
        %5747 = vmatprep.subr.mxu0 0.0
        %v5748 = vand.u32 %v523, 4294901760
        %5749 = vmatpush1.msra.mxu0 %v5748
        %5750 = vmatprep.subr.mxu0 0.0
        %5751 = vmatpush1.msra.mxu0 0.0
        %5752 = vmatprep.subr.mxu0 0.0
        %5753 = vmatpush1.msra.mxu0 0.0
        %5754 = vmatprep.subr.mxu0 0.0
        %5755 = vmatpush1.msra.mxu0 0.0
        %5756 = vmatprep.subr.mxu0 0.0
        %5757 = vmatpush1.msra.mxu0 0.0
        %5758 = vmatprep.subr.mxu0 0.0
        %5759 = vmatpush1.msra.mxu0 0.0
        %5760 = vmatprep.subr.mxu0 0.0
        %5761 = vmatpush1.msra.mxu0 0.0
        %5762 = vmatprep.subr.mxu0 0.0
        %5763 = vmatpush1.msra.mxu0 0.0
        %5764 = vmatprep.subr.mxu0 0.0
        %5765 = vmatpush1.msra.mxu0 0.0
        %5766 = vmatprep.subr.mxu0 0.0
        %5767 = vmatpush1.msra.mxu0 0.0
        %5768 = vmatprep.subr.mxu0 0.0
        %5769 = vmatpush1.msra.mxu0 0.0
        %5770 = vmatprep.subr.mxu0 0.0
        %5771 = vmatpush1.msra.mxu0 0.0
        %5772 = vmatprep.subr.mxu0 0.0
        %5773 = vmatpush1.msra.mxu0 0.0
        %5774 = vmatprep.subr.mxu0 0.0
        %5775 = vmatpush1.msra.mxu0 0.0
        %5776 = vmatprep.subr.mxu0 0.0
        %5777 = vmatpush1.msra.mxu0 0.0
        %5778 = vmatprep.subr.mxu0 0.0
        %5779 = vmatpush1.msra.mxu0 0.0
        %5780 = vmatprep.subr.mxu0 0.0
        %5781 = vmatpush1.msra.mxu0 0.0
        %5782 = vmatprep.mubr.f32.mxu0 0.0
        %v5783 = vand.u32 %v5681, 4294901760
        %v5784 = vsub.f32 %v5681, %v5783
        %v5785 = vand.u32 %v5784, 4294901760
        %v5786 = vsub.f32 %v5784, %v5785
        %v5787 = vand.u32 %v5786, 4294901760
        %5788 = vmatmul.mubr.f32.gmra.mrb[0].mxu0 %v5787
        %v5789 = vpop.f32.mrb[0].mxu0
        %v5790 = vadd.f32 0.0, %v5789
        %v5791 = vpop.f32.mrb[0].mxu0
        %5792 = vmatprep.mubr.f32.mxu0 0.0
        %v5793 = vand.u32 %v5687, 4294901760
        %v5794 = vsub.f32 %v5687, %v5793
        %v5795 = vand.u32 %v5794, 4294901760
        %v5796 = vsub.f32 %v5794, %v5795
        %v5797 = vand.u32 %v5796, 4294901760
        %5798 = vmatmul.mubr.f32.gmra.mrb[0].mxu0 %v5797
        %v5799 = vpop.f32.mrb[0].mxu0
        %v5800 = vadd.f32 0.0, %v5799
        %v5801 = vpop.f32.mrb[0].mxu0
        %5802 = vmatprep.mubr.f32.mxu0 0.0
        %v5803 = vand.u32 %v5693, 4294901760
        %v5804 = vsub.f32 %v5693, %v5803
        %v5805 = vand.u32 %v5804, 4294901760
        %v5806 = vsub.f32 %v5804, %v5805
        %v5807 = vand.u32 %v5806, 4294901760
        %5808 = vmatmul.mubr.f32.gmra.mrb[0].mxu0 %v5807
        %v5809 = vpop.f32.mrb[0].mxu0
        %v5810 = vadd.f32 0.0, %v5809
        %v5811 = vpop.f32.mrb[0].mxu0
        %5812 = vmatprep.mubr.f32.mxu0 0.0
        %v5813 = vand.u32 %v5699, 4294901760
        %v5814 = vsub.f32 %v5699, %v5813
        %v5815 = vand.u32 %v5814, 4294901760
        %v5816 = vsub.f32 %v5814, %v5815
        %v5817 = vand.u32 %v5816, 4294901760
        %5818 = vmatmul.mubr.f32.gmra.mrb[0].mxu0 %v5817
        %v5819 = vpop.f32.mrb[0].mxu0
        %v5820 = vadd.f32 0.0, %v5819
        %v5821 = vpop.f32.mrb[0].mxu0
        %5822 = vdwg.mxu0
        %5823 = vmatprep.subr.mxu0 0.0
        %v5824 = vand.u32 %v508, 4294901760
        %v5825 = vsub.f32 %v508, %v5824
        %v5826 = vand.u32 %v5825, 4294901760
        %v5827 = vsub.f32 %v5825, %v5826
        %v5828 = vand.u32 %v5827, 4294901760
        %5829 = vmatpush1.msra.mxu0 %v5828
        %5830 = vmatprep.subr.mxu0 0.0
        %v5831 = vand.u32 %v509, 4294901760
        %v5832 = vsub.f32 %v509, %v5831
        %v5833 = vand.u32 %v5832, 4294901760
        %v5834 = vsub.f32 %v5832, %v5833
        %v5835 = vand.u32 %v5834, 4294901760
        %5836 = vmatpush1.msra.mxu0 %v5835
        %5837 = vmatprep.subr.mxu0 0.0
        %v5838 = vand.u32 %v510, 4294901760
        %v5839 = vsub.f32 %v510, %v5838
        %v5840 = vand.u32 %v5839, 4294901760
        %v5841 = vsub.f32 %v5839, %v5840
        %v5842 = vand.u32 %v5841, 4294901760
        %5843 = vmatpush1.msra.mxu0 %v5842
        %5844 = vmatprep.subr.mxu0 0.0
        %v5845 = vand.u32 %v511, 4294901760
        %v5846 = vsub.f32 %v511, %v5845
        %v5847 = vand.u32 %v5846, 4294901760
        %v5848 = vsub.f32 %v5846, %v5847
        %v5849 = vand.u32 %v5848, 4294901760
        %5850 = vmatpush1.msra.mxu0 %v5849
        %5851 = vmatprep.subr.mxu0 0.0
        %v5852 = vand.u32 %v512, 4294901760
        %v5853 = vsub.f32 %v512, %v5852
        %v5854 = vand.u32 %v5853, 4294901760
        %v5855 = vsub.f32 %v5853, %v5854
        %v5856 = vand.u32 %v5855, 4294901760
        %5857 = vmatpush1.msra.mxu0 %v5856
        %5858 = vmatprep.subr.mxu0 0.0
        %v5859 = vand.u32 %v513, 4294901760
        %v5860 = vsub.f32 %v513, %v5859
        %v5861 = vand.u32 %v5860, 4294901760
        %v5862 = vsub.f32 %v5860, %v5861
        %v5863 = vand.u32 %v5862, 4294901760
        %5864 = vmatpush1.msra.mxu0 %v5863
        %5865 = vmatprep.subr.mxu0 0.0
        %v5866 = vand.u32 %v514, 4294901760
        %v5867 = vsub.f32 %v514, %v5866
        %v5868 = vand.u32 %v5867, 4294901760
        %v5869 = vsub.f32 %v5867, %v5868
        %v5870 = vand.u32 %v5869, 4294901760
        %5871 = vmatpush1.msra.mxu0 %v5870
        %5872 = vmatprep.subr.mxu0 0.0
        %v5873 = vand.u32 %v515, 4294901760
        %v5874 = vsub.f32 %v515, %v5873
        %v5875 = vand.u32 %v5874, 4294901760
        %v5876 = vsub.f32 %v5874, %v5875
        %v5877 = vand.u32 %v5876, 4294901760
        %5878 = vmatpush1.msra.mxu0 %v5877
        %5879 = vmatprep.subr.mxu0 0.0
        %v5880 = vand.u32 %v516, 4294901760
        %v5881 = vsub.f32 %v516, %v5880
        %v5882 = vand.u32 %v5881, 4294901760
        %v5883 = vsub.f32 %v5881, %v5882
        %v5884 = vand.u32 %v5883, 4294901760
        %5885 = vmatpush1.msra.mxu0 %v5884
        %5886 = vmatprep.subr.mxu0 0.0
        %v5887 = vand.u32 %v517, 4294901760
        %v5888 = vsub.f32 %v517, %v5887
        %v5889 = vand.u32 %v5888, 4294901760
        %v5890 = vsub.f32 %v5888, %v5889
        %v5891 = vand.u32 %v5890, 4294901760
        %5892 = vmatpush1.msra.mxu0 %v5891
        %5893 = vmatprep.subr.mxu0 0.0
        %v5894 = vand.u32 %v518, 4294901760
        %v5895 = vsub.f32 %v518, %v5894
        %v5896 = vand.u32 %v5895, 4294901760
        %v5897 = vsub.f32 %v5895, %v5896
        %v5898 = vand.u32 %v5897, 4294901760
        %5899 = vmatpush1.msra.mxu0 %v5898
        %5900 = vmatprep.subr.mxu0 0.0
        %v5901 = vand.u32 %v519, 4294901760
        %v5902 = vsub.f32 %v519, %v5901
        %v5903 = vand.u32 %v5902, 4294901760
        %v5904 = vsub.f32 %v5902, %v5903
        %v5905 = vand.u32 %v5904, 4294901760
        %5906 = vmatpush1.msra.mxu0 %v5905
        %5907 = vmatprep.subr.mxu0 0.0
        %v5908 = vand.u32 %v520, 4294901760
        %v5909 = vsub.f32 %v520, %v5908
        %v5910 = vand.u32 %v5909, 4294901760
        %v5911 = vsub.f32 %v5909, %v5910
        %v5912 = vand.u32 %v5911, 4294901760
        %5913 = vmatpush1.msra.mxu0 %v5912
        %5914 = vmatprep.subr.mxu0 0.0
        %v5915 = vand.u32 %v521, 4294901760
        %v5916 = vsub.f32 %v521, %v5915
        %v5917 = vand.u32 %v5916, 4294901760
        %v5918 = vsub.f32 %v5916, %v5917
        %v5919 = vand.u32 %v5918, 4294901760
        %5920 = vmatpush1.msra.mxu0 %v5919
        %5921 = vmatprep.subr.mxu0 0.0
        %v5922 = vand.u32 %v522, 4294901760
        %v5923 = vsub.f32 %v522, %v5922
        %v5924 = vand.u32 %v5923, 4294901760
        %v5925 = vsub.f32 %v5923, %v5924
        %v5926 = vand.u32 %v5925, 4294901760
        %5927 = vmatpush1.msra.mxu0 %v5926
        %5928 = vmatprep.subr.mxu0 0.0
        %v5929 = vand.u32 %v523, 4294901760
        %v5930 = vsub.f32 %v523, %v5929
        %v5931 = vand.u32 %v5930, 4294901760
        %v5932 = vsub.f32 %v5930, %v5931
        %v5933 = vand.u32 %v5932, 4294901760
        %5934 = vmatpush1.msra.mxu0 %v5933
        %5935 = vmatprep.subr.mxu0 0.0
        %5936 = vmatpush1.msra.mxu0 0.0
        %5937 = vmatprep.subr.mxu0 0.0
        %5938 = vmatpush1.msra.mxu0 0.0
        %5939 = vmatprep.subr.mxu0 0.0
        %5940 = vmatpush1.msra.mxu0 0.0
        %5941 = vmatprep.subr.mxu0 0.0
        %5942 = vmatpush1.msra.mxu0 0.0
        %5943 = vmatprep.subr.mxu0 0.0
        %5944 = vmatpush1.msra.mxu0 0.0
        %5945 = vmatprep.subr.mxu0 0.0
        %5946 = vmatpush1.msra.mxu0 0.0
        %5947 = vmatprep.subr.mxu0 0.0
        %5948 = vmatpush1.msra.mxu0 0.0
        %5949 = vmatprep.subr.mxu0 0.0
        %5950 = vmatpush1.msra.mxu0 0.0
        %5951 = vmatprep.subr.mxu0 0.0
        %5952 = vmatpush1.msra.mxu0 0.0
        %5953 = vmatprep.subr.mxu0 0.0
        %5954 = vmatpush1.msra.mxu0 0.0
        %5955 = vmatprep.subr.mxu0 0.0
        %5956 = vmatpush1.msra.mxu0 0.0
        %5957 = vmatprep.subr.mxu0 0.0
        %5958 = vmatpush1.msra.mxu0 0.0
        %5959 = vmatprep.subr.mxu0 0.0
        %5960 = vmatpush1.msra.mxu0 0.0
        %5961 = vmatprep.subr.mxu0 0.0
        %5962 = vmatpush1.msra.mxu0 0.0
        %5963 = vmatprep.subr.mxu0 0.0
        %5964 = vmatpush1.msra.mxu0 0.0
        %5965 = vmatprep.subr.mxu0 0.0
        %5966 = vmatpush1.msra.mxu0 0.0
        %5967 = vmatprep.mubr.f32.mxu0 0.0
        %v5968 = vand.u32 %v5681, 4294901760
        %5969 = vmatmul.mubr.f32.gmra.mrb[0].mxu0 %v5968
        %v5970 = vpop.f32.mrb[0].mxu0
        %v5971 = vadd.f32 %v5790, %v5970
        %v5972 = vpop.f32.mrb[0].mxu0
        %5973 = vmatprep.mubr.f32.mxu0 0.0
        %v5974 = vand.u32 %v5687, 4294901760
        %5975 = vmatmul.mubr.f32.gmra.mrb[0].mxu0 %v5974
        %v5976 = vpop.f32.mrb[0].mxu0
        %v5977 = vadd.f32 %v5800, %v5976
        %v5978 = vpop.f32.mrb[0].mxu0
        %5979 = vmatprep.mubr.f32.mxu0 0.0
        %v5980 = vand.u32 %v5693, 4294901760
        %5981 = vmatmul.mubr.f32.gmra.mrb[0].mxu0 %v5980
        %v5982 = vpop.f32.mrb[0].mxu0
        %v5983 = vadd.f32 %v5810, %v5982
        %v5984 = vpop.f32.mrb[0].mxu0
        %5985 = vmatprep.mubr.f32.mxu0 0.0
        %v5986 = vand.u32 %v5699, 4294901760
        %5987 = vmatmul.mubr.f32.gmra.mrb[0].mxu0 %v5986
        %v5988 = vpop.f32.mrb[0].mxu0
        %v5989 = vadd.f32 %v5820, %v5988
        %v5990 = vpop.f32.mrb[0].mxu0
        %5991 = vdwg.mxu0
        %5992 = vmatprep.subr.mxu0 0.0
        %v5993 = vand.u32 %v508, 4294901760
        %v5994 = vsub.f32 %v508, %v5993
        %5995 = vmatpush1.msra.mxu0 %v5994
        %5996 = vmatprep.subr.mxu0 0.0
        %v5997 = vand.u32 %v509, 4294901760
        %v5998 = vsub.f32 %v509, %v5997
        %5999 = vmatpush1.msra.mxu0 %v5998
        %6000 = vmatprep.subr.mxu0 0.0
        %v6001 = vand.u32 %v510, 4294901760
        %v6002 = vsub.f32 %v510, %v6001
        %6003 = vmatpush1.msra.mxu0 %v6002
        %6004 = vmatprep.subr.mxu0 0.0
        %v6005 = vand.u32 %v511, 4294901760
        %v6006 = vsub.f32 %v511, %v6005
        %6007 = vmatpush1.msra.mxu0 %v6006
        %6008 = vmatprep.subr.mxu0 0.0
        %v6009 = vand.u32 %v512, 4294901760
        %v6010 = vsub.f32 %v512, %v6009
        %6011 = vmatpush1.msra.mxu0 %v6010
        %6012 = vmatprep.subr.mxu0 0.0
        %v6013 = vand.u32 %v513, 4294901760
        %v6014 = vsub.f32 %v513, %v6013
        %6015 = vmatpush1.msra.mxu0 %v6014
        %6016 = vmatprep.subr.mxu0 0.0
        %v6017 = vand.u32 %v514, 4294901760
        %v6018 = vsub.f32 %v514, %v6017
        %6019 = vmatpush1.msra.mxu0 %v6018
        %6020 = vmatprep.subr.mxu0 0.0
        %v6021 = vand.u32 %v515, 4294901760
        %v6022 = vsub.f32 %v515, %v6021
        %6023 = vmatpush1.msra.mxu0 %v6022
        %6024 = vmatprep.subr.mxu0 0.0
        %v6025 = vand.u32 %v516, 4294901760
        %v6026 = vsub.f32 %v516, %v6025
        %6027 = vmatpush1.msra.mxu0 %v6026
        %6028 = vmatprep.subr.mxu0 0.0
        %v6029 = vand.u32 %v517, 4294901760
        %v6030 = vsub.f32 %v517, %v6029
        %6031 = vmatpush1.msra.mxu0 %v6030
        %6032 = vmatprep.subr.mxu0 0.0
        %v6033 = vand.u32 %v518, 4294901760
        %v6034 = vsub.f32 %v518, %v6033
        %6035 = vmatpush1.msra.mxu0 %v6034
        %6036 = vmatprep.subr.mxu0 0.0
        %v6037 = vand.u32 %v519, 4294901760
        %v6038 = vsub.f32 %v519, %v6037
        %6039 = vmatpush1.msra.mxu0 %v6038
        %6040 = vmatprep.subr.mxu0 0.0
        %v6041 = vand.u32 %v520, 4294901760
        %v6042 = vsub.f32 %v520, %v6041
        %6043 = vmatpush1.msra.mxu0 %v6042
        %6044 = vmatprep.subr.mxu0 0.0
        %v6045 = vand.u32 %v521, 4294901760
        %v6046 = vsub.f32 %v521, %v6045
        %6047 = vmatpush1.msra.mxu0 %v6046
        %6048 = vmatprep.subr.mxu0 0.0
        %v6049 = vand.u32 %v522, 4294901760
        %v6050 = vsub.f32 %v522, %v6049
        %6051 = vmatpush1.msra.mxu0 %v6050
        %6052 = vmatprep.subr.mxu0 0.0
        %v6053 = vand.u32 %v523, 4294901760
        %v6054 = vsub.f32 %v523, %v6053
        %6055 = vmatpush1.msra.mxu0 %v6054
        %6056 = vmatprep.subr.mxu0 0.0
        %6057 = vmatpush1.msra.mxu0 0.0
        %6058 = vmatprep.subr.mxu0 0.0
        %6059 = vmatpush1.msra.mxu0 0.0
        %6060 = vmatprep.subr.mxu0 0.0
        %6061 = vmatpush1.msra.mxu0 0.0
        %6062 = vmatprep.subr.mxu0 0.0
        %6063 = vmatpush1.msra.mxu0 0.0
        %6064 = vmatprep.subr.mxu0 0.0
        %6065 = vmatpush1.msra.mxu0 0.0
        %6066 = vmatprep.subr.mxu0 0.0
        %6067 = vmatpush1.msra.mxu0 0.0
        %6068 = vmatprep.subr.mxu0 0.0
        %6069 = vmatpush1.msra.mxu0 0.0
        %6070 = vmatprep.subr.mxu0 0.0
        %6071 = vmatpush1.msra.mxu0 0.0
        %6072 = vmatprep.subr.mxu0 0.0
        %6073 = vmatpush1.msra.mxu0 0.0
        %6074 = vmatprep.subr.mxu0 0.0
        %6075 = vmatpush1.msra.mxu0 0.0
        %6076 = vmatprep.subr.mxu0 0.0
        %6077 = vmatpush1.msra.mxu0 0.0
        %6078 = vmatprep.subr.mxu0 0.0
        %6079 = vmatpush1.msra.mxu0 0.0
        %6080 = vmatprep.subr.mxu0 0.0
        %6081 = vmatpush1.msra.mxu0 0.0
        %6082 = vmatprep.subr.mxu0 0.0
        %6083 = vmatpush1.msra.mxu0 0.0
        %6084 = vmatprep.subr.mxu0 0.0
        %6085 = vmatpush1.msra.mxu0 0.0
        %6086 = vmatprep.subr.mxu0 0.0
        %6087 = vmatpush1.msra.mxu0 0.0
        %6088 = vmatprep.mubr.f32.mxu0 0.0
        %v6089 = vand.u32 %v5681, 4294901760
        %v6090 = vsub.f32 %v5681, %v6089
        %6091 = vmatmul.mubr.f32.gmra.mrb[0].mxu0 %v6090
        %v6092 = vpop.f32.mrb[0].mxu0
        %v6093 = vadd.f32 %v5971, %v6092
        %v6094 = vpop.f32.mrb[0].mxu0
        %6095 = vmatprep.mubr.f32.mxu0 0.0
        %v6096 = vand.u32 %v5687, 4294901760
        %v6097 = vsub.f32 %v5687, %v6096
        %6098 = vmatmul.mubr.f32.gmra.mrb[0].mxu0 %v6097
        %v6099 = vpop.f32.mrb[0].mxu0
        %v6100 = vadd.f32 %v5977, %v6099
        %v6101 = vpop.f32.mrb[0].mxu0
        %6102 = vmatprep.mubr.f32.mxu0 0.0
        %v6103 = vand.u32 %v5693, 4294901760
        %v6104 = vsub.f32 %v5693, %v6103
        %6105 = vmatmul.mubr.f32.gmra.mrb[0].mxu0 %v6104
        %v6106 = vpop.f32.mrb[0].mxu0
        %v6107 = vadd.f32 %v5983, %v6106
        %v6108 = vpop.f32.mrb[0].mxu0
        %6109 = vmatprep.mubr.f32.mxu0 0.0
        %v6110 = vand.u32 %v5699, 4294901760
        %v6111 = vsub.f32 %v5699, %v6110
        %6112 = vmatmul.mubr.f32.gmra.mrb[0].mxu0 %v6111
        %v6113 = vpop.f32.mrb[0].mxu0
        %v6114 = vadd.f32 %v5989, %v6113
        %v6115 = vpop.f32.mrb[0].mxu0
        %6116 = vdwg.mxu0
        %6117 = vmatprep.subr.mxu0 0.0
        %v6118 = vand.u32 %v508, 4294901760
        %6119 = vmatpush1.msra.mxu0 %v6118
        %6120 = vmatprep.subr.mxu0 0.0
        %v6121 = vand.u32 %v509, 4294901760
        %6122 = vmatpush1.msra.mxu0 %v6121
        %6123 = vmatprep.subr.mxu0 0.0
        %v6124 = vand.u32 %v510, 4294901760
        %6125 = vmatpush1.msra.mxu0 %v6124
        %6126 = vmatprep.subr.mxu0 0.0
        %v6127 = vand.u32 %v511, 4294901760
        %6128 = vmatpush1.msra.mxu0 %v6127
        %6129 = vmatprep.subr.mxu0 0.0
        %v6130 = vand.u32 %v512, 4294901760
        %6131 = vmatpush1.msra.mxu0 %v6130
        %6132 = vmatprep.subr.mxu0 0.0
        %v6133 = vand.u32 %v513, 4294901760
        %6134 = vmatpush1.msra.mxu0 %v6133
        %6135 = vmatprep.subr.mxu0 0.0
        %v6136 = vand.u32 %v514, 4294901760
        %6137 = vmatpush1.msra.mxu0 %v6136
        %6138 = vmatprep.subr.mxu0 0.0
        %v6139 = vand.u32 %v515, 4294901760
        %6140 = vmatpush1.msra.mxu0 %v6139
        %6141 = vmatprep.subr.mxu0 0.0
        %v6142 = vand.u32 %v516, 4294901760
        %6143 = vmatpush1.msra.mxu0 %v6142
        %6144 = vmatprep.subr.mxu0 0.0
        %v6145 = vand.u32 %v517, 4294901760
        %6146 = vmatpush1.msra.mxu0 %v6145
        %6147 = vmatprep.subr.mxu0 0.0
        %v6148 = vand.u32 %v518, 4294901760
        %6149 = vmatpush1.msra.mxu0 %v6148
        %6150 = vmatprep.subr.mxu0 0.0
        %v6151 = vand.u32 %v519, 4294901760
        %6152 = vmatpush1.msra.mxu0 %v6151
        %6153 = vmatprep.subr.mxu0 0.0
        %v6154 = vand.u32 %v520, 4294901760
        %6155 = vmatpush1.msra.mxu0 %v6154
        %6156 = vmatprep.subr.mxu0 0.0
        %v6157 = vand.u32 %v521, 4294901760
        %6158 = vmatpush1.msra.mxu0 %v6157
        %6159 = vmatprep.subr.mxu0 0.0
        %v6160 = vand.u32 %v522, 4294901760
        %6161 = vmatpush1.msra.mxu0 %v6160
        %6162 = vmatprep.subr.mxu0 0.0
        %v6163 = vand.u32 %v523, 4294901760
        %6164 = vmatpush1.msra.mxu0 %v6163
        %6165 = vmatprep.subr.mxu0 0.0
        %6166 = vmatpush1.msra.mxu0 0.0
        %6167 = vmatprep.subr.mxu0 0.0
        %6168 = vmatpush1.msra.mxu0 0.0
        %6169 = vmatprep.subr.mxu0 0.0
        %6170 = vmatpush1.msra.mxu0 0.0
        %6171 = vmatprep.subr.mxu0 0.0
        %6172 = vmatpush1.msra.mxu0 0.0
        %6173 = vmatprep.subr.mxu0 0.0
        %6174 = vmatpush1.msra.mxu0 0.0
        %6175 = vmatprep.subr.mxu0 0.0
        %6176 = vmatpush1.msra.mxu0 0.0
        %6177 = vmatprep.subr.mxu0 0.0
        %6178 = vmatpush1.msra.mxu0 0.0
        %6179 = vmatprep.subr.mxu0 0.0
        %6180 = vmatpush1.msra.mxu0 0.0
        %6181 = vmatprep.subr.mxu0 0.0
        %6182 = vmatpush1.msra.mxu0 0.0
        %6183 = vmatprep.subr.mxu0 0.0
        %6184 = vmatpush1.msra.mxu0 0.0
        %6185 = vmatprep.subr.mxu0 0.0
        %6186 = vmatpush1.msra.mxu0 0.0
        %6187 = vmatprep.subr.mxu0 0.0
        %6188 = vmatpush1.msra.mxu0 0.0
        %6189 = vmatprep.subr.mxu0 0.0
        %6190 = vmatpush1.msra.mxu0 0.0
        %6191 = vmatprep.subr.mxu0 0.0
        %6192 = vmatpush1.msra.mxu0 0.0
        %6193 = vmatprep.subr.mxu0 0.0
        %6194 = vmatpush1.msra.mxu0 0.0
        %6195 = vmatprep.subr.mxu0 0.0
        %6196 = vmatpush1.msra.mxu0 0.0
        %6197 = vmatprep.mubr.f32.mxu0 0.0
        %v6198 = vand.u32 %v5681, 4294901760
        %v6199 = vsub.f32 %v5681, %v6198
        %v6200 = vand.u32 %v6199, 4294901760
        %6201 = vmatmul.mubr.f32.gmra.mrb[0].mxu0 %v6200
        %v6202 = vpop.f32.mrb[0].mxu0
        %v6203 = vadd.f32 %v6093, %v6202
        %v6204 = vpop.f32.mrb[0].mxu0
        %6205 = vmatprep.mubr.f32.mxu0 0.0
        %v6206 = vand.u32 %v5687, 4294901760
        %v6207 = vsub.f32 %v5687, %v6206
        %v6208 = vand.u32 %v6207, 4294901760
        %6209 = vmatmul.mubr.f32.gmra.mrb[0].mxu0 %v6208
        %v6210 = vpop.f32.mrb[0].mxu0
        %v6211 = vadd.f32 %v6100, %v6210
        %v6212 = vpop.f32.mrb[0].mxu0
        %6213 = vmatprep.mubr.f32.mxu0 0.0
        %v6214 = vand.u32 %v5693, 4294901760
        %v6215 = vsub.f32 %v5693, %v6214
        %v6216 = vand.u32 %v6215, 4294901760
        %6217 = vmatmul.mubr.f32.gmra.mrb[0].mxu0 %v6216
        %v6218 = vpop.f32.mrb[0].mxu0
        %v6219 = vadd.f32 %v6107, %v6218
        %v6220 = vpop.f32.mrb[0].mxu0
        %6221 = vmatprep.mubr.f32.mxu0 0.0
        %v6222 = vand.u32 %v5699, 4294901760
        %v6223 = vsub.f32 %v5699, %v6222
        %v6224 = vand.u32 %v6223, 4294901760
        %6225 = vmatmul.mubr.f32.gmra.mrb[0].mxu0 %v6224
        %v6226 = vpop.f32.mrb[0].mxu0
        %v6227 = vadd.f32 %v6114, %v6226
        %v6228 = vpop.f32.mrb[0].mxu0
        %6229 = vdwg.mxu0
        %6230 = vmatprep.subr.mxu0 0.0
        %v6231 = vand.u32 %v508, 4294901760
        %v6232 = vsub.f32 %v508, %v6231
        %v6233 = vand.u32 %v6232, 4294901760
        %6234 = vmatpush1.msra.mxu0 %v6233
        %6235 = vmatprep.subr.mxu0 0.0
        %v6236 = vand.u32 %v509, 4294901760
        %v6237 = vsub.f32 %v509, %v6236
        %v6238 = vand.u32 %v6237, 4294901760
        %6239 = vmatpush1.msra.mxu0 %v6238
        %6240 = vmatprep.subr.mxu0 0.0
        %v6241 = vand.u32 %v510, 4294901760
        %v6242 = vsub.f32 %v510, %v6241
        %v6243 = vand.u32 %v6242, 4294901760
        %6244 = vmatpush1.msra.mxu0 %v6243
        %6245 = vmatprep.subr.mxu0 0.0
        %v6246 = vand.u32 %v511, 4294901760
        %v6247 = vsub.f32 %v511, %v6246
        %v6248 = vand.u32 %v6247, 4294901760
        %6249 = vmatpush1.msra.mxu0 %v6248
        %6250 = vmatprep.subr.mxu0 0.0
        %v6251 = vand.u32 %v512, 4294901760
        %v6252 = vsub.f32 %v512, %v6251
        %v6253 = vand.u32 %v6252, 4294901760
        %6254 = vmatpush1.msra.mxu0 %v6253
        %6255 = vmatprep.subr.mxu0 0.0
        %v6256 = vand.u32 %v513, 4294901760
        %v6257 = vsub.f32 %v513, %v6256
        %v6258 = vand.u32 %v6257, 4294901760
        %6259 = vmatpush1.msra.mxu0 %v6258
        %6260 = vmatprep.subr.mxu0 0.0
        %v6261 = vand.u32 %v514, 4294901760
        %v6262 = vsub.f32 %v514, %v6261
        %v6263 = vand.u32 %v6262, 4294901760
        %6264 = vmatpush1.msra.mxu0 %v6263
        %6265 = vmatprep.subr.mxu0 0.0
        %v6266 = vand.u32 %v515, 4294901760
        %v6267 = vsub.f32 %v515, %v6266
        %v6268 = vand.u32 %v6267, 4294901760
        %6269 = vmatpush1.msra.mxu0 %v6268
        %6270 = vmatprep.subr.mxu0 0.0
        %v6271 = vand.u32 %v516, 4294901760
        %v6272 = vsub.f32 %v516, %v6271
        %v6273 = vand.u32 %v6272, 4294901760
        %6274 = vmatpush1.msra.mxu0 %v6273
        %6275 = vmatprep.subr.mxu0 0.0
        %v6276 = vand.u32 %v517, 4294901760
        %v6277 = vsub.f32 %v517, %v6276
        %v6278 = vand.u32 %v6277, 4294901760
        %6279 = vmatpush1.msra.mxu0 %v6278
        %6280 = vmatprep.subr.mxu0 0.0
        %v6281 = vand.u32 %v518, 4294901760
        %v6282 = vsub.f32 %v518, %v6281
        %v6283 = vand.u32 %v6282, 4294901760
        %6284 = vmatpush1.msra.mxu0 %v6283
        %6285 = vmatprep.subr.mxu0 0.0
        %v6286 = vand.u32 %v519, 4294901760
        %v6287 = vsub.f32 %v519, %v6286
        %v6288 = vand.u32 %v6287, 4294901760
        %6289 = vmatpush1.msra.mxu0 %v6288
        %6290 = vmatprep.subr.mxu0 0.0
        %v6291 = vand.u32 %v520, 4294901760
        %v6292 = vsub.f32 %v520, %v6291
        %v6293 = vand.u32 %v6292, 4294901760
        %6294 = vmatpush1.msra.mxu0 %v6293
        %6295 = vmatprep.subr.mxu0 0.0
        %v6296 = vand.u32 %v521, 4294901760
        %v6297 = vsub.f32 %v521, %v6296
        %v6298 = vand.u32 %v6297, 4294901760
        %6299 = vmatpush1.msra.mxu0 %v6298
        %6300 = vmatprep.subr.mxu0 0.0
        %v6301 = vand.u32 %v522, 4294901760
        %v6302 = vsub.f32 %v522, %v6301
        %v6303 = vand.u32 %v6302, 4294901760
        %6304 = vmatpush1.msra.mxu0 %v6303
        %6305 = vmatprep.subr.mxu0 0.0
        %v6306 = vand.u32 %v523, 4294901760
        %v6307 = vsub.f32 %v523, %v6306
        %v6308 = vand.u32 %v6307, 4294901760
        %6309 = vmatpush1.msra.mxu0 %v6308
        %6310 = vmatprep.subr.mxu0 0.0
        %6311 = vmatpush1.msra.mxu0 0.0
        %6312 = vmatprep.subr.mxu0 0.0
        %6313 = vmatpush1.msra.mxu0 0.0
        %6314 = vmatprep.subr.mxu0 0.0
        %6315 = vmatpush1.msra.mxu0 0.0
        %6316 = vmatprep.subr.mxu0 0.0
        %6317 = vmatpush1.msra.mxu0 0.0
        %6318 = vmatprep.subr.mxu0 0.0
        %6319 = vmatpush1.msra.mxu0 0.0
        %6320 = vmatprep.subr.mxu0 0.0
        %6321 = vmatpush1.msra.mxu0 0.0
        %6322 = vmatprep.subr.mxu0 0.0
        %6323 = vmatpush1.msra.mxu0 0.0
        %6324 = vmatprep.subr.mxu0 0.0
        %6325 = vmatpush1.msra.mxu0 0.0
        %6326 = vmatprep.subr.mxu0 0.0
        %6327 = vmatpush1.msra.mxu0 0.0
        %6328 = vmatprep.subr.mxu0 0.0
        %6329 = vmatpush1.msra.mxu0 0.0
        %6330 = vmatprep.subr.mxu0 0.0
        %6331 = vmatpush1.msra.mxu0 0.0
        %6332 = vmatprep.subr.mxu0 0.0
        %6333 = vmatpush1.msra.mxu0 0.0
        %6334 = vmatprep.subr.mxu0 0.0
        %6335 = vmatpush1.msra.mxu0 0.0
        %6336 = vmatprep.subr.mxu0 0.0
        %6337 = vmatpush1.msra.mxu0 0.0
        %6338 = vmatprep.subr.mxu0 0.0
        %6339 = vmatpush1.msra.mxu0 0.0
        %6340 = vmatprep.subr.mxu0 0.0
        %6341 = vmatpush1.msra.mxu0 0.0
        %6342 = vmatprep.mubr.f32.mxu0 0.0
        %v6343 = vand.u32 %v5681, 4294901760
        %6344 = vmatmul.mubr.f32.gmra.mrb[0].mxu0 %v6343
        %v6345 = vpop.f32.mrb[0].mxu0
        %v6346 = vadd.f32 %v6203, %v6345
        %v6347 = vpop.f32.mrb[0].mxu0
        %6348 = vmatprep.mubr.f32.mxu0 0.0
        %v6349 = vand.u32 %v5687, 4294901760
        %6350 = vmatmul.mubr.f32.gmra.mrb[0].mxu0 %v6349
        %v6351 = vpop.f32.mrb[0].mxu0
        %v6352 = vadd.f32 %v6211, %v6351
        %v6353 = vpop.f32.mrb[0].mxu0
        %6354 = vmatprep.mubr.f32.mxu0 0.0
        %v6355 = vand.u32 %v5693, 4294901760
        %6356 = vmatmul.mubr.f32.gmra.mrb[0].mxu0 %v6355
        %v6357 = vpop.f32.mrb[0].mxu0
        %v6358 = vadd.f32 %v6219, %v6357
        %v6359 = vpop.f32.mrb[0].mxu0
        %6360 = vmatprep.mubr.f32.mxu0 0.0
        %v6361 = vand.u32 %v5699, 4294901760
        %6362 = vmatmul.mubr.f32.gmra.mrb[0].mxu0 %v6361
        %v6363 = vpop.f32.mrb[0].mxu0
        %v6364 = vadd.f32 %v6227, %v6363
        %v6365 = vpop.f32.mrb[0].mxu0
        %6366 = vdwg.mxu0
        %6367 = vmatprep.subr.mxu0 0.0
        %v6368 = vand.u32 %v508, 4294901760
        %6369 = vmatpush1.msra.mxu0 %v6368
        %6370 = vmatprep.subr.mxu0 0.0
        %v6371 = vand.u32 %v509, 4294901760
        %6372 = vmatpush1.msra.mxu0 %v6371
        %6373 = vmatprep.subr.mxu0 0.0
        %v6374 = vand.u32 %v510, 4294901760
        %6375 = vmatpush1.msra.mxu0 %v6374
        %6376 = vmatprep.subr.mxu0 0.0
        %v6377 = vand.u32 %v511, 4294901760
        %6378 = vmatpush1.msra.mxu0 %v6377
        %6379 = vmatprep.subr.mxu0 0.0
        %v6380 = vand.u32 %v512, 4294901760
        %6381 = vmatpush1.msra.mxu0 %v6380
        %6382 = vmatprep.subr.mxu0 0.0
        %v6383 = vand.u32 %v513, 4294901760
        %6384 = vmatpush1.msra.mxu0 %v6383
        %6385 = vmatprep.subr.mxu0 0.0
        %v6386 = vand.u32 %v514, 4294901760
        %6387 = vmatpush1.msra.mxu0 %v6386
        %6388 = vmatprep.subr.mxu0 0.0
        %v6389 = vand.u32 %v515, 4294901760
        %6390 = vmatpush1.msra.mxu0 %v6389
        %6391 = vmatprep.subr.mxu0 0.0
        %v6392 = vand.u32 %v516, 4294901760
        %6393 = vmatpush1.msra.mxu0 %v6392
        %6394 = vmatprep.subr.mxu0 0.0
        %v6395 = vand.u32 %v517, 4294901760
        %6396 = vmatpush1.msra.mxu0 %v6395
        %6397 = vmatprep.subr.mxu0 0.0
        %v6398 = vand.u32 %v518, 4294901760
        %6399 = vmatpush1.msra.mxu0 %v6398
        %6400 = vmatprep.subr.mxu0 0.0
        %v6401 = vand.u32 %v519, 4294901760
        %6402 = vmatpush1.msra.mxu0 %v6401
        %6403 = vmatprep.subr.mxu0 0.0
        %v6404 = vand.u32 %v520, 4294901760
        %6405 = vmatpush1.msra.mxu0 %v6404
        %6406 = vmatprep.subr.mxu0 0.0
        %v6407 = vand.u32 %v521, 4294901760
        %6408 = vmatpush1.msra.mxu0 %v6407
        %6409 = vmatprep.subr.mxu0 0.0
        %v6410 = vand.u32 %v522, 4294901760
        %6411 = vmatpush1.msra.mxu0 %v6410
        %6412 = vmatprep.subr.mxu0 0.0
        %v6413 = vand.u32 %v523, 4294901760
        %6414 = vmatpush1.msra.mxu0 %v6413
        %6415 = vmatprep.subr.mxu0 0.0
        %6416 = vmatpush1.msra.mxu0 0.0
        %6417 = vmatprep.subr.mxu0 0.0
        %6418 = vmatpush1.msra.mxu0 0.0
        %6419 = vmatprep.subr.mxu0 0.0
        %6420 = vmatpush1.msra.mxu0 0.0
        %6421 = vmatprep.subr.mxu0 0.0
        %6422 = vmatpush1.msra.mxu0 0.0
        %6423 = vmatprep.subr.mxu0 0.0
        %6424 = vmatpush1.msra.mxu0 0.0
        %6425 = vmatprep.subr.mxu0 0.0
        %6426 = vmatpush1.msra.mxu0 0.0
        %6427 = vmatprep.subr.mxu0 0.0
        %6428 = vmatpush1.msra.mxu0 0.0
        %6429 = vmatprep.subr.mxu0 0.0
        %6430 = vmatpush1.msra.mxu0 0.0
        %6431 = vmatprep.subr.mxu0 0.0
        %6432 = vmatpush1.msra.mxu0 0.0
        %6433 = vmatprep.subr.mxu0 0.0
        %6434 = vmatpush1.msra.mxu0 0.0
        %6435 = vmatprep.subr.mxu0 0.0
        %6436 = vmatpush1.msra.mxu0 0.0
        %6437 = vmatprep.subr.mxu0 0.0
        %6438 = vmatpush1.msra.mxu0 0.0
        %6439 = vmatprep.subr.mxu0 0.0
        %6440 = vmatpush1.msra.mxu0 0.0
        %6441 = vmatprep.subr.mxu0 0.0
        %6442 = vmatpush1.msra.mxu0 0.0
        %6443 = vmatprep.subr.mxu0 0.0
        %6444 = vmatpush1.msra.mxu0 0.0
        %6445 = vmatprep.subr.mxu0 0.0
        %6446 = vmatpush1.msra.mxu0 0.0
        %6447 = vmatprep.mubr.f32.mxu0 0.0
        %v6448 = vand.u32 %v5681, 4294901760
        %6449 = vmatmul.mubr.f32.gmra.mrb[0].mxu0 %v6448
        %v6450 = vpop.f32.mrb[0].mxu0
        %v6451 = vadd.f32 %v6346, %v6450
        %v6452 = vpop.f32.mrb[0].mxu0
        %6453 = vmatprep.mubr.f32.mxu0 0.0
        %v6454 = vand.u32 %v5687, 4294901760
        %6455 = vmatmul.mubr.f32.gmra.mrb[0].mxu0 %v6454
        %v6456 = vpop.f32.mrb[0].mxu0
        %v6457 = vadd.f32 %v6352, %v6456
        %v6458 = vpop.f32.mrb[0].mxu0
        %6459 = vmatprep.mubr.f32.mxu0 0.0
        %v6460 = vand.u32 %v5693, 4294901760
        %6461 = vmatmul.mubr.f32.gmra.mrb[0].mxu0 %v6460
        %v6462 = vpop.f32.mrb[0].mxu0
        %v6463 = vadd.f32 %v6358, %v6462
        %v6464 = vpop.f32.mrb[0].mxu0
        %6465 = vmatprep.mubr.f32.mxu0 0.0
        %v6466 = vand.u32 %v5699, 4294901760
        %6467 = vmatmul.mubr.f32.gmra.mrb[0].mxu0 %v6466
        %v6468 = vpop.f32.mrb[0].mxu0
        %v6469 = vadd.f32 %v6364, %v6468
        %v6470 = vpop.f32.mrb[0].mxu0
        %6471 = vdwg.mxu0
        %v6472 = vmul.f32 %v488, %v488
        %v6473 = vmul.f32 %v489, %v489
        %v6474 = vmul.f32 %v490, %v490
        %v6475 = vmul.f32 %v491, %v491
        %v6476 = vmul.f32 %v498, %v498
        %v6477 = vmul.f32 %v499, %v499
        %6478 = vmatprep.subr.mxu0 0.0
        %v6479 = vand.u32 %v6476, 4294901760
        %6480 = vmatpush1.msra.mxu0 %v6479
        %6481 = vmatprep.subr.mxu0 0.0
        %v6482 = vand.u32 %v6477, 4294901760
        %6483 = vmatpush1.msra.mxu0 %v6482
        %6484 = vmatprep.subr.mxu0 0.0
        %6485 = vmatpush1.msra.mxu0 0.0
        %6486 = vmatprep.subr.mxu0 0.0
        %6487 = vmatpush1.msra.mxu0 0.0
        %6488 = vmatprep.subr.mxu0 0.0
        %6489 = vmatpush1.msra.mxu0 0.0
        %6490 = vmatprep.subr.mxu0 0.0
        %6491 = vmatpush1.msra.mxu0 0.0
        %6492 = vmatprep.subr.mxu0 0.0
        %6493 = vmatpush1.msra.mxu0 0.0
        %6494 = vmatprep.subr.mxu0 0.0
        %6495 = vmatpush1.msra.mxu0 0.0
        %6496 = vmatprep.subr.mxu0 0.0
        %6497 = vmatpush1.msra.mxu0 0.0
        %6498 = vmatprep.subr.mxu0 0.0
        %6499 = vmatpush1.msra.mxu0 0.0
        %6500 = vmatprep.subr.mxu0 0.0
        %6501 = vmatpush1.msra.mxu0 0.0
        %6502 = vmatprep.subr.mxu0 0.0
        %6503 = vmatpush1.msra.mxu0 0.0
        %6504 = vmatprep.subr.mxu0 0.0
        %6505 = vmatpush1.msra.mxu0 0.0
        %6506 = vmatprep.subr.mxu0 0.0
        %6507 = vmatpush1.msra.mxu0 0.0
        %6508 = vmatprep.subr.mxu0 0.0
        %6509 = vmatpush1.msra.mxu0 0.0
        %6510 = vmatprep.subr.mxu0 0.0
        %6511 = vmatpush1.msra.mxu0 0.0
        %6512 = vmatprep.subr.mxu0 0.0
        %6513 = vmatpush1.msra.mxu0 0.0
        %6514 = vmatprep.subr.mxu0 0.0
        %6515 = vmatpush1.msra.mxu0 0.0
        %6516 = vmatprep.subr.mxu0 0.0
        %6517 = vmatpush1.msra.mxu0 0.0
        %6518 = vmatprep.subr.mxu0 0.0
        %6519 = vmatpush1.msra.mxu0 0.0
        %6520 = vmatprep.subr.mxu0 0.0
        %6521 = vmatpush1.msra.mxu0 0.0
        %6522 = vmatprep.subr.mxu0 0.0
        %6523 = vmatpush1.msra.mxu0 0.0
        %6524 = vmatprep.subr.mxu0 0.0
        %6525 = vmatpush1.msra.mxu0 0.0
        %6526 = vmatprep.subr.mxu0 0.0
        %6527 = vmatpush1.msra.mxu0 0.0
        %6528 = vmatprep.subr.mxu0 0.0
        %6529 = vmatpush1.msra.mxu0 0.0
        %6530 = vmatprep.subr.mxu0 0.0
        %6531 = vmatpush1.msra.mxu0 0.0
        %6532 = vmatprep.subr.mxu0 0.0
        %6533 = vmatpush1.msra.mxu0 0.0
        %6534 = vmatprep.subr.mxu0 0.0
        %6535 = vmatpush1.msra.mxu0 0.0
        %6536 = vmatprep.subr.mxu0 0.0
        %6537 = vmatpush1.msra.mxu0 0.0
        %6538 = vmatprep.subr.mxu0 0.0
        %6539 = vmatpush1.msra.mxu0 0.0
        %6540 = vmatprep.subr.mxu0 0.0
        %6541 = vmatpush1.msra.mxu0 0.0
        %6542 = vmatprep.subr.mxu0 0.0
        %6543 = vmatpush1.msra.mxu0 0.0
        %6544 = vmatprep.mubr.f32.mxu0 0.0
        %v6545 = vand.u32 %v526, 4294901760
        %v6546 = vsub.f32 %v526, %v6545
        %v6547 = vand.u32 %v6546, 4294901760
        %v6548 = vsub.f32 %v6546, %v6547
        %v6549 = vand.u32 %v6548, 4294901760
        %6550 = vmatmul.mubr.f32.gmra.mrb[0].mxu0 %v6549
        %v6551 = vpop.f32.mrb[0].mxu0
        %v6552 = vadd.f32 0.0, %v6551
        %v6553 = vpop.f32.mrb[0].mxu0
        %6554 = vmatprep.mubr.f32.mxu0 0.0
        %v6555 = vand.u32 %v529, 4294901760
        %v6556 = vsub.f32 %v529, %v6555
        %v6557 = vand.u32 %v6556, 4294901760
        %v6558 = vsub.f32 %v6556, %v6557
        %v6559 = vand.u32 %v6558, 4294901760
        %6560 = vmatmul.mubr.f32.gmra.mrb[0].mxu0 %v6559
        %v6561 = vpop.f32.mrb[0].mxu0
        %v6562 = vadd.f32 0.0, %v6561
        %v6563 = vpop.f32.mrb[0].mxu0
        %6564 = vmatprep.mubr.f32.mxu0 0.0
        %v6565 = vand.u32 %v532, 4294901760
        %v6566 = vsub.f32 %v532, %v6565
        %v6567 = vand.u32 %v6566, 4294901760
        %v6568 = vsub.f32 %v6566, %v6567
        %v6569 = vand.u32 %v6568, 4294901760
        %6570 = vmatmul.mubr.f32.gmra.mrb[0].mxu0 %v6569
        %v6571 = vpop.f32.mrb[0].mxu0
        %v6572 = vadd.f32 0.0, %v6571
        %v6573 = vpop.f32.mrb[0].mxu0
        %6574 = vmatprep.mubr.f32.mxu0 0.0
        %v6575 = vand.u32 %v535, 4294901760
        %v6576 = vsub.f32 %v535, %v6575
        %v6577 = vand.u32 %v6576, 4294901760
        %v6578 = vsub.f32 %v6576, %v6577
        %v6579 = vand.u32 %v6578, 4294901760
        %6580 = vmatmul.mubr.f32.gmra.mrb[0].mxu0 %v6579
        %v6581 = vpop.f32.mrb[0].mxu0
        %v6582 = vadd.f32 0.0, %v6581
        %v6583 = vpop.f32.mrb[0].mxu0
        %6584 = vdwg.mxu0
        %6585 = vmatprep.subr.mxu0 0.0
        %v6586 = vand.u32 %v6476, 4294901760
        %v6587 = vsub.f32 %v6476, %v6586
        %v6588 = vand.u32 %v6587, 4294901760
        %v6589 = vsub.f32 %v6587, %v6588
        %v6590 = vand.u32 %v6589, 4294901760
        %6591 = vmatpush1.msra.mxu0 %v6590
        %6592 = vmatprep.subr.mxu0 0.0
        %v6593 = vand.u32 %v6477, 4294901760
        %v6594 = vsub.f32 %v6477, %v6593
        %v6595 = vand.u32 %v6594, 4294901760
        %v6596 = vsub.f32 %v6594, %v6595
        %v6597 = vand.u32 %v6596, 4294901760
        %6598 = vmatpush1.msra.mxu0 %v6597
        %6599 = vmatprep.subr.mxu0 0.0
        %6600 = vmatpush1.msra.mxu0 0.0
        %6601 = vmatprep.subr.mxu0 0.0
        %6602 = vmatpush1.msra.mxu0 0.0
        %6603 = vmatprep.subr.mxu0 0.0
        %6604 = vmatpush1.msra.mxu0 0.0
        %6605 = vmatprep.subr.mxu0 0.0
        %6606 = vmatpush1.msra.mxu0 0.0
        %6607 = vmatprep.subr.mxu0 0.0
        %6608 = vmatpush1.msra.mxu0 0.0
        %6609 = vmatprep.subr.mxu0 0.0
        %6610 = vmatpush1.msra.mxu0 0.0
        %6611 = vmatprep.subr.mxu0 0.0
        %6612 = vmatpush1.msra.mxu0 0.0
        %6613 = vmatprep.subr.mxu0 0.0
        %6614 = vmatpush1.msra.mxu0 0.0
        %6615 = vmatprep.subr.mxu0 0.0
        %6616 = vmatpush1.msra.mxu0 0.0
        %6617 = vmatprep.subr.mxu0 0.0
        %6618 = vmatpush1.msra.mxu0 0.0
        %6619 = vmatprep.subr.mxu0 0.0
        %6620 = vmatpush1.msra.mxu0 0.0
        %6621 = vmatprep.subr.mxu0 0.0
        %6622 = vmatpush1.msra.mxu0 0.0
        %6623 = vmatprep.subr.mxu0 0.0
        %6624 = vmatpush1.msra.mxu0 0.0
        %6625 = vmatprep.subr.mxu0 0.0
        %6626 = vmatpush1.msra.mxu0 0.0
        %6627 = vmatprep.subr.mxu0 0.0
        %6628 = vmatpush1.msra.mxu0 0.0
        %6629 = vmatprep.subr.mxu0 0.0
        %6630 = vmatpush1.msra.mxu0 0.0
        %6631 = vmatprep.subr.mxu0 0.0
        %6632 = vmatpush1.msra.mxu0 0.0
        %6633 = vmatprep.subr.mxu0 0.0
        %6634 = vmatpush1.msra.mxu0 0.0
        %6635 = vmatprep.subr.mxu0 0.0
        %6636 = vmatpush1.msra.mxu0 0.0
        %6637 = vmatprep.subr.mxu0 0.0
        %6638 = vmatpush1.msra.mxu0 0.0
        %6639 = vmatprep.subr.mxu0 0.0
        %6640 = vmatpush1.msra.mxu0 0.0
        %6641 = vmatprep.subr.mxu0 0.0
        %6642 = vmatpush1.msra.mxu0 0.0
        %6643 = vmatprep.subr.mxu0 0.0
        %6644 = vmatpush1.msra.mxu0 0.0
        %6645 = vmatprep.subr.mxu0 0.0
        %6646 = vmatpush1.msra.mxu0 0.0
        %6647 = vmatprep.subr.mxu0 0.0
        %6648 = vmatpush1.msra.mxu0 0.0
        %6649 = vmatprep.subr.mxu0 0.0
        %6650 = vmatpush1.msra.mxu0 0.0
        %6651 = vmatprep.subr.mxu0 0.0
        %6652 = vmatpush1.msra.mxu0 0.0
        %6653 = vmatprep.subr.mxu0 0.0
        %6654 = vmatpush1.msra.mxu0 0.0
        %6655 = vmatprep.subr.mxu0 0.0
        %6656 = vmatpush1.msra.mxu0 0.0
        %6657 = vmatprep.subr.mxu0 0.0
        %6658 = vmatpush1.msra.mxu0 0.0
        %6659 = vmatprep.mubr.f32.mxu0 0.0
        %v6660 = vand.u32 %v526, 4294901760
        %6661 = vmatmul.mubr.f32.gmra.mrb[0].mxu0 %v6660
        %v6662 = vpop.f32.mrb[0].mxu0
        %v6663 = vadd.f32 %v6552, %v6662
        %v6664 = vpop.f32.mrb[0].mxu0
        %6665 = vmatprep.mubr.f32.mxu0 0.0
        %v6666 = vand.u32 %v529, 4294901760
        %6667 = vmatmul.mubr.f32.gmra.mrb[0].mxu0 %v6666
        %v6668 = vpop.f32.mrb[0].mxu0
        %v6669 = vadd.f32 %v6562, %v6668
        %v6670 = vpop.f32.mrb[0].mxu0
        %6671 = vmatprep.mubr.f32.mxu0 0.0
        %v6672 = vand.u32 %v532, 4294901760
        %6673 = vmatmul.mubr.f32.gmra.mrb[0].mxu0 %v6672
        %v6674 = vpop.f32.mrb[0].mxu0
        %v6675 = vadd.f32 %v6572, %v6674
        %v6676 = vpop.f32.mrb[0].mxu0
        %6677 = vmatprep.mubr.f32.mxu0 0.0
        %v6678 = vand.u32 %v535, 4294901760
        %6679 = vmatmul.mubr.f32.gmra.mrb[0].mxu0 %v6678
        %v6680 = vpop.f32.mrb[0].mxu0
        %v6681 = vadd.f32 %v6582, %v6680
        %v6682 = vpop.f32.mrb[0].mxu0
        %6683 = vdwg.mxu0
        %6684 = vmatprep.subr.mxu0 0.0
        %v6685 = vand.u32 %v6476, 4294901760
        %v6686 = vsub.f32 %v6476, %v6685
        %6687 = vmatpush1.msra.mxu0 %v6686
        %6688 = vmatprep.subr.mxu0 0.0
        %v6689 = vand.u32 %v6477, 4294901760
        %v6690 = vsub.f32 %v6477, %v6689
        %6691 = vmatpush1.msra.mxu0 %v6690
        %6692 = vmatprep.subr.mxu0 0.0
        %6693 = vmatpush1.msra.mxu0 0.0
        %6694 = vmatprep.subr.mxu0 0.0
        %6695 = vmatpush1.msra.mxu0 0.0
        %6696 = vmatprep.subr.mxu0 0.0
        %6697 = vmatpush1.msra.mxu0 0.0
        %6698 = vmatprep.subr.mxu0 0.0
        %6699 = vmatpush1.msra.mxu0 0.0
        %6700 = vmatprep.subr.mxu0 0.0
        %6701 = vmatpush1.msra.mxu0 0.0
        %6702 = vmatprep.subr.mxu0 0.0
        %6703 = vmatpush1.msra.mxu0 0.0
        %6704 = vmatprep.subr.mxu0 0.0
        %6705 = vmatpush1.msra.mxu0 0.0
        %6706 = vmatprep.subr.mxu0 0.0
        %6707 = vmatpush1.msra.mxu0 0.0
        %6708 = vmatprep.subr.mxu0 0.0
        %6709 = vmatpush1.msra.mxu0 0.0
        %6710 = vmatprep.subr.mxu0 0.0
        %6711 = vmatpush1.msra.mxu0 0.0
        %6712 = vmatprep.subr.mxu0 0.0
        %6713 = vmatpush1.msra.mxu0 0.0
        %6714 = vmatprep.subr.mxu0 0.0
        %6715 = vmatpush1.msra.mxu0 0.0
        %6716 = vmatprep.subr.mxu0 0.0
        %6717 = vmatpush1.msra.mxu0 0.0
        %6718 = vmatprep.subr.mxu0 0.0
        %6719 = vmatpush1.msra.mxu0 0.0
        %6720 = vmatprep.subr.mxu0 0.0
        %6721 = vmatpush1.msra.mxu0 0.0
        %6722 = vmatprep.subr.mxu0 0.0
        %6723 = vmatpush1.msra.mxu0 0.0
        %6724 = vmatprep.subr.mxu0 0.0
        %6725 = vmatpush1.msra.mxu0 0.0
        %6726 = vmatprep.subr.mxu0 0.0
        %6727 = vmatpush1.msra.mxu0 0.0
        %6728 = vmatprep.subr.mxu0 0.0
        %6729 = vmatpush1.msra.mxu0 0.0
        %6730 = vmatprep.subr.mxu0 0.0
        %6731 = vmatpush1.msra.mxu0 0.0
        %6732 = vmatprep.subr.mxu0 0.0
        %6733 = vmatpush1.msra.mxu0 0.0
        %6734 = vmatprep.subr.mxu0 0.0
        %6735 = vmatpush1.msra.mxu0 0.0
        %6736 = vmatprep.subr.mxu0 0.0
        %6737 = vmatpush1.msra.mxu0 0.0
        %6738 = vmatprep.subr.mxu0 0.0
        %6739 = vmatpush1.msra.mxu0 0.0
        %6740 = vmatprep.subr.mxu0 0.0
        %6741 = vmatpush1.msra.mxu0 0.0
        %6742 = vmatprep.subr.mxu0 0.0
        %6743 = vmatpush1.msra.mxu0 0.0
        %6744 = vmatprep.subr.mxu0 0.0
        %6745 = vmatpush1.msra.mxu0 0.0
        %6746 = vmatprep.subr.mxu0 0.0
        %6747 = vmatpush1.msra.mxu0 0.0
        %6748 = vmatprep.subr.mxu0 0.0
        %6749 = vmatpush1.msra.mxu0 0.0
        %6750 = vmatprep.subr.mxu0 0.0
        %6751 = vmatpush1.msra.mxu0 0.0
        %6752 = vmatprep.mubr.f32.mxu0 0.0
        %v6753 = vand.u32 %v526, 4294901760
        %v6754 = vsub.f32 %v526, %v6753
        %6755 = vmatmul.mubr.f32.gmra.mrb[0].mxu0 %v6754
        %v6756 = vpop.f32.mrb[0].mxu0
        %v6757 = vadd.f32 %v6663, %v6756
        %v6758 = vpop.f32.mrb[0].mxu0
        %6759 = vmatprep.mubr.f32.mxu0 0.0
        %v6760 = vand.u32 %v529, 4294901760
        %v6761 = vsub.f32 %v529, %v6760
        %6762 = vmatmul.mubr.f32.gmra.mrb[0].mxu0 %v6761
        %v6763 = vpop.f32.mrb[0].mxu0
        %v6764 = vadd.f32 %v6669, %v6763
        %v6765 = vpop.f32.mrb[0].mxu0
        %6766 = vmatprep.mubr.f32.mxu0 0.0
        %v6767 = vand.u32 %v532, 4294901760
        %v6768 = vsub.f32 %v532, %v6767
        %6769 = vmatmul.mubr.f32.gmra.mrb[0].mxu0 %v6768
        %v6770 = vpop.f32.mrb[0].mxu0
        %v6771 = vadd.f32 %v6675, %v6770
        %v6772 = vpop.f32.mrb[0].mxu0
        %6773 = vmatprep.mubr.f32.mxu0 0.0
        %v6774 = vand.u32 %v535, 4294901760
        %v6775 = vsub.f32 %v535, %v6774
        %6776 = vmatmul.mubr.f32.gmra.mrb[0].mxu0 %v6775
        %v6777 = vpop.f32.mrb[0].mxu0
        %v6778 = vadd.f32 %v6681, %v6777
        %v6779 = vpop.f32.mrb[0].mxu0
        %6780 = vdwg.mxu0
        %6781 = vmatprep.subr.mxu0 0.0
        %v6782 = vand.u32 %v6476, 4294901760
        %6783 = vmatpush1.msra.mxu0 %v6782
        %6784 = vmatprep.subr.mxu0 0.0
        %v6785 = vand.u32 %v6477, 4294901760
        %6786 = vmatpush1.msra.mxu0 %v6785
        %6787 = vmatprep.subr.mxu0 0.0
        %6788 = vmatpush1.msra.mxu0 0.0
        %6789 = vmatprep.subr.mxu0 0.0
        %6790 = vmatpush1.msra.mxu0 0.0
        %6791 = vmatprep.subr.mxu0 0.0
        %6792 = vmatpush1.msra.mxu0 0.0
        %6793 = vmatprep.subr.mxu0 0.0
        %6794 = vmatpush1.msra.mxu0 0.0
        %6795 = vmatprep.subr.mxu0 0.0
        %6796 = vmatpush1.msra.mxu0 0.0
        %6797 = vmatprep.subr.mxu0 0.0
        %6798 = vmatpush1.msra.mxu0 0.0
        %6799 = vmatprep.subr.mxu0 0.0
        %6800 = vmatpush1.msra.mxu0 0.0
        %6801 = vmatprep.subr.mxu0 0.0
        %6802 = vmatpush1.msra.mxu0 0.0
        %6803 = vmatprep.subr.mxu0 0.0
        %6804 = vmatpush1.msra.mxu0 0.0
        %6805 = vmatprep.subr.mxu0 0.0
        %6806 = vmatpush1.msra.mxu0 0.0
        %6807 = vmatprep.subr.mxu0 0.0
        %6808 = vmatpush1.msra.mxu0 0.0
        %6809 = vmatprep.subr.mxu0 0.0
        %6810 = vmatpush1.msra.mxu0 0.0
        %6811 = vmatprep.subr.mxu0 0.0
        %6812 = vmatpush1.msra.mxu0 0.0
        %6813 = vmatprep.subr.mxu0 0.0
        %6814 = vmatpush1.msra.mxu0 0.0
        %6815 = vmatprep.subr.mxu0 0.0
        %6816 = vmatpush1.msra.mxu0 0.0
        %6817 = vmatprep.subr.mxu0 0.0
        %6818 = vmatpush1.msra.mxu0 0.0
        %6819 = vmatprep.subr.mxu0 0.0
        %6820 = vmatpush1.msra.mxu0 0.0
        %6821 = vmatprep.subr.mxu0 0.0
        %6822 = vmatpush1.msra.mxu0 0.0
        %6823 = vmatprep.subr.mxu0 0.0
        %6824 = vmatpush1.msra.mxu0 0.0
        %6825 = vmatprep.subr.mxu0 0.0
        %6826 = vmatpush1.msra.mxu0 0.0
        %6827 = vmatprep.subr.mxu0 0.0
        %6828 = vmatpush1.msra.mxu0 0.0
        %6829 = vmatprep.subr.mxu0 0.0
        %6830 = vmatpush1.msra.mxu0 0.0
        %6831 = vmatprep.subr.mxu0 0.0
        %6832 = vmatpush1.msra.mxu0 0.0
        %6833 = vmatprep.subr.mxu0 0.0
        %6834 = vmatpush1.msra.mxu0 0.0
        %6835 = vmatprep.subr.mxu0 0.0
        %6836 = vmatpush1.msra.mxu0 0.0
        %6837 = vmatprep.subr.mxu0 0.0
        %6838 = vmatpush1.msra.mxu0 0.0
        %6839 = vmatprep.subr.mxu0 0.0
        %6840 = vmatpush1.msra.mxu0 0.0
        %6841 = vmatprep.subr.mxu0 0.0
        %6842 = vmatpush1.msra.mxu0 0.0
        %6843 = vmatprep.subr.mxu0 0.0
        %6844 = vmatpush1.msra.mxu0 0.0
        %6845 = vmatprep.subr.mxu0 0.0
        %6846 = vmatpush1.msra.mxu0 0.0
        %6847 = vmatprep.mubr.f32.mxu0 0.0
        %v6848 = vand.u32 %v526, 4294901760
        %v6849 = vsub.f32 %v526, %v6848
        %v6850 = vand.u32 %v6849, 4294901760
        %6851 = vmatmul.mubr.f32.gmra.mrb[0].mxu0 %v6850
        %v6852 = vpop.f32.mrb[0].mxu0
        %v6853 = vadd.f32 %v6757, %v6852
        %v6854 = vpop.f32.mrb[0].mxu0
        %6855 = vmatprep.mubr.f32.mxu0 0.0
        %v6856 = vand.u32 %v529, 4294901760
        %v6857 = vsub.f32 %v529, %v6856
        %v6858 = vand.u32 %v6857, 4294901760
        %6859 = vmatmul.mubr.f32.gmra.mrb[0].mxu0 %v6858
        %v6860 = vpop.f32.mrb[0].mxu0
        %v6861 = vadd.f32 %v6764, %v6860
        %v6862 = vpop.f32.mrb[0].mxu0
        %6863 = vmatprep.mubr.f32.mxu0 0.0
        %v6864 = vand.u32 %v532, 4294901760
        %v6865 = vsub.f32 %v532, %v6864
        %v6866 = vand.u32 %v6865, 4294901760
        %6867 = vmatmul.mubr.f32.gmra.mrb[0].mxu0 %v6866
        %v6868 = vpop.f32.mrb[0].mxu0
        %v6869 = vadd.f32 %v6771, %v6868
        %v6870 = vpop.f32.mrb[0].mxu0
        %6871 = vmatprep.mubr.f32.mxu0 0.0
        %v6872 = vand.u32 %v535, 4294901760
        %v6873 = vsub.f32 %v535, %v6872
        %v6874 = vand.u32 %v6873, 4294901760
        %6875 = vmatmul.mubr.f32.gmra.mrb[0].mxu0 %v6874
        %v6876 = vpop.f32.mrb[0].mxu0
        %v6877 = vadd.f32 %v6778, %v6876
        %v6878 = vpop.f32.mrb[0].mxu0
        %6879 = vdwg.mxu0
        %6880 = vmatprep.subr.mxu0 0.0
        %v6881 = vand.u32 %v6476, 4294901760
        %v6882 = vsub.f32 %v6476, %v6881
        %v6883 = vand.u32 %v6882, 4294901760
        %6884 = vmatpush1.msra.mxu0 %v6883
        %6885 = vmatprep.subr.mxu0 0.0
        %v6886 = vand.u32 %v6477, 4294901760
        %v6887 = vsub.f32 %v6477, %v6886
        %v6888 = vand.u32 %v6887, 4294901760
        %6889 = vmatpush1.msra.mxu0 %v6888
        %6890 = vmatprep.subr.mxu0 0.0
        %6891 = vmatpush1.msra.mxu0 0.0
        %6892 = vmatprep.subr.mxu0 0.0
        %6893 = vmatpush1.msra.mxu0 0.0
        %6894 = vmatprep.subr.mxu0 0.0
        %6895 = vmatpush1.msra.mxu0 0.0
        %6896 = vmatprep.subr.mxu0 0.0
        %6897 = vmatpush1.msra.mxu0 0.0
        %6898 = vmatprep.subr.mxu0 0.0
        %6899 = vmatpush1.msra.mxu0 0.0
        %6900 = vmatprep.subr.mxu0 0.0
        %6901 = vmatpush1.msra.mxu0 0.0
        %6902 = vmatprep.subr.mxu0 0.0
        %6903 = vmatpush1.msra.mxu0 0.0
        %6904 = vmatprep.subr.mxu0 0.0
        %6905 = vmatpush1.msra.mxu0 0.0
        %6906 = vmatprep.subr.mxu0 0.0
        %6907 = vmatpush1.msra.mxu0 0.0
        %6908 = vmatprep.subr.mxu0 0.0
        %6909 = vmatpush1.msra.mxu0 0.0
        %6910 = vmatprep.subr.mxu0 0.0
        %6911 = vmatpush1.msra.mxu0 0.0
        %6912 = vmatprep.subr.mxu0 0.0
        %6913 = vmatpush1.msra.mxu0 0.0
        %6914 = vmatprep.subr.mxu0 0.0
        %6915 = vmatpush1.msra.mxu0 0.0
        %6916 = vmatprep.subr.mxu0 0.0
        %6917 = vmatpush1.msra.mxu0 0.0
        %6918 = vmatprep.subr.mxu0 0.0
        %6919 = vmatpush1.msra.mxu0 0.0
        %6920 = vmatprep.subr.mxu0 0.0
        %6921 = vmatpush1.msra.mxu0 0.0
        %6922 = vmatprep.subr.mxu0 0.0
        %6923 = vmatpush1.msra.mxu0 0.0
        %6924 = vmatprep.subr.mxu0 0.0
        %6925 = vmatpush1.msra.mxu0 0.0
        %6926 = vmatprep.subr.mxu0 0.0
        %6927 = vmatpush1.msra.mxu0 0.0
        %6928 = vmatprep.subr.mxu0 0.0
        %6929 = vmatpush1.msra.mxu0 0.0
        %6930 = vmatprep.subr.mxu0 0.0
        %6931 = vmatpush1.msra.mxu0 0.0
        %6932 = vmatprep.subr.mxu0 0.0
        %6933 = vmatpush1.msra.mxu0 0.0
        %6934 = vmatprep.subr.mxu0 0.0
        %6935 = vmatpush1.msra.mxu0 0.0
        %6936 = vmatprep.subr.mxu0 0.0
        %6937 = vmatpush1.msra.mxu0 0.0
        %6938 = vmatprep.subr.mxu0 0.0
        %6939 = vmatpush1.msra.mxu0 0.0
        %6940 = vmatprep.subr.mxu0 0.0
        %6941 = vmatpush1.msra.mxu0 0.0
        %6942 = vmatprep.subr.mxu0 0.0
        %6943 = vmatpush1.msra.mxu0 0.0
        %6944 = vmatprep.subr.mxu0 0.0
        %6945 = vmatpush1.msra.mxu0 0.0
        %6946 = vmatprep.subr.mxu0 0.0
        %6947 = vmatpush1.msra.mxu0 0.0
        %6948 = vmatprep.subr.mxu0 0.0
        %6949 = vmatpush1.msra.mxu0 0.0
        %6950 = vmatprep.mubr.f32.mxu0 0.0
        %v6951 = vand.u32 %v526, 4294901760
        %6952 = vmatmul.mubr.f32.gmra.mrb[0].mxu0 %v6951
        %v6953 = vpop.f32.mrb[0].mxu0
        %v6954 = vadd.f32 %v6853, %v6953
        %v6955 = vpop.f32.mrb[0].mxu0
        %6956 = vmatprep.mubr.f32.mxu0 0.0
        %v6957 = vand.u32 %v529, 4294901760
        %6958 = vmatmul.mubr.f32.gmra.mrb[0].mxu0 %v6957
        %v6959 = vpop.f32.mrb[0].mxu0
        %v6960 = vadd.f32 %v6861, %v6959
        %v6961 = vpop.f32.mrb[0].mxu0
        %6962 = vmatprep.mubr.f32.mxu0 0.0
        %v6963 = vand.u32 %v532, 4294901760
        %6964 = vmatmul.mubr.f32.gmra.mrb[0].mxu0 %v6963
        %v6965 = vpop.f32.mrb[0].mxu0
        %v6966 = vadd.f32 %v6869, %v6965
        %v6967 = vpop.f32.mrb[0].mxu0
        %6968 = vmatprep.mubr.f32.mxu0 0.0
        %v6969 = vand.u32 %v535, 4294901760
        %6970 = vmatmul.mubr.f32.gmra.mrb[0].mxu0 %v6969
        %v6971 = vpop.f32.mrb[0].mxu0
        %v6972 = vadd.f32 %v6877, %v6971
        %v6973 = vpop.f32.mrb[0].mxu0
        %6974 = vdwg.mxu0
        %6975 = vmatprep.subr.mxu0 0.0
        %v6976 = vand.u32 %v6476, 4294901760
        %6977 = vmatpush1.msra.mxu0 %v6976
        %6978 = vmatprep.subr.mxu0 0.0
        %v6979 = vand.u32 %v6477, 4294901760
        %6980 = vmatpush1.msra.mxu0 %v6979
        %6981 = vmatprep.subr.mxu0 0.0
        %6982 = vmatpush1.msra.mxu0 0.0
        %6983 = vmatprep.subr.mxu0 0.0
        %6984 = vmatpush1.msra.mxu0 0.0
        %6985 = vmatprep.subr.mxu0 0.0
        %6986 = vmatpush1.msra.mxu0 0.0
        %6987 = vmatprep.subr.mxu0 0.0
        %6988 = vmatpush1.msra.mxu0 0.0
        %6989 = vmatprep.subr.mxu0 0.0
        %6990 = vmatpush1.msra.mxu0 0.0
        %6991 = vmatprep.subr.mxu0 0.0
        %6992 = vmatpush1.msra.mxu0 0.0
        %6993 = vmatprep.subr.mxu0 0.0
        %6994 = vmatpush1.msra.mxu0 0.0
        %6995 = vmatprep.subr.mxu0 0.0
        %6996 = vmatpush1.msra.mxu0 0.0
        %6997 = vmatprep.subr.mxu0 0.0
        %6998 = vmatpush1.msra.mxu0 0.0
        %6999 = vmatprep.subr.mxu0 0.0
        %7000 = vmatpush1.msra.mxu0 0.0
        %7001 = vmatprep.subr.mxu0 0.0
        %7002 = vmatpush1.msra.mxu0 0.0
        %7003 = vmatprep.subr.mxu0 0.0
        %7004 = vmatpush1.msra.mxu0 0.0
        %7005 = vmatprep.subr.mxu0 0.0
        %7006 = vmatpush1.msra.mxu0 0.0
        %7007 = vmatprep.subr.mxu0 0.0
        %7008 = vmatpush1.msra.mxu0 0.0
        %7009 = vmatprep.subr.mxu0 0.0
        %7010 = vmatpush1.msra.mxu0 0.0
        %7011 = vmatprep.subr.mxu0 0.0
        %7012 = vmatpush1.msra.mxu0 0.0
        %7013 = vmatprep.subr.mxu0 0.0
        %7014 = vmatpush1.msra.mxu0 0.0
        %7015 = vmatprep.subr.mxu0 0.0
        %7016 = vmatpush1.msra.mxu0 0.0
        %7017 = vmatprep.subr.mxu0 0.0
        %7018 = vmatpush1.msra.mxu0 0.0
        %7019 = vmatprep.subr.mxu0 0.0
        %7020 = vmatpush1.msra.mxu0 0.0
        %7021 = vmatprep.subr.mxu0 0.0
        %7022 = vmatpush1.msra.mxu0 0.0
        %7023 = vmatprep.subr.mxu0 0.0
        %7024 = vmatpush1.msra.mxu0 0.0
        %7025 = vmatprep.subr.mxu0 0.0
        %7026 = vmatpush1.msra.mxu0 0.0
        %7027 = vmatprep.subr.mxu0 0.0
        %7028 = vmatpush1.msra.mxu0 0.0
        %7029 = vmatprep.subr.mxu0 0.0
        %7030 = vmatpush1.msra.mxu0 0.0
        %7031 = vmatprep.subr.mxu0 0.0
        %7032 = vmatpush1.msra.mxu0 0.0
        %7033 = vmatprep.subr.mxu0 0.0
        %7034 = vmatpush1.msra.mxu0 0.0
        %7035 = vmatprep.subr.mxu0 0.0
        %7036 = vmatpush1.msra.mxu0 0.0
        %7037 = vmatprep.subr.mxu0 0.0
        %7038 = vmatpush1.msra.mxu0 0.0
        %7039 = vmatprep.subr.mxu0 0.0
        %7040 = vmatpush1.msra.mxu0 0.0
        %7041 = vmatprep.mubr.f32.mxu0 0.0
        %v7042 = vand.u32 %v526, 4294901760
        %7043 = vmatmul.mubr.f32.gmra.mrb[0].mxu0 %v7042
        %v7044 = vpop.f32.mrb[0].mxu0
        %v7045 = vadd.f32 %v6954, %v7044
        %v7046 = vpop.f32.mrb[0].mxu0
        %7047 = vmatprep.mubr.f32.mxu0 0.0
        %v7048 = vand.u32 %v529, 4294901760
        %7049 = vmatmul.mubr.f32.gmra.mrb[0].mxu0 %v7048
        %v7050 = vpop.f32.mrb[0].mxu0
        %v7051 = vadd.f32 %v6960, %v7050
        %v7052 = vpop.f32.mrb[0].mxu0
        %7053 = vmatprep.mubr.f32.mxu0 0.0
        %v7054 = vand.u32 %v532, 4294901760
        %7055 = vmatmul.mubr.f32.gmra.mrb[0].mxu0 %v7054
        %v7056 = vpop.f32.mrb[0].mxu0
        %v7057 = vadd.f32 %v6966, %v7056
        %v7058 = vpop.f32.mrb[0].mxu0
        %7059 = vmatprep.mubr.f32.mxu0 0.0
        %v7060 = vand.u32 %v535, 4294901760
        %7061 = vmatmul.mubr.f32.gmra.mrb[0].mxu0 %v7060
        %v7062 = vpop.f32.mrb[0].mxu0
        %v7063 = vadd.f32 %v6972, %v7062
        %v7064 = vpop.f32.mrb[0].mxu0
        %7065 = vdwg.mxu0
        %7066 = vmatprep.subr.mxu0 0.0
        %v7067 = vand.u32 %v6472, 4294901760
        %7068 = vmatpush1.msra.mxu0 %v7067
        %7069 = vmatprep.subr.mxu0 0.0
        %v7070 = vand.u32 %v6473, 4294901760
        %7071 = vmatpush1.msra.mxu0 %v7070
        %7072 = vmatprep.subr.mxu0 0.0
        %v7073 = vand.u32 %v6474, 4294901760
        %7074 = vmatpush1.msra.mxu0 %v7073
        %7075 = vmatprep.subr.mxu0 0.0
        %v7076 = vand.u32 %v6475, 4294901760
        %7077 = vmatpush1.msra.mxu0 %v7076
        %7078 = vmatprep.subr.mxu0 0.0
        %7079 = vmatpush1.msra.mxu0 0.0
        %7080 = vmatprep.subr.mxu0 0.0
        %7081 = vmatpush1.msra.mxu0 0.0
        %7082 = vmatprep.subr.mxu0 0.0
        %7083 = vmatpush1.msra.mxu0 0.0
        %7084 = vmatprep.subr.mxu0 0.0
        %7085 = vmatpush1.msra.mxu0 0.0
        %7086 = vmatprep.subr.mxu0 0.0
        %7087 = vmatpush1.msra.mxu0 0.0
        %7088 = vmatprep.subr.mxu0 0.0
        %7089 = vmatpush1.msra.mxu0 0.0
        %7090 = vmatprep.subr.mxu0 0.0
        %7091 = vmatpush1.msra.mxu0 0.0
        %7092 = vmatprep.subr.mxu0 0.0
        %7093 = vmatpush1.msra.mxu0 0.0
        %7094 = vmatprep.subr.mxu0 0.0
        %7095 = vmatpush1.msra.mxu0 0.0
        %7096 = vmatprep.subr.mxu0 0.0
        %7097 = vmatpush1.msra.mxu0 0.0
        %7098 = vmatprep.subr.mxu0 0.0
        %7099 = vmatpush1.msra.mxu0 0.0
        %7100 = vmatprep.subr.mxu0 0.0
        %7101 = vmatpush1.msra.mxu0 0.0
        %7102 = vmatprep.subr.mxu0 0.0
        %7103 = vmatpush1.msra.mxu0 0.0
        %7104 = vmatprep.subr.mxu0 0.0
        %7105 = vmatpush1.msra.mxu0 0.0
        %7106 = vmatprep.subr.mxu0 0.0
        %7107 = vmatpush1.msra.mxu0 0.0
        %7108 = vmatprep.subr.mxu0 0.0
        %7109 = vmatpush1.msra.mxu0 0.0
        %7110 = vmatprep.subr.mxu0 0.0
        %7111 = vmatpush1.msra.mxu0 0.0
        %7112 = vmatprep.subr.mxu0 0.0
        %7113 = vmatpush1.msra.mxu0 0.0
        %7114 = vmatprep.subr.mxu0 0.0
        %7115 = vmatpush1.msra.mxu0 0.0
        %7116 = vmatprep.subr.mxu0 0.0
        %7117 = vmatpush1.msra.mxu0 0.0
        %7118 = vmatprep.subr.mxu0 0.0
        %7119 = vmatpush1.msra.mxu0 0.0
        %7120 = vmatprep.subr.mxu0 0.0
        %7121 = vmatpush1.msra.mxu0 0.0
        %7122 = vmatprep.subr.mxu0 0.0
        %7123 = vmatpush1.msra.mxu0 0.0
        %7124 = vmatprep.subr.mxu0 0.0
        %7125 = vmatpush1.msra.mxu0 0.0
        %7126 = vmatprep.subr.mxu0 0.0
        %7127 = vmatpush1.msra.mxu0 0.0
        %7128 = vmatprep.subr.mxu0 0.0
        %7129 = vmatpush1.msra.mxu0 0.0
        %7130 = vmatprep.subr.mxu0 0.0
        %7131 = vmatpush1.msra.mxu0 0.0
        %7132 = vmatprep.subr.mxu0 0.0
        %7133 = vmatpush1.msra.mxu0 0.0
        %7134 = vmatprep.mubr.f32.mxu0 0.0
        %v7135 = vand.u32 %v1127, 4294901760
        %v7136 = vsub.f32 %v1127, %v7135
        %v7137 = vand.u32 %v7136, 4294901760
        %v7138 = vsub.f32 %v7136, %v7137
        %v7139 = vand.u32 %v7138, 4294901760
        %7140 = vmatmul.mubr.f32.gmra.mrb[0].mxu0 %v7139
        %v7141 = vpop.f32.mrb[0].mxu0
        %v7142 = vadd.f32 %v7045, %v7141
        %v7143 = vpop.f32.mrb[0].mxu0
        %7144 = vmatprep.mubr.f32.mxu0 0.0
        %v7145 = vand.u32 %v1130, 4294901760
        %v7146 = vsub.f32 %v1130, %v7145
        %v7147 = vand.u32 %v7146, 4294901760
        %v7148 = vsub.f32 %v7146, %v7147
        %v7149 = vand.u32 %v7148, 4294901760
        %7150 = vmatmul.mubr.f32.gmra.mrb[0].mxu0 %v7149
        %v7151 = vpop.f32.mrb[0].mxu0
        %v7152 = vadd.f32 %v7051, %v7151
        %v7153 = vpop.f32.mrb[0].mxu0
        %7154 = vmatprep.mubr.f32.mxu0 0.0
        %v7155 = vand.u32 %v1133, 4294901760
        %v7156 = vsub.f32 %v1133, %v7155
        %v7157 = vand.u32 %v7156, 4294901760
        %v7158 = vsub.f32 %v7156, %v7157
        %v7159 = vand.u32 %v7158, 4294901760
        %7160 = vmatmul.mubr.f32.gmra.mrb[0].mxu0 %v7159
        %v7161 = vpop.f32.mrb[0].mxu0
        %v7162 = vadd.f32 %v7057, %v7161
        %v7163 = vpop.f32.mrb[0].mxu0
        %7164 = vmatprep.mubr.f32.mxu0 0.0
        %v7165 = vand.u32 %v1136, 4294901760
        %v7166 = vsub.f32 %v1136, %v7165
        %v7167 = vand.u32 %v7166, 4294901760
        %v7168 = vsub.f32 %v7166, %v7167
        %v7169 = vand.u32 %v7168, 4294901760
        %7170 = vmatmul.mubr.f32.gmra.mrb[0].mxu0 %v7169
        %v7171 = vpop.f32.mrb[0].mxu0
        %v7172 = vadd.f32 %v7063, %v7171
        %v7173 = vpop.f32.mrb[0].mxu0
        %7174 = vdwg.mxu0
        %7175 = vmatprep.subr.mxu0 0.0
        %v7176 = vand.u32 %v6472, 4294901760
        %v7177 = vsub.f32 %v6472, %v7176
        %v7178 = vand.u32 %v7177, 4294901760
        %v7179 = vsub.f32 %v7177, %v7178
        %v7180 = vand.u32 %v7179, 4294901760
        %7181 = vmatpush1.msra.mxu0 %v7180
        %7182 = vmatprep.subr.mxu0 0.0
        %v7183 = vand.u32 %v6473, 4294901760
        %v7184 = vsub.f32 %v6473, %v7183
        %v7185 = vand.u32 %v7184, 4294901760
        %v7186 = vsub.f32 %v7184, %v7185
        %v7187 = vand.u32 %v7186, 4294901760
        %7188 = vmatpush1.msra.mxu0 %v7187
        %7189 = vmatprep.subr.mxu0 0.0
        %v7190 = vand.u32 %v6474, 4294901760
        %v7191 = vsub.f32 %v6474, %v7190
        %v7192 = vand.u32 %v7191, 4294901760
        %v7193 = vsub.f32 %v7191, %v7192
        %v7194 = vand.u32 %v7193, 4294901760
        %7195 = vmatpush1.msra.mxu0 %v7194
        %7196 = vmatprep.subr.mxu0 0.0
        %v7197 = vand.u32 %v6475, 4294901760
        %v7198 = vsub.f32 %v6475, %v7197
        %v7199 = vand.u32 %v7198, 4294901760
        %v7200 = vsub.f32 %v7198, %v7199
        %v7201 = vand.u32 %v7200, 4294901760
        %7202 = vmatpush1.msra.mxu0 %v7201
        %7203 = vmatprep.subr.mxu0 0.0
        %7204 = vmatpush1.msra.mxu0 0.0
        %7205 = vmatprep.subr.mxu0 0.0
        %7206 = vmatpush1.msra.mxu0 0.0
        %7207 = vmatprep.subr.mxu0 0.0
        %7208 = vmatpush1.msra.mxu0 0.0
        %7209 = vmatprep.subr.mxu0 0.0
        %7210 = vmatpush1.msra.mxu0 0.0
        %7211 = vmatprep.subr.mxu0 0.0
        %7212 = vmatpush1.msra.mxu0 0.0
        %7213 = vmatprep.subr.mxu0 0.0
        %7214 = vmatpush1.msra.mxu0 0.0
        %7215 = vmatprep.subr.mxu0 0.0
        %7216 = vmatpush1.msra.mxu0 0.0
        %7217 = vmatprep.subr.mxu0 0.0
        %7218 = vmatpush1.msra.mxu0 0.0
        %7219 = vmatprep.subr.mxu0 0.0
        %7220 = vmatpush1.msra.mxu0 0.0
        %7221 = vmatprep.subr.mxu0 0.0
        %7222 = vmatpush1.msra.mxu0 0.0
        %7223 = vmatprep.subr.mxu0 0.0
        %7224 = vmatpush1.msra.mxu0 0.0
        %7225 = vmatprep.subr.mxu0 0.0
        %7226 = vmatpush1.msra.mxu0 0.0
        %7227 = vmatprep.subr.mxu0 0.0
        %7228 = vmatpush1.msra.mxu0 0.0
        %7229 = vmatprep.subr.mxu0 0.0
        %7230 = vmatpush1.msra.mxu0 0.0
        %7231 = vmatprep.subr.mxu0 0.0
        %7232 = vmatpush1.msra.mxu0 0.0
        %7233 = vmatprep.subr.mxu0 0.0
        %7234 = vmatpush1.msra.mxu0 0.0
        %7235 = vmatprep.subr.mxu0 0.0
        %7236 = vmatpush1.msra.mxu0 0.0
        %7237 = vmatprep.subr.mxu0 0.0
        %7238 = vmatpush1.msra.mxu0 0.0
        %7239 = vmatprep.subr.mxu0 0.0
        %7240 = vmatpush1.msra.mxu0 0.0
        %7241 = vmatprep.subr.mxu0 0.0
        %7242 = vmatpush1.msra.mxu0 0.0
        %7243 = vmatprep.subr.mxu0 0.0
        %7244 = vmatpush1.msra.mxu0 0.0
        %7245 = vmatprep.subr.mxu0 0.0
        %7246 = vmatpush1.msra.mxu0 0.0
        %7247 = vmatprep.subr.mxu0 0.0
        %7248 = vmatpush1.msra.mxu0 0.0
        %7249 = vmatprep.subr.mxu0 0.0
        %7250 = vmatpush1.msra.mxu0 0.0
        %7251 = vmatprep.subr.mxu0 0.0
        %7252 = vmatpush1.msra.mxu0 0.0
        %7253 = vmatprep.subr.mxu0 0.0
        %7254 = vmatpush1.msra.mxu0 0.0
        %7255 = vmatprep.subr.mxu0 0.0
        %7256 = vmatpush1.msra.mxu0 0.0
        %7257 = vmatprep.subr.mxu0 0.0
        %7258 = vmatpush1.msra.mxu0 0.0
        %7259 = vmatprep.mubr.f32.mxu0 0.0
        %v7260 = vand.u32 %v1127, 4294901760
        %7261 = vmatmul.mubr.f32.gmra.mrb[0].mxu0 %v7260
        %v7262 = vpop.f32.mrb[0].mxu0
        %v7263 = vadd.f32 %v7142, %v7262
        %v7264 = vpop.f32.mrb[0].mxu0
        %7265 = vmatprep.mubr.f32.mxu0 0.0
        %v7266 = vand.u32 %v1130, 4294901760
        %7267 = vmatmul.mubr.f32.gmra.mrb[0].mxu0 %v7266
        %v7268 = vpop.f32.mrb[0].mxu0
        %v7269 = vadd.f32 %v7152, %v7268
        %v7270 = vpop.f32.mrb[0].mxu0
        %7271 = vmatprep.mubr.f32.mxu0 0.0
        %v7272 = vand.u32 %v1133, 4294901760
        %7273 = vmatmul.mubr.f32.gmra.mrb[0].mxu0 %v7272
        %v7274 = vpop.f32.mrb[0].mxu0
        %v7275 = vadd.f32 %v7162, %v7274
        %v7276 = vpop.f32.mrb[0].mxu0
        %7277 = vmatprep.mubr.f32.mxu0 0.0
        %v7278 = vand.u32 %v1136, 4294901760
        %7279 = vmatmul.mubr.f32.gmra.mrb[0].mxu0 %v7278
        %v7280 = vpop.f32.mrb[0].mxu0
        %v7281 = vadd.f32 %v7172, %v7280
        %v7282 = vpop.f32.mrb[0].mxu0
        %7283 = vdwg.mxu0
        %7284 = vmatprep.subr.mxu0 0.0
        %v7285 = vand.u32 %v6472, 4294901760
        %v7286 = vsub.f32 %v6472, %v7285
        %7287 = vmatpush1.msra.mxu0 %v7286
        %7288 = vmatprep.subr.mxu0 0.0
        %v7289 = vand.u32 %v6473, 4294901760
        %v7290 = vsub.f32 %v6473, %v7289
        %7291 = vmatpush1.msra.mxu0 %v7290
        %7292 = vmatprep.subr.mxu0 0.0
        %v7293 = vand.u32 %v6474, 4294901760
        %v7294 = vsub.f32 %v6474, %v7293
        %7295 = vmatpush1.msra.mxu0 %v7294
        %7296 = vmatprep.subr.mxu0 0.0
        %v7297 = vand.u32 %v6475, 4294901760
        %v7298 = vsub.f32 %v6475, %v7297
        %7299 = vmatpush1.msra.mxu0 %v7298
        %7300 = vmatprep.subr.mxu0 0.0
        %7301 = vmatpush1.msra.mxu0 0.0
        %7302 = vmatprep.subr.mxu0 0.0
        %7303 = vmatpush1.msra.mxu0 0.0
        %7304 = vmatprep.subr.mxu0 0.0
        %7305 = vmatpush1.msra.mxu0 0.0
        %7306 = vmatprep.subr.mxu0 0.0
        %7307 = vmatpush1.msra.mxu0 0.0
        %7308 = vmatprep.subr.mxu0 0.0
        %7309 = vmatpush1.msra.mxu0 0.0
        %7310 = vmatprep.subr.mxu0 0.0
        %7311 = vmatpush1.msra.mxu0 0.0
        %7312 = vmatprep.subr.mxu0 0.0
        %7313 = vmatpush1.msra.mxu0 0.0
        %7314 = vmatprep.subr.mxu0 0.0
        %7315 = vmatpush1.msra.mxu0 0.0
        %7316 = vmatprep.subr.mxu0 0.0
        %7317 = vmatpush1.msra.mxu0 0.0
        %7318 = vmatprep.subr.mxu0 0.0
        %7319 = vmatpush1.msra.mxu0 0.0
        %7320 = vmatprep.subr.mxu0 0.0
        %7321 = vmatpush1.msra.mxu0 0.0
        %7322 = vmatprep.subr.mxu0 0.0
        %7323 = vmatpush1.msra.mxu0 0.0
        %7324 = vmatprep.subr.mxu0 0.0
        %7325 = vmatpush1.msra.mxu0 0.0
        %7326 = vmatprep.subr.mxu0 0.0
        %7327 = vmatpush1.msra.mxu0 0.0
        %7328 = vmatprep.subr.mxu0 0.0
        %7329 = vmatpush1.msra.mxu0 0.0
        %7330 = vmatprep.subr.mxu0 0.0
        %7331 = vmatpush1.msra.mxu0 0.0
        %7332 = vmatprep.subr.mxu0 0.0
        %7333 = vmatpush1.msra.mxu0 0.0
        %7334 = vmatprep.subr.mxu0 0.0
        %7335 = vmatpush1.msra.mxu0 0.0
        %7336 = vmatprep.subr.mxu0 0.0
        %7337 = vmatpush1.msra.mxu0 0.0
        %7338 = vmatprep.subr.mxu0 0.0
        %7339 = vmatpush1.msra.mxu0 0.0
        %7340 = vmatprep.subr.mxu0 0.0
        %7341 = vmatpush1.msra.mxu0 0.0
        %7342 = vmatprep.subr.mxu0 0.0
        %7343 = vmatpush1.msra.mxu0 0.0
        %7344 = vmatprep.subr.mxu0 0.0
        %7345 = vmatpush1.msra.mxu0 0.0
        %7346 = vmatprep.subr.mxu0 0.0
        %7347 = vmatpush1.msra.mxu0 0.0
        %7348 = vmatprep.subr.mxu0 0.0
        %7349 = vmatpush1.msra.mxu0 0.0
        %7350 = vmatprep.subr.mxu0 0.0
        %7351 = vmatpush1.msra.mxu0 0.0
        %7352 = vmatprep.subr.mxu0 0.0
        %7353 = vmatpush1.msra.mxu0 0.0
        %7354 = vmatprep.subr.mxu0 0.0
        %7355 = vmatpush1.msra.mxu0 0.0
        %7356 = vmatprep.mubr.f32.mxu0 0.0
        %v7357 = vand.u32 %v1127, 4294901760
        %v7358 = vsub.f32 %v1127, %v7357
        %7359 = vmatmul.mubr.f32.gmra.mrb[0].mxu0 %v7358
        %v7360 = vpop.f32.mrb[0].mxu0
        %v7361 = vadd.f32 %v7263, %v7360
        %v7362 = vpop.f32.mrb[0].mxu0
        %7363 = vmatprep.mubr.f32.mxu0 0.0
        %v7364 = vand.u32 %v1130, 4294901760
        %v7365 = vsub.f32 %v1130, %v7364
        %7366 = vmatmul.mubr.f32.gmra.mrb[0].mxu0 %v7365
        %v7367 = vpop.f32.mrb[0].mxu0
        %v7368 = vadd.f32 %v7269, %v7367
        %v7369 = vpop.f32.mrb[0].mxu0
        %7370 = vmatprep.mubr.f32.mxu0 0.0
        %v7371 = vand.u32 %v1133, 4294901760
        %v7372 = vsub.f32 %v1133, %v7371
        %7373 = vmatmul.mubr.f32.gmra.mrb[0].mxu0 %v7372
        %v7374 = vpop.f32.mrb[0].mxu0
        %v7375 = vadd.f32 %v7275, %v7374
        %v7376 = vpop.f32.mrb[0].mxu0
        %7377 = vmatprep.mubr.f32.mxu0 0.0
        %v7378 = vand.u32 %v1136, 4294901760
        %v7379 = vsub.f32 %v1136, %v7378
        %7380 = vmatmul.mubr.f32.gmra.mrb[0].mxu0 %v7379
        %v7381 = vpop.f32.mrb[0].mxu0
        %v7382 = vadd.f32 %v7281, %v7381
        %v7383 = vpop.f32.mrb[0].mxu0
        %7384 = vdwg.mxu0
        %7385 = vmatprep.subr.mxu0 0.0
        %v7386 = vand.u32 %v6472, 4294901760
        %7387 = vmatpush1.msra.mxu0 %v7386
        %7388 = vmatprep.subr.mxu0 0.0
        %v7389 = vand.u32 %v6473, 4294901760
        %7390 = vmatpush1.msra.mxu0 %v7389
        %7391 = vmatprep.subr.mxu0 0.0
        %v7392 = vand.u32 %v6474, 4294901760
        %7393 = vmatpush1.msra.mxu0 %v7392
        %7394 = vmatprep.subr.mxu0 0.0
        %v7395 = vand.u32 %v6475, 4294901760
        %7396 = vmatpush1.msra.mxu0 %v7395
        %7397 = vmatprep.subr.mxu0 0.0
        %7398 = vmatpush1.msra.mxu0 0.0
        %7399 = vmatprep.subr.mxu0 0.0
        %7400 = vmatpush1.msra.mxu0 0.0
        %7401 = vmatprep.subr.mxu0 0.0
        %7402 = vmatpush1.msra.mxu0 0.0
        %7403 = vmatprep.subr.mxu0 0.0
        %7404 = vmatpush1.msra.mxu0 0.0
        %7405 = vmatprep.subr.mxu0 0.0
        %7406 = vmatpush1.msra.mxu0 0.0
        %7407 = vmatprep.subr.mxu0 0.0
        %7408 = vmatpush1.msra.mxu0 0.0
        %7409 = vmatprep.subr.mxu0 0.0
        %7410 = vmatpush1.msra.mxu0 0.0
        %7411 = vmatprep.subr.mxu0 0.0
        %7412 = vmatpush1.msra.mxu0 0.0
        %7413 = vmatprep.subr.mxu0 0.0
        %7414 = vmatpush1.msra.mxu0 0.0
        %7415 = vmatprep.subr.mxu0 0.0
        %7416 = vmatpush1.msra.mxu0 0.0
        %7417 = vmatprep.subr.mxu0 0.0
        %7418 = vmatpush1.msra.mxu0 0.0
        %7419 = vmatprep.subr.mxu0 0.0
        %7420 = vmatpush1.msra.mxu0 0.0
        %7421 = vmatprep.subr.mxu0 0.0
        %7422 = vmatpush1.msra.mxu0 0.0
        %7423 = vmatprep.subr.mxu0 0.0
        %7424 = vmatpush1.msra.mxu0 0.0
        %7425 = vmatprep.subr.mxu0 0.0
        %7426 = vmatpush1.msra.mxu0 0.0
        %7427 = vmatprep.subr.mxu0 0.0
        %7428 = vmatpush1.msra.mxu0 0.0
        %7429 = vmatprep.subr.mxu0 0.0
        %7430 = vmatpush1.msra.mxu0 0.0
        %7431 = vmatprep.subr.mxu0 0.0
        %7432 = vmatpush1.msra.mxu0 0.0
        %7433 = vmatprep.subr.mxu0 0.0
        %7434 = vmatpush1.msra.mxu0 0.0
        %7435 = vmatprep.subr.mxu0 0.0
        %7436 = vmatpush1.msra.mxu0 0.0
        %7437 = vmatprep.subr.mxu0 0.0
        %7438 = vmatpush1.msra.mxu0 0.0
        %7439 = vmatprep.subr.mxu0 0.0
        %7440 = vmatpush1.msra.mxu0 0.0
        %7441 = vmatprep.subr.mxu0 0.0
        %7442 = vmatpush1.msra.mxu0 0.0
        %7443 = vmatprep.subr.mxu0 0.0
        %7444 = vmatpush1.msra.mxu0 0.0
        %7445 = vmatprep.subr.mxu0 0.0
        %7446 = vmatpush1.msra.mxu0 0.0
        %7447 = vmatprep.subr.mxu0 0.0
        %7448 = vmatpush1.msra.mxu0 0.0
        %7449 = vmatprep.subr.mxu0 0.0
        %7450 = vmatpush1.msra.mxu0 0.0
        %7451 = vmatprep.subr.mxu0 0.0
        %7452 = vmatpush1.msra.mxu0 0.0
        %7453 = vmatprep.mubr.f32.mxu0 0.0
        %v7454 = vand.u32 %v1127, 4294901760
        %v7455 = vsub.f32 %v1127, %v7454
        %v7456 = vand.u32 %v7455, 4294901760
        %7457 = vmatmul.mubr.f32.gmra.mrb[0].mxu0 %v7456
        %v7458 = vpop.f32.mrb[0].mxu0
        %v7459 = vadd.f32 %v7361, %v7458
        %v7460 = vpop.f32.mrb[0].mxu0
        %7461 = vmatprep.mubr.f32.mxu0 0.0
        %v7462 = vand.u32 %v1130, 4294901760
        %v7463 = vsub.f32 %v1130, %v7462
        %v7464 = vand.u32 %v7463, 4294901760
        %7465 = vmatmul.mubr.f32.gmra.mrb[0].mxu0 %v7464
        %v7466 = vpop.f32.mrb[0].mxu0
        %v7467 = vadd.f32 %v7368, %v7466
        %v7468 = vpop.f32.mrb[0].mxu0
        %7469 = vmatprep.mubr.f32.mxu0 0.0
        %v7470 = vand.u32 %v1133, 4294901760
        %v7471 = vsub.f32 %v1133, %v7470
        %v7472 = vand.u32 %v7471, 4294901760
        %7473 = vmatmul.mubr.f32.gmra.mrb[0].mxu0 %v7472
        %v7474 = vpop.f32.mrb[0].mxu0
        %v7475 = vadd.f32 %v7375, %v7474
        %v7476 = vpop.f32.mrb[0].mxu0
        %7477 = vmatprep.mubr.f32.mxu0 0.0
        %v7478 = vand.u32 %v1136, 4294901760
        %v7479 = vsub.f32 %v1136, %v7478
        %v7480 = vand.u32 %v7479, 4294901760
        %7481 = vmatmul.mubr.f32.gmra.mrb[0].mxu0 %v7480
        %v7482 = vpop.f32.mrb[0].mxu0
        %v7483 = vadd.f32 %v7382, %v7482
        %v7484 = vpop.f32.mrb[0].mxu0
        %7485 = vdwg.mxu0
        %7486 = vmatprep.subr.mxu0 0.0
        %v7487 = vand.u32 %v6472, 4294901760
        %v7488 = vsub.f32 %v6472, %v7487
        %v7489 = vand.u32 %v7488, 4294901760
        %7490 = vmatpush1.msra.mxu0 %v7489
        %7491 = vmatprep.subr.mxu0 0.0
        %v7492 = vand.u32 %v6473, 4294901760
        %v7493 = vsub.f32 %v6473, %v7492
        %v7494 = vand.u32 %v7493, 4294901760
        %7495 = vmatpush1.msra.mxu0 %v7494
        %7496 = vmatprep.subr.mxu0 0.0
        %v7497 = vand.u32 %v6474, 4294901760
        %v7498 = vsub.f32 %v6474, %v7497
        %v7499 = vand.u32 %v7498, 4294901760
        %7500 = vmatpush1.msra.mxu0 %v7499
        %7501 = vmatprep.subr.mxu0 0.0
        %v7502 = vand.u32 %v6475, 4294901760
        %v7503 = vsub.f32 %v6475, %v7502
        %v7504 = vand.u32 %v7503, 4294901760
        %7505 = vmatpush1.msra.mxu0 %v7504
        %7506 = vmatprep.subr.mxu0 0.0
        %7507 = vmatpush1.msra.mxu0 0.0
        %7508 = vmatprep.subr.mxu0 0.0
        %7509 = vmatpush1.msra.mxu0 0.0
        %7510 = vmatprep.subr.mxu0 0.0
        %7511 = vmatpush1.msra.mxu0 0.0
        %7512 = vmatprep.subr.mxu0 0.0
        %7513 = vmatpush1.msra.mxu0 0.0
        %7514 = vmatprep.subr.mxu0 0.0
        %7515 = vmatpush1.msra.mxu0 0.0
        %7516 = vmatprep.subr.mxu0 0.0
        %7517 = vmatpush1.msra.mxu0 0.0
        %7518 = vmatprep.subr.mxu0 0.0
        %7519 = vmatpush1.msra.mxu0 0.0
        %7520 = vmatprep.subr.mxu0 0.0
        %7521 = vmatpush1.msra.mxu0 0.0
        %7522 = vmatprep.subr.mxu0 0.0
        %7523 = vmatpush1.msra.mxu0 0.0
        %7524 = vmatprep.subr.mxu0 0.0
        %7525 = vmatpush1.msra.mxu0 0.0
        %7526 = vmatprep.subr.mxu0 0.0
        %7527 = vmatpush1.msra.mxu0 0.0
        %7528 = vmatprep.subr.mxu0 0.0
        %7529 = vmatpush1.msra.mxu0 0.0
        %7530 = vmatprep.subr.mxu0 0.0
        %7531 = vmatpush1.msra.mxu0 0.0
        %7532 = vmatprep.subr.mxu0 0.0
        %7533 = vmatpush1.msra.mxu0 0.0
        %7534 = vmatprep.subr.mxu0 0.0
        %7535 = vmatpush1.msra.mxu0 0.0
        %7536 = vmatprep.subr.mxu0 0.0
        %7537 = vmatpush1.msra.mxu0 0.0
        %7538 = vmatprep.subr.mxu0 0.0
        %7539 = vmatpush1.msra.mxu0 0.0
        %7540 = vmatprep.subr.mxu0 0.0
        %7541 = vmatpush1.msra.mxu0 0.0
        %7542 = vmatprep.subr.mxu0 0.0
        %7543 = vmatpush1.msra.mxu0 0.0
        %7544 = vmatprep.subr.mxu0 0.0
        %7545 = vmatpush1.msra.mxu0 0.0
        %7546 = vmatprep.subr.mxu0 0.0
        %7547 = vmatpush1.msra.mxu0 0.0
        %7548 = vmatprep.subr.mxu0 0.0
        %7549 = vmatpush1.msra.mxu0 0.0
        %7550 = vmatprep.subr.mxu0 0.0
        %7551 = vmatpush1.msra.mxu0 0.0
        %7552 = vmatprep.subr.mxu0 0.0
        %7553 = vmatpush1.msra.mxu0 0.0
        %7554 = vmatprep.subr.mxu0 0.0
        %7555 = vmatpush1.msra.mxu0 0.0
        %7556 = vmatprep.subr.mxu0 0.0
        %7557 = vmatpush1.msra.mxu0 0.0
        %7558 = vmatprep.subr.mxu0 0.0
        %7559 = vmatpush1.msra.mxu0 0.0
        %7560 = vmatprep.subr.mxu0 0.0
        %7561 = vmatpush1.msra.mxu0 0.0
        %7562 = vmatprep.mubr.f32.mxu0 0.0
        %v7563 = vand.u32 %v1127, 4294901760
        %7564 = vmatmul.mubr.f32.gmra.mrb[0].mxu0 %v7563
        %v7565 = vpop.f32.mrb[0].mxu0
        %v7566 = vadd.f32 %v7459, %v7565
        %v7567 = vpop.f32.mrb[0].mxu0
        %7568 = vmatprep.mubr.f32.mxu0 0.0
        %v7569 = vand.u32 %v1130, 4294901760
        %7570 = vmatmul.mubr.f32.gmra.mrb[0].mxu0 %v7569
        %v7571 = vpop.f32.mrb[0].mxu0
        %v7572 = vadd.f32 %v7467, %v7571
        %v7573 = vpop.f32.mrb[0].mxu0
        %7574 = vmatprep.mubr.f32.mxu0 0.0
        %v7575 = vand.u32 %v1133, 4294901760
        %7576 = vmatmul.mubr.f32.gmra.mrb[0].mxu0 %v7575
        %v7577 = vpop.f32.mrb[0].mxu0
        %v7578 = vadd.f32 %v7475, %v7577
        %v7579 = vpop.f32.mrb[0].mxu0
        %7580 = vmatprep.mubr.f32.mxu0 0.0
        %v7581 = vand.u32 %v1136, 4294901760
        %7582 = vmatmul.mubr.f32.gmra.mrb[0].mxu0 %v7581
        %v7583 = vpop.f32.mrb[0].mxu0
        %v7584 = vadd.f32 %v7483, %v7583
        %v7585 = vpop.f32.mrb[0].mxu0
        %7586 = vdwg.mxu0
        %7587 = vmatprep.subr.mxu0 0.0
        %v7588 = vand.u32 %v6472, 4294901760
        %7589 = vmatpush1.msra.mxu0 %v7588
        %7590 = vmatprep.subr.mxu0 0.0
        %v7591 = vand.u32 %v6473, 4294901760
        %7592 = vmatpush1.msra.mxu0 %v7591
        %7593 = vmatprep.subr.mxu0 0.0
        %v7594 = vand.u32 %v6474, 4294901760
        %7595 = vmatpush1.msra.mxu0 %v7594
        %7596 = vmatprep.subr.mxu0 0.0
        %v7597 = vand.u32 %v6475, 4294901760
        %7598 = vmatpush1.msra.mxu0 %v7597
        %7599 = vmatprep.subr.mxu0 0.0
        %7600 = vmatpush1.msra.mxu0 0.0
        %7601 = vmatprep.subr.mxu0 0.0
        %7602 = vmatpush1.msra.mxu0 0.0
        %7603 = vmatprep.subr.mxu0 0.0
        %7604 = vmatpush1.msra.mxu0 0.0
        %7605 = vmatprep.subr.mxu0 0.0
        %7606 = vmatpush1.msra.mxu0 0.0
        %7607 = vmatprep.subr.mxu0 0.0
        %7608 = vmatpush1.msra.mxu0 0.0
        %7609 = vmatprep.subr.mxu0 0.0
        %7610 = vmatpush1.msra.mxu0 0.0
        %7611 = vmatprep.subr.mxu0 0.0
        %7612 = vmatpush1.msra.mxu0 0.0
        %7613 = vmatprep.subr.mxu0 0.0
        %7614 = vmatpush1.msra.mxu0 0.0
        %7615 = vmatprep.subr.mxu0 0.0
        %7616 = vmatpush1.msra.mxu0 0.0
        %7617 = vmatprep.subr.mxu0 0.0
        %7618 = vmatpush1.msra.mxu0 0.0
        %7619 = vmatprep.subr.mxu0 0.0
        %7620 = vmatpush1.msra.mxu0 0.0
        %7621 = vmatprep.subr.mxu0 0.0
        %7622 = vmatpush1.msra.mxu0 0.0
        %7623 = vmatprep.subr.mxu0 0.0
        %7624 = vmatpush1.msra.mxu0 0.0
        %7625 = vmatprep.subr.mxu0 0.0
        %7626 = vmatpush1.msra.mxu0 0.0
        %7627 = vmatprep.subr.mxu0 0.0
        %7628 = vmatpush1.msra.mxu0 0.0
        %7629 = vmatprep.subr.mxu0 0.0
        %7630 = vmatpush1.msra.mxu0 0.0
        %7631 = vmatprep.subr.mxu0 0.0
        %7632 = vmatpush1.msra.mxu0 0.0
        %7633 = vmatprep.subr.mxu0 0.0
        %7634 = vmatpush1.msra.mxu0 0.0
        %7635 = vmatprep.subr.mxu0 0.0
        %7636 = vmatpush1.msra.mxu0 0.0
        %7637 = vmatprep.subr.mxu0 0.0
        %7638 = vmatpush1.msra.mxu0 0.0
        %7639 = vmatprep.subr.mxu0 0.0
        %7640 = vmatpush1.msra.mxu0 0.0
        %7641 = vmatprep.subr.mxu0 0.0
        %7642 = vmatpush1.msra.mxu0 0.0
        %7643 = vmatprep.subr.mxu0 0.0
        %7644 = vmatpush1.msra.mxu0 0.0
        %7645 = vmatprep.subr.mxu0 0.0
        %7646 = vmatpush1.msra.mxu0 0.0
        %7647 = vmatprep.subr.mxu0 0.0
        %7648 = vmatpush1.msra.mxu0 0.0
        %7649 = vmatprep.subr.mxu0 0.0
        %7650 = vmatpush1.msra.mxu0 0.0
        %7651 = vmatprep.subr.mxu0 0.0
        %7652 = vmatpush1.msra.mxu0 0.0
        %7653 = vmatprep.subr.mxu0 0.0
        %7654 = vmatpush1.msra.mxu0 0.0
        %7655 = vmatprep.mubr.f32.mxu0 0.0
        %v7656 = vand.u32 %v1127, 4294901760
        %7657 = vmatmul.mubr.f32.gmra.mrb[0].mxu0 %v7656
        %v7658 = vpop.f32.mrb[0].mxu0
        %v7659 = vadd.f32 %v7566, %v7658
        %v7660 = vpop.f32.mrb[0].mxu0
        %7661 = vmatprep.mubr.f32.mxu0 0.0
        %v7662 = vand.u32 %v1130, 4294901760
        %7663 = vmatmul.mubr.f32.gmra.mrb[0].mxu0 %v7662
        %v7664 = vpop.f32.mrb[0].mxu0
        %v7665 = vadd.f32 %v7572, %v7664
        %v7666 = vpop.f32.mrb[0].mxu0
        %7667 = vmatprep.mubr.f32.mxu0 0.0
        %v7668 = vand.u32 %v1133, 4294901760
        %7669 = vmatmul.mubr.f32.gmra.mrb[0].mxu0 %v7668
        %v7670 = vpop.f32.mrb[0].mxu0
        %v7671 = vadd.f32 %v7578, %v7670
        %v7672 = vpop.f32.mrb[0].mxu0
        %7673 = vmatprep.mubr.f32.mxu0 0.0
        %v7674 = vand.u32 %v1136, 4294901760
        %7675 = vmatmul.mubr.f32.gmra.mrb[0].mxu0 %v7674
        %v7676 = vpop.f32.mrb[0].mxu0
        %v7677 = vadd.f32 %v7584, %v7676
        %v7678 = vpop.f32.mrb[0].mxu0
        %7679 = vdwg.mxu0
        %7680 = vmatprep.subr.mxu0 0.0
        %v7681 = vand.u32 %v508, 4294901760
        %7682 = vmatpush1.msra.mxu0 %v7681
        %7683 = vmatprep.subr.mxu0 0.0
        %v7684 = vand.u32 %v509, 4294901760
        %7685 = vmatpush1.msra.mxu0 %v7684
        %7686 = vmatprep.subr.mxu0 0.0
        %v7687 = vand.u32 %v510, 4294901760
        %7688 = vmatpush1.msra.mxu0 %v7687
        %7689 = vmatprep.subr.mxu0 0.0
        %v7690 = vand.u32 %v511, 4294901760
        %7691 = vmatpush1.msra.mxu0 %v7690
        %7692 = vmatprep.subr.mxu0 0.0
        %v7693 = vand.u32 %v512, 4294901760
        %7694 = vmatpush1.msra.mxu0 %v7693
        %7695 = vmatprep.subr.mxu0 0.0
        %v7696 = vand.u32 %v513, 4294901760
        %7697 = vmatpush1.msra.mxu0 %v7696
        %7698 = vmatprep.subr.mxu0 0.0
        %v7699 = vand.u32 %v514, 4294901760
        %7700 = vmatpush1.msra.mxu0 %v7699
        %7701 = vmatprep.subr.mxu0 0.0
        %v7702 = vand.u32 %v515, 4294901760
        %7703 = vmatpush1.msra.mxu0 %v7702
        %7704 = vmatprep.subr.mxu0 0.0
        %v7705 = vand.u32 %v516, 4294901760
        %7706 = vmatpush1.msra.mxu0 %v7705
        %7707 = vmatprep.subr.mxu0 0.0
        %v7708 = vand.u32 %v517, 4294901760
        %7709 = vmatpush1.msra.mxu0 %v7708
        %7710 = vmatprep.subr.mxu0 0.0
        %v7711 = vand.u32 %v518, 4294901760
        %7712 = vmatpush1.msra.mxu0 %v7711
        %7713 = vmatprep.subr.mxu0 0.0
        %v7714 = vand.u32 %v519, 4294901760
        %7715 = vmatpush1.msra.mxu0 %v7714
        %7716 = vmatprep.subr.mxu0 0.0
        %v7717 = vand.u32 %v520, 4294901760
        %7718 = vmatpush1.msra.mxu0 %v7717
        %7719 = vmatprep.subr.mxu0 0.0
        %v7720 = vand.u32 %v521, 4294901760
        %7721 = vmatpush1.msra.mxu0 %v7720
        %7722 = vmatprep.subr.mxu0 0.0
        %v7723 = vand.u32 %v522, 4294901760
        %7724 = vmatpush1.msra.mxu0 %v7723
        %7725 = vmatprep.subr.mxu0 0.0
        %v7726 = vand.u32 %v523, 4294901760
        %7727 = vmatpush1.msra.mxu0 %v7726
        %7728 = vmatprep.subr.mxu0 0.0
        %7729 = vmatpush1.msra.mxu0 0.0
        %7730 = vmatprep.subr.mxu0 0.0
        %7731 = vmatpush1.msra.mxu0 0.0
        %7732 = vmatprep.subr.mxu0 0.0
        %7733 = vmatpush1.msra.mxu0 0.0
        %7734 = vmatprep.subr.mxu0 0.0
        %7735 = vmatpush1.msra.mxu0 0.0
        %7736 = vmatprep.subr.mxu0 0.0
        %7737 = vmatpush1.msra.mxu0 0.0
        %7738 = vmatprep.subr.mxu0 0.0
        %7739 = vmatpush1.msra.mxu0 0.0
        %7740 = vmatprep.subr.mxu0 0.0
        %7741 = vmatpush1.msra.mxu0 0.0
        %7742 = vmatprep.subr.mxu0 0.0
        %7743 = vmatpush1.msra.mxu0 0.0
        %7744 = vmatprep.subr.mxu0 0.0
        %7745 = vmatpush1.msra.mxu0 0.0
        %7746 = vmatprep.subr.mxu0 0.0
        %7747 = vmatpush1.msra.mxu0 0.0
        %7748 = vmatprep.subr.mxu0 0.0
        %7749 = vmatpush1.msra.mxu0 0.0
        %7750 = vmatprep.subr.mxu0 0.0
        %7751 = vmatpush1.msra.mxu0 0.0
        %7752 = vmatprep.subr.mxu0 0.0
        %7753 = vmatpush1.msra.mxu0 0.0
        %7754 = vmatprep.subr.mxu0 0.0
        %7755 = vmatpush1.msra.mxu0 0.0
        %7756 = vmatprep.subr.mxu0 0.0
        %7757 = vmatpush1.msra.mxu0 0.0
        %7758 = vmatprep.subr.mxu0 0.0
        %7759 = vmatpush1.msra.mxu0 0.0
        %7760 = vmatprep.mubr.f32.mxu0 0.0
        %v7761 = vand.u32 %v7659, 4294901760
        %v7762 = vsub.f32 %v7659, %v7761
        %v7763 = vand.u32 %v7762, 4294901760
        %v7764 = vsub.f32 %v7762, %v7763
        %v7765 = vand.u32 %v7764, 4294901760
        %7766 = vmatmul.mubr.f32.gmra.mrb[0].mxu0 %v7765
        %v7767 = vpop.f32.mrb[0].mxu0
        %v7768 = vadd.f32 0.0, %v7767
        %v7769 = vpop.f32.mrb[0].mxu0
        %7770 = vmatprep.mubr.f32.mxu0 0.0
        %v7771 = vand.u32 %v7665, 4294901760
        %v7772 = vsub.f32 %v7665, %v7771
        %v7773 = vand.u32 %v7772, 4294901760
        %v7774 = vsub.f32 %v7772, %v7773
        %v7775 = vand.u32 %v7774, 4294901760
        %7776 = vmatmul.mubr.f32.gmra.mrb[0].mxu0 %v7775
        %v7777 = vpop.f32.mrb[0].mxu0
        %v7778 = vadd.f32 0.0, %v7777
        %v7779 = vpop.f32.mrb[0].mxu0
        %7780 = vmatprep.mubr.f32.mxu0 0.0
        %v7781 = vand.u32 %v7671, 4294901760
        %v7782 = vsub.f32 %v7671, %v7781
        %v7783 = vand.u32 %v7782, 4294901760
        %v7784 = vsub.f32 %v7782, %v7783
        %v7785 = vand.u32 %v7784, 4294901760
        %7786 = vmatmul.mubr.f32.gmra.mrb[0].mxu0 %v7785
        %v7787 = vpop.f32.mrb[0].mxu0
        %v7788 = vadd.f32 0.0, %v7787
        %v7789 = vpop.f32.mrb[0].mxu0
        %7790 = vmatprep.mubr.f32.mxu0 0.0
        %v7791 = vand.u32 %v7677, 4294901760
        %v7792 = vsub.f32 %v7677, %v7791
        %v7793 = vand.u32 %v7792, 4294901760
        %v7794 = vsub.f32 %v7792, %v7793
        %v7795 = vand.u32 %v7794, 4294901760
        %7796 = vmatmul.mubr.f32.gmra.mrb[0].mxu0 %v7795
        %v7797 = vpop.f32.mrb[0].mxu0
        %v7798 = vadd.f32 0.0, %v7797
        %v7799 = vpop.f32.mrb[0].mxu0
        %7800 = vdwg.mxu0
        %7801 = vmatprep.subr.mxu0 0.0
        %v7802 = vand.u32 %v508, 4294901760
        %v7803 = vsub.f32 %v508, %v7802
        %v7804 = vand.u32 %v7803, 4294901760
        %v7805 = vsub.f32 %v7803, %v7804
        %v7806 = vand.u32 %v7805, 4294901760
        %7807 = vmatpush1.msra.mxu0 %v7806
        %7808 = vmatprep.subr.mxu0 0.0
        %v7809 = vand.u32 %v509, 4294901760
        %v7810 = vsub.f32 %v509, %v7809
        %v7811 = vand.u32 %v7810, 4294901760
        %v7812 = vsub.f32 %v7810, %v7811
        %v7813 = vand.u32 %v7812, 4294901760
        %7814 = vmatpush1.msra.mxu0 %v7813
        %7815 = vmatprep.subr.mxu0 0.0
        %v7816 = vand.u32 %v510, 4294901760
        %v7817 = vsub.f32 %v510, %v7816
        %v7818 = vand.u32 %v7817, 4294901760
        %v7819 = vsub.f32 %v7817, %v7818
        %v7820 = vand.u32 %v7819, 4294901760
        %7821 = vmatpush1.msra.mxu0 %v7820
        %7822 = vmatprep.subr.mxu0 0.0
        %v7823 = vand.u32 %v511, 4294901760
        %v7824 = vsub.f32 %v511, %v7823
        %v7825 = vand.u32 %v7824, 4294901760
        %v7826 = vsub.f32 %v7824, %v7825
        %v7827 = vand.u32 %v7826, 4294901760
        %7828 = vmatpush1.msra.mxu0 %v7827
        %7829 = vmatprep.subr.mxu0 0.0
        %v7830 = vand.u32 %v512, 4294901760
        %v7831 = vsub.f32 %v512, %v7830
        %v7832 = vand.u32 %v7831, 4294901760
        %v7833 = vsub.f32 %v7831, %v7832
        %v7834 = vand.u32 %v7833, 4294901760
        %7835 = vmatpush1.msra.mxu0 %v7834
        %7836 = vmatprep.subr.mxu0 0.0
        %v7837 = vand.u32 %v513, 4294901760
        %v7838 = vsub.f32 %v513, %v7837
        %v7839 = vand.u32 %v7838, 4294901760
        %v7840 = vsub.f32 %v7838, %v7839
        %v7841 = vand.u32 %v7840, 4294901760
        %7842 = vmatpush1.msra.mxu0 %v7841
        %7843 = vmatprep.subr.mxu0 0.0
        %v7844 = vand.u32 %v514, 4294901760
        %v7845 = vsub.f32 %v514, %v7844
        %v7846 = vand.u32 %v7845, 4294901760
        %v7847 = vsub.f32 %v7845, %v7846
        %v7848 = vand.u32 %v7847, 4294901760
        %7849 = vmatpush1.msra.mxu0 %v7848
        %7850 = vmatprep.subr.mxu0 0.0
        %v7851 = vand.u32 %v515, 4294901760
        %v7852 = vsub.f32 %v515, %v7851
        %v7853 = vand.u32 %v7852, 4294901760
        %v7854 = vsub.f32 %v7852, %v7853
        %v7855 = vand.u32 %v7854, 4294901760
        %7856 = vmatpush1.msra.mxu0 %v7855
        %7857 = vmatprep.subr.mxu0 0.0
        %v7858 = vand.u32 %v516, 4294901760
        %v7859 = vsub.f32 %v516, %v7858
        %v7860 = vand.u32 %v7859, 4294901760
        %v7861 = vsub.f32 %v7859, %v7860
        %v7862 = vand.u32 %v7861, 4294901760
        %7863 = vmatpush1.msra.mxu0 %v7862
        %7864 = vmatprep.subr.mxu0 0.0
        %v7865 = vand.u32 %v517, 4294901760
        %v7866 = vsub.f32 %v517, %v7865
        %v7867 = vand.u32 %v7866, 4294901760
        %v7868 = vsub.f32 %v7866, %v7867
        %v7869 = vand.u32 %v7868, 4294901760
        %7870 = vmatpush1.msra.mxu0 %v7869
        %7871 = vmatprep.subr.mxu0 0.0
        %v7872 = vand.u32 %v518, 4294901760
        %v7873 = vsub.f32 %v518, %v7872
        %v7874 = vand.u32 %v7873, 4294901760
        %v7875 = vsub.f32 %v7873, %v7874
        %v7876 = vand.u32 %v7875, 4294901760
        %7877 = vmatpush1.msra.mxu0 %v7876
        %7878 = vmatprep.subr.mxu0 0.0
        %v7879 = vand.u32 %v519, 4294901760
        %v7880 = vsub.f32 %v519, %v7879
        %v7881 = vand.u32 %v7880, 4294901760
        %v7882 = vsub.f32 %v7880, %v7881
        %v7883 = vand.u32 %v7882, 4294901760
        %7884 = vmatpush1.msra.mxu0 %v7883
        %7885 = vmatprep.subr.mxu0 0.0
        %v7886 = vand.u32 %v520, 4294901760
        %v7887 = vsub.f32 %v520, %v7886
        %v7888 = vand.u32 %v7887, 4294901760
        %v7889 = vsub.f32 %v7887, %v7888
        %v7890 = vand.u32 %v7889, 4294901760
        %7891 = vmatpush1.msra.mxu0 %v7890
        %7892 = vmatprep.subr.mxu0 0.0
        %v7893 = vand.u32 %v521, 4294901760
        %v7894 = vsub.f32 %v521, %v7893
        %v7895 = vand.u32 %v7894, 4294901760
        %v7896 = vsub.f32 %v7894, %v7895
        %v7897 = vand.u32 %v7896, 4294901760
        %7898 = vmatpush1.msra.mxu0 %v7897
        %7899 = vmatprep.subr.mxu0 0.0
        %v7900 = vand.u32 %v522, 4294901760
        %v7901 = vsub.f32 %v522, %v7900
        %v7902 = vand.u32 %v7901, 4294901760
        %v7903 = vsub.f32 %v7901, %v7902
        %v7904 = vand.u32 %v7903, 4294901760
        %7905 = vmatpush1.msra.mxu0 %v7904
        %7906 = vmatprep.subr.mxu0 0.0
        %v7907 = vand.u32 %v523, 4294901760
        %v7908 = vsub.f32 %v523, %v7907
        %v7909 = vand.u32 %v7908, 4294901760
        %v7910 = vsub.f32 %v7908, %v7909
        %v7911 = vand.u32 %v7910, 4294901760
        %7912 = vmatpush1.msra.mxu0 %v7911
        %7913 = vmatprep.subr.mxu0 0.0
        %7914 = vmatpush1.msra.mxu0 0.0
        %7915 = vmatprep.subr.mxu0 0.0
        %7916 = vmatpush1.msra.mxu0 0.0
        %7917 = vmatprep.subr.mxu0 0.0
        %7918 = vmatpush1.msra.mxu0 0.0
        %7919 = vmatprep.subr.mxu0 0.0
        %7920 = vmatpush1.msra.mxu0 0.0
        %7921 = vmatprep.subr.mxu0 0.0
        %7922 = vmatpush1.msra.mxu0 0.0
        %7923 = vmatprep.subr.mxu0 0.0
        %7924 = vmatpush1.msra.mxu0 0.0
        %7925 = vmatprep.subr.mxu0 0.0
        %7926 = vmatpush1.msra.mxu0 0.0
        %7927 = vmatprep.subr.mxu0 0.0
        %7928 = vmatpush1.msra.mxu0 0.0
        %7929 = vmatprep.subr.mxu0 0.0
        %7930 = vmatpush1.msra.mxu0 0.0
        %7931 = vmatprep.subr.mxu0 0.0
        %7932 = vmatpush1.msra.mxu0 0.0
        %7933 = vmatprep.subr.mxu0 0.0
        %7934 = vmatpush1.msra.mxu0 0.0
        %7935 = vmatprep.subr.mxu0 0.0
        %7936 = vmatpush1.msra.mxu0 0.0
        %7937 = vmatprep.subr.mxu0 0.0
        %7938 = vmatpush1.msra.mxu0 0.0
        %7939 = vmatprep.subr.mxu0 0.0
        %7940 = vmatpush1.msra.mxu0 0.0
        %7941 = vmatprep.subr.mxu0 0.0
        %7942 = vmatpush1.msra.mxu0 0.0
        %7943 = vmatprep.subr.mxu0 0.0
        %7944 = vmatpush1.msra.mxu0 0.0
        %7945 = vmatprep.mubr.f32.mxu0 0.0
        %v7946 = vand.u32 %v7659, 4294901760
        %7947 = vmatmul.mubr.f32.gmra.mrb[0].mxu0 %v7946
        %v7948 = vpop.f32.mrb[0].mxu0
        %v7949 = vadd.f32 %v7768, %v7948
        %v7950 = vpop.f32.mrb[0].mxu0
        %7951 = vmatprep.mubr.f32.mxu0 0.0
        %v7952 = vand.u32 %v7665, 4294901760
        %7953 = vmatmul.mubr.f32.gmra.mrb[0].mxu0 %v7952
        %v7954 = vpop.f32.mrb[0].mxu0
        %v7955 = vadd.f32 %v7778, %v7954
        %v7956 = vpop.f32.mrb[0].mxu0
        %7957 = vmatprep.mubr.f32.mxu0 0.0
        %v7958 = vand.u32 %v7671, 4294901760
        %7959 = vmatmul.mubr.f32.gmra.mrb[0].mxu0 %v7958
        %v7960 = vpop.f32.mrb[0].mxu0
        %v7961 = vadd.f32 %v7788, %v7960
        %v7962 = vpop.f32.mrb[0].mxu0
        %7963 = vmatprep.mubr.f32.mxu0 0.0
        %v7964 = vand.u32 %v7677, 4294901760
        %7965 = vmatmul.mubr.f32.gmra.mrb[0].mxu0 %v7964
        %v7966 = vpop.f32.mrb[0].mxu0
        %v7967 = vadd.f32 %v7798, %v7966
        %v7968 = vpop.f32.mrb[0].mxu0
        %7969 = vdwg.mxu0
        %7970 = vmatprep.subr.mxu0 0.0
        %v7971 = vand.u32 %v508, 4294901760
        %v7972 = vsub.f32 %v508, %v7971
        %7973 = vmatpush1.msra.mxu0 %v7972
        %7974 = vmatprep.subr.mxu0 0.0
        %v7975 = vand.u32 %v509, 4294901760
        %v7976 = vsub.f32 %v509, %v7975
        %7977 = vmatpush1.msra.mxu0 %v7976
        %7978 = vmatprep.subr.mxu0 0.0
        %v7979 = vand.u32 %v510, 4294901760
        %v7980 = vsub.f32 %v510, %v7979
        %7981 = vmatpush1.msra.mxu0 %v7980
        %7982 = vmatprep.subr.mxu0 0.0
        %v7983 = vand.u32 %v511, 4294901760
        %v7984 = vsub.f32 %v511, %v7983
        %7985 = vmatpush1.msra.mxu0 %v7984
        %7986 = vmatprep.subr.mxu0 0.0
        %v7987 = vand.u32 %v512, 4294901760
        %v7988 = vsub.f32 %v512, %v7987
        %7989 = vmatpush1.msra.mxu0 %v7988
        %7990 = vmatprep.subr.mxu0 0.0
        %v7991 = vand.u32 %v513, 4294901760
        %v7992 = vsub.f32 %v513, %v7991
        %7993 = vmatpush1.msra.mxu0 %v7992
        %7994 = vmatprep.subr.mxu0 0.0
        %v7995 = vand.u32 %v514, 4294901760
        %v7996 = vsub.f32 %v514, %v7995
        %7997 = vmatpush1.msra.mxu0 %v7996
        %7998 = vmatprep.subr.mxu0 0.0
        %v7999 = vand.u32 %v515, 4294901760
        %v8000 = vsub.f32 %v515, %v7999
        %8001 = vmatpush1.msra.mxu0 %v8000
        %8002 = vmatprep.subr.mxu0 0.0
        %v8003 = vand.u32 %v516, 4294901760
        %v8004 = vsub.f32 %v516, %v8003
        %8005 = vmatpush1.msra.mxu0 %v8004
        %8006 = vmatprep.subr.mxu0 0.0
        %v8007 = vand.u32 %v517, 4294901760
        %v8008 = vsub.f32 %v517, %v8007
        %8009 = vmatpush1.msra.mxu0 %v8008
        %8010 = vmatprep.subr.mxu0 0.0
        %v8011 = vand.u32 %v518, 4294901760
        %v8012 = vsub.f32 %v518, %v8011
        %8013 = vmatpush1.msra.mxu0 %v8012
        %8014 = vmatprep.subr.mxu0 0.0
        %v8015 = vand.u32 %v519, 4294901760
        %v8016 = vsub.f32 %v519, %v8015
        %8017 = vmatpush1.msra.mxu0 %v8016
        %8018 = vmatprep.subr.mxu0 0.0
        %v8019 = vand.u32 %v520, 4294901760
        %v8020 = vsub.f32 %v520, %v8019
        %8021 = vmatpush1.msra.mxu0 %v8020
        %8022 = vmatprep.subr.mxu0 0.0
        %v8023 = vand.u32 %v521, 4294901760
        %v8024 = vsub.f32 %v521, %v8023
        %8025 = vmatpush1.msra.mxu0 %v8024
        %8026 = vmatprep.subr.mxu0 0.0
        %v8027 = vand.u32 %v522, 4294901760
        %v8028 = vsub.f32 %v522, %v8027
        %8029 = vmatpush1.msra.mxu0 %v8028
        %8030 = vmatprep.subr.mxu0 0.0
        %v8031 = vand.u32 %v523, 4294901760
        %v8032 = vsub.f32 %v523, %v8031
        %8033 = vmatpush1.msra.mxu0 %v8032
        %8034 = vmatprep.subr.mxu0 0.0
        %8035 = vmatpush1.msra.mxu0 0.0
        %8036 = vmatprep.subr.mxu0 0.0
        %8037 = vmatpush1.msra.mxu0 0.0
        %8038 = vmatprep.subr.mxu0 0.0
        %8039 = vmatpush1.msra.mxu0 0.0
        %8040 = vmatprep.subr.mxu0 0.0
        %8041 = vmatpush1.msra.mxu0 0.0
        %8042 = vmatprep.subr.mxu0 0.0
        %8043 = vmatpush1.msra.mxu0 0.0
        %8044 = vmatprep.subr.mxu0 0.0
        %8045 = vmatpush1.msra.mxu0 0.0
        %8046 = vmatprep.subr.mxu0 0.0
        %8047 = vmatpush1.msra.mxu0 0.0
        %8048 = vmatprep.subr.mxu0 0.0
        %8049 = vmatpush1.msra.mxu0 0.0
        %8050 = vmatprep.subr.mxu0 0.0
        %8051 = vmatpush1.msra.mxu0 0.0
        %8052 = vmatprep.subr.mxu0 0.0
        %8053 = vmatpush1.msra.mxu0 0.0
        %8054 = vmatprep.subr.mxu0 0.0
        %8055 = vmatpush1.msra.mxu0 0.0
        %8056 = vmatprep.subr.mxu0 0.0
        %8057 = vmatpush1.msra.mxu0 0.0
        %8058 = vmatprep.subr.mxu0 0.0
        %8059 = vmatpush1.msra.mxu0 0.0
        %8060 = vmatprep.subr.mxu0 0.0
        %8061 = vmatpush1.msra.mxu0 0.0
        %8062 = vmatprep.subr.mxu0 0.0
        %8063 = vmatpush1.msra.mxu0 0.0
        %8064 = vmatprep.subr.mxu0 0.0
        %8065 = vmatpush1.msra.mxu0 0.0
        %8066 = vmatprep.mubr.f32.mxu0 0.0
        %v8067 = vand.u32 %v7659, 4294901760
        %v8068 = vsub.f32 %v7659, %v8067
        %8069 = vmatmul.mubr.f32.gmra.mrb[0].mxu0 %v8068
        %v8070 = vpop.f32.mrb[0].mxu0
        %v8071 = vadd.f32 %v7949, %v8070
        %v8072 = vpop.f32.mrb[0].mxu0
        %8073 = vmatprep.mubr.f32.mxu0 0.0
        %v8074 = vand.u32 %v7665, 4294901760
        %v8075 = vsub.f32 %v7665, %v8074
        %8076 = vmatmul.mubr.f32.gmra.mrb[0].mxu0 %v8075
        %v8077 = vpop.f32.mrb[0].mxu0
        %v8078 = vadd.f32 %v7955, %v8077
        %v8079 = vpop.f32.mrb[0].mxu0
        %8080 = vmatprep.mubr.f32.mxu0 0.0
        %v8081 = vand.u32 %v7671, 4294901760
        %v8082 = vsub.f32 %v7671, %v8081
        %8083 = vmatmul.mubr.f32.gmra.mrb[0].mxu0 %v8082
        %v8084 = vpop.f32.mrb[0].mxu0
        %v8085 = vadd.f32 %v7961, %v8084
        %v8086 = vpop.f32.mrb[0].mxu0
        %8087 = vmatprep.mubr.f32.mxu0 0.0
        %v8088 = vand.u32 %v7677, 4294901760
        %v8089 = vsub.f32 %v7677, %v8088
        %8090 = vmatmul.mubr.f32.gmra.mrb[0].mxu0 %v8089
        %v8091 = vpop.f32.mrb[0].mxu0
        %v8092 = vadd.f32 %v7967, %v8091
        %v8093 = vpop.f32.mrb[0].mxu0
        %8094 = vdwg.mxu0
        %8095 = vmatprep.subr.mxu0 0.0
        %v8096 = vand.u32 %v508, 4294901760
        %8097 = vmatpush1.msra.mxu0 %v8096
        %8098 = vmatprep.subr.mxu0 0.0
        %v8099 = vand.u32 %v509, 4294901760
        %8100 = vmatpush1.msra.mxu0 %v8099
        %8101 = vmatprep.subr.mxu0 0.0
        %v8102 = vand.u32 %v510, 4294901760
        %8103 = vmatpush1.msra.mxu0 %v8102
        %8104 = vmatprep.subr.mxu0 0.0
        %v8105 = vand.u32 %v511, 4294901760
        %8106 = vmatpush1.msra.mxu0 %v8105
        %8107 = vmatprep.subr.mxu0 0.0
        %v8108 = vand.u32 %v512, 4294901760
        %8109 = vmatpush1.msra.mxu0 %v8108
        %8110 = vmatprep.subr.mxu0 0.0
        %v8111 = vand.u32 %v513, 4294901760
        %8112 = vmatpush1.msra.mxu0 %v8111
        %8113 = vmatprep.subr.mxu0 0.0
        %v8114 = vand.u32 %v514, 4294901760
        %8115 = vmatpush1.msra.mxu0 %v8114
        %8116 = vmatprep.subr.mxu0 0.0
        %v8117 = vand.u32 %v515, 4294901760
        %8118 = vmatpush1.msra.mxu0 %v8117
        %8119 = vmatprep.subr.mxu0 0.0
        %v8120 = vand.u32 %v516, 4294901760
        %8121 = vmatpush1.msra.mxu0 %v8120
        %8122 = vmatprep.subr.mxu0 0.0
        %v8123 = vand.u32 %v517, 4294901760
        %8124 = vmatpush1.msra.mxu0 %v8123
        %8125 = vmatprep.subr.mxu0 0.0
        %v8126 = vand.u32 %v518, 4294901760
        %8127 = vmatpush1.msra.mxu0 %v8126
        %8128 = vmatprep.subr.mxu0 0.0
        %v8129 = vand.u32 %v519, 4294901760
        %8130 = vmatpush1.msra.mxu0 %v8129
        %8131 = vmatprep.subr.mxu0 0.0
        %v8132 = vand.u32 %v520, 4294901760
        %8133 = vmatpush1.msra.mxu0 %v8132
        %8134 = vmatprep.subr.mxu0 0.0
        %v8135 = vand.u32 %v521, 4294901760
        %8136 = vmatpush1.msra.mxu0 %v8135
        %8137 = vmatprep.subr.mxu0 0.0
        %v8138 = vand.u32 %v522, 4294901760
        %8139 = vmatpush1.msra.mxu0 %v8138
        %8140 = vmatprep.subr.mxu0 0.0
        %v8141 = vand.u32 %v523, 4294901760
        %8142 = vmatpush1.msra.mxu0 %v8141
        %8143 = vmatprep.subr.mxu0 0.0
        %8144 = vmatpush1.msra.mxu0 0.0
        %8145 = vmatprep.subr.mxu0 0.0
        %8146 = vmatpush1.msra.mxu0 0.0
        %8147 = vmatprep.subr.mxu0 0.0
        %8148 = vmatpush1.msra.mxu0 0.0
        %8149 = vmatprep.subr.mxu0 0.0
        %8150 = vmatpush1.msra.mxu0 0.0
        %8151 = vmatprep.subr.mxu0 0.0
        %8152 = vmatpush1.msra.mxu0 0.0
        %8153 = vmatprep.subr.mxu0 0.0
        %8154 = vmatpush1.msra.mxu0 0.0
        %8155 = vmatprep.subr.mxu0 0.0
        %8156 = vmatpush1.msra.mxu0 0.0
        %8157 = vmatprep.subr.mxu0 0.0
        %8158 = vmatpush1.msra.mxu0 0.0
        %8159 = vmatprep.subr.mxu0 0.0
        %8160 = vmatpush1.msra.mxu0 0.0
        %8161 = vmatprep.subr.mxu0 0.0
        %8162 = vmatpush1.msra.mxu0 0.0
        %8163 = vmatprep.subr.mxu0 0.0
        %8164 = vmatpush1.msra.mxu0 0.0
        %8165 = vmatprep.subr.mxu0 0.0
        %8166 = vmatpush1.msra.mxu0 0.0
        %8167 = vmatprep.subr.mxu0 0.0
        %8168 = vmatpush1.msra.mxu0 0.0
        %8169 = vmatprep.subr.mxu0 0.0
        %8170 = vmatpush1.msra.mxu0 0.0
        %8171 = vmatprep.subr.mxu0 0.0
        %8172 = vmatpush1.msra.mxu0 0.0
        %8173 = vmatprep.subr.mxu0 0.0
        %8174 = vmatpush1.msra.mxu0 0.0
        %8175 = vmatprep.mubr.f32.mxu0 0.0
        %v8176 = vand.u32 %v7659, 4294901760
        %v8177 = vsub.f32 %v7659, %v8176
        %v8178 = vand.u32 %v8177, 4294901760
        %8179 = vmatmul.mubr.f32.gmra.mrb[0].mxu0 %v8178
        %v8180 = vpop.f32.mrb[0].mxu0
        %v8181 = vadd.f32 %v8071, %v8180
        %v8182 = vpop.f32.mrb[0].mxu0
        %8183 = vmatprep.mubr.f32.mxu0 0.0
        %v8184 = vand.u32 %v7665, 4294901760
        %v8185 = vsub.f32 %v7665, %v8184
        %v8186 = vand.u32 %v8185, 4294901760
        %8187 = vmatmul.mubr.f32.gmra.mrb[0].mxu0 %v8186
        %v8188 = vpop.f32.mrb[0].mxu0
        %v8189 = vadd.f32 %v8078, %v8188
        %v8190 = vpop.f32.mrb[0].mxu0
        %8191 = vmatprep.mubr.f32.mxu0 0.0
        %v8192 = vand.u32 %v7671, 4294901760
        %v8193 = vsub.f32 %v7671, %v8192
        %v8194 = vand.u32 %v8193, 4294901760
        %8195 = vmatmul.mubr.f32.gmra.mrb[0].mxu0 %v8194
        %v8196 = vpop.f32.mrb[0].mxu0
        %v8197 = vadd.f32 %v8085, %v8196
        %v8198 = vpop.f32.mrb[0].mxu0
        %8199 = vmatprep.mubr.f32.mxu0 0.0
        %v8200 = vand.u32 %v7677, 4294901760
        %v8201 = vsub.f32 %v7677, %v8200
        %v8202 = vand.u32 %v8201, 4294901760
        %8203 = vmatmul.mubr.f32.gmra.mrb[0].mxu0 %v8202
        %v8204 = vpop.f32.mrb[0].mxu0
        %v8205 = vadd.f32 %v8092, %v8204
        %v8206 = vpop.f32.mrb[0].mxu0
        %8207 = vdwg.mxu0
        %8208 = vmatprep.subr.mxu0 0.0
        %v8209 = vand.u32 %v508, 4294901760
        %v8210 = vsub.f32 %v508, %v8209
        %v8211 = vand.u32 %v8210, 4294901760
        %8212 = vmatpush1.msra.mxu0 %v8211
        %8213 = vmatprep.subr.mxu0 0.0
        %v8214 = vand.u32 %v509, 4294901760
        %v8215 = vsub.f32 %v509, %v8214
        %v8216 = vand.u32 %v8215, 4294901760
        %8217 = vmatpush1.msra.mxu0 %v8216
        %8218 = vmatprep.subr.mxu0 0.0
        %v8219 = vand.u32 %v510, 4294901760
        %v8220 = vsub.f32 %v510, %v8219
        %v8221 = vand.u32 %v8220, 4294901760
        %8222 = vmatpush1.msra.mxu0 %v8221
        %8223 = vmatprep.subr.mxu0 0.0
        %v8224 = vand.u32 %v511, 4294901760
        %v8225 = vsub.f32 %v511, %v8224
        %v8226 = vand.u32 %v8225, 4294901760
        %8227 = vmatpush1.msra.mxu0 %v8226
        %8228 = vmatprep.subr.mxu0 0.0
        %v8229 = vand.u32 %v512, 4294901760
        %v8230 = vsub.f32 %v512, %v8229
        %v8231 = vand.u32 %v8230, 4294901760
        %8232 = vmatpush1.msra.mxu0 %v8231
        %8233 = vmatprep.subr.mxu0 0.0
        %v8234 = vand.u32 %v513, 4294901760
        %v8235 = vsub.f32 %v513, %v8234
        %v8236 = vand.u32 %v8235, 4294901760
        %8237 = vmatpush1.msra.mxu0 %v8236
        %8238 = vmatprep.subr.mxu0 0.0
        %v8239 = vand.u32 %v514, 4294901760
        %v8240 = vsub.f32 %v514, %v8239
        %v8241 = vand.u32 %v8240, 4294901760
        %8242 = vmatpush1.msra.mxu0 %v8241
        %8243 = vmatprep.subr.mxu0 0.0
        %v8244 = vand.u32 %v515, 4294901760
        %v8245 = vsub.f32 %v515, %v8244
        %v8246 = vand.u32 %v8245, 4294901760
        %8247 = vmatpush1.msra.mxu0 %v8246
        %8248 = vmatprep.subr.mxu0 0.0
        %v8249 = vand.u32 %v516, 4294901760
        %v8250 = vsub.f32 %v516, %v8249
        %v8251 = vand.u32 %v8250, 4294901760
        %8252 = vmatpush1.msra.mxu0 %v8251
        %8253 = vmatprep.subr.mxu0 0.0
        %v8254 = vand.u32 %v517, 4294901760
        %v8255 = vsub.f32 %v517, %v8254
        %v8256 = vand.u32 %v8255, 4294901760
        %8257 = vmatpush1.msra.mxu0 %v8256
        %8258 = vmatprep.subr.mxu0 0.0
        %v8259 = vand.u32 %v518, 4294901760
        %v8260 = vsub.f32 %v518, %v8259
        %v8261 = vand.u32 %v8260, 4294901760
        %8262 = vmatpush1.msra.mxu0 %v8261
        %8263 = vmatprep.subr.mxu0 0.0
        %v8264 = vand.u32 %v519, 4294901760
        %v8265 = vsub.f32 %v519, %v8264
        %v8266 = vand.u32 %v8265, 4294901760
        %8267 = vmatpush1.msra.mxu0 %v8266
        %8268 = vmatprep.subr.mxu0 0.0
        %v8269 = vand.u32 %v520, 4294901760
        %v8270 = vsub.f32 %v520, %v8269
        %v8271 = vand.u32 %v8270, 4294901760
        %8272 = vmatpush1.msra.mxu0 %v8271
        %8273 = vmatprep.subr.mxu0 0.0
        %v8274 = vand.u32 %v521, 4294901760
        %v8275 = vsub.f32 %v521, %v8274
        %v8276 = vand.u32 %v8275, 4294901760
        %8277 = vmatpush1.msra.mxu0 %v8276
        %8278 = vmatprep.subr.mxu0 0.0
        %v8279 = vand.u32 %v522, 4294901760
        %v8280 = vsub.f32 %v522, %v8279
        %v8281 = vand.u32 %v8280, 4294901760
        %8282 = vmatpush1.msra.mxu0 %v8281
        %8283 = vmatprep.subr.mxu0 0.0
        %v8284 = vand.u32 %v523, 4294901760
        %v8285 = vsub.f32 %v523, %v8284
        %v8286 = vand.u32 %v8285, 4294901760
        %8287 = vmatpush1.msra.mxu0 %v8286
        %8288 = vmatprep.subr.mxu0 0.0
        %8289 = vmatpush1.msra.mxu0 0.0
        %8290 = vmatprep.subr.mxu0 0.0
        %8291 = vmatpush1.msra.mxu0 0.0
        %8292 = vmatprep.subr.mxu0 0.0
        %8293 = vmatpush1.msra.mxu0 0.0
        %8294 = vmatprep.subr.mxu0 0.0
        %8295 = vmatpush1.msra.mxu0 0.0
        %8296 = vmatprep.subr.mxu0 0.0
        %8297 = vmatpush1.msra.mxu0 0.0
        %8298 = vmatprep.subr.mxu0 0.0
        %8299 = vmatpush1.msra.mxu0 0.0
        %8300 = vmatprep.subr.mxu0 0.0
        %8301 = vmatpush1.msra.mxu0 0.0
        %8302 = vmatprep.subr.mxu0 0.0
        %8303 = vmatpush1.msra.mxu0 0.0
        %8304 = vmatprep.subr.mxu0 0.0
        %8305 = vmatpush1.msra.mxu0 0.0
        %8306 = vmatprep.subr.mxu0 0.0
        %8307 = vmatpush1.msra.mxu0 0.0
        %8308 = vmatprep.subr.mxu0 0.0
        %8309 = vmatpush1.msra.mxu0 0.0
        %8310 = vmatprep.subr.mxu0 0.0
        %8311 = vmatpush1.msra.mxu0 0.0
        %8312 = vmatprep.subr.mxu0 0.0
        %8313 = vmatpush1.msra.mxu0 0.0
        %8314 = vmatprep.subr.mxu0 0.0
        %8315 = vmatpush1.msra.mxu0 0.0
        %8316 = vmatprep.subr.mxu0 0.0
        %8317 = vmatpush1.msra.mxu0 0.0
        %8318 = vmatprep.subr.mxu0 0.0
        %8319 = vmatpush1.msra.mxu0 0.0
        %8320 = vmatprep.mubr.f32.mxu0 0.0
        %v8321 = vand.u32 %v7659, 4294901760
        %8322 = vmatmul.mubr.f32.gmra.mrb[0].mxu0 %v8321
        %v8323 = vpop.f32.mrb[0].mxu0
        %v8324 = vadd.f32 %v8181, %v8323
        %v8325 = vpop.f32.mrb[0].mxu0
        %8326 = vmatprep.mubr.f32.mxu0 0.0
        %v8327 = vand.u32 %v7665, 4294901760
        %8328 = vmatmul.mubr.f32.gmra.mrb[0].mxu0 %v8327
        %v8329 = vpop.f32.mrb[0].mxu0
        %v8330 = vadd.f32 %v8189, %v8329
        %v8331 = vpop.f32.mrb[0].mxu0
        %8332 = vmatprep.mubr.f32.mxu0 0.0
        %v8333 = vand.u32 %v7671, 4294901760
        %8334 = vmatmul.mubr.f32.gmra.mrb[0].mxu0 %v8333
        %v8335 = vpop.f32.mrb[0].mxu0
        %v8336 = vadd.f32 %v8197, %v8335
        %v8337 = vpop.f32.mrb[0].mxu0
        %8338 = vmatprep.mubr.f32.mxu0 0.0
        %v8339 = vand.u32 %v7677, 4294901760
        %8340 = vmatmul.mubr.f32.gmra.mrb[0].mxu0 %v8339
        %v8341 = vpop.f32.mrb[0].mxu0
        %v8342 = vadd.f32 %v8205, %v8341
        %v8343 = vpop.f32.mrb[0].mxu0
        %8344 = vdwg.mxu0
        %8345 = vmatprep.subr.mxu0 0.0
        %v8346 = vand.u32 %v508, 4294901760
        %8347 = vmatpush1.msra.mxu0 %v8346
        %8348 = vmatprep.subr.mxu0 0.0
        %v8349 = vand.u32 %v509, 4294901760
        %8350 = vmatpush1.msra.mxu0 %v8349
        %8351 = vmatprep.subr.mxu0 0.0
        %v8352 = vand.u32 %v510, 4294901760
        %8353 = vmatpush1.msra.mxu0 %v8352
        %8354 = vmatprep.subr.mxu0 0.0
        %v8355 = vand.u32 %v511, 4294901760
        %8356 = vmatpush1.msra.mxu0 %v8355
        %8357 = vmatprep.subr.mxu0 0.0
        %v8358 = vand.u32 %v512, 4294901760
        %8359 = vmatpush1.msra.mxu0 %v8358
        %8360 = vmatprep.subr.mxu0 0.0
        %v8361 = vand.u32 %v513, 4294901760
        %8362 = vmatpush1.msra.mxu0 %v8361
        %8363 = vmatprep.subr.mxu0 0.0
        %v8364 = vand.u32 %v514, 4294901760
        %8365 = vmatpush1.msra.mxu0 %v8364
        %8366 = vmatprep.subr.mxu0 0.0
        %v8367 = vand.u32 %v515, 4294901760
        %8368 = vmatpush1.msra.mxu0 %v8367
        %8369 = vmatprep.subr.mxu0 0.0
        %v8370 = vand.u32 %v516, 4294901760
        %8371 = vmatpush1.msra.mxu0 %v8370
        %8372 = vmatprep.subr.mxu0 0.0
        %v8373 = vand.u32 %v517, 4294901760
        %8374 = vmatpush1.msra.mxu0 %v8373
        %8375 = vmatprep.subr.mxu0 0.0
        %v8376 = vand.u32 %v518, 4294901760
        %8377 = vmatpush1.msra.mxu0 %v8376
        %8378 = vmatprep.subr.mxu0 0.0
        %v8379 = vand.u32 %v519, 4294901760
        %8380 = vmatpush1.msra.mxu0 %v8379
        %8381 = vmatprep.subr.mxu0 0.0
        %v8382 = vand.u32 %v520, 4294901760
        %8383 = vmatpush1.msra.mxu0 %v8382
        %8384 = vmatprep.subr.mxu0 0.0
        %v8385 = vand.u32 %v521, 4294901760
        %8386 = vmatpush1.msra.mxu0 %v8385
        %8387 = vmatprep.subr.mxu0 0.0
        %v8388 = vand.u32 %v522, 4294901760
        %8389 = vmatpush1.msra.mxu0 %v8388
        %8390 = vmatprep.subr.mxu0 0.0
        %v8391 = vand.u32 %v523, 4294901760
        %8392 = vmatpush1.msra.mxu0 %v8391
        %8393 = vmatprep.subr.mxu0 0.0
        %8394 = vmatpush1.msra.mxu0 0.0
        %8395 = vmatprep.subr.mxu0 0.0
        %8396 = vmatpush1.msra.mxu0 0.0
        %8397 = vmatprep.subr.mxu0 0.0
        %8398 = vmatpush1.msra.mxu0 0.0
        %8399 = vmatprep.subr.mxu0 0.0
        %8400 = vmatpush1.msra.mxu0 0.0
        %8401 = vmatprep.subr.mxu0 0.0
        %8402 = vmatpush1.msra.mxu0 0.0
        %8403 = vmatprep.subr.mxu0 0.0
        %8404 = vmatpush1.msra.mxu0 0.0
        %8405 = vmatprep.subr.mxu0 0.0
        %8406 = vmatpush1.msra.mxu0 0.0
        %8407 = vmatprep.subr.mxu0 0.0
        %8408 = vmatpush1.msra.mxu0 0.0
        %8409 = vmatprep.subr.mxu0 0.0
        %8410 = vmatpush1.msra.mxu0 0.0
        %8411 = vmatprep.subr.mxu0 0.0
        %8412 = vmatpush1.msra.mxu0 0.0
        %8413 = vmatprep.subr.mxu0 0.0
        %8414 = vmatpush1.msra.mxu0 0.0
        %8415 = vmatprep.subr.mxu0 0.0
        %8416 = vmatpush1.msra.mxu0 0.0
        %8417 = vmatprep.subr.mxu0 0.0
        %8418 = vmatpush1.msra.mxu0 0.0
        %8419 = vmatprep.subr.mxu0 0.0
        %8420 = vmatpush1.msra.mxu0 0.0
        %8421 = vmatprep.subr.mxu0 0.0
        %8422 = vmatpush1.msra.mxu0 0.0
        %8423 = vmatprep.subr.mxu0 0.0
        %8424 = vmatpush1.msra.mxu0 0.0
        %8425 = vmatprep.mubr.f32.mxu0 0.0
        %v8426 = vand.u32 %v7659, 4294901760
        %8427 = vmatmul.mubr.f32.gmra.mrb[0].mxu0 %v8426
        %v8428 = vpop.f32.mrb[0].mxu0
        %v8429 = vadd.f32 %v8324, %v8428
        %v8430 = vpop.f32.mrb[0].mxu0
        %8431 = vmatprep.mubr.f32.mxu0 0.0
        %v8432 = vand.u32 %v7665, 4294901760
        %8433 = vmatmul.mubr.f32.gmra.mrb[0].mxu0 %v8432
        %v8434 = vpop.f32.mrb[0].mxu0
        %v8435 = vadd.f32 %v8330, %v8434
        %v8436 = vpop.f32.mrb[0].mxu0
        %8437 = vmatprep.mubr.f32.mxu0 0.0
        %v8438 = vand.u32 %v7671, 4294901760
        %8439 = vmatmul.mubr.f32.gmra.mrb[0].mxu0 %v8438
        %v8440 = vpop.f32.mrb[0].mxu0
        %v8441 = vadd.f32 %v8336, %v8440
        %v8442 = vpop.f32.mrb[0].mxu0
        %8443 = vmatprep.mubr.f32.mxu0 0.0
        %v8444 = vand.u32 %v7677, 4294901760
        %8445 = vmatmul.mubr.f32.gmra.mrb[0].mxu0 %v8444
        %v8446 = vpop.f32.mrb[0].mxu0
        %v8447 = vadd.f32 %v8342, %v8446
        %v8448 = vpop.f32.mrb[0].mxu0
        %8449 = vdwg.mxu0
        %v8450 = vmul.f32 %v480, %v488
        %v8451 = vmul.f32 %v481, %v489
        %v8452 = vmul.f32 %v482, %v490
        %v8453 = vmul.f32 %v483, %v491
        %v8454 = vmul.f32 %v494, %v498
        %v8455 = vmul.f32 %v495, %v499
        %8456 = vmatprep.subr.mxu0 0.0
        %v8457 = vand.u32 %v8454, 4294901760
        %8458 = vmatpush1.msra.mxu0 %v8457
        %8459 = vmatprep.subr.mxu0 0.0
        %v8460 = vand.u32 %v8455, 4294901760
        %8461 = vmatpush1.msra.mxu0 %v8460
        %8462 = vmatprep.subr.mxu0 0.0
        %8463 = vmatpush1.msra.mxu0 0.0
        %8464 = vmatprep.subr.mxu0 0.0
        %8465 = vmatpush1.msra.mxu0 0.0
        %8466 = vmatprep.subr.mxu0 0.0
        %8467 = vmatpush1.msra.mxu0 0.0
        %8468 = vmatprep.subr.mxu0 0.0
        %8469 = vmatpush1.msra.mxu0 0.0
        %8470 = vmatprep.subr.mxu0 0.0
        %8471 = vmatpush1.msra.mxu0 0.0
        %8472 = vmatprep.subr.mxu0 0.0
        %8473 = vmatpush1.msra.mxu0 0.0
        %8474 = vmatprep.subr.mxu0 0.0
        %8475 = vmatpush1.msra.mxu0 0.0
        %8476 = vmatprep.subr.mxu0 0.0
        %8477 = vmatpush1.msra.mxu0 0.0
        %8478 = vmatprep.subr.mxu0 0.0
        %8479 = vmatpush1.msra.mxu0 0.0
        %8480 = vmatprep.subr.mxu0 0.0
        %8481 = vmatpush1.msra.mxu0 0.0
        %8482 = vmatprep.subr.mxu0 0.0
        %8483 = vmatpush1.msra.mxu0 0.0
        %8484 = vmatprep.subr.mxu0 0.0
        %8485 = vmatpush1.msra.mxu0 0.0
        %8486 = vmatprep.subr.mxu0 0.0
        %8487 = vmatpush1.msra.mxu0 0.0
        %8488 = vmatprep.subr.mxu0 0.0
        %8489 = vmatpush1.msra.mxu0 0.0
        %8490 = vmatprep.subr.mxu0 0.0
        %8491 = vmatpush1.msra.mxu0 0.0
        %8492 = vmatprep.subr.mxu0 0.0
        %8493 = vmatpush1.msra.mxu0 0.0
        %8494 = vmatprep.subr.mxu0 0.0
        %8495 = vmatpush1.msra.mxu0 0.0
        %8496 = vmatprep.subr.mxu0 0.0
        %8497 = vmatpush1.msra.mxu0 0.0
        %8498 = vmatprep.subr.mxu0 0.0
        %8499 = vmatpush1.msra.mxu0 0.0
        %8500 = vmatprep.subr.mxu0 0.0
        %8501 = vmatpush1.msra.mxu0 0.0
        %8502 = vmatprep.subr.mxu0 0.0
        %8503 = vmatpush1.msra.mxu0 0.0
        %8504 = vmatprep.subr.mxu0 0.0
        %8505 = vmatpush1.msra.mxu0 0.0
        %8506 = vmatprep.subr.mxu0 0.0
        %8507 = vmatpush1.msra.mxu0 0.0
        %8508 = vmatprep.subr.mxu0 0.0
        %8509 = vmatpush1.msra.mxu0 0.0
        %8510 = vmatprep.subr.mxu0 0.0
        %8511 = vmatpush1.msra.mxu0 0.0
        %8512 = vmatprep.subr.mxu0 0.0
        %8513 = vmatpush1.msra.mxu0 0.0
        %8514 = vmatprep.subr.mxu0 0.0
        %8515 = vmatpush1.msra.mxu0 0.0
        %8516 = vmatprep.subr.mxu0 0.0
        %8517 = vmatpush1.msra.mxu0 0.0
        %8518 = vmatprep.subr.mxu0 0.0
        %8519 = vmatpush1.msra.mxu0 0.0
        %8520 = vmatprep.subr.mxu0 0.0
        %8521 = vmatpush1.msra.mxu0 0.0
        %8522 = vmatprep.mubr.f32.mxu0 0.0
        %v8523 = vand.u32 %v526, 4294901760
        %v8524 = vsub.f32 %v526, %v8523
        %v8525 = vand.u32 %v8524, 4294901760
        %v8526 = vsub.f32 %v8524, %v8525
        %v8527 = vand.u32 %v8526, 4294901760
        %8528 = vmatmul.mubr.f32.gmra.mrb[0].mxu0 %v8527
        %v8529 = vpop.f32.mrb[0].mxu0
        %v8530 = vadd.f32 0.0, %v8529
        %v8531 = vpop.f32.mrb[0].mxu0
        %8532 = vmatprep.mubr.f32.mxu0 0.0
        %v8533 = vand.u32 %v529, 4294901760
        %v8534 = vsub.f32 %v529, %v8533
        %v8535 = vand.u32 %v8534, 4294901760
        %v8536 = vsub.f32 %v8534, %v8535
        %v8537 = vand.u32 %v8536, 4294901760
        %8538 = vmatmul.mubr.f32.gmra.mrb[0].mxu0 %v8537
        %v8539 = vpop.f32.mrb[0].mxu0
        %v8540 = vadd.f32 0.0, %v8539
        %v8541 = vpop.f32.mrb[0].mxu0
        %8542 = vmatprep.mubr.f32.mxu0 0.0
        %v8543 = vand.u32 %v532, 4294901760
        %v8544 = vsub.f32 %v532, %v8543
        %v8545 = vand.u32 %v8544, 4294901760
        %v8546 = vsub.f32 %v8544, %v8545
        %v8547 = vand.u32 %v8546, 4294901760
        %8548 = vmatmul.mubr.f32.gmra.mrb[0].mxu0 %v8547
        %v8549 = vpop.f32.mrb[0].mxu0
        %v8550 = vadd.f32 0.0, %v8549
        %v8551 = vpop.f32.mrb[0].mxu0
        %8552 = vmatprep.mubr.f32.mxu0 0.0
        %v8553 = vand.u32 %v535, 4294901760
        %v8554 = vsub.f32 %v535, %v8553
        %v8555 = vand.u32 %v8554, 4294901760
        %v8556 = vsub.f32 %v8554, %v8555
        %v8557 = vand.u32 %v8556, 4294901760
        %8558 = vmatmul.mubr.f32.gmra.mrb[0].mxu0 %v8557
        %v8559 = vpop.f32.mrb[0].mxu0
        %v8560 = vadd.f32 0.0, %v8559
        %v8561 = vpop.f32.mrb[0].mxu0
        %8562 = vdwg.mxu0
        %8563 = vmatprep.subr.mxu0 0.0
        %v8564 = vand.u32 %v8454, 4294901760
        %v8565 = vsub.f32 %v8454, %v8564
        %v8566 = vand.u32 %v8565, 4294901760
        %v8567 = vsub.f32 %v8565, %v8566
        %v8568 = vand.u32 %v8567, 4294901760
        %8569 = vmatpush1.msra.mxu0 %v8568
        %8570 = vmatprep.subr.mxu0 0.0
        %v8571 = vand.u32 %v8455, 4294901760
        %v8572 = vsub.f32 %v8455, %v8571
        %v8573 = vand.u32 %v8572, 4294901760
        %v8574 = vsub.f32 %v8572, %v8573
        %v8575 = vand.u32 %v8574, 4294901760
        %8576 = vmatpush1.msra.mxu0 %v8575
        %8577 = vmatprep.subr.mxu0 0.0
        %8578 = vmatpush1.msra.mxu0 0.0
        %8579 = vmatprep.subr.mxu0 0.0
        %8580 = vmatpush1.msra.mxu0 0.0
        %8581 = vmatprep.subr.mxu0 0.0
        %8582 = vmatpush1.msra.mxu0 0.0
        %8583 = vmatprep.subr.mxu0 0.0
        %8584 = vmatpush1.msra.mxu0 0.0
        %8585 = vmatprep.subr.mxu0 0.0
        %8586 = vmatpush1.msra.mxu0 0.0
        %8587 = vmatprep.subr.mxu0 0.0
        %8588 = vmatpush1.msra.mxu0 0.0
        %8589 = vmatprep.subr.mxu0 0.0
        %8590 = vmatpush1.msra.mxu0 0.0
        %8591 = vmatprep.subr.mxu0 0.0
        %8592 = vmatpush1.msra.mxu0 0.0
        %8593 = vmatprep.subr.mxu0 0.0
        %8594 = vmatpush1.msra.mxu0 0.0
        %8595 = vmatprep.subr.mxu0 0.0
        %8596 = vmatpush1.msra.mxu0 0.0
        %8597 = vmatprep.subr.mxu0 0.0
        %8598 = vmatpush1.msra.mxu0 0.0
        %8599 = vmatprep.subr.mxu0 0.0
        %8600 = vmatpush1.msra.mxu0 0.0
        %8601 = vmatprep.subr.mxu0 0.0
        %8602 = vmatpush1.msra.mxu0 0.0
        %8603 = vmatprep.subr.mxu0 0.0
        %8604 = vmatpush1.msra.mxu0 0.0
        %8605 = vmatprep.subr.mxu0 0.0
        %8606 = vmatpush1.msra.mxu0 0.0
        %8607 = vmatprep.subr.mxu0 0.0
        %8608 = vmatpush1.msra.mxu0 0.0
        %8609 = vmatprep.subr.mxu0 0.0
        %8610 = vmatpush1.msra.mxu0 0.0
        %8611 = vmatprep.subr.mxu0 0.0
        %8612 = vmatpush1.msra.mxu0 0.0
        %8613 = vmatprep.subr.mxu0 0.0
        %8614 = vmatpush1.msra.mxu0 0.0
        %8615 = vmatprep.subr.mxu0 0.0
        %8616 = vmatpush1.msra.mxu0 0.0
        %8617 = vmatprep.subr.mxu0 0.0
        %8618 = vmatpush1.msra.mxu0 0.0
        %8619 = vmatprep.subr.mxu0 0.0
        %8620 = vmatpush1.msra.mxu0 0.0
        %8621 = vmatprep.subr.mxu0 0.0
        %8622 = vmatpush1.msra.mxu0 0.0
        %8623 = vmatprep.subr.mxu0 0.0
        %8624 = vmatpush1.msra.mxu0 0.0
        %8625 = vmatprep.subr.mxu0 0.0
        %8626 = vmatpush1.msra.mxu0 0.0
        %8627 = vmatprep.subr.mxu0 0.0
        %8628 = vmatpush1.msra.mxu0 0.0
        %8629 = vmatprep.subr.mxu0 0.0
        %8630 = vmatpush1.msra.mxu0 0.0
        %8631 = vmatprep.subr.mxu0 0.0
        %8632 = vmatpush1.msra.mxu0 0.0
        %8633 = vmatprep.subr.mxu0 0.0
        %8634 = vmatpush1.msra.mxu0 0.0
        %8635 = vmatprep.subr.mxu0 0.0
        %8636 = vmatpush1.msra.mxu0 0.0
        %8637 = vmatprep.mubr.f32.mxu0 0.0
        %v8638 = vand.u32 %v526, 4294901760
        %8639 = vmatmul.mubr.f32.gmra.mrb[0].mxu0 %v8638
        %v8640 = vpop.f32.mrb[0].mxu0
        %v8641 = vadd.f32 %v8530, %v8640
        %v8642 = vpop.f32.mrb[0].mxu0
        %8643 = vmatprep.mubr.f32.mxu0 0.0
        %v8644 = vand.u32 %v529, 4294901760
        %8645 = vmatmul.mubr.f32.gmra.mrb[0].mxu0 %v8644
        %v8646 = vpop.f32.mrb[0].mxu0
        %v8647 = vadd.f32 %v8540, %v8646
        %v8648 = vpop.f32.mrb[0].mxu0
        %8649 = vmatprep.mubr.f32.mxu0 0.0
        %v8650 = vand.u32 %v532, 4294901760
        %8651 = vmatmul.mubr.f32.gmra.mrb[0].mxu0 %v8650
        %v8652 = vpop.f32.mrb[0].mxu0
        %v8653 = vadd.f32 %v8550, %v8652
        %v8654 = vpop.f32.mrb[0].mxu0
        %8655 = vmatprep.mubr.f32.mxu0 0.0
        %v8656 = vand.u32 %v535, 4294901760
        %8657 = vmatmul.mubr.f32.gmra.mrb[0].mxu0 %v8656
        %v8658 = vpop.f32.mrb[0].mxu0
        %v8659 = vadd.f32 %v8560, %v8658
        %v8660 = vpop.f32.mrb[0].mxu0
        %8661 = vdwg.mxu0
        %8662 = vmatprep.subr.mxu0 0.0
        %v8663 = vand.u32 %v8454, 4294901760
        %v8664 = vsub.f32 %v8454, %v8663
        %8665 = vmatpush1.msra.mxu0 %v8664
        %8666 = vmatprep.subr.mxu0 0.0
        %v8667 = vand.u32 %v8455, 4294901760
        %v8668 = vsub.f32 %v8455, %v8667
        %8669 = vmatpush1.msra.mxu0 %v8668
        %8670 = vmatprep.subr.mxu0 0.0
        %8671 = vmatpush1.msra.mxu0 0.0
        %8672 = vmatprep.subr.mxu0 0.0
        %8673 = vmatpush1.msra.mxu0 0.0
        %8674 = vmatprep.subr.mxu0 0.0
        %8675 = vmatpush1.msra.mxu0 0.0
        %8676 = vmatprep.subr.mxu0 0.0
        %8677 = vmatpush1.msra.mxu0 0.0
        %8678 = vmatprep.subr.mxu0 0.0
        %8679 = vmatpush1.msra.mxu0 0.0
        %8680 = vmatprep.subr.mxu0 0.0
        %8681 = vmatpush1.msra.mxu0 0.0
        %8682 = vmatprep.subr.mxu0 0.0
        %8683 = vmatpush1.msra.mxu0 0.0
        %8684 = vmatprep.subr.mxu0 0.0
        %8685 = vmatpush1.msra.mxu0 0.0
        %8686 = vmatprep.subr.mxu0 0.0
        %8687 = vmatpush1.msra.mxu0 0.0
        %8688 = vmatprep.subr.mxu0 0.0
        %8689 = vmatpush1.msra.mxu0 0.0
        %8690 = vmatprep.subr.mxu0 0.0
        %8691 = vmatpush1.msra.mxu0 0.0
        %8692 = vmatprep.subr.mxu0 0.0
        %8693 = vmatpush1.msra.mxu0 0.0
        %8694 = vmatprep.subr.mxu0 0.0
        %8695 = vmatpush1.msra.mxu0 0.0
        %8696 = vmatprep.subr.mxu0 0.0
        %8697 = vmatpush1.msra.mxu0 0.0
        %8698 = vmatprep.subr.mxu0 0.0
        %8699 = vmatpush1.msra.mxu0 0.0
        %8700 = vmatprep.subr.mxu0 0.0
        %8701 = vmatpush1.msra.mxu0 0.0
        %8702 = vmatprep.subr.mxu0 0.0
        %8703 = vmatpush1.msra.mxu0 0.0
        %8704 = vmatprep.subr.mxu0 0.0
        %8705 = vmatpush1.msra.mxu0 0.0
        %8706 = vmatprep.subr.mxu0 0.0
        %8707 = vmatpush1.msra.mxu0 0.0
        %8708 = vmatprep.subr.mxu0 0.0
        %8709 = vmatpush1.msra.mxu0 0.0
        %8710 = vmatprep.subr.mxu0 0.0
        %8711 = vmatpush1.msra.mxu0 0.0
        %8712 = vmatprep.subr.mxu0 0.0
        %8713 = vmatpush1.msra.mxu0 0.0
        %8714 = vmatprep.subr.mxu0 0.0
        %8715 = vmatpush1.msra.mxu0 0.0
        %8716 = vmatprep.subr.mxu0 0.0
        %8717 = vmatpush1.msra.mxu0 0.0
        %8718 = vmatprep.subr.mxu0 0.0
        %8719 = vmatpush1.msra.mxu0 0.0
        %8720 = vmatprep.subr.mxu0 0.0
        %8721 = vmatpush1.msra.mxu0 0.0
        %8722 = vmatprep.subr.mxu0 0.0
        %8723 = vmatpush1.msra.mxu0 0.0
        %8724 = vmatprep.subr.mxu0 0.0
        %8725 = vmatpush1.msra.mxu0 0.0
        %8726 = vmatprep.subr.mxu0 0.0
        %8727 = vmatpush1.msra.mxu0 0.0
        %8728 = vmatprep.subr.mxu0 0.0
        %8729 = vmatpush1.msra.mxu0 0.0
        %8730 = vmatprep.mubr.f32.mxu0 0.0
        %v8731 = vand.u32 %v526, 4294901760
        %v8732 = vsub.f32 %v526, %v8731
        %8733 = vmatmul.mubr.f32.gmra.mrb[0].mxu0 %v8732
        %v8734 = vpop.f32.mrb[0].mxu0
        %v8735 = vadd.f32 %v8641, %v8734
        %v8736 = vpop.f32.mrb[0].mxu0
        %8737 = vmatprep.mubr.f32.mxu0 0.0
        %v8738 = vand.u32 %v529, 4294901760
        %v8739 = vsub.f32 %v529, %v8738
        %8740 = vmatmul.mubr.f32.gmra.mrb[0].mxu0 %v8739
        %v8741 = vpop.f32.mrb[0].mxu0
        %v8742 = vadd.f32 %v8647, %v8741
        %v8743 = vpop.f32.mrb[0].mxu0
        %8744 = vmatprep.mubr.f32.mxu0 0.0
        %v8745 = vand.u32 %v532, 4294901760
        %v8746 = vsub.f32 %v532, %v8745
        %8747 = vmatmul.mubr.f32.gmra.mrb[0].mxu0 %v8746
        %v8748 = vpop.f32.mrb[0].mxu0
        %v8749 = vadd.f32 %v8653, %v8748
        %v8750 = vpop.f32.mrb[0].mxu0
        %8751 = vmatprep.mubr.f32.mxu0 0.0
        %v8752 = vand.u32 %v535, 4294901760
        %v8753 = vsub.f32 %v535, %v8752
        %8754 = vmatmul.mubr.f32.gmra.mrb[0].mxu0 %v8753
        %v8755 = vpop.f32.mrb[0].mxu0
        %v8756 = vadd.f32 %v8659, %v8755
        %v8757 = vpop.f32.mrb[0].mxu0
        %8758 = vdwg.mxu0
        %8759 = vmatprep.subr.mxu0 0.0
        %v8760 = vand.u32 %v8454, 4294901760
        %8761 = vmatpush1.msra.mxu0 %v8760
        %8762 = vmatprep.subr.mxu0 0.0
        %v8763 = vand.u32 %v8455, 4294901760
        %8764 = vmatpush1.msra.mxu0 %v8763
        %8765 = vmatprep.subr.mxu0 0.0
        %8766 = vmatpush1.msra.mxu0 0.0
        %8767 = vmatprep.subr.mxu0 0.0
        %8768 = vmatpush1.msra.mxu0 0.0
        %8769 = vmatprep.subr.mxu0 0.0
        %8770 = vmatpush1.msra.mxu0 0.0
        %8771 = vmatprep.subr.mxu0 0.0
        %8772 = vmatpush1.msra.mxu0 0.0
        %8773 = vmatprep.subr.mxu0 0.0
        %8774 = vmatpush1.msra.mxu0 0.0
        %8775 = vmatprep.subr.mxu0 0.0
        %8776 = vmatpush1.msra.mxu0 0.0
        %8777 = vmatprep.subr.mxu0 0.0
        %8778 = vmatpush1.msra.mxu0 0.0
        %8779 = vmatprep.subr.mxu0 0.0
        %8780 = vmatpush1.msra.mxu0 0.0
        %8781 = vmatprep.subr.mxu0 0.0
        %8782 = vmatpush1.msra.mxu0 0.0
        %8783 = vmatprep.subr.mxu0 0.0
        %8784 = vmatpush1.msra.mxu0 0.0
        %8785 = vmatprep.subr.mxu0 0.0
        %8786 = vmatpush1.msra.mxu0 0.0
        %8787 = vmatprep.subr.mxu0 0.0
        %8788 = vmatpush1.msra.mxu0 0.0
        %8789 = vmatprep.subr.mxu0 0.0
        %8790 = vmatpush1.msra.mxu0 0.0
        %8791 = vmatprep.subr.mxu0 0.0
        %8792 = vmatpush1.msra.mxu0 0.0
        %8793 = vmatprep.subr.mxu0 0.0
        %8794 = vmatpush1.msra.mxu0 0.0
        %8795 = vmatprep.subr.mxu0 0.0
        %8796 = vmatpush1.msra.mxu0 0.0
        %8797 = vmatprep.subr.mxu0 0.0
        %8798 = vmatpush1.msra.mxu0 0.0
        %8799 = vmatprep.subr.mxu0 0.0
        %8800 = vmatpush1.msra.mxu0 0.0
        %8801 = vmatprep.subr.mxu0 0.0
        %8802 = vmatpush1.msra.mxu0 0.0
        %8803 = vmatprep.subr.mxu0 0.0
        %8804 = vmatpush1.msra.mxu0 0.0
        %8805 = vmatprep.subr.mxu0 0.0
        %8806 = vmatpush1.msra.mxu0 0.0
        %8807 = vmatprep.subr.mxu0 0.0
        %8808 = vmatpush1.msra.mxu0 0.0
        %8809 = vmatprep.subr.mxu0 0.0
        %8810 = vmatpush1.msra.mxu0 0.0
        %8811 = vmatprep.subr.mxu0 0.0
        %8812 = vmatpush1.msra.mxu0 0.0
        %8813 = vmatprep.subr.mxu0 0.0
        %8814 = vmatpush1.msra.mxu0 0.0
        %8815 = vmatprep.subr.mxu0 0.0
        %8816 = vmatpush1.msra.mxu0 0.0
        %8817 = vmatprep.subr.mxu0 0.0
        %8818 = vmatpush1.msra.mxu0 0.0
        %8819 = vmatprep.subr.mxu0 0.0
        %8820 = vmatpush1.msra.mxu0 0.0
        %8821 = vmatprep.subr.mxu0 0.0
        %8822 = vmatpush1.msra.mxu0 0.0
        %8823 = vmatprep.subr.mxu0 0.0
        %8824 = vmatpush1.msra.mxu0 0.0
        %8825 = vmatprep.mubr.f32.mxu0 0.0
        %v8826 = vand.u32 %v526, 4294901760
        %v8827 = vsub.f32 %v526, %v8826
        %v8828 = vand.u32 %v8827, 4294901760
        %8829 = vmatmul.mubr.f32.gmra.mrb[0].mxu0 %v8828
        %v8830 = vpop.f32.mrb[0].mxu0
        %v8831 = vadd.f32 %v8735, %v8830
        %v8832 = vpop.f32.mrb[0].mxu0
        %8833 = vmatprep.mubr.f32.mxu0 0.0
        %v8834 = vand.u32 %v529, 4294901760
        %v8835 = vsub.f32 %v529, %v8834
        %v8836 = vand.u32 %v8835, 4294901760
        %8837 = vmatmul.mubr.f32.gmra.mrb[0].mxu0 %v8836
        %v8838 = vpop.f32.mrb[0].mxu0
        %v8839 = vadd.f32 %v8742, %v8838
        %v8840 = vpop.f32.mrb[0].mxu0
        %8841 = vmatprep.mubr.f32.mxu0 0.0
        %v8842 = vand.u32 %v532, 4294901760
        %v8843 = vsub.f32 %v532, %v8842
        %v8844 = vand.u32 %v8843, 4294901760
        %8845 = vmatmul.mubr.f32.gmra.mrb[0].mxu0 %v8844
        %v8846 = vpop.f32.mrb[0].mxu0
        %v8847 = vadd.f32 %v8749, %v8846
        %v8848 = vpop.f32.mrb[0].mxu0
        %8849 = vmatprep.mubr.f32.mxu0 0.0
        %v8850 = vand.u32 %v535, 4294901760
        %v8851 = vsub.f32 %v535, %v8850
        %v8852 = vand.u32 %v8851, 4294901760
        %8853 = vmatmul.mubr.f32.gmra.mrb[0].mxu0 %v8852
        %v8854 = vpop.f32.mrb[0].mxu0
        %v8855 = vadd.f32 %v8756, %v8854
        %v8856 = vpop.f32.mrb[0].mxu0
        %8857 = vdwg.mxu0
        %8858 = vmatprep.subr.mxu0 0.0
        %v8859 = vand.u32 %v8454, 4294901760
        %v8860 = vsub.f32 %v8454, %v8859
        %v8861 = vand.u32 %v8860, 4294901760
        %8862 = vmatpush1.msra.mxu0 %v8861
        %8863 = vmatprep.subr.mxu0 0.0
        %v8864 = vand.u32 %v8455, 4294901760
        %v8865 = vsub.f32 %v8455, %v8864
        %v8866 = vand.u32 %v8865, 4294901760
        %8867 = vmatpush1.msra.mxu0 %v8866
        %8868 = vmatprep.subr.mxu0 0.0
        %8869 = vmatpush1.msra.mxu0 0.0
        %8870 = vmatprep.subr.mxu0 0.0
        %8871 = vmatpush1.msra.mxu0 0.0
        %8872 = vmatprep.subr.mxu0 0.0
        %8873 = vmatpush1.msra.mxu0 0.0
        %8874 = vmatprep.subr.mxu0 0.0
        %8875 = vmatpush1.msra.mxu0 0.0
        %8876 = vmatprep.subr.mxu0 0.0
        %8877 = vmatpush1.msra.mxu0 0.0
        %8878 = vmatprep.subr.mxu0 0.0
        %8879 = vmatpush1.msra.mxu0 0.0
        %8880 = vmatprep.subr.mxu0 0.0
        %8881 = vmatpush1.msra.mxu0 0.0
        %8882 = vmatprep.subr.mxu0 0.0
        %8883 = vmatpush1.msra.mxu0 0.0
        %8884 = vmatprep.subr.mxu0 0.0
        %8885 = vmatpush1.msra.mxu0 0.0
        %8886 = vmatprep.subr.mxu0 0.0
        %8887 = vmatpush1.msra.mxu0 0.0
        %8888 = vmatprep.subr.mxu0 0.0
        %8889 = vmatpush1.msra.mxu0 0.0
        %8890 = vmatprep.subr.mxu0 0.0
        %8891 = vmatpush1.msra.mxu0 0.0
        %8892 = vmatprep.subr.mxu0 0.0
        %8893 = vmatpush1.msra.mxu0 0.0
        %8894 = vmatprep.subr.mxu0 0.0
        %8895 = vmatpush1.msra.mxu0 0.0
        %8896 = vmatprep.subr.mxu0 0.0
        %8897 = vmatpush1.msra.mxu0 0.0
        %8898 = vmatprep.subr.mxu0 0.0
        %8899 = vmatpush1.msra.mxu0 0.0
        %8900 = vmatprep.subr.mxu0 0.0
        %8901 = vmatpush1.msra.mxu0 0.0
        %8902 = vmatprep.subr.mxu0 0.0
        %8903 = vmatpush1.msra.mxu0 0.0
        %8904 = vmatprep.subr.mxu0 0.0
        %8905 = vmatpush1.msra.mxu0 0.0
        %8906 = vmatprep.subr.mxu0 0.0
        %8907 = vmatpush1.msra.mxu0 0.0
        %8908 = vmatprep.subr.mxu0 0.0
        %8909 = vmatpush1.msra.mxu0 0.0
        %8910 = vmatprep.subr.mxu0 0.0
        %8911 = vmatpush1.msra.mxu0 0.0
        %8912 = vmatprep.subr.mxu0 0.0
        %8913 = vmatpush1.msra.mxu0 0.0
        %8914 = vmatprep.subr.mxu0 0.0
        %8915 = vmatpush1.msra.mxu0 0.0
        %8916 = vmatprep.subr.mxu0 0.0
        %8917 = vmatpush1.msra.mxu0 0.0
        %8918 = vmatprep.subr.mxu0 0.0
        %8919 = vmatpush1.msra.mxu0 0.0
        %8920 = vmatprep.subr.mxu0 0.0
        %8921 = vmatpush1.msra.mxu0 0.0
        %8922 = vmatprep.subr.mxu0 0.0
        %8923 = vmatpush1.msra.mxu0 0.0
        %8924 = vmatprep.subr.mxu0 0.0
        %8925 = vmatpush1.msra.mxu0 0.0
        %8926 = vmatprep.subr.mxu0 0.0
        %8927 = vmatpush1.msra.mxu0 0.0
        %8928 = vmatprep.mubr.f32.mxu0 0.0
        %v8929 = vand.u32 %v526, 4294901760
        %8930 = vmatmul.mubr.f32.gmra.mrb[0].mxu0 %v8929
        %v8931 = vpop.f32.mrb[0].mxu0
        %v8932 = vadd.f32 %v8831, %v8931
        %v8933 = vpop.f32.mrb[0].mxu0
        %8934 = vmatprep.mubr.f32.mxu0 0.0
        %v8935 = vand.u32 %v529, 4294901760
        %8936 = vmatmul.mubr.f32.gmra.mrb[0].mxu0 %v8935
        %v8937 = vpop.f32.mrb[0].mxu0
        %v8938 = vadd.f32 %v8839, %v8937
        %v8939 = vpop.f32.mrb[0].mxu0
        %8940 = vmatprep.mubr.f32.mxu0 0.0
        %v8941 = vand.u32 %v532, 4294901760
        %8942 = vmatmul.mubr.f32.gmra.mrb[0].mxu0 %v8941
        %v8943 = vpop.f32.mrb[0].mxu0
        %v8944 = vadd.f32 %v8847, %v8943
        %v8945 = vpop.f32.mrb[0].mxu0
        %8946 = vmatprep.mubr.f32.mxu0 0.0
        %v8947 = vand.u32 %v535, 4294901760
        %8948 = vmatmul.mubr.f32.gmra.mrb[0].mxu0 %v8947
        %v8949 = vpop.f32.mrb[0].mxu0
        %v8950 = vadd.f32 %v8855, %v8949
        %v8951 = vpop.f32.mrb[0].mxu0
        %8952 = vdwg.mxu0
        %8953 = vmatprep.subr.mxu0 0.0
        %v8954 = vand.u32 %v8454, 4294901760
        %8955 = vmatpush1.msra.mxu0 %v8954
        %8956 = vmatprep.subr.mxu0 0.0
        %v8957 = vand.u32 %v8455, 4294901760
        %8958 = vmatpush1.msra.mxu0 %v8957
        %8959 = vmatprep.subr.mxu0 0.0
        %8960 = vmatpush1.msra.mxu0 0.0
        %8961 = vmatprep.subr.mxu0 0.0
        %8962 = vmatpush1.msra.mxu0 0.0
        %8963 = vmatprep.subr.mxu0 0.0
        %8964 = vmatpush1.msra.mxu0 0.0
        %8965 = vmatprep.subr.mxu0 0.0
        %8966 = vmatpush1.msra.mxu0 0.0
        %8967 = vmatprep.subr.mxu0 0.0
        %8968 = vmatpush1.msra.mxu0 0.0
        %8969 = vmatprep.subr.mxu0 0.0
        %8970 = vmatpush1.msra.mxu0 0.0
        %8971 = vmatprep.subr.mxu0 0.0
        %8972 = vmatpush1.msra.mxu0 0.0
        %8973 = vmatprep.subr.mxu0 0.0
        %8974 = vmatpush1.msra.mxu0 0.0
        %8975 = vmatprep.subr.mxu0 0.0
        %8976 = vmatpush1.msra.mxu0 0.0
        %8977 = vmatprep.subr.mxu0 0.0
        %8978 = vmatpush1.msra.mxu0 0.0
        %8979 = vmatprep.subr.mxu0 0.0
        %8980 = vmatpush1.msra.mxu0 0.0
        %8981 = vmatprep.subr.mxu0 0.0
        %8982 = vmatpush1.msra.mxu0 0.0
        %8983 = vmatprep.subr.mxu0 0.0
        %8984 = vmatpush1.msra.mxu0 0.0
        %8985 = vmatprep.subr.mxu0 0.0
        %8986 = vmatpush1.msra.mxu0 0.0
        %8987 = vmatprep.subr.mxu0 0.0
        %8988 = vmatpush1.msra.mxu0 0.0
        %8989 = vmatprep.subr.mxu0 0.0
        %8990 = vmatpush1.msra.mxu0 0.0
        %8991 = vmatprep.subr.mxu0 0.0
        %8992 = vmatpush1.msra.mxu0 0.0
        %8993 = vmatprep.subr.mxu0 0.0
        %8994 = vmatpush1.msra.mxu0 0.0
        %8995 = vmatprep.subr.mxu0 0.0
        %8996 = vmatpush1.msra.mxu0 0.0
        %8997 = vmatprep.subr.mxu0 0.0
        %8998 = vmatpush1.msra.mxu0 0.0
        %8999 = vmatprep.subr.mxu0 0.0
        %9000 = vmatpush1.msra.mxu0 0.0
        %9001 = vmatprep.subr.mxu0 0.0
        %9002 = vmatpush1.msra.mxu0 0.0
        %9003 = vmatprep.subr.mxu0 0.0
        %9004 = vmatpush1.msra.mxu0 0.0
        %9005 = vmatprep.subr.mxu0 0.0
        %9006 = vmatpush1.msra.mxu0 0.0
        %9007 = vmatprep.subr.mxu0 0.0
        %9008 = vmatpush1.msra.mxu0 0.0
        %9009 = vmatprep.subr.mxu0 0.0
        %9010 = vmatpush1.msra.mxu0 0.0
        %9011 = vmatprep.subr.mxu0 0.0
        %9012 = vmatpush1.msra.mxu0 0.0
        %9013 = vmatprep.subr.mxu0 0.0
        %9014 = vmatpush1.msra.mxu0 0.0
        %9015 = vmatprep.subr.mxu0 0.0
        %9016 = vmatpush1.msra.mxu0 0.0
        %9017 = vmatprep.subr.mxu0 0.0
        %9018 = vmatpush1.msra.mxu0 0.0
        %9019 = vmatprep.mubr.f32.mxu0 0.0
        %v9020 = vand.u32 %v526, 4294901760
        %9021 = vmatmul.mubr.f32.gmra.mrb[0].mxu0 %v9020
        %v9022 = vpop.f32.mrb[0].mxu0
        %v9023 = vadd.f32 %v8932, %v9022
        %v9024 = vpop.f32.mrb[0].mxu0
        %9025 = vmatprep.mubr.f32.mxu0 0.0
        %v9026 = vand.u32 %v529, 4294901760
        %9027 = vmatmul.mubr.f32.gmra.mrb[0].mxu0 %v9026
        %v9028 = vpop.f32.mrb[0].mxu0
        %v9029 = vadd.f32 %v8938, %v9028
        %v9030 = vpop.f32.mrb[0].mxu0
        %9031 = vmatprep.mubr.f32.mxu0 0.0
        %v9032 = vand.u32 %v532, 4294901760
        %9033 = vmatmul.mubr.f32.gmra.mrb[0].mxu0 %v9032
        %v9034 = vpop.f32.mrb[0].mxu0
        %v9035 = vadd.f32 %v8944, %v9034
        %v9036 = vpop.f32.mrb[0].mxu0
        %9037 = vmatprep.mubr.f32.mxu0 0.0
        %v9038 = vand.u32 %v535, 4294901760
        %9039 = vmatmul.mubr.f32.gmra.mrb[0].mxu0 %v9038
        %v9040 = vpop.f32.mrb[0].mxu0
        %v9041 = vadd.f32 %v8950, %v9040
        %v9042 = vpop.f32.mrb[0].mxu0
        %9043 = vdwg.mxu0
        %9044 = vmatprep.subr.mxu0 0.0
        %v9045 = vand.u32 %v8450, 4294901760
        %9046 = vmatpush1.msra.mxu0 %v9045
        %9047 = vmatprep.subr.mxu0 0.0
        %v9048 = vand.u32 %v8451, 4294901760
        %9049 = vmatpush1.msra.mxu0 %v9048
        %9050 = vmatprep.subr.mxu0 0.0
        %v9051 = vand.u32 %v8452, 4294901760
        %9052 = vmatpush1.msra.mxu0 %v9051
        %9053 = vmatprep.subr.mxu0 0.0
        %v9054 = vand.u32 %v8453, 4294901760
        %9055 = vmatpush1.msra.mxu0 %v9054
        %9056 = vmatprep.subr.mxu0 0.0
        %9057 = vmatpush1.msra.mxu0 0.0
        %9058 = vmatprep.subr.mxu0 0.0
        %9059 = vmatpush1.msra.mxu0 0.0
        %9060 = vmatprep.subr.mxu0 0.0
        %9061 = vmatpush1.msra.mxu0 0.0
        %9062 = vmatprep.subr.mxu0 0.0
        %9063 = vmatpush1.msra.mxu0 0.0
        %9064 = vmatprep.subr.mxu0 0.0
        %9065 = vmatpush1.msra.mxu0 0.0
        %9066 = vmatprep.subr.mxu0 0.0
        %9067 = vmatpush1.msra.mxu0 0.0
        %9068 = vmatprep.subr.mxu0 0.0
        %9069 = vmatpush1.msra.mxu0 0.0
        %9070 = vmatprep.subr.mxu0 0.0
        %9071 = vmatpush1.msra.mxu0 0.0
        %9072 = vmatprep.subr.mxu0 0.0
        %9073 = vmatpush1.msra.mxu0 0.0
        %9074 = vmatprep.subr.mxu0 0.0
        %9075 = vmatpush1.msra.mxu0 0.0
        %9076 = vmatprep.subr.mxu0 0.0
        %9077 = vmatpush1.msra.mxu0 0.0
        %9078 = vmatprep.subr.mxu0 0.0
        %9079 = vmatpush1.msra.mxu0 0.0
        %9080 = vmatprep.subr.mxu0 0.0
        %9081 = vmatpush1.msra.mxu0 0.0
        %9082 = vmatprep.subr.mxu0 0.0
        %9083 = vmatpush1.msra.mxu0 0.0
        %9084 = vmatprep.subr.mxu0 0.0
        %9085 = vmatpush1.msra.mxu0 0.0
        %9086 = vmatprep.subr.mxu0 0.0
        %9087 = vmatpush1.msra.mxu0 0.0
        %9088 = vmatprep.subr.mxu0 0.0
        %9089 = vmatpush1.msra.mxu0 0.0
        %9090 = vmatprep.subr.mxu0 0.0
        %9091 = vmatpush1.msra.mxu0 0.0
        %9092 = vmatprep.subr.mxu0 0.0
        %9093 = vmatpush1.msra.mxu0 0.0
        %9094 = vmatprep.subr.mxu0 0.0
        %9095 = vmatpush1.msra.mxu0 0.0
        %9096 = vmatprep.subr.mxu0 0.0
        %9097 = vmatpush1.msra.mxu0 0.0
        %9098 = vmatprep.subr.mxu0 0.0
        %9099 = vmatpush1.msra.mxu0 0.0
        %9100 = vmatprep.subr.mxu0 0.0
        %9101 = vmatpush1.msra.mxu0 0.0
        %9102 = vmatprep.subr.mxu0 0.0
        %9103 = vmatpush1.msra.mxu0 0.0
        %9104 = vmatprep.subr.mxu0 0.0
        %9105 = vmatpush1.msra.mxu0 0.0
        %9106 = vmatprep.subr.mxu0 0.0
        %9107 = vmatpush1.msra.mxu0 0.0
        %9108 = vmatprep.subr.mxu0 0.0
        %9109 = vmatpush1.msra.mxu0 0.0
        %9110 = vmatprep.subr.mxu0 0.0
        %9111 = vmatpush1.msra.mxu0 0.0
        %9112 = vmatprep.mubr.f32.mxu0 0.0
        %v9113 = vand.u32 %v1127, 4294901760
        %v9114 = vsub.f32 %v1127, %v9113
        %v9115 = vand.u32 %v9114, 4294901760
        %v9116 = vsub.f32 %v9114, %v9115
        %v9117 = vand.u32 %v9116, 4294901760
        %9118 = vmatmul.mubr.f32.gmra.mrb[0].mxu0 %v9117
        %v9119 = vpop.f32.mrb[0].mxu0
        %v9120 = vadd.f32 %v9023, %v9119
        %v9121 = vpop.f32.mrb[0].mxu0
        %9122 = vmatprep.mubr.f32.mxu0 0.0
        %v9123 = vand.u32 %v1130, 4294901760
        %v9124 = vsub.f32 %v1130, %v9123
        %v9125 = vand.u32 %v9124, 4294901760
        %v9126 = vsub.f32 %v9124, %v9125
        %v9127 = vand.u32 %v9126, 4294901760
        %9128 = vmatmul.mubr.f32.gmra.mrb[0].mxu0 %v9127
        %v9129 = vpop.f32.mrb[0].mxu0
        %v9130 = vadd.f32 %v9029, %v9129
        %v9131 = vpop.f32.mrb[0].mxu0
        %9132 = vmatprep.mubr.f32.mxu0 0.0
        %v9133 = vand.u32 %v1133, 4294901760
        %v9134 = vsub.f32 %v1133, %v9133
        %v9135 = vand.u32 %v9134, 4294901760
        %v9136 = vsub.f32 %v9134, %v9135
        %v9137 = vand.u32 %v9136, 4294901760
        %9138 = vmatmul.mubr.f32.gmra.mrb[0].mxu0 %v9137
        %v9139 = vpop.f32.mrb[0].mxu0
        %v9140 = vadd.f32 %v9035, %v9139
        %v9141 = vpop.f32.mrb[0].mxu0
        %9142 = vmatprep.mubr.f32.mxu0 0.0
        %v9143 = vand.u32 %v1136, 4294901760
        %v9144 = vsub.f32 %v1136, %v9143
        %v9145 = vand.u32 %v9144, 4294901760
        %v9146 = vsub.f32 %v9144, %v9145
        %v9147 = vand.u32 %v9146, 4294901760
        %9148 = vmatmul.mubr.f32.gmra.mrb[0].mxu0 %v9147
        %v9149 = vpop.f32.mrb[0].mxu0
        %v9150 = vadd.f32 %v9041, %v9149
        %v9151 = vpop.f32.mrb[0].mxu0
        %9152 = vdwg.mxu0
        %9153 = vmatprep.subr.mxu0 0.0
        %v9154 = vand.u32 %v8450, 4294901760
        %v9155 = vsub.f32 %v8450, %v9154
        %v9156 = vand.u32 %v9155, 4294901760
        %v9157 = vsub.f32 %v9155, %v9156
        %v9158 = vand.u32 %v9157, 4294901760
        %9159 = vmatpush1.msra.mxu0 %v9158
        %9160 = vmatprep.subr.mxu0 0.0
        %v9161 = vand.u32 %v8451, 4294901760
        %v9162 = vsub.f32 %v8451, %v9161
        %v9163 = vand.u32 %v9162, 4294901760
        %v9164 = vsub.f32 %v9162, %v9163
        %v9165 = vand.u32 %v9164, 4294901760
        %9166 = vmatpush1.msra.mxu0 %v9165
        %9167 = vmatprep.subr.mxu0 0.0
        %v9168 = vand.u32 %v8452, 4294901760
        %v9169 = vsub.f32 %v8452, %v9168
        %v9170 = vand.u32 %v9169, 4294901760
        %v9171 = vsub.f32 %v9169, %v9170
        %v9172 = vand.u32 %v9171, 4294901760
        %9173 = vmatpush1.msra.mxu0 %v9172
        %9174 = vmatprep.subr.mxu0 0.0
        %v9175 = vand.u32 %v8453, 4294901760
        %v9176 = vsub.f32 %v8453, %v9175
        %v9177 = vand.u32 %v9176, 4294901760
        %v9178 = vsub.f32 %v9176, %v9177
        %v9179 = vand.u32 %v9178, 4294901760
        %9180 = vmatpush1.msra.mxu0 %v9179
        %9181 = vmatprep.subr.mxu0 0.0
        %9182 = vmatpush1.msra.mxu0 0.0
        %9183 = vmatprep.subr.mxu0 0.0
        %9184 = vmatpush1.msra.mxu0 0.0
        %9185 = vmatprep.subr.mxu0 0.0
        %9186 = vmatpush1.msra.mxu0 0.0
        %9187 = vmatprep.subr.mxu0 0.0
        %9188 = vmatpush1.msra.mxu0 0.0
        %9189 = vmatprep.subr.mxu0 0.0
        %9190 = vmatpush1.msra.mxu0 0.0
        %9191 = vmatprep.subr.mxu0 0.0
        %9192 = vmatpush1.msra.mxu0 0.0
        %9193 = vmatprep.subr.mxu0 0.0
        %9194 = vmatpush1.msra.mxu0 0.0
        %9195 = vmatprep.subr.mxu0 0.0
        %9196 = vmatpush1.msra.mxu0 0.0
        %9197 = vmatprep.subr.mxu0 0.0
        %9198 = vmatpush1.msra.mxu0 0.0
        %9199 = vmatprep.subr.mxu0 0.0
        %9200 = vmatpush1.msra.mxu0 0.0
        %9201 = vmatprep.subr.mxu0 0.0
        %9202 = vmatpush1.msra.mxu0 0.0
        %9203 = vmatprep.subr.mxu0 0.0
        %9204 = vmatpush1.msra.mxu0 0.0
        %9205 = vmatprep.subr.mxu0 0.0
        %9206 = vmatpush1.msra.mxu0 0.0
        %9207 = vmatprep.subr.mxu0 0.0
        %9208 = vmatpush1.msra.mxu0 0.0
        %9209 = vmatprep.subr.mxu0 0.0
        %9210 = vmatpush1.msra.mxu0 0.0
        %9211 = vmatprep.subr.mxu0 0.0
        %9212 = vmatpush1.msra.mxu0 0.0
        %9213 = vmatprep.subr.mxu0 0.0
        %9214 = vmatpush1.msra.mxu0 0.0
        %9215 = vmatprep.subr.mxu0 0.0
        %9216 = vmatpush1.msra.mxu0 0.0
        %9217 = vmatprep.subr.mxu0 0.0
        %9218 = vmatpush1.msra.mxu0 0.0
        %9219 = vmatprep.subr.mxu0 0.0
        %9220 = vmatpush1.msra.mxu0 0.0
        %9221 = vmatprep.subr.mxu0 0.0
        %9222 = vmatpush1.msra.mxu0 0.0
        %9223 = vmatprep.subr.mxu0 0.0
        %9224 = vmatpush1.msra.mxu0 0.0
        %9225 = vmatprep.subr.mxu0 0.0
        %9226 = vmatpush1.msra.mxu0 0.0
        %9227 = vmatprep.subr.mxu0 0.0
        %9228 = vmatpush1.msra.mxu0 0.0
        %9229 = vmatprep.subr.mxu0 0.0
        %9230 = vmatpush1.msra.mxu0 0.0
        %9231 = vmatprep.subr.mxu0 0.0
        %9232 = vmatpush1.msra.mxu0 0.0
        %9233 = vmatprep.subr.mxu0 0.0
        %9234 = vmatpush1.msra.mxu0 0.0
        %9235 = vmatprep.subr.mxu0 0.0
        %9236 = vmatpush1.msra.mxu0 0.0
        %9237 = vmatprep.mubr.f32.mxu0 0.0
        %v9238 = vand.u32 %v1127, 4294901760
        %9239 = vmatmul.mubr.f32.gmra.mrb[0].mxu0 %v9238
        %v9240 = vpop.f32.mrb[0].mxu0
        %v9241 = vadd.f32 %v9120, %v9240
        %v9242 = vpop.f32.mrb[0].mxu0
        %9243 = vmatprep.mubr.f32.mxu0 0.0
        %v9244 = vand.u32 %v1130, 4294901760
        %9245 = vmatmul.mubr.f32.gmra.mrb[0].mxu0 %v9244
        %v9246 = vpop.f32.mrb[0].mxu0
        %v9247 = vadd.f32 %v9130, %v9246
        %v9248 = vpop.f32.mrb[0].mxu0
        %9249 = vmatprep.mubr.f32.mxu0 0.0
        %v9250 = vand.u32 %v1133, 4294901760
        %9251 = vmatmul.mubr.f32.gmra.mrb[0].mxu0 %v9250
        %v9252 = vpop.f32.mrb[0].mxu0
        %v9253 = vadd.f32 %v9140, %v9252
        %v9254 = vpop.f32.mrb[0].mxu0
        %9255 = vmatprep.mubr.f32.mxu0 0.0
        %v9256 = vand.u32 %v1136, 4294901760
        %9257 = vmatmul.mubr.f32.gmra.mrb[0].mxu0 %v9256
        %v9258 = vpop.f32.mrb[0].mxu0
        %v9259 = vadd.f32 %v9150, %v9258
        %v9260 = vpop.f32.mrb[0].mxu0
        %9261 = vdwg.mxu0
        %9262 = vmatprep.subr.mxu0 0.0
        %v9263 = vand.u32 %v8450, 4294901760
        %v9264 = vsub.f32 %v8450, %v9263
        %9265 = vmatpush1.msra.mxu0 %v9264
        %9266 = vmatprep.subr.mxu0 0.0
        %v9267 = vand.u32 %v8451, 4294901760
        %v9268 = vsub.f32 %v8451, %v9267
        %9269 = vmatpush1.msra.mxu0 %v9268
        %9270 = vmatprep.subr.mxu0 0.0
        %v9271 = vand.u32 %v8452, 4294901760
        %v9272 = vsub.f32 %v8452, %v9271
        %9273 = vmatpush1.msra.mxu0 %v9272
        %9274 = vmatprep.subr.mxu0 0.0
        %v9275 = vand.u32 %v8453, 4294901760
        %v9276 = vsub.f32 %v8453, %v9275
        %9277 = vmatpush1.msra.mxu0 %v9276
        %9278 = vmatprep.subr.mxu0 0.0
        %9279 = vmatpush1.msra.mxu0 0.0
        %9280 = vmatprep.subr.mxu0 0.0
        %9281 = vmatpush1.msra.mxu0 0.0
        %9282 = vmatprep.subr.mxu0 0.0
        %9283 = vmatpush1.msra.mxu0 0.0
        %9284 = vmatprep.subr.mxu0 0.0
        %9285 = vmatpush1.msra.mxu0 0.0
        %9286 = vmatprep.subr.mxu0 0.0
        %9287 = vmatpush1.msra.mxu0 0.0
        %9288 = vmatprep.subr.mxu0 0.0
        %9289 = vmatpush1.msra.mxu0 0.0
        %9290 = vmatprep.subr.mxu0 0.0
        %9291 = vmatpush1.msra.mxu0 0.0
        %9292 = vmatprep.subr.mxu0 0.0
        %9293 = vmatpush1.msra.mxu0 0.0
        %9294 = vmatprep.subr.mxu0 0.0
        %9295 = vmatpush1.msra.mxu0 0.0
        %9296 = vmatprep.subr.mxu0 0.0
        %9297 = vmatpush1.msra.mxu0 0.0
        %9298 = vmatprep.subr.mxu0 0.0
        %9299 = vmatpush1.msra.mxu0 0.0
        %9300 = vmatprep.subr.mxu0 0.0
        %9301 = vmatpush1.msra.mxu0 0.0
        %9302 = vmatprep.subr.mxu0 0.0
        %9303 = vmatpush1.msra.mxu0 0.0
        %9304 = vmatprep.subr.mxu0 0.0
        %9305 = vmatpush1.msra.mxu0 0.0
        %9306 = vmatprep.subr.mxu0 0.0
        %9307 = vmatpush1.msra.mxu0 0.0
        %9308 = vmatprep.subr.mxu0 0.0
        %9309 = vmatpush1.msra.mxu0 0.0
        %9310 = vmatprep.subr.mxu0 0.0
        %9311 = vmatpush1.msra.mxu0 0.0
        %9312 = vmatprep.subr.mxu0 0.0
        %9313 = vmatpush1.msra.mxu0 0.0
        %9314 = vmatprep.subr.mxu0 0.0
        %9315 = vmatpush1.msra.mxu0 0.0
        %9316 = vmatprep.subr.mxu0 0.0
        %9317 = vmatpush1.msra.mxu0 0.0
        %9318 = vmatprep.subr.mxu0 0.0
        %9319 = vmatpush1.msra.mxu0 0.0
        %9320 = vmatprep.subr.mxu0 0.0
        %9321 = vmatpush1.msra.mxu0 0.0
        %9322 = vmatprep.subr.mxu0 0.0
        %9323 = vmatpush1.msra.mxu0 0.0
        %9324 = vmatprep.subr.mxu0 0.0
        %9325 = vmatpush1.msra.mxu0 0.0
        %9326 = vmatprep.subr.mxu0 0.0
        %9327 = vmatpush1.msra.mxu0 0.0
        %9328 = vmatprep.subr.mxu0 0.0
        %9329 = vmatpush1.msra.mxu0 0.0
        %9330 = vmatprep.subr.mxu0 0.0
        %9331 = vmatpush1.msra.mxu0 0.0
        %9332 = vmatprep.subr.mxu0 0.0
        %9333 = vmatpush1.msra.mxu0 0.0
        %9334 = vmatprep.mubr.f32.mxu0 0.0
        %v9335 = vand.u32 %v1127, 4294901760
        %v9336 = vsub.f32 %v1127, %v9335
        %9337 = vmatmul.mubr.f32.gmra.mrb[0].mxu0 %v9336
        %v9338 = vpop.f32.mrb[0].mxu0
        %v9339 = vadd.f32 %v9241, %v9338
        %v9340 = vpop.f32.mrb[0].mxu0
        %9341 = vmatprep.mubr.f32.mxu0 0.0
        %v9342 = vand.u32 %v1130, 4294901760
        %v9343 = vsub.f32 %v1130, %v9342
        %9344 = vmatmul.mubr.f32.gmra.mrb[0].mxu0 %v9343
        %v9345 = vpop.f32.mrb[0].mxu0
        %v9346 = vadd.f32 %v9247, %v9345
        %v9347 = vpop.f32.mrb[0].mxu0
        %9348 = vmatprep.mubr.f32.mxu0 0.0
        %v9349 = vand.u32 %v1133, 4294901760
        %v9350 = vsub.f32 %v1133, %v9349
        %9351 = vmatmul.mubr.f32.gmra.mrb[0].mxu0 %v9350
        %v9352 = vpop.f32.mrb[0].mxu0
        %v9353 = vadd.f32 %v9253, %v9352
        %v9354 = vpop.f32.mrb[0].mxu0
        %9355 = vmatprep.mubr.f32.mxu0 0.0
        %v9356 = vand.u32 %v1136, 4294901760
        %v9357 = vsub.f32 %v1136, %v9356
        %9358 = vmatmul.mubr.f32.gmra.mrb[0].mxu0 %v9357
        %v9359 = vpop.f32.mrb[0].mxu0
        %v9360 = vadd.f32 %v9259, %v9359
        %v9361 = vpop.f32.mrb[0].mxu0
        %9362 = vdwg.mxu0
        %9363 = vmatprep.subr.mxu0 0.0
        %v9364 = vand.u32 %v8450, 4294901760
        %9365 = vmatpush1.msra.mxu0 %v9364
        %9366 = vmatprep.subr.mxu0 0.0
        %v9367 = vand.u32 %v8451, 4294901760
        %9368 = vmatpush1.msra.mxu0 %v9367
        %9369 = vmatprep.subr.mxu0 0.0
        %v9370 = vand.u32 %v8452, 4294901760
        %9371 = vmatpush1.msra.mxu0 %v9370
        %9372 = vmatprep.subr.mxu0 0.0
        %v9373 = vand.u32 %v8453, 4294901760
        %9374 = vmatpush1.msra.mxu0 %v9373
        %9375 = vmatprep.subr.mxu0 0.0
        %9376 = vmatpush1.msra.mxu0 0.0
        %9377 = vmatprep.subr.mxu0 0.0
        %9378 = vmatpush1.msra.mxu0 0.0
        %9379 = vmatprep.subr.mxu0 0.0
        %9380 = vmatpush1.msra.mxu0 0.0
        %9381 = vmatprep.subr.mxu0 0.0
        %9382 = vmatpush1.msra.mxu0 0.0
        %9383 = vmatprep.subr.mxu0 0.0
        %9384 = vmatpush1.msra.mxu0 0.0
        %9385 = vmatprep.subr.mxu0 0.0
        %9386 = vmatpush1.msra.mxu0 0.0
        %9387 = vmatprep.subr.mxu0 0.0
        %9388 = vmatpush1.msra.mxu0 0.0
        %9389 = vmatprep.subr.mxu0 0.0
        %9390 = vmatpush1.msra.mxu0 0.0
        %9391 = vmatprep.subr.mxu0 0.0
        %9392 = vmatpush1.msra.mxu0 0.0
        %9393 = vmatprep.subr.mxu0 0.0
        %9394 = vmatpush1.msra.mxu0 0.0
        %9395 = vmatprep.subr.mxu0 0.0
        %9396 = vmatpush1.msra.mxu0 0.0
        %9397 = vmatprep.subr.mxu0 0.0
        %9398 = vmatpush1.msra.mxu0 0.0
        %9399 = vmatprep.subr.mxu0 0.0
        %9400 = vmatpush1.msra.mxu0 0.0
        %9401 = vmatprep.subr.mxu0 0.0
        %9402 = vmatpush1.msra.mxu0 0.0
        %9403 = vmatprep.subr.mxu0 0.0
        %9404 = vmatpush1.msra.mxu0 0.0
        %9405 = vmatprep.subr.mxu0 0.0
        %9406 = vmatpush1.msra.mxu0 0.0
        %9407 = vmatprep.subr.mxu0 0.0
        %9408 = vmatpush1.msra.mxu0 0.0
        %9409 = vmatprep.subr.mxu0 0.0
        %9410 = vmatpush1.msra.mxu0 0.0
        %9411 = vmatprep.subr.mxu0 0.0
        %9412 = vmatpush1.msra.mxu0 0.0
        %9413 = vmatprep.subr.mxu0 0.0
        %9414 = vmatpush1.msra.mxu0 0.0
        %9415 = vmatprep.subr.mxu0 0.0
        %9416 = vmatpush1.msra.mxu0 0.0
        %9417 = vmatprep.subr.mxu0 0.0
        %9418 = vmatpush1.msra.mxu0 0.0
        %9419 = vmatprep.subr.mxu0 0.0
        %9420 = vmatpush1.msra.mxu0 0.0
        %9421 = vmatprep.subr.mxu0 0.0
        %9422 = vmatpush1.msra.mxu0 0.0
        %9423 = vmatprep.subr.mxu0 0.0
        %9424 = vmatpush1.msra.mxu0 0.0
        %9425 = vmatprep.subr.mxu0 0.0
        %9426 = vmatpush1.msra.mxu0 0.0
        %9427 = vmatprep.subr.mxu0 0.0
        %9428 = vmatpush1.msra.mxu0 0.0
        %9429 = vmatprep.subr.mxu0 0.0
        %9430 = vmatpush1.msra.mxu0 0.0
        %9431 = vmatprep.mubr.f32.mxu0 0.0
        %v9432 = vand.u32 %v1127, 4294901760
        %v9433 = vsub.f32 %v1127, %v9432
        %v9434 = vand.u32 %v9433, 4294901760
        %9435 = vmatmul.mubr.f32.gmra.mrb[0].mxu0 %v9434
        %v9436 = vpop.f32.mrb[0].mxu0
        %v9437 = vadd.f32 %v9339, %v9436
        %v9438 = vpop.f32.mrb[0].mxu0
        %9439 = vmatprep.mubr.f32.mxu0 0.0
        %v9440 = vand.u32 %v1130, 4294901760
        %v9441 = vsub.f32 %v1130, %v9440
        %v9442 = vand.u32 %v9441, 4294901760
        %9443 = vmatmul.mubr.f32.gmra.mrb[0].mxu0 %v9442
        %v9444 = vpop.f32.mrb[0].mxu0
        %v9445 = vadd.f32 %v9346, %v9444
        %v9446 = vpop.f32.mrb[0].mxu0
        %9447 = vmatprep.mubr.f32.mxu0 0.0
        %v9448 = vand.u32 %v1133, 4294901760
        %v9449 = vsub.f32 %v1133, %v9448
        %v9450 = vand.u32 %v9449, 4294901760
        %9451 = vmatmul.mubr.f32.gmra.mrb[0].mxu0 %v9450
        %v9452 = vpop.f32.mrb[0].mxu0
        %v9453 = vadd.f32 %v9353, %v9452
        %v9454 = vpop.f32.mrb[0].mxu0
        %9455 = vmatprep.mubr.f32.mxu0 0.0
        %v9456 = vand.u32 %v1136, 4294901760
        %v9457 = vsub.f32 %v1136, %v9456
        %v9458 = vand.u32 %v9457, 4294901760
        %9459 = vmatmul.mubr.f32.gmra.mrb[0].mxu0 %v9458
        %v9460 = vpop.f32.mrb[0].mxu0
        %v9461 = vadd.f32 %v9360, %v9460
        %v9462 = vpop.f32.mrb[0].mxu0
        %9463 = vdwg.mxu0
        %9464 = vmatprep.subr.mxu0 0.0
        %v9465 = vand.u32 %v8450, 4294901760
        %v9466 = vsub.f32 %v8450, %v9465
        %v9467 = vand.u32 %v9466, 4294901760
        %9468 = vmatpush1.msra.mxu0 %v9467
        %9469 = vmatprep.subr.mxu0 0.0
        %v9470 = vand.u32 %v8451, 4294901760
        %v9471 = vsub.f32 %v8451, %v9470
        %v9472 = vand.u32 %v9471, 4294901760
        %9473 = vmatpush1.msra.mxu0 %v9472
        %9474 = vmatprep.subr.mxu0 0.0
        %v9475 = vand.u32 %v8452, 4294901760
        %v9476 = vsub.f32 %v8452, %v9475
        %v9477 = vand.u32 %v9476, 4294901760
        %9478 = vmatpush1.msra.mxu0 %v9477
        %9479 = vmatprep.subr.mxu0 0.0
        %v9480 = vand.u32 %v8453, 4294901760
        %v9481 = vsub.f32 %v8453, %v9480
        %v9482 = vand.u32 %v9481, 4294901760
        %9483 = vmatpush1.msra.mxu0 %v9482
        %9484 = vmatprep.subr.mxu0 0.0
        %9485 = vmatpush1.msra.mxu0 0.0
        %9486 = vmatprep.subr.mxu0 0.0
        %9487 = vmatpush1.msra.mxu0 0.0
        %9488 = vmatprep.subr.mxu0 0.0
        %9489 = vmatpush1.msra.mxu0 0.0
        %9490 = vmatprep.subr.mxu0 0.0
        %9491 = vmatpush1.msra.mxu0 0.0
        %9492 = vmatprep.subr.mxu0 0.0
        %9493 = vmatpush1.msra.mxu0 0.0
        %9494 = vmatprep.subr.mxu0 0.0
        %9495 = vmatpush1.msra.mxu0 0.0
        %9496 = vmatprep.subr.mxu0 0.0
        %9497 = vmatpush1.msra.mxu0 0.0
        %9498 = vmatprep.subr.mxu0 0.0
        %9499 = vmatpush1.msra.mxu0 0.0
        %9500 = vmatprep.subr.mxu0 0.0
        %9501 = vmatpush1.msra.mxu0 0.0
        %9502 = vmatprep.subr.mxu0 0.0
        %9503 = vmatpush1.msra.mxu0 0.0
        %9504 = vmatprep.subr.mxu0 0.0
        %9505 = vmatpush1.msra.mxu0 0.0
        %9506 = vmatprep.subr.mxu0 0.0
        %9507 = vmatpush1.msra.mxu0 0.0
        %9508 = vmatprep.subr.mxu0 0.0
        %9509 = vmatpush1.msra.mxu0 0.0
        %9510 = vmatprep.subr.mxu0 0.0
        %9511 = vmatpush1.msra.mxu0 0.0
        %9512 = vmatprep.subr.mxu0 0.0
        %9513 = vmatpush1.msra.mxu0 0.0
        %9514 = vmatprep.subr.mxu0 0.0
        %9515 = vmatpush1.msra.mxu0 0.0
        %9516 = vmatprep.subr.mxu0 0.0
        %9517 = vmatpush1.msra.mxu0 0.0
        %9518 = vmatprep.subr.mxu0 0.0
        %9519 = vmatpush1.msra.mxu0 0.0
        %9520 = vmatprep.subr.mxu0 0.0
        %9521 = vmatpush1.msra.mxu0 0.0
        %9522 = vmatprep.subr.mxu0 0.0
        %9523 = vmatpush1.msra.mxu0 0.0
        %9524 = vmatprep.subr.mxu0 0.0
        %9525 = vmatpush1.msra.mxu0 0.0
        %9526 = vmatprep.subr.mxu0 0.0
        %9527 = vmatpush1.msra.mxu0 0.0
        %9528 = vmatprep.subr.mxu0 0.0
        %9529 = vmatpush1.msra.mxu0 0.0
        %9530 = vmatprep.subr.mxu0 0.0
        %9531 = vmatpush1.msra.mxu0 0.0
        %9532 = vmatprep.subr.mxu0 0.0
        %9533 = vmatpush1.msra.mxu0 0.0
        %9534 = vmatprep.subr.mxu0 0.0
        %9535 = vmatpush1.msra.mxu0 0.0
        %9536 = vmatprep.subr.mxu0 0.0
        %9537 = vmatpush1.msra.mxu0 0.0
        %9538 = vmatprep.subr.mxu0 0.0
        %9539 = vmatpush1.msra.mxu0 0.0
        %9540 = vmatprep.mubr.f32.mxu0 0.0
        %v9541 = vand.u32 %v1127, 4294901760
        %9542 = vmatmul.mubr.f32.gmra.mrb[0].mxu0 %v9541
        %v9543 = vpop.f32.mrb[0].mxu0
        %v9544 = vadd.f32 %v9437, %v9543
        %v9545 = vpop.f32.mrb[0].mxu0
        %9546 = vmatprep.mubr.f32.mxu0 0.0
        %v9547 = vand.u32 %v1130, 4294901760
        %9548 = vmatmul.mubr.f32.gmra.mrb[0].mxu0 %v9547
        %v9549 = vpop.f32.mrb[0].mxu0
        %v9550 = vadd.f32 %v9445, %v9549
        %v9551 = vpop.f32.mrb[0].mxu0
        %9552 = vmatprep.mubr.f32.mxu0 0.0
        %v9553 = vand.u32 %v1133, 4294901760
        %9554 = vmatmul.mubr.f32.gmra.mrb[0].mxu0 %v9553
        %v9555 = vpop.f32.mrb[0].mxu0
        %v9556 = vadd.f32 %v9453, %v9555
        %v9557 = vpop.f32.mrb[0].mxu0
        %9558 = vmatprep.mubr.f32.mxu0 0.0
        %v9559 = vand.u32 %v1136, 4294901760
        %9560 = vmatmul.mubr.f32.gmra.mrb[0].mxu0 %v9559
        %v9561 = vpop.f32.mrb[0].mxu0
        %v9562 = vadd.f32 %v9461, %v9561
        %v9563 = vpop.f32.mrb[0].mxu0
        %9564 = vdwg.mxu0
        %9565 = vmatprep.subr.mxu0 0.0
        %v9566 = vand.u32 %v8450, 4294901760
        %9567 = vmatpush1.msra.mxu0 %v9566
        %9568 = vmatprep.subr.mxu0 0.0
        %v9569 = vand.u32 %v8451, 4294901760
        %9570 = vmatpush1.msra.mxu0 %v9569
        %9571 = vmatprep.subr.mxu0 0.0
        %v9572 = vand.u32 %v8452, 4294901760
        %9573 = vmatpush1.msra.mxu0 %v9572
        %9574 = vmatprep.subr.mxu0 0.0
        %v9575 = vand.u32 %v8453, 4294901760
        %9576 = vmatpush1.msra.mxu0 %v9575
        %9577 = vmatprep.subr.mxu0 0.0
        %9578 = vmatpush1.msra.mxu0 0.0
        %9579 = vmatprep.subr.mxu0 0.0
        %9580 = vmatpush1.msra.mxu0 0.0
        %9581 = vmatprep.subr.mxu0 0.0
        %9582 = vmatpush1.msra.mxu0 0.0
        %9583 = vmatprep.subr.mxu0 0.0
        %9584 = vmatpush1.msra.mxu0 0.0
        %9585 = vmatprep.subr.mxu0 0.0
        %9586 = vmatpush1.msra.mxu0 0.0
        %9587 = vmatprep.subr.mxu0 0.0
        %9588 = vmatpush1.msra.mxu0 0.0
        %9589 = vmatprep.subr.mxu0 0.0
        %9590 = vmatpush1.msra.mxu0 0.0
        %9591 = vmatprep.subr.mxu0 0.0
        %9592 = vmatpush1.msra.mxu0 0.0
        %9593 = vmatprep.subr.mxu0 0.0
        %9594 = vmatpush1.msra.mxu0 0.0
        %9595 = vmatprep.subr.mxu0 0.0
        %9596 = vmatpush1.msra.mxu0 0.0
        %9597 = vmatprep.subr.mxu0 0.0
        %9598 = vmatpush1.msra.mxu0 0.0
        %9599 = vmatprep.subr.mxu0 0.0
        %9600 = vmatpush1.msra.mxu0 0.0
        %9601 = vmatprep.subr.mxu0 0.0
        %9602 = vmatpush1.msra.mxu0 0.0
        %9603 = vmatprep.subr.mxu0 0.0
        %9604 = vmatpush1.msra.mxu0 0.0
        %9605 = vmatprep.subr.mxu0 0.0
        %9606 = vmatpush1.msra.mxu0 0.0
        %9607 = vmatprep.subr.mxu0 0.0
        %9608 = vmatpush1.msra.mxu0 0.0
        %9609 = vmatprep.subr.mxu0 0.0
        %9610 = vmatpush1.msra.mxu0 0.0
        %9611 = vmatprep.subr.mxu0 0.0
        %9612 = vmatpush1.msra.mxu0 0.0
        %9613 = vmatprep.subr.mxu0 0.0
        %9614 = vmatpush1.msra.mxu0 0.0
        %9615 = vmatprep.subr.mxu0 0.0
        %9616 = vmatpush1.msra.mxu0 0.0
        %9617 = vmatprep.subr.mxu0 0.0
        %9618 = vmatpush1.msra.mxu0 0.0
        %9619 = vmatprep.subr.mxu0 0.0
        %9620 = vmatpush1.msra.mxu0 0.0
        %9621 = vmatprep.subr.mxu0 0.0
        %9622 = vmatpush1.msra.mxu0 0.0
        %9623 = vmatprep.subr.mxu0 0.0
        %9624 = vmatpush1.msra.mxu0 0.0
        %9625 = vmatprep.subr.mxu0 0.0
        %9626 = vmatpush1.msra.mxu0 0.0
        %9627 = vmatprep.subr.mxu0 0.0
        %9628 = vmatpush1.msra.mxu0 0.0
        %9629 = vmatprep.subr.mxu0 0.0
        %9630 = vmatpush1.msra.mxu0 0.0
        %9631 = vmatprep.subr.mxu0 0.0
        %9632 = vmatpush1.msra.mxu0 0.0
        %9633 = vmatprep.mubr.f32.mxu0 0.0
        %v9634 = vand.u32 %v1127, 4294901760
        %9635 = vmatmul.mubr.f32.gmra.mrb[0].mxu0 %v9634
        %v9636 = vpop.f32.mrb[0].mxu0
        %v9637 = vadd.f32 %v9544, %v9636
        %v9638 = vpop.f32.mrb[0].mxu0
        %9639 = vmatprep.mubr.f32.mxu0 0.0
        %v9640 = vand.u32 %v1130, 4294901760
        %9641 = vmatmul.mubr.f32.gmra.mrb[0].mxu0 %v9640
        %v9642 = vpop.f32.mrb[0].mxu0
        %v9643 = vadd.f32 %v9550, %v9642
        %v9644 = vpop.f32.mrb[0].mxu0
        %9645 = vmatprep.mubr.f32.mxu0 0.0
        %v9646 = vand.u32 %v1133, 4294901760
        %9647 = vmatmul.mubr.f32.gmra.mrb[0].mxu0 %v9646
        %v9648 = vpop.f32.mrb[0].mxu0
        %v9649 = vadd.f32 %v9556, %v9648
        %v9650 = vpop.f32.mrb[0].mxu0
        %9651 = vmatprep.mubr.f32.mxu0 0.0
        %v9652 = vand.u32 %v1136, 4294901760
        %9653 = vmatmul.mubr.f32.gmra.mrb[0].mxu0 %v9652
        %v9654 = vpop.f32.mrb[0].mxu0
        %v9655 = vadd.f32 %v9562, %v9654
        %v9656 = vpop.f32.mrb[0].mxu0
        %9657 = vdwg.mxu0
        %9658 = vmatprep.subr.mxu0 0.0
        %v9659 = vand.u32 %v508, 4294901760
        %9660 = vmatpush1.msra.mxu0 %v9659
        %9661 = vmatprep.subr.mxu0 0.0
        %v9662 = vand.u32 %v509, 4294901760
        %9663 = vmatpush1.msra.mxu0 %v9662
        %9664 = vmatprep.subr.mxu0 0.0
        %v9665 = vand.u32 %v510, 4294901760
        %9666 = vmatpush1.msra.mxu0 %v9665
        %9667 = vmatprep.subr.mxu0 0.0
        %v9668 = vand.u32 %v511, 4294901760
        %9669 = vmatpush1.msra.mxu0 %v9668
        %9670 = vmatprep.subr.mxu0 0.0
        %v9671 = vand.u32 %v512, 4294901760
        %9672 = vmatpush1.msra.mxu0 %v9671
        %9673 = vmatprep.subr.mxu0 0.0
        %v9674 = vand.u32 %v513, 4294901760
        %9675 = vmatpush1.msra.mxu0 %v9674
        %9676 = vmatprep.subr.mxu0 0.0
        %v9677 = vand.u32 %v514, 4294901760
        %9678 = vmatpush1.msra.mxu0 %v9677
        %9679 = vmatprep.subr.mxu0 0.0
        %v9680 = vand.u32 %v515, 4294901760
        %9681 = vmatpush1.msra.mxu0 %v9680
        %9682 = vmatprep.subr.mxu0 0.0
        %v9683 = vand.u32 %v516, 4294901760
        %9684 = vmatpush1.msra.mxu0 %v9683
        %9685 = vmatprep.subr.mxu0 0.0
        %v9686 = vand.u32 %v517, 4294901760
        %9687 = vmatpush1.msra.mxu0 %v9686
        %9688 = vmatprep.subr.mxu0 0.0
        %v9689 = vand.u32 %v518, 4294901760
        %9690 = vmatpush1.msra.mxu0 %v9689
        %9691 = vmatprep.subr.mxu0 0.0
        %v9692 = vand.u32 %v519, 4294901760
        %9693 = vmatpush1.msra.mxu0 %v9692
        %9694 = vmatprep.subr.mxu0 0.0
        %v9695 = vand.u32 %v520, 4294901760
        %9696 = vmatpush1.msra.mxu0 %v9695
        %9697 = vmatprep.subr.mxu0 0.0
        %v9698 = vand.u32 %v521, 4294901760
        %9699 = vmatpush1.msra.mxu0 %v9698
        %9700 = vmatprep.subr.mxu0 0.0
        %v9701 = vand.u32 %v522, 4294901760
        %9702 = vmatpush1.msra.mxu0 %v9701
        %9703 = vmatprep.subr.mxu0 0.0
        %v9704 = vand.u32 %v523, 4294901760
        %9705 = vmatpush1.msra.mxu0 %v9704
        %9706 = vmatprep.subr.mxu0 0.0
        %9707 = vmatpush1.msra.mxu0 0.0
        %9708 = vmatprep.subr.mxu0 0.0
        %9709 = vmatpush1.msra.mxu0 0.0
        %9710 = vmatprep.subr.mxu0 0.0
        %9711 = vmatpush1.msra.mxu0 0.0
        %9712 = vmatprep.subr.mxu0 0.0
        %9713 = vmatpush1.msra.mxu0 0.0
        %9714 = vmatprep.subr.mxu0 0.0
        %9715 = vmatpush1.msra.mxu0 0.0
        %9716 = vmatprep.subr.mxu0 0.0
        %9717 = vmatpush1.msra.mxu0 0.0
        %9718 = vmatprep.subr.mxu0 0.0
        %9719 = vmatpush1.msra.mxu0 0.0
        %9720 = vmatprep.subr.mxu0 0.0
        %9721 = vmatpush1.msra.mxu0 0.0
        %9722 = vmatprep.subr.mxu0 0.0
        %9723 = vmatpush1.msra.mxu0 0.0
        %9724 = vmatprep.subr.mxu0 0.0
        %9725 = vmatpush1.msra.mxu0 0.0
        %9726 = vmatprep.subr.mxu0 0.0
        %9727 = vmatpush1.msra.mxu0 0.0
        %9728 = vmatprep.subr.mxu0 0.0
        %9729 = vmatpush1.msra.mxu0 0.0
        %9730 = vmatprep.subr.mxu0 0.0
        %9731 = vmatpush1.msra.mxu0 0.0
        %9732 = vmatprep.subr.mxu0 0.0
        %9733 = vmatpush1.msra.mxu0 0.0
        %9734 = vmatprep.subr.mxu0 0.0
        %9735 = vmatpush1.msra.mxu0 0.0
        %9736 = vmatprep.subr.mxu0 0.0
        %9737 = vmatpush1.msra.mxu0 0.0
        %9738 = vmatprep.mubr.f32.mxu0 0.0
        %v9739 = vand.u32 %v9637, 4294901760
        %v9740 = vsub.f32 %v9637, %v9739
        %v9741 = vand.u32 %v9740, 4294901760
        %v9742 = vsub.f32 %v9740, %v9741
        %v9743 = vand.u32 %v9742, 4294901760
        %9744 = vmatmul.mubr.f32.gmra.mrb[0].mxu0 %v9743
        %v9745 = vpop.f32.mrb[0].mxu0
        %v9746 = vadd.f32 0.0, %v9745
        %v9747 = vpop.f32.mrb[0].mxu0
        %9748 = vmatprep.mubr.f32.mxu0 0.0
        %v9749 = vand.u32 %v9643, 4294901760
        %v9750 = vsub.f32 %v9643, %v9749
        %v9751 = vand.u32 %v9750, 4294901760
        %v9752 = vsub.f32 %v9750, %v9751
        %v9753 = vand.u32 %v9752, 4294901760
        %9754 = vmatmul.mubr.f32.gmra.mrb[0].mxu0 %v9753
        %v9755 = vpop.f32.mrb[0].mxu0
        %v9756 = vadd.f32 0.0, %v9755
        %v9757 = vpop.f32.mrb[0].mxu0
        %9758 = vmatprep.mubr.f32.mxu0 0.0
        %v9759 = vand.u32 %v9649, 4294901760
        %v9760 = vsub.f32 %v9649, %v9759
        %v9761 = vand.u32 %v9760, 4294901760
        %v9762 = vsub.f32 %v9760, %v9761
        %v9763 = vand.u32 %v9762, 4294901760
        %9764 = vmatmul.mubr.f32.gmra.mrb[0].mxu0 %v9763
        %v9765 = vpop.f32.mrb[0].mxu0
        %v9766 = vadd.f32 0.0, %v9765
        %v9767 = vpop.f32.mrb[0].mxu0
        %9768 = vmatprep.mubr.f32.mxu0 0.0
        %v9769 = vand.u32 %v9655, 4294901760
        %v9770 = vsub.f32 %v9655, %v9769
        %v9771 = vand.u32 %v9770, 4294901760
        %v9772 = vsub.f32 %v9770, %v9771
        %v9773 = vand.u32 %v9772, 4294901760
        %9774 = vmatmul.mubr.f32.gmra.mrb[0].mxu0 %v9773
        %v9775 = vpop.f32.mrb[0].mxu0
        %v9776 = vadd.f32 0.0, %v9775
        %v9777 = vpop.f32.mrb[0].mxu0
        %9778 = vdwg.mxu0
        %9779 = vmatprep.subr.mxu0 0.0
        %v9780 = vand.u32 %v508, 4294901760
        %v9781 = vsub.f32 %v508, %v9780
        %v9782 = vand.u32 %v9781, 4294901760
        %v9783 = vsub.f32 %v9781, %v9782
        %v9784 = vand.u32 %v9783, 4294901760
        %9785 = vmatpush1.msra.mxu0 %v9784
        %9786 = vmatprep.subr.mxu0 0.0
        %v9787 = vand.u32 %v509, 4294901760
        %v9788 = vsub.f32 %v509, %v9787
        %v9789 = vand.u32 %v9788, 4294901760
        %v9790 = vsub.f32 %v9788, %v9789
        %v9791 = vand.u32 %v9790, 4294901760
        %9792 = vmatpush1.msra.mxu0 %v9791
        %9793 = vmatprep.subr.mxu0 0.0
        %v9794 = vand.u32 %v510, 4294901760
        %v9795 = vsub.f32 %v510, %v9794
        %v9796 = vand.u32 %v9795, 4294901760
        %v9797 = vsub.f32 %v9795, %v9796
        %v9798 = vand.u32 %v9797, 4294901760
        %9799 = vmatpush1.msra.mxu0 %v9798
        %9800 = vmatprep.subr.mxu0 0.0
        %v9801 = vand.u32 %v511, 4294901760
        %v9802 = vsub.f32 %v511, %v9801
        %v9803 = vand.u32 %v9802, 4294901760
        %v9804 = vsub.f32 %v9802, %v9803
        %v9805 = vand.u32 %v9804, 4294901760
        %9806 = vmatpush1.msra.mxu0 %v9805
        %9807 = vmatprep.subr.mxu0 0.0
        %v9808 = vand.u32 %v512, 4294901760
        %v9809 = vsub.f32 %v512, %v9808
        %v9810 = vand.u32 %v9809, 4294901760
        %v9811 = vsub.f32 %v9809, %v9810
        %v9812 = vand.u32 %v9811, 4294901760
        %9813 = vmatpush1.msra.mxu0 %v9812
        %9814 = vmatprep.subr.mxu0 0.0
        %v9815 = vand.u32 %v513, 4294901760
        %v9816 = vsub.f32 %v513, %v9815
        %v9817 = vand.u32 %v9816, 4294901760
        %v9818 = vsub.f32 %v9816, %v9817
        %v9819 = vand.u32 %v9818, 4294901760
        %9820 = vmatpush1.msra.mxu0 %v9819
        %9821 = vmatprep.subr.mxu0 0.0
        %v9822 = vand.u32 %v514, 4294901760
        %v9823 = vsub.f32 %v514, %v9822
        %v9824 = vand.u32 %v9823, 4294901760
        %v9825 = vsub.f32 %v9823, %v9824
        %v9826 = vand.u32 %v9825, 4294901760
        %9827 = vmatpush1.msra.mxu0 %v9826
        %9828 = vmatprep.subr.mxu0 0.0
        %v9829 = vand.u32 %v515, 4294901760
        %v9830 = vsub.f32 %v515, %v9829
        %v9831 = vand.u32 %v9830, 4294901760
        %v9832 = vsub.f32 %v9830, %v9831
        %v9833 = vand.u32 %v9832, 4294901760
        %9834 = vmatpush1.msra.mxu0 %v9833
        %9835 = vmatprep.subr.mxu0 0.0
        %v9836 = vand.u32 %v516, 4294901760
        %v9837 = vsub.f32 %v516, %v9836
        %v9838 = vand.u32 %v9837, 4294901760
        %v9839 = vsub.f32 %v9837, %v9838
        %v9840 = vand.u32 %v9839, 4294901760
        %9841 = vmatpush1.msra.mxu0 %v9840
        %9842 = vmatprep.subr.mxu0 0.0
        %v9843 = vand.u32 %v517, 4294901760
        %v9844 = vsub.f32 %v517, %v9843
        %v9845 = vand.u32 %v9844, 4294901760
        %v9846 = vsub.f32 %v9844, %v9845
        %v9847 = vand.u32 %v9846, 4294901760
        %9848 = vmatpush1.msra.mxu0 %v9847
        %9849 = vmatprep.subr.mxu0 0.0
        %v9850 = vand.u32 %v518, 4294901760
        %v9851 = vsub.f32 %v518, %v9850
        %v9852 = vand.u32 %v9851, 4294901760
        %v9853 = vsub.f32 %v9851, %v9852
        %v9854 = vand.u32 %v9853, 4294901760
        %9855 = vmatpush1.msra.mxu0 %v9854
        %9856 = vmatprep.subr.mxu0 0.0
        %v9857 = vand.u32 %v519, 4294901760
        %v9858 = vsub.f32 %v519, %v9857
        %v9859 = vand.u32 %v9858, 4294901760
        %v9860 = vsub.f32 %v9858, %v9859
        %v9861 = vand.u32 %v9860, 4294901760
        %9862 = vmatpush1.msra.mxu0 %v9861
        %9863 = vmatprep.subr.mxu0 0.0
        %v9864 = vand.u32 %v520, 4294901760
        %v9865 = vsub.f32 %v520, %v9864
        %v9866 = vand.u32 %v9865, 4294901760
        %v9867 = vsub.f32 %v9865, %v9866
        %v9868 = vand.u32 %v9867, 4294901760
        %9869 = vmatpush1.msra.mxu0 %v9868
        %9870 = vmatprep.subr.mxu0 0.0
        %v9871 = vand.u32 %v521, 4294901760
        %v9872 = vsub.f32 %v521, %v9871
        %v9873 = vand.u32 %v9872, 4294901760
        %v9874 = vsub.f32 %v9872, %v9873
        %v9875 = vand.u32 %v9874, 4294901760
        %9876 = vmatpush1.msra.mxu0 %v9875
        %9877 = vmatprep.subr.mxu0 0.0
        %v9878 = vand.u32 %v522, 4294901760
        %v9879 = vsub.f32 %v522, %v9878
        %v9880 = vand.u32 %v9879, 4294901760
        %v9881 = vsub.f32 %v9879, %v9880
        %v9882 = vand.u32 %v9881, 4294901760
        %9883 = vmatpush1.msra.mxu0 %v9882
        %9884 = vmatprep.subr.mxu0 0.0
        %v9885 = vand.u32 %v523, 4294901760
        %v9886 = vsub.f32 %v523, %v9885
        %v9887 = vand.u32 %v9886, 4294901760
        %v9888 = vsub.f32 %v9886, %v9887
        %v9889 = vand.u32 %v9888, 4294901760
        %9890 = vmatpush1.msra.mxu0 %v9889
        %9891 = vmatprep.subr.mxu0 0.0
        %9892 = vmatpush1.msra.mxu0 0.0
        %9893 = vmatprep.subr.mxu0 0.0
        %9894 = vmatpush1.msra.mxu0 0.0
        %9895 = vmatprep.subr.mxu0 0.0
        %9896 = vmatpush1.msra.mxu0 0.0
        %9897 = vmatprep.subr.mxu0 0.0
        %9898 = vmatpush1.msra.mxu0 0.0
        %9899 = vmatprep.subr.mxu0 0.0
        %9900 = vmatpush1.msra.mxu0 0.0
        %9901 = vmatprep.subr.mxu0 0.0
        %9902 = vmatpush1.msra.mxu0 0.0
        %9903 = vmatprep.subr.mxu0 0.0
        %9904 = vmatpush1.msra.mxu0 0.0
        %9905 = vmatprep.subr.mxu0 0.0
        %9906 = vmatpush1.msra.mxu0 0.0
        %9907 = vmatprep.subr.mxu0 0.0
        %9908 = vmatpush1.msra.mxu0 0.0
        %9909 = vmatprep.subr.mxu0 0.0
        %9910 = vmatpush1.msra.mxu0 0.0
        %9911 = vmatprep.subr.mxu0 0.0
        %9912 = vmatpush1.msra.mxu0 0.0
        %9913 = vmatprep.subr.mxu0 0.0
        %9914 = vmatpush1.msra.mxu0 0.0
        %9915 = vmatprep.subr.mxu0 0.0
        %9916 = vmatpush1.msra.mxu0 0.0
        %9917 = vmatprep.subr.mxu0 0.0
        %9918 = vmatpush1.msra.mxu0 0.0
        %9919 = vmatprep.subr.mxu0 0.0
        %9920 = vmatpush1.msra.mxu0 0.0
        %9921 = vmatprep.subr.mxu0 0.0
        %9922 = vmatpush1.msra.mxu0 0.0
        %9923 = vmatprep.mubr.f32.mxu0 0.0
        %v9924 = vand.u32 %v9637, 4294901760
        %9925 = vmatmul.mubr.f32.gmra.mrb[0].mxu0 %v9924
        %v9926 = vpop.f32.mrb[0].mxu0
        %v9927 = vadd.f32 %v9746, %v9926
        %v9928 = vpop.f32.mrb[0].mxu0
        %9929 = vmatprep.mubr.f32.mxu0 0.0
        %v9930 = vand.u32 %v9643, 4294901760
        %9931 = vmatmul.mubr.f32.gmra.mrb[0].mxu0 %v9930
        %v9932 = vpop.f32.mrb[0].mxu0
        %v9933 = vadd.f32 %v9756, %v9932
        %v9934 = vpop.f32.mrb[0].mxu0
        %9935 = vmatprep.mubr.f32.mxu0 0.0
        %v9936 = vand.u32 %v9649, 4294901760
        %9937 = vmatmul.mubr.f32.gmra.mrb[0].mxu0 %v9936
        %v9938 = vpop.f32.mrb[0].mxu0
        %v9939 = vadd.f32 %v9766, %v9938
        %v9940 = vpop.f32.mrb[0].mxu0
        %9941 = vmatprep.mubr.f32.mxu0 0.0
        %v9942 = vand.u32 %v9655, 4294901760
        %9943 = vmatmul.mubr.f32.gmra.mrb[0].mxu0 %v9942
        %v9944 = vpop.f32.mrb[0].mxu0
        %v9945 = vadd.f32 %v9776, %v9944
        %v9946 = vpop.f32.mrb[0].mxu0
        %9947 = vdwg.mxu0
        %9948 = vmatprep.subr.mxu0 0.0
        %v9949 = vand.u32 %v508, 4294901760
        %v9950 = vsub.f32 %v508, %v9949
        %9951 = vmatpush1.msra.mxu0 %v9950
        %9952 = vmatprep.subr.mxu0 0.0
        %v9953 = vand.u32 %v509, 4294901760
        %v9954 = vsub.f32 %v509, %v9953
        %9955 = vmatpush1.msra.mxu0 %v9954
        %9956 = vmatprep.subr.mxu0 0.0
        %v9957 = vand.u32 %v510, 4294901760
        %v9958 = vsub.f32 %v510, %v9957
        %9959 = vmatpush1.msra.mxu0 %v9958
        %9960 = vmatprep.subr.mxu0 0.0
        %v9961 = vand.u32 %v511, 4294901760
        %v9962 = vsub.f32 %v511, %v9961
        %9963 = vmatpush1.msra.mxu0 %v9962
        %9964 = vmatprep.subr.mxu0 0.0
        %v9965 = vand.u32 %v512, 4294901760
        %v9966 = vsub.f32 %v512, %v9965
        %9967 = vmatpush1.msra.mxu0 %v9966
        %9968 = vmatprep.subr.mxu0 0.0
        %v9969 = vand.u32 %v513, 4294901760
        %v9970 = vsub.f32 %v513, %v9969
        %9971 = vmatpush1.msra.mxu0 %v9970
        %9972 = vmatprep.subr.mxu0 0.0
        %v9973 = vand.u32 %v514, 4294901760
        %v9974 = vsub.f32 %v514, %v9973
        %9975 = vmatpush1.msra.mxu0 %v9974
        %9976 = vmatprep.subr.mxu0 0.0
        %v9977 = vand.u32 %v515, 4294901760
        %v9978 = vsub.f32 %v515, %v9977
        %9979 = vmatpush1.msra.mxu0 %v9978
        %9980 = vmatprep.subr.mxu0 0.0
        %v9981 = vand.u32 %v516, 4294901760
        %v9982 = vsub.f32 %v516, %v9981
        %9983 = vmatpush1.msra.mxu0 %v9982
        %9984 = vmatprep.subr.mxu0 0.0
        %v9985 = vand.u32 %v517, 4294901760
        %v9986 = vsub.f32 %v517, %v9985
        %9987 = vmatpush1.msra.mxu0 %v9986
        %9988 = vmatprep.subr.mxu0 0.0
        %v9989 = vand.u32 %v518, 4294901760
        %v9990 = vsub.f32 %v518, %v9989
        %9991 = vmatpush1.msra.mxu0 %v9990
        %9992 = vmatprep.subr.mxu0 0.0
        %v9993 = vand.u32 %v519, 4294901760
        %v9994 = vsub.f32 %v519, %v9993
        %9995 = vmatpush1.msra.mxu0 %v9994
        %9996 = vmatprep.subr.mxu0 0.0
        %v9997 = vand.u32 %v520, 4294901760
        %v9998 = vsub.f32 %v520, %v9997
        %9999 = vmatpush1.msra.mxu0 %v9998
        %10000 = vmatprep.subr.mxu0 0.0
        %v10001 = vand.u32 %v521, 4294901760
        %v10002 = vsub.f32 %v521, %v10001
        %10003 = vmatpush1.msra.mxu0 %v10002
        %10004 = vmatprep.subr.mxu0 0.0
        %v10005 = vand.u32 %v522, 4294901760
        %v10006 = vsub.f32 %v522, %v10005
        %10007 = vmatpush1.msra.mxu0 %v10006
        %10008 = vmatprep.subr.mxu0 0.0
        %v10009 = vand.u32 %v523, 4294901760
        %v10010 = vsub.f32 %v523, %v10009
        %10011 = vmatpush1.msra.mxu0 %v10010
        %10012 = vmatprep.subr.mxu0 0.0
        %10013 = vmatpush1.msra.mxu0 0.0
        %10014 = vmatprep.subr.mxu0 0.0
        %10015 = vmatpush1.msra.mxu0 0.0
        %10016 = vmatprep.subr.mxu0 0.0
        %10017 = vmatpush1.msra.mxu0 0.0
        %10018 = vmatprep.subr.mxu0 0.0
        %10019 = vmatpush1.msra.mxu0 0.0
        %10020 = vmatprep.subr.mxu0 0.0
        %10021 = vmatpush1.msra.mxu0 0.0
        %10022 = vmatprep.subr.mxu0 0.0
        %10023 = vmatpush1.msra.mxu0 0.0
        %10024 = vmatprep.subr.mxu0 0.0
        %10025 = vmatpush1.msra.mxu0 0.0
        %10026 = vmatprep.subr.mxu0 0.0
        %10027 = vmatpush1.msra.mxu0 0.0
        %10028 = vmatprep.subr.mxu0 0.0
        %10029 = vmatpush1.msra.mxu0 0.0
        %10030 = vmatprep.subr.mxu0 0.0
        %10031 = vmatpush1.msra.mxu0 0.0
        %10032 = vmatprep.subr.mxu0 0.0
        %10033 = vmatpush1.msra.mxu0 0.0
        %10034 = vmatprep.subr.mxu0 0.0
        %10035 = vmatpush1.msra.mxu0 0.0
        %10036 = vmatprep.subr.mxu0 0.0
        %10037 = vmatpush1.msra.mxu0 0.0
        %10038 = vmatprep.subr.mxu0 0.0
        %10039 = vmatpush1.msra.mxu0 0.0
        %10040 = vmatprep.subr.mxu0 0.0
        %10041 = vmatpush1.msra.mxu0 0.0
        %10042 = vmatprep.subr.mxu0 0.0
        %10043 = vmatpush1.msra.mxu0 0.0
        %10044 = vmatprep.mubr.f32.mxu0 0.0
        %v10045 = vand.u32 %v9637, 4294901760
        %v10046 = vsub.f32 %v9637, %v10045
        %10047 = vmatmul.mubr.f32.gmra.mrb[0].mxu0 %v10046
        %v10048 = vpop.f32.mrb[0].mxu0
        %v10049 = vadd.f32 %v9927, %v10048
        %v10050 = vpop.f32.mrb[0].mxu0
        %10051 = vmatprep.mubr.f32.mxu0 0.0
        %v10052 = vand.u32 %v9643, 4294901760
        %v10053 = vsub.f32 %v9643, %v10052
        %10054 = vmatmul.mubr.f32.gmra.mrb[0].mxu0 %v10053
        %v10055 = vpop.f32.mrb[0].mxu0
        %v10056 = vadd.f32 %v9933, %v10055
        %v10057 = vpop.f32.mrb[0].mxu0
        %10058 = vmatprep.mubr.f32.mxu0 0.0
        %v10059 = vand.u32 %v9649, 4294901760
        %v10060 = vsub.f32 %v9649, %v10059
        %10061 = vmatmul.mubr.f32.gmra.mrb[0].mxu0 %v10060
        %v10062 = vpop.f32.mrb[0].mxu0
        %v10063 = vadd.f32 %v9939, %v10062
        %v10064 = vpop.f32.mrb[0].mxu0
        %10065 = vmatprep.mubr.f32.mxu0 0.0
        %v10066 = vand.u32 %v9655, 4294901760
        %v10067 = vsub.f32 %v9655, %v10066
        %10068 = vmatmul.mubr.f32.gmra.mrb[0].mxu0 %v10067
        %v10069 = vpop.f32.mrb[0].mxu0
        %v10070 = vadd.f32 %v9945, %v10069
        %v10071 = vpop.f32.mrb[0].mxu0
        %10072 = vdwg.mxu0
        %10073 = vmatprep.subr.mxu0 0.0
        %v10074 = vand.u32 %v508, 4294901760
        %10075 = vmatpush1.msra.mxu0 %v10074
        %10076 = vmatprep.subr.mxu0 0.0
        %v10077 = vand.u32 %v509, 4294901760
        %10078 = vmatpush1.msra.mxu0 %v10077
        %10079 = vmatprep.subr.mxu0 0.0
        %v10080 = vand.u32 %v510, 4294901760
        %10081 = vmatpush1.msra.mxu0 %v10080
        %10082 = vmatprep.subr.mxu0 0.0
        %v10083 = vand.u32 %v511, 4294901760
        %10084 = vmatpush1.msra.mxu0 %v10083
        %10085 = vmatprep.subr.mxu0 0.0
        %v10086 = vand.u32 %v512, 4294901760
        %10087 = vmatpush1.msra.mxu0 %v10086
        %10088 = vmatprep.subr.mxu0 0.0
        %v10089 = vand.u32 %v513, 4294901760
        %10090 = vmatpush1.msra.mxu0 %v10089
        %10091 = vmatprep.subr.mxu0 0.0
        %v10092 = vand.u32 %v514, 4294901760
        %10093 = vmatpush1.msra.mxu0 %v10092
        %10094 = vmatprep.subr.mxu0 0.0
        %v10095 = vand.u32 %v515, 4294901760
        %10096 = vmatpush1.msra.mxu0 %v10095
        %10097 = vmatprep.subr.mxu0 0.0
        %v10098 = vand.u32 %v516, 4294901760
        %10099 = vmatpush1.msra.mxu0 %v10098
        %10100 = vmatprep.subr.mxu0 0.0
        %v10101 = vand.u32 %v517, 4294901760
        %10102 = vmatpush1.msra.mxu0 %v10101
        %10103 = vmatprep.subr.mxu0 0.0
        %v10104 = vand.u32 %v518, 4294901760
        %10105 = vmatpush1.msra.mxu0 %v10104
        %10106 = vmatprep.subr.mxu0 0.0
        %v10107 = vand.u32 %v519, 4294901760
        %10108 = vmatpush1.msra.mxu0 %v10107
        %10109 = vmatprep.subr.mxu0 0.0
        %v10110 = vand.u32 %v520, 4294901760
        %10111 = vmatpush1.msra.mxu0 %v10110
        %10112 = vmatprep.subr.mxu0 0.0
        %v10113 = vand.u32 %v521, 4294901760
        %10114 = vmatpush1.msra.mxu0 %v10113
        %10115 = vmatprep.subr.mxu0 0.0
        %v10116 = vand.u32 %v522, 4294901760
        %10117 = vmatpush1.msra.mxu0 %v10116
        %10118 = vmatprep.subr.mxu0 0.0
        %v10119 = vand.u32 %v523, 4294901760
        %10120 = vmatpush1.msra.mxu0 %v10119
        %10121 = vmatprep.subr.mxu0 0.0
        %10122 = vmatpush1.msra.mxu0 0.0
        %10123 = vmatprep.subr.mxu0 0.0
        %10124 = vmatpush1.msra.mxu0 0.0
        %10125 = vmatprep.subr.mxu0 0.0
        %10126 = vmatpush1.msra.mxu0 0.0
        %10127 = vmatprep.subr.mxu0 0.0
        %10128 = vmatpush1.msra.mxu0 0.0
        %10129 = vmatprep.subr.mxu0 0.0
        %10130 = vmatpush1.msra.mxu0 0.0
        %10131 = vmatprep.subr.mxu0 0.0
        %10132 = vmatpush1.msra.mxu0 0.0
        %10133 = vmatprep.subr.mxu0 0.0
        %10134 = vmatpush1.msra.mxu0 0.0
        %10135 = vmatprep.subr.mxu0 0.0
        %10136 = vmatpush1.msra.mxu0 0.0
        %10137 = vmatprep.subr.mxu0 0.0
        %10138 = vmatpush1.msra.mxu0 0.0
        %10139 = vmatprep.subr.mxu0 0.0
        %10140 = vmatpush1.msra.mxu0 0.0
        %10141 = vmatprep.subr.mxu0 0.0
        %10142 = vmatpush1.msra.mxu0 0.0
        %10143 = vmatprep.subr.mxu0 0.0
        %10144 = vmatpush1.msra.mxu0 0.0
        %10145 = vmatprep.subr.mxu0 0.0
        %10146 = vmatpush1.msra.mxu0 0.0
        %10147 = vmatprep.subr.mxu0 0.0
        %10148 = vmatpush1.msra.mxu0 0.0
        %10149 = vmatprep.subr.mxu0 0.0
        %10150 = vmatpush1.msra.mxu0 0.0
        %10151 = vmatprep.subr.mxu0 0.0
        %10152 = vmatpush1.msra.mxu0 0.0
        %10153 = vmatprep.mubr.f32.mxu0 0.0
        %v10154 = vand.u32 %v9637, 4294901760
        %v10155 = vsub.f32 %v9637, %v10154
        %v10156 = vand.u32 %v10155, 4294901760
        %10157 = vmatmul.mubr.f32.gmra.mrb[0].mxu0 %v10156
        %v10158 = vpop.f32.mrb[0].mxu0
        %v10159 = vadd.f32 %v10049, %v10158
        %v10160 = vpop.f32.mrb[0].mxu0
        %10161 = vmatprep.mubr.f32.mxu0 0.0
        %v10162 = vand.u32 %v9643, 4294901760
        %v10163 = vsub.f32 %v9643, %v10162
        %v10164 = vand.u32 %v10163, 4294901760
        %10165 = vmatmul.mubr.f32.gmra.mrb[0].mxu0 %v10164
        %v10166 = vpop.f32.mrb[0].mxu0
        %v10167 = vadd.f32 %v10056, %v10166
        %v10168 = vpop.f32.mrb[0].mxu0
        %10169 = vmatprep.mubr.f32.mxu0 0.0
        %v10170 = vand.u32 %v9649, 4294901760
        %v10171 = vsub.f32 %v9649, %v10170
        %v10172 = vand.u32 %v10171, 4294901760
        %10173 = vmatmul.mubr.f32.gmra.mrb[0].mxu0 %v10172
        %v10174 = vpop.f32.mrb[0].mxu0
        %v10175 = vadd.f32 %v10063, %v10174
        %v10176 = vpop.f32.mrb[0].mxu0
        %10177 = vmatprep.mubr.f32.mxu0 0.0
        %v10178 = vand.u32 %v9655, 4294901760
        %v10179 = vsub.f32 %v9655, %v10178
        %v10180 = vand.u32 %v10179, 4294901760
        %10181 = vmatmul.mubr.f32.gmra.mrb[0].mxu0 %v10180
        %v10182 = vpop.f32.mrb[0].mxu0
        %v10183 = vadd.f32 %v10070, %v10182
        %v10184 = vpop.f32.mrb[0].mxu0
        %10185 = vdwg.mxu0
        %10186 = vmatprep.subr.mxu0 0.0
        %v10187 = vand.u32 %v508, 4294901760
        %v10188 = vsub.f32 %v508, %v10187
        %v10189 = vand.u32 %v10188, 4294901760
        %10190 = vmatpush1.msra.mxu0 %v10189
        %10191 = vmatprep.subr.mxu0 0.0
        %v10192 = vand.u32 %v509, 4294901760
        %v10193 = vsub.f32 %v509, %v10192
        %v10194 = vand.u32 %v10193, 4294901760
        %10195 = vmatpush1.msra.mxu0 %v10194
        %10196 = vmatprep.subr.mxu0 0.0
        %v10197 = vand.u32 %v510, 4294901760
        %v10198 = vsub.f32 %v510, %v10197
        %v10199 = vand.u32 %v10198, 4294901760
        %10200 = vmatpush1.msra.mxu0 %v10199
        %10201 = vmatprep.subr.mxu0 0.0
        %v10202 = vand.u32 %v511, 4294901760
        %v10203 = vsub.f32 %v511, %v10202
        %v10204 = vand.u32 %v10203, 4294901760
        %10205 = vmatpush1.msra.mxu0 %v10204
        %10206 = vmatprep.subr.mxu0 0.0
        %v10207 = vand.u32 %v512, 4294901760
        %v10208 = vsub.f32 %v512, %v10207
        %v10209 = vand.u32 %v10208, 4294901760
        %10210 = vmatpush1.msra.mxu0 %v10209
        %10211 = vmatprep.subr.mxu0 0.0
        %v10212 = vand.u32 %v513, 4294901760
        %v10213 = vsub.f32 %v513, %v10212
        %v10214 = vand.u32 %v10213, 4294901760
        %10215 = vmatpush1.msra.mxu0 %v10214
        %10216 = vmatprep.subr.mxu0 0.0
        %v10217 = vand.u32 %v514, 4294901760
        %v10218 = vsub.f32 %v514, %v10217
        %v10219 = vand.u32 %v10218, 4294901760
        %10220 = vmatpush1.msra.mxu0 %v10219
        %10221 = vmatprep.subr.mxu0 0.0
        %v10222 = vand.u32 %v515, 4294901760
        %v10223 = vsub.f32 %v515, %v10222
        %v10224 = vand.u32 %v10223, 4294901760
        %10225 = vmatpush1.msra.mxu0 %v10224
        %10226 = vmatprep.subr.mxu0 0.0
        %v10227 = vand.u32 %v516, 4294901760
        %v10228 = vsub.f32 %v516, %v10227
        %v10229 = vand.u32 %v10228, 4294901760
        %10230 = vmatpush1.msra.mxu0 %v10229
        %10231 = vmatprep.subr.mxu0 0.0
        %v10232 = vand.u32 %v517, 4294901760
        %v10233 = vsub.f32 %v517, %v10232
        %v10234 = vand.u32 %v10233, 4294901760
        %10235 = vmatpush1.msra.mxu0 %v10234
        %10236 = vmatprep.subr.mxu0 0.0
        %v10237 = vand.u32 %v518, 4294901760
        %v10238 = vsub.f32 %v518, %v10237
        %v10239 = vand.u32 %v10238, 4294901760
        %10240 = vmatpush1.msra.mxu0 %v10239
        %10241 = vmatprep.subr.mxu0 0.0
        %v10242 = vand.u32 %v519, 4294901760
        %v10243 = vsub.f32 %v519, %v10242
        %v10244 = vand.u32 %v10243, 4294901760
        %10245 = vmatpush1.msra.mxu0 %v10244
        %10246 = vmatprep.subr.mxu0 0.0
        %v10247 = vand.u32 %v520, 4294901760
        %v10248 = vsub.f32 %v520, %v10247
        %v10249 = vand.u32 %v10248, 4294901760
        %10250 = vmatpush1.msra.mxu0 %v10249
        %10251 = vmatprep.subr.mxu0 0.0
        %v10252 = vand.u32 %v521, 4294901760
        %v10253 = vsub.f32 %v521, %v10252
        %v10254 = vand.u32 %v10253, 4294901760
        %10255 = vmatpush1.msra.mxu0 %v10254
        %10256 = vmatprep.subr.mxu0 0.0
        %v10257 = vand.u32 %v522, 4294901760
        %v10258 = vsub.f32 %v522, %v10257
        %v10259 = vand.u32 %v10258, 4294901760
        %10260 = vmatpush1.msra.mxu0 %v10259
        %10261 = vmatprep.subr.mxu0 0.0
        %v10262 = vand.u32 %v523, 4294901760
        %v10263 = vsub.f32 %v523, %v10262
        %v10264 = vand.u32 %v10263, 4294901760
        %10265 = vmatpush1.msra.mxu0 %v10264
        %10266 = vmatprep.subr.mxu0 0.0
        %10267 = vmatpush1.msra.mxu0 0.0
        %10268 = vmatprep.subr.mxu0 0.0
        %10269 = vmatpush1.msra.mxu0 0.0
        %10270 = vmatprep.subr.mxu0 0.0
        %10271 = vmatpush1.msra.mxu0 0.0
        %10272 = vmatprep.subr.mxu0 0.0
        %10273 = vmatpush1.msra.mxu0 0.0
        %10274 = vmatprep.subr.mxu0 0.0
        %10275 = vmatpush1.msra.mxu0 0.0
        %10276 = vmatprep.subr.mxu0 0.0
        %10277 = vmatpush1.msra.mxu0 0.0
        %10278 = vmatprep.subr.mxu0 0.0
        %10279 = vmatpush1.msra.mxu0 0.0
        %10280 = vmatprep.subr.mxu0 0.0
        %10281 = vmatpush1.msra.mxu0 0.0
        %10282 = vmatprep.subr.mxu0 0.0
        %10283 = vmatpush1.msra.mxu0 0.0
        %10284 = vmatprep.subr.mxu0 0.0
        %10285 = vmatpush1.msra.mxu0 0.0
        %10286 = vmatprep.subr.mxu0 0.0
        %10287 = vmatpush1.msra.mxu0 0.0
        %10288 = vmatprep.subr.mxu0 0.0
        %10289 = vmatpush1.msra.mxu0 0.0
        %10290 = vmatprep.subr.mxu0 0.0
        %10291 = vmatpush1.msra.mxu0 0.0
        %10292 = vmatprep.subr.mxu0 0.0
        %10293 = vmatpush1.msra.mxu0 0.0
        %10294 = vmatprep.subr.mxu0 0.0
        %10295 = vmatpush1.msra.mxu0 0.0
        %10296 = vmatprep.subr.mxu0 0.0
        %10297 = vmatpush1.msra.mxu0 0.0
        %10298 = vmatprep.mubr.f32.mxu0 0.0
        %v10299 = vand.u32 %v9637, 4294901760
        %10300 = vmatmul.mubr.f32.gmra.mrb[0].mxu0 %v10299
        %v10301 = vpop.f32.mrb[0].mxu0
        %v10302 = vadd.f32 %v10159, %v10301
        %v10303 = vpop.f32.mrb[0].mxu0
        %10304 = vmatprep.mubr.f32.mxu0 0.0
        %v10305 = vand.u32 %v9643, 4294901760
        %10306 = vmatmul.mubr.f32.gmra.mrb[0].mxu0 %v10305
        %v10307 = vpop.f32.mrb[0].mxu0
        %v10308 = vadd.f32 %v10167, %v10307
        %v10309 = vpop.f32.mrb[0].mxu0
        %10310 = vmatprep.mubr.f32.mxu0 0.0
        %v10311 = vand.u32 %v9649, 4294901760
        %10312 = vmatmul.mubr.f32.gmra.mrb[0].mxu0 %v10311
        %v10313 = vpop.f32.mrb[0].mxu0
        %v10314 = vadd.f32 %v10175, %v10313
        %v10315 = vpop.f32.mrb[0].mxu0
        %10316 = vmatprep.mubr.f32.mxu0 0.0
        %v10317 = vand.u32 %v9655, 4294901760
        %10318 = vmatmul.mubr.f32.gmra.mrb[0].mxu0 %v10317
        %v10319 = vpop.f32.mrb[0].mxu0
        %v10320 = vadd.f32 %v10183, %v10319
        %v10321 = vpop.f32.mrb[0].mxu0
        %10322 = vdwg.mxu0
        %10323 = vmatprep.subr.mxu0 0.0
        %v10324 = vand.u32 %v508, 4294901760
        %10325 = vmatpush1.msra.mxu0 %v10324
        %10326 = vmatprep.subr.mxu0 0.0
        %v10327 = vand.u32 %v509, 4294901760
        %10328 = vmatpush1.msra.mxu0 %v10327
        %10329 = vmatprep.subr.mxu0 0.0
        %v10330 = vand.u32 %v510, 4294901760
        %10331 = vmatpush1.msra.mxu0 %v10330
        %10332 = vmatprep.subr.mxu0 0.0
        %v10333 = vand.u32 %v511, 4294901760
        %10334 = vmatpush1.msra.mxu0 %v10333
        %10335 = vmatprep.subr.mxu0 0.0
        %v10336 = vand.u32 %v512, 4294901760
        %10337 = vmatpush1.msra.mxu0 %v10336
        %10338 = vmatprep.subr.mxu0 0.0
        %v10339 = vand.u32 %v513, 4294901760
        %10340 = vmatpush1.msra.mxu0 %v10339
        %10341 = vmatprep.subr.mxu0 0.0
        %v10342 = vand.u32 %v514, 4294901760
        %10343 = vmatpush1.msra.mxu0 %v10342
        %10344 = vmatprep.subr.mxu0 0.0
        %v10345 = vand.u32 %v515, 4294901760
        %10346 = vmatpush1.msra.mxu0 %v10345
        %10347 = vmatprep.subr.mxu0 0.0
        %v10348 = vand.u32 %v516, 4294901760
        %10349 = vmatpush1.msra.mxu0 %v10348
        %10350 = vmatprep.subr.mxu0 0.0
        %v10351 = vand.u32 %v517, 4294901760
        %10352 = vmatpush1.msra.mxu0 %v10351
        %10353 = vmatprep.subr.mxu0 0.0
        %v10354 = vand.u32 %v518, 4294901760
        %10355 = vmatpush1.msra.mxu0 %v10354
        %10356 = vmatprep.subr.mxu0 0.0
        %v10357 = vand.u32 %v519, 4294901760
        %10358 = vmatpush1.msra.mxu0 %v10357
        %10359 = vmatprep.subr.mxu0 0.0
        %v10360 = vand.u32 %v520, 4294901760
        %10361 = vmatpush1.msra.mxu0 %v10360
        %10362 = vmatprep.subr.mxu0 0.0
        %v10363 = vand.u32 %v521, 4294901760
        %10364 = vmatpush1.msra.mxu0 %v10363
        %10365 = vmatprep.subr.mxu0 0.0
        %v10366 = vand.u32 %v522, 4294901760
        %10367 = vmatpush1.msra.mxu0 %v10366
        %10368 = vmatprep.subr.mxu0 0.0
        %v10369 = vand.u32 %v523, 4294901760
        %10370 = vmatpush1.msra.mxu0 %v10369
        %10371 = vmatprep.subr.mxu0 0.0
        %10372 = vmatpush1.msra.mxu0 0.0
        %10373 = vmatprep.subr.mxu0 0.0
        %10374 = vmatpush1.msra.mxu0 0.0
        %10375 = vmatprep.subr.mxu0 0.0
        %10376 = vmatpush1.msra.mxu0 0.0
        %10377 = vmatprep.subr.mxu0 0.0
        %10378 = vmatpush1.msra.mxu0 0.0
        %10379 = vmatprep.subr.mxu0 0.0
        %10380 = vmatpush1.msra.mxu0 0.0
        %10381 = vmatprep.subr.mxu0 0.0
        %10382 = vmatpush1.msra.mxu0 0.0
        %10383 = vmatprep.subr.mxu0 0.0
        %10384 = vmatpush1.msra.mxu0 0.0
        %10385 = vmatprep.subr.mxu0 0.0
        %10386 = vmatpush1.msra.mxu0 0.0
        %10387 = vmatprep.subr.mxu0 0.0
        %10388 = vmatpush1.msra.mxu0 0.0
        %10389 = vmatprep.subr.mxu0 0.0
        %10390 = vmatpush1.msra.mxu0 0.0
        %10391 = vmatprep.subr.mxu0 0.0
        %10392 = vmatpush1.msra.mxu0 0.0
        %10393 = vmatprep.subr.mxu0 0.0
        %10394 = vmatpush1.msra.mxu0 0.0
        %10395 = vmatprep.subr.mxu0 0.0
        %10396 = vmatpush1.msra.mxu0 0.0
        %10397 = vmatprep.subr.mxu0 0.0
        %10398 = vmatpush1.msra.mxu0 0.0
        %10399 = vmatprep.subr.mxu0 0.0
        %10400 = vmatpush1.msra.mxu0 0.0
        %10401 = vmatprep.subr.mxu0 0.0
        %10402 = vmatpush1.msra.mxu0 0.0
        %10403 = vmatprep.mubr.f32.mxu0 0.0
        %v10404 = vand.u32 %v9637, 4294901760
        %10405 = vmatmul.mubr.f32.gmra.mrb[0].mxu0 %v10404
        %v10406 = vpop.f32.mrb[0].mxu0
        %v10407 = vadd.f32 %v10302, %v10406
        %v10408 = vpop.f32.mrb[0].mxu0
        %10409 = vmatprep.mubr.f32.mxu0 0.0
        %v10410 = vand.u32 %v9643, 4294901760
        %10411 = vmatmul.mubr.f32.gmra.mrb[0].mxu0 %v10410
        %v10412 = vpop.f32.mrb[0].mxu0
        %v10413 = vadd.f32 %v10308, %v10412
        %v10414 = vpop.f32.mrb[0].mxu0
        %10415 = vmatprep.mubr.f32.mxu0 0.0
        %v10416 = vand.u32 %v9649, 4294901760
        %10417 = vmatmul.mubr.f32.gmra.mrb[0].mxu0 %v10416
        %v10418 = vpop.f32.mrb[0].mxu0
        %v10419 = vadd.f32 %v10314, %v10418
        %v10420 = vpop.f32.mrb[0].mxu0
        %10421 = vmatprep.mubr.f32.mxu0 0.0
        %v10422 = vand.u32 %v9655, 4294901760
        %10423 = vmatmul.mubr.f32.gmra.mrb[0].mxu0 %v10422
        %v10424 = vpop.f32.mrb[0].mxu0
        %v10425 = vadd.f32 %v10320, %v10424
        %v10426 = vpop.f32.mrb[0].mxu0
        %10427 = vdwg.mxu0
        %v10428 = vadd.f32 %v2501, 127.5
        %v10429 = vadd.f32 %v2507, 127.5
        %v10430 = vadd.f32 %v2513, 127.5
        %v10431 = vadd.f32 %v2519, 127.5
        %v10432 = vadd.f32 %v4473, 127.5
        %v10433 = vadd.f32 %v4479, 127.5
        %v10434 = vadd.f32 %v4485, 127.5
        %v10435 = vadd.f32 %v4491, 127.5
        %v10436 = vmul.f32 %v2501, %v2501
        %v10437 = vmul.f32 %v2507, %v2507
        %v10438 = vmul.f32 %v2513, %v2513
        %v10439 = vmul.f32 %v2519, %v2519
        %v10440 = vsub.f32 %v6451, %v10436
        %v10441 = vsub.f32 %v6457, %v10437
        %v10442 = vsub.f32 %v6463, %v10438
        %v10443 = vsub.f32 %v6469, %v10439
        %v10444 = vmul.f32 %v4473, %v4473
        %v10445 = vmul.f32 %v4479, %v4479
        %v10446 = vmul.f32 %v4485, %v4485
        %v10447 = vmul.f32 %v4491, %v4491
        %v10448 = vsub.f32 %v8429, %v10444
        %v10449 = vsub.f32 %v8435, %v10445
        %v10450 = vsub.f32 %v8441, %v10446
        %v10451 = vsub.f32 %v8447, %v10447
        %v10452 = vmul.f32 %v2501, %v4473
        %v10453 = vmul.f32 %v2507, %v4479
        %v10454 = vmul.f32 %v2513, %v4485
        %v10455 = vmul.f32 %v2519, %v4491
        %v10456 = vsub.f32 %v10407, %v10452
        %v10457 = vsub.f32 %v10413, %v10453
        %v10458 = vsub.f32 %v10419, %v10454
        %v10459 = vsub.f32 %v10425, %v10455
        %v10460 = vmul.f32 %v10428, %v10432
        %v10461 = vmul.f32 %v10429, %v10433
        %v10462 = vmul.f32 %v10430, %v10434
        %v10463 = vmul.f32 %v10431, %v10435
        %v10464 = vmul.f32 %v10460, 2.0
        %v10465 = vmul.f32 %v10461, 2.0
        %v10466 = vmul.f32 %v10462, 2.0
        %v10467 = vmul.f32 %v10463, 2.0
        %v10468 = vadd.f32 %v10464, 6.5025
        %v10469 = vadd.f32 %v10465, 6.5025
        %v10470 = vadd.f32 %v10466, 6.5025
        %v10471 = vadd.f32 %v10467, 6.5025
        %v10472 = vmul.f32 %v10456, 2.0
        %v10473 = vmul.f32 %v10457, 2.0
        %v10474 = vmul.f32 %v10458, 2.0
        %v10475 = vmul.f32 %v10459, 2.0
        %v10476 = vadd.f32 %v10472, 58.5225
        %v10477 = vadd.f32 %v10473, 58.5225
        %v10478 = vadd.f32 %v10474, 58.5225
        %v10479 = vadd.f32 %v10475, 58.5225
        %v10480 = vmul.f32 %v10468, %v10476
        %v10481 = vmul.f32 %v10469, %v10477
        %v10482 = vmul.f32 %v10470, %v10478
        %v10483 = vmul.f32 %v10471, %v10479
        %v10484 = vmul.f32 %v10428, %v10428
        %v10485 = vmul.f32 %v10429, %v10429
        %v10486 = vmul.f32 %v10430, %v10430
        %v10487 = vmul.f32 %v10431, %v10431
        %v10488 = vmul.f32 %v10432, %v10432
        %v10489 = vmul.f32 %v10433, %v10433
        %v10490 = vmul.f32 %v10434, %v10434
        %v10491 = vmul.f32 %v10435, %v10435
        %v10492 = vadd.f32 %v10484, %v10488
        %v10493 = vadd.f32 %v10485, %v10489
        %v10494 = vadd.f32 %v10486, %v10490
        %v10495 = vadd.f32 %v10487, %v10491
        %v10496 = vadd.f32 %v10492, 6.5025
        %v10497 = vadd.f32 %v10493, 6.5025
        %v10498 = vadd.f32 %v10494, 6.5025
        %v10499 = vadd.f32 %v10495, 6.5025
        %v10500 = vadd.f32 %v10440, %v10448
        %v10501 = vadd.f32 %v10441, %v10449
        %v10502 = vadd.f32 %v10442, %v10450
        %v10503 = vadd.f32 %v10443, %v10451
        %v10504 = vadd.f32 %v10500, 58.5225
        %v10505 = vadd.f32 %v10501, 58.5225
        %v10506 = vadd.f32 %v10502, 58.5225
        %v10507 = vadd.f32 %v10503, 58.5225
        %v10508 = vmul.f32 %v10496, %v10504
        %v10509 = vmul.f32 %v10497, %v10505
        %v10510 = vmul.f32 %v10498, %v10506
        %v10511 = vmul.f32 %v10499, %v10507
        %v10512 = vrcp.pop %v10508
        %v10513 = vrcp.pop %v10509
        %v10514 = vrcp.pop %v10510
        %v10515 = vrcp.pop %v10511
        %v10516 = vmul.f32 %v10508, %v10512
        %v10517 = vmul.f32 %v10509, %v10513
        %v10518 = vmul.f32 %v10510, %v10514
        %v10519 = vmul.f32 %v10511, %v10515
        %v10520 = vsub.f32 2.0, %v10516
        %v10521 = vsub.f32 2.0, %v10517
        %v10522 = vsub.f32 2.0, %v10518
        %v10523 = vsub.f32 2.0, %v10519
        %v10524 = vmul.f32 %v10512, %v10520
        %v10525 = vmul.f32 %v10513, %v10521
        %v10526 = vmul.f32 %v10514, %v10522
        %v10527 = vmul.f32 %v10515, %v10523
        %v10528 = vmul.f32 %v10480, %v10524
        %v10529 = vmul.f32 %v10481, %v10525
        %v10530 = vmul.f32 %v10482, %v10526
        %v10531 = vmul.f32 %v10483, %v10527
        %v10532 = vlaneseq
        %v10533 = vand.u32 %v10532, 127
        %vm10534 = vcmp.ge.s32.totalorder %v10533, 5
        %vm10535 = vcmp.lt.s32.totalorder %v10533, 27
        %vm10536 = vmand %vm10534, %vm10535
        %p10537 = scmp.ne.s32.totalorder %s32, 0
        // Predicated region
        $region69: #{tpu_custom_call.1} parent=47 // pred_check
          %p10538 = pneg %p10537
        $region70: #{tpu_custom_call.1} parent=47 // pred_check_branch
          %10540 = sbr.rel (%p10538) target = $region72
        $region71: #{tpu_custom_call.1} parent=47 // pred_region
          %v10541 = vsel %vm10536, 1, 0
          %vm10542 = vcmp.eq.s32.totalorder %v10541, 1
          %v10543 = vsel %vm10542, %v10528, 0.0
          %v10544 = vsel %vm10542, %v10529, 0.0
          %v10545 = vsel %vm10542, %v10530, 0.0
          %v10546 = vsel %vm10542, %v10531, 0.0
          %v10547 = vadd.f32 %v10543, %v10544
          %v10548 = vadd.f32 %v10547, %v10545
          %v10549 = vadd.f32 %v10548, %v10546
          %10550 = vst [vmem:[%s467] sm:$0xff] %v10549
        $region72: #{tpu_custom_call.1} parent=47 // pred_fallthru
          _
        %p10551 = scmp.eq.s32.totalorder %s32, 0
        // Predicated region
        $region73: #{tpu_custom_call.1} parent=47 // pred_check
          %p10552 = pneg %p10551
        $region74: #{tpu_custom_call.1} parent=47 // pred_check_branch
          %10554 = sbr.rel (%p10552) target = $region76
        $region75: #{tpu_custom_call.1} parent=47 // pred_region
          %v10555 = vlaneseq
          %v10556 = vshrl.u32 %v10555, 7
          %v10557 = vadd.s32 %v10556, 8
          %v10558 = vadd.s32 %v10556, 16
          %v10559 = vadd.s32 %v10556, 24
          %s10560 = smul.u32 %s32, 32
          %v10561 = vstv %s10560
          %v10562 = vadd.s32 %v10556, %v10561
          %v10563 = vadd.s32 %v10557, %v10561
          %v10564 = vadd.s32 %v10558, %v10561
          %v10565 = vadd.s32 %v10559, %v10561
          %vm10566 = vcmp.lt.s32.totalorder %v10562, 22
          %vm10567 = vcmp.lt.s32.totalorder %v10563, 22
          %vm10568 = vcmp.lt.s32.totalorder %v10564, 22
          %vm10569 = vcmp.lt.s32.totalorder %v10565, 22
          %v10570 = vsel %vm10566, 1, 0
          %v10571 = vsel %vm10567, 1, 0
          %v10572 = vsel %vm10568, 1, 0
          %v10573 = vsel %vm10569, 1, 0
          %vm10574 = vcmp.eq.s32.totalorder %v10570, 1
          %vm10575 = vcmp.eq.s32.totalorder %v10571, 1
          %vm10576 = vcmp.eq.s32.totalorder %v10572, 1
          %vm10577 = vcmp.eq.s32.totalorder %v10573, 1
          %v10578 = vsel %vm10536, 1, 0
          %vm10579 = vcmp.eq.s32.totalorder %v10578, 1
          %vm10580 = vmand %vm10574, %vm10579
          %vm10581 = vmand %vm10575, %vm10579
          %vm10582 = vmand %vm10576, %vm10579
          %vm10583 = vmand %vm10577, %vm10579
          %v10584 = vsel %vm10580, %v10528, 0.0
          %v10585 = vsel %vm10581, %v10529, 0.0
          %v10586 = vsel %vm10582, %v10530, 0.0
          %v10587 = vsel %vm10583, %v10531, 0.0
          %v10588 = vadd.f32 %v10584, %v10585
          %v10589 = vadd.f32 %v10588, %v10586
          %v10590 = vadd.f32 %v10589, %v10587
          %10591 = vst [vmem:[%s467] sm:$0xff] %v10590
        $region76: #{tpu_custom_call.1} parent=47 // pred_fallthru
          _
        %s10592 = sand.u32 %s233, 1
        %s10593 = scalar_lea.sflag [#allocation4], %s10592
        %s10594 = sand.u32 %s233, 1
        %s10595 = smul.addr %s10594, 8
        %s10596 = scalar_lea.vmem [#allocation11], %s10595
        // Predicated region
        $region77: #{tpu_custom_call.1} parent=47 // pred_check
          %p10597 = pneg %p243
        $region78: #{tpu_custom_call.1} parent=47 // pred_check_branch
          %10599 = sbr.rel (%p10597) target = $region80
        $region79: #{tpu_custom_call.1} parent=47 // pred_region
          %s10601 = ssub.s32 128, 128
          %10602 = vsyncadd %s10593, %s10601
          %s10603 = smul.addr %s32, 3
          %s10604 = sadd.s32 %s33, %s10603
          %s10605 = smul.addr %s10604, 128
          %s10606 = scalar_lea.hbm %s7, %s10605
          %s10608 = sshll.u32 %s10596, 4
          %s10609 = int_to_ptr.vmem [resolvable:$true] %s10608
          %10611 = dma.vmem_to_hbm [thread:$0]  %s10609, 128, %s10606, %s10593
        $region80: #{tpu_custom_call.1} parent=47 // pred_fallthru
          _
      $region48: #{tpu_custom_call.1} parent=5 // pred_fallthru
        _
      %p10612 = scmp.le.s32.totalorder 2, %s23
      // Predicated region
      $region81: #{tpu_custom_call.1} parent=5 // pred_check
        %p10613 = pneg %p10612
      $region82: #{tpu_custom_call.1} parent=5 // pred_check_branch
        %10615 = sbr.rel (%p10613) target = $region84
      $region83: #{tpu_custom_call.1} parent=5 // pred_region
        %s10616 = ssub.s32 %s23, 2
        // Predicated region
        $region85: #{tpu_custom_call.1} parent=83 // pred_check
          %p10617 = pneg %p249
        $region86: #{tpu_custom_call.1} parent=83 // pred_check_branch
          %10619 = sbr.rel (%p10617) target = $region88
        $region87: #{tpu_custom_call.1} parent=83 // pred_region
          %s10620 = sand.u32 %s234, 1
          %s10621 = scalar_lea.sflag [#allocation4], %s10620
          %s10622 = sand.u32 %s234, 1
          %s10623 = smul.addr %s10622, 8
          %s10624 = scalar_lea.vmem [#allocation11], %s10623
          %10625 = dma.done %s10621, 128
        $region88: #{tpu_custom_call.1} parent=83 // pred_fallthru
          _
      $region84: #{tpu_custom_call.1} parent=5 // pred_fallthru
        _
    $region6: #{tpu_custom_call.1} parent=1 // loop_footer
      %s27 = sadd.s32 1, %s23
    $region7: #{tpu_custom_call.1} parent=1 // loop_footer_branch
      %22 = sbr.rel target = $region3
    $region8: #{tpu_custom_call.1} parent=1 // loop_exit
      _
    %10626 = vsyncpa [#allocation3], 1
    %s10627 = scalar_lea.sflag [#allocation3], 1
    %10628 = vsyncpa %s10627, 1
    %10629 = vsyncpa [#allocation6], 1
    %s10630 = scalar_lea.sflag [#allocation6], 1
    %10631 = vsyncpa %s10630, 1
    %10632 = vsyncpa [#allocation9], 1
    %s10633 = scalar_lea.sflag [#allocation9], 1
    %10634 = vsyncpa %s10633, 1
    %10635 = vsyncpa [#allocation4], 1
    %s10636 = scalar_lea.sflag [#allocation4], 1
    %10637 = vsyncpa %s10636, 1

</llo_original>
